<compile_context>
chip_gen: v5e
topology: v5e:2x2
jax: 0.10.0
libtpu: 0.0.40
codegen_flags: <defaults>
</compile_context>

<pallas_src>
import numpy as np
import jax
import jax.numpy as jnp
from jax import lax
from jax.experimental import pallas as pl
from jax.experimental.pallas import tpu as pltpu

NEG_SLOPE = 0.01                 # nn.LeakyReLU default negative_slope
H0, W0 = 96, 128                 # conv-stack spatial size (forced by view(-1, 48*33))
H1, W1 = 48, 64                  # spatial size after MaxPool2d(2, 2)
PADH, PADW = H0 + 4, W0 + 4      # pre-pool planes, padded by the max pad (2) on all sides
PADH2, PADW2 = H1 + 2, W1 + 2    # post-pool planes, padded by 1 on all sides


def _lrelu(v):
    return jnp.where(v >= 0.0, v, NEG_SLOPE * v)


# ----------------------------------------------------------------------------
# In-kernel helpers (operate on VMEM scratch refs laid out as described above)
# ----------------------------------------------------------------------------
def _conv_rows(in_ref, out_ref, w_ref, b_ref, *, KH, KW, Cin, Cout, Hout, W,
               out_roff, out_coff):
    """Conv2d(stride=1, 'same') + LeakyReLU, one output row per loop step.

    in_ref : ((Hin+2*roff_in)*Cin, Wp_in)  zero-padded plane; the window for output
             row y and tap kw is the aligned slice [y*Cin : y*Cin + KH*Cin, kw : kw+W].
    out_ref: ((Hout+2*out_roff)*Cout, Wp_out); row y is written once at
             [(y+out_roff)*Cout : +Cout, out_coff : out_coff+W].
    w_ref  : (KW, Cout, KH*Cin);  b_ref: (Cout, 1).
    """
    def body(y, carry):
        start = pl.multiple_of(y * Cin, 8)
        acc = jnp.zeros((Cout, W), jnp.float32)
        for kw in range(KW):
            a = in_ref[pl.ds(start, KH * Cin), kw:kw + W]          # (KH*Cin, W)
            acc = acc + jnp.dot(w_ref[kw], a, preferred_element_type=jnp.float32)
        res = _lrelu(acc + b_ref[...])                             # (Cout, W)
        wstart = pl.multiple_of((y + out_roff) * Cout, 8)
        out_ref[pl.ds(wstart, Cout), out_coff:out_coff + W] = res
        return carry

    lax.fori_loop(0, Hout, body, 0)


def _conv_pool_rows(in_ref, out_ref, w_ref, b_ref, sel_e_ref, sel_o_ref, *,
                    KH, KW, Cin, Cout, Hout_p, W):
    """Conv2d + LeakyReLU with a fused 2x2 MaxPool epilogue.

    Two conv rows are computed per step, max-reduced, and the width pairs are
    compacted with two 0/1 column-selection matmuls (exact one-hot selection),
    so no strided-lane gather is needed.  Pooled row t is written to
    out_ref[(t+1)*Cout : +Cout, 1 : 1+W//2].
    """
    def body(t, carry):
        rows = []
        for dy in range(2):
            start = pl.multiple_of((2 * t + dy) * Cin, 8)
            acc = jnp.zeros((Cout, W), jnp.float32)
            for kw in range(KW):
                a = in_ref[pl.ds(start, KH * Cin), kw:kw + W]      # (KH*Cin, W)
                acc = acc + jnp.dot(w_ref[kw], a, preferred_element_type=jnp.float32)
            rows.append(_lrelu(acc + b_ref[...]))
        m = jnp.maximum(rows[0], rows[1])                          # (Cout, W) row-pooled
        pooled = jnp.maximum(
            jnp.dot(m, sel_e_ref[...], preferred_element_type=jnp.float32),
            jnp.dot(m, sel_o_ref[...], preferred_element_type=jnp.float32))  # (Cout, W//2)
        wstart = pl.multiple_of((t + 1) * Cout, 8)
        out_ref[pl.ds(wstart, Cout), 1:1 + W // 2] = pooled
        return carry

    lax.fori_loop(0, Hout_p, body, 0)


# ----------------------------------------------------------------------------
# Fused conv stack: conv1..conv6 + maxpool in a single kernel, grid=(N,)
# ----------------------------------------------------------------------------
def fused_conv_kernel(x_ref, sel_e_ref, sel_o_ref,
                      w1_ref, b1_ref, w2_ref, b2_ref, w3_ref, b3_ref,
                      w4_ref, b4_ref, w5_ref, b5_ref, w6_ref, b6_ref,
                      out_ref, p1, p2, q1, q2):
    # Re-zero the padded activation planes for every image: only the interiors are
    # overwritten below, and the borders must read back as the convs' zero padding.
    # (Per-step zeroing keeps this correct if the batch axis is sharded across
    # TensorCores; it is a few thousand splat stores, negligible next to the matmuls.)
    p1[...] = jnp.zeros_like(p1)
    p2[...] = jnp.zeros_like(p2)
    q1[...] = jnp.zeros_like(q1)
    q2[...] = jnp.zeros_like(q2)

    # ---- conv1: 1 -> 16, k=3, pad=1.  Cin == 1, so use VPU broadcast FMAs
    # (9 taps per row) instead of K=1 MXU outer products.
    w1 = w1_ref[...]                                   # (16, 9)
    b1 = b1_ref[...]                                   # (16, 1)

    def c1_body(y, carry):
        acc = jnp.zeros((16, W0), jnp.float32)
        for kh in range(3):
            row = x_ref[pl.ds(y + 1 + kh, 1), :]       # (1, PADW)
            for kw in range(3):
                tap = row[:, 1 + kw:1 + kw + W0]       # (1, W0)
                acc = acc + w1[:, 3 * kh + kw:3 * kh + kw + 1] * tap
        wstart = pl.multiple_of((y + 2) * 16, 8)
        p1[pl.ds(wstart, 16), 2:2 + W0] = _lrelu(acc + b1)
        return carry

    lax.fori_loop(0, H0, c1_body, 0)

    # ---- conv2: 16 -> 32, k=5, pad=2   (K = 5*16 = 80 per tap matmul)
    _conv_rows(p1, p2, w2_ref, b2_ref, KH=5, KW=5, Cin=16, Cout=32,
               Hout=H0, W=W0, out_roff=2, out_coff=2)

    # ---- conv3: 32 -> 32, k=5, pad=2   (K = 160) with the 2x2 maxpool fused in.
    _conv_pool_rows(p2, q1, w3_ref, b3_ref, sel_e_ref, sel_o_ref,
                    KH=5, KW=5, Cin=32, Cout=32, Hout_p=H1, W=W0)

    # ---- conv4: 32 -> 8, k=3, pad=1    (K = 96)
    _conv_rows(q1, q2, w4_ref, b4_ref, KH=3, KW=3, Cin=32, Cout=8,
               Hout=H1, W=W1, out_roff=1, out_coff=1)

    # ---- conv5 (8 -> 8, k=3, pad=1, K = 24) fused with conv6 (8 -> 1, 1x1):
    # conv6 is pointwise, so conv5's row is consumed immediately and never stored.
    def c56_body(y, carry):
        start = pl.multiple_of(y * 8, 8)
        acc = jnp.zeros((8, W1), jnp.float32)
        for kw in range(3):
            a = q2[pl.ds(start, 24), kw:kw + W1]       # (3*8, 64)
            acc = acc + jnp.dot(w5_ref[kw], a, preferred_element_type=jnp.float32)
        r5 = _lrelu(acc + b5_ref[...])                 # conv5 output row y, (8, 64)
        z = jnp.dot(w6_ref[...], r5, preferred_element_type=jnp.float32) + b6_ref[...]
        out_ref[pl.ds(y, 1), :] = _lrelu(z)            # (1, 64)
        return carry

    lax.fori_loop(0, H1, c56_body, 0)


def fused_conv_stack(x, p):
    # x: (N, 96, 128) float32 -> (N, 48, 64) float32 (output of the conv pipeline)
    N = x.shape[0]
    # glue: zero-pad once in HBM so the kernel's padded plane is simply the input block
    xp = jnp.pad(x, ((0, 0), (2, 2), (2, 2)))          # (N, 100, 132)

    # 0/1 column-selection matrices used to compact even / odd columns of the pool
    cols = np.arange(W0)[:, None]
    sel_e = jnp.asarray((cols == 2 * np.arange(W1)[None, :]).astype(np.float32))
    sel_o = jnp.asarray((cols == 2 * np.arange(W1)[None, :] + 1).astype(np.float32))

    return pl.pallas_call(
        fused_conv_kernel,
        grid=(N,),
        in_specs=[
            pl.BlockSpec((None, PADH, PADW), lambda n: (n, 0, 0)),   # padded image
            pl.BlockSpec((W0, W1), lambda n: (0, 0)),                # pool even selector
            pl.BlockSpec((W0, W1), lambda n: (0, 0)),                # pool odd selector
            pl.BlockSpec((16, 9), lambda n: (0, 0)),                 # conv1 w
            pl.BlockSpec((16, 1), lambda n: (0, 0)),                 # conv1 b
            pl.BlockSpec((5, 32, 80), lambda n: (0, 0, 0)),          # conv2 w
            pl.BlockSpec((32, 1), lambda n: (0, 0)),                 # conv2 b
            pl.BlockSpec((5, 32, 160), lambda n: (0, 0, 0)),         # conv3 w
            pl.BlockSpec((32, 1), lambda n: (0, 0)),                 # conv3 b
            pl.BlockSpec((3, 8, 96), lambda n: (0, 0, 0)),           # conv4 w
            pl.BlockSpec((8, 1), lambda n: (0, 0)),                  # conv4 b
            pl.BlockSpec((3, 8, 24), lambda n: (0, 0, 0)),           # conv5 w
            pl.BlockSpec((8, 1), lambda n: (0, 0)),                  # conv5 b
            pl.BlockSpec((1, 8), lambda n: (0, 0)),                  # conv6 w
            pl.BlockSpec((1, 1), lambda n: (0, 0)),                  # conv6 b
        ],
        out_specs=pl.BlockSpec((None, H1, W1), lambda n: (n, 0, 0)),
        out_shape=jax.ShapeDtypeStruct((N, H1, W1), jnp.float32),
        scratch_shapes=[
            pltpu.VMEM((PADH * 16, PADW), jnp.float32),     # conv1 output plane
            pltpu.VMEM((PADH * 32, PADW), jnp.float32),     # conv2 output plane
            pltpu.VMEM((PADH2 * 32, PADW2), jnp.float32),   # pooled conv3 output plane
            pltpu.VMEM((PADH2 * 8, PADW2), jnp.float32),    # conv4 output plane
        ],
        compiler_params=pltpu.CompilerParams(
            dimension_semantics=("parallel",),              # v7x: one image per TensorCore
            vmem_limit_bytes=32 * 1024 * 1024,              # actual use < 8 MiB
        ),
    )(xp, sel_e, sel_o,
      p["c1w"], p["c1b"], p["c2w"], p["c2b"], p["c3w"], p["c3b"],
      p["c4w"], p["c4b"], p["c5w"], p["c5b"], p["c6w"], p["c6b"])


# ----------------------------------------------------------------------------
# Linear pipeline: 4 Linear layers + LeakyReLU + LogSoftmax fused in one kernel.
# ----------------------------------------------------------------------------
def mlp_kernel(x_ref, w1, b1, w2, b2, w3, b3, w4, b4, o_ref):
    h = _lrelu(jnp.dot(x_ref[...], w1[...], preferred_element_type=jnp.float32) + b1[...])
    h = _lrelu(jnp.dot(h, w2[...], preferred_element_type=jnp.float32) + b2[...])
    h = _lrelu(jnp.dot(h, w3[...], preferred_element_type=jnp.float32) + b3[...])
    z = jnp.dot(h, w4[...], preferred_element_type=jnp.float32) + b4[...]
    # LogSoftmax over the class axis (torch nn.LogSoftmax() -> dim=1 for 2-D input)
    m = jnp.max(z, axis=-1, keepdims=True)
    zc = z - m
    lse = jnp.log(jnp.sum(jnp.exp(zc), axis=-1, keepdims=True))
    o_ref[...] = zc - lse


def mlp_logsoftmax(x, p):
    N = x.shape[0]
    return pl.pallas_call(
        mlp_kernel,
        out_shape=jax.ShapeDtypeStruct((N, 6), jnp.float32),
    )(x, p["l1w"], p["l1b"], p["l2w"], p["l2b"],
      p["l3w"], p["l3b"], p["l4w"], p["l4b"])


# ----------------------------------------------------------------------------
# Full forward pass (matches HandGestureClassifier2.forward)
# ----------------------------------------------------------------------------
def forward(X, p):
    # X: (N, 1, 96, 128) NCHW float32, same convention as the PyTorch module
    # (the spatial size is forced to 96x128 by the `view(-1, 48*33)` after the rfft).
    N = X.shape[0]
    x = X.reshape(N, H0, W0)                           # channel dim is 1
    conv_out = fused_conv_stack(x, p)                  # (N, 48, 64)
    # TODO(synk): torch.fft.rfftn has no Pallas equivalent; the FFT magnitude is plain JAX.
    spec = jnp.abs(jnp.fft.rfft2(conv_out))            # (N, 48, 33)
    feat = spec.reshape(N, 48 * 33).astype(jnp.float32)
    return mlp_logsoftmax(feat, p)                     # (N, 6) log-probabilities


# ----------------------------------------------------------------------------
# Deterministic synthetic parameters (shapes match the module's __init__)
# ----------------------------------------------------------------------------
def init_params(key):
    ks = jax.random.split(key, 10)

    def conv_w(k, KH, KW, cin, cout):
        # layout: w[kw, co, kh*cin + ci] == torch_w[co, ci, kh, kw]
        std = 1.0 / np.sqrt(cin * KH * KW)
        return (std * jax.random.normal(k, (KW, cout, KH * cin))).astype(jnp.float32)

    def lin_w(k, fin, fout):
        std = 1.0 / np.sqrt(fin)
        return (std * jax.random.normal(k, (fin, fout))).astype(jnp.float32)

    return {
        # conv1: w[co, 3*kh + kw] == torch_w[co, 0, kh, kw]
        "c1w": ((1.0 / 3.0) * jax.random.normal(ks[0], (16, 9))).astype(jnp.float32),
        "c1b": 0.01 * jnp.ones((16, 1), jnp.float32),
        "c2w": conv_w(ks[1], 5, 5, 16, 32), "c2b": 0.01 * jnp.ones((32, 1), jnp.float32),
        "c3w": conv_w(ks[2], 5, 5, 32, 32), "c3b": 0.01 * jnp.ones((32, 1), jnp.float32),
        "c4w": conv_w(ks[3], 3, 3, 32, 8),  "c4b": 0.01 * jnp.ones((8, 1), jnp.float32),
        "c5w": conv_w(ks[4], 3, 3, 8, 8),   "c5b": 0.01 * jnp.ones((8, 1), jnp.float32),
        # conv6 (1x1): w[0, ci] == torch_w[0, ci, 0, 0]
        "c6w": ((1.0 / np.sqrt(8.0)) * jax.random.normal(ks[5], (1, 8))).astype(jnp.float32),
        "c6b": 0.01 * jnp.ones((1, 1), jnp.float32),
        "l1w": lin_w(ks[6], 48 * 33, 64),   "l1b": jnp.zeros((1, 64), jnp.float32),
        "l2w": lin_w(ks[7], 64, 48),        "l2b": jnp.zeros((1, 48), jnp.float32),
        "l3w": lin_w(ks[8], 48, 48),        "l3b": jnp.zeros((1, 48), jnp.float32),
        "l4w": lin_w(ks[9], 48, 6),         "l4b": jnp.zeros((1, 6), jnp.float32),
    }


if __name__ == "__main__":
    key = jax.random.PRNGKey(0)
    k_x, k_p = jax.random.split(key)
    params = init_params(k_p)
    # Spatial size is dictated by the module's view(-1, 48*33): input must be 96x128.
    X = jax.random.normal(k_x, (2, 1, 96, 128), jnp.float32)

    out = jax.jit(forward)(X, params)
    out = jax.block_until_ready(out)

    assert out.shape == (2, 6)
    assert bool(jnp.all(jnp.isfinite(out)))
    print("KERNEL_OK")
</pallas_src>

<mosaic_0001>
module attributes {stable_mosaic.version = 11 : i64} {
  func.func @fused_conv_kernel(%arg0: i32, %arg1: memref<1x100x132xf32, #tpu.memory_space<vmem>>, %arg2: memref<128x64xf32, #tpu.memory_space<vmem>>, %arg3: memref<128x64xf32, #tpu.memory_space<vmem>>, %arg4: memref<16x9xf32, #tpu.memory_space<vmem>>, %arg5: memref<16x1xf32, #tpu.memory_space<vmem>>, %arg6: memref<5x32x80xf32, #tpu.memory_space<vmem>>, %arg7: memref<32x1xf32, #tpu.memory_space<vmem>>, %arg8: memref<5x32x160xf32, #tpu.memory_space<vmem>>, %arg9: memref<32x1xf32, #tpu.memory_space<vmem>>, %arg10: memref<3x8x96xf32, #tpu.memory_space<vmem>>, %arg11: memref<8x1xf32, #tpu.memory_space<vmem>>, %arg12: memref<3x8x24xf32, #tpu.memory_space<vmem>>, %arg13: memref<8x1xf32, #tpu.memory_space<vmem>>, %arg14: memref<1x8xf32, #tpu.memory_space<vmem>>, %arg15: memref<1x1xf32, #tpu.memory_space<vmem>>, %arg16: memref<1x48x64xf32, #tpu.memory_space<vmem>>, %arg17: memref<1600x132xf32, #tpu.memory_space<vmem>>, %arg18: memref<3200x132xf32, #tpu.memory_space<vmem>>, %arg19: memref<1600x66xf32, #tpu.memory_space<vmem>>, %arg20: memref<400x66xf32, #tpu.memory_space<vmem>>) attributes {dimension_semantics = [#tpu.dimension_semantics<parallel>], iteration_bounds = array<i64: 2>, scalar_prefetch = 0 : i64, scratch_operands = 4 : i64, tpu.core_type = #tpu.core_type<tc>, window_params = [{transform_indices = @transform_0, window_bounds = array<i64: 1, 100, 132>}, {pipeline_mode = #tpu.pipeline_mode<synchronous>, transform_indices = @transform_1, window_bounds = array<i64: 128, 64>}, {pipeline_mode = #tpu.pipeline_mode<synchronous>, transform_indices = @transform_2, window_bounds = array<i64: 128, 64>}, {pipeline_mode = #tpu.pipeline_mode<synchronous>, transform_indices = @transform_3, window_bounds = array<i64: 16, 9>}, {pipeline_mode = #tpu.pipeline_mode<synchronous>, transform_indices = @transform_4, window_bounds = array<i64: 16, 1>}, {pipeline_mode = #tpu.pipeline_mode<synchronous>, transform_indices = @transform_5, window_bounds = array<i64: 5, 32, 80>}, {pipeline_mode = #tpu.pipeline_mode<synchronous>, transform_indices = @transform_6, window_bounds = array<i64: 32, 1>}, {pipeline_mode = #tpu.pipeline_mode<synchronous>, transform_indices = @transform_7, window_bounds = array<i64: 5, 32, 160>}, {pipeline_mode = #tpu.pipeline_mode<synchronous>, transform_indices = @transform_8, window_bounds = array<i64: 32, 1>}, {pipeline_mode = #tpu.pipeline_mode<synchronous>, transform_indices = @transform_9, window_bounds = array<i64: 3, 8, 96>}, {pipeline_mode = #tpu.pipeline_mode<synchronous>, transform_indices = @transform_10, window_bounds = array<i64: 8, 1>}, {pipeline_mode = #tpu.pipeline_mode<synchronous>, transform_indices = @transform_11, window_bounds = array<i64: 3, 8, 24>}, {pipeline_mode = #tpu.pipeline_mode<synchronous>, transform_indices = @transform_12, window_bounds = array<i64: 8, 1>}, {pipeline_mode = #tpu.pipeline_mode<synchronous>, transform_indices = @transform_13, window_bounds = array<i64: 1, 8>}, {pipeline_mode = #tpu.pipeline_mode<synchronous>, transform_indices = @transform_14, window_bounds = array<i64: 1, 1>}, {transform_indices = @transform_15, window_bounds = array<i64: 1, 48, 64>}]} {
    %cst = arith.constant 0.000000e+00 : f32
    %0 = vector.broadcast %cst : f32 to vector<1600x132xf32>
    %c0 = arith.constant 0 : index
    %c0_0 = arith.constant 0 : index
    %1 = vector.load %arg17[%c0, %c0_0] : memref<1600x132xf32, #tpu.memory_space<vmem>>, vector<1600x132xf32>
    tpu.vector_store %arg17[%c0, %c0_0], %0 {strides = array<i32>} : memref<1600x132xf32, #tpu.memory_space<vmem>>, vector<1600x132xf32>,
    %cst_1 = arith.constant 0.000000e+00 : f32
    %2 = vector.broadcast %cst_1 : f32 to vector<3200x132xf32>
    %c0_2 = arith.constant 0 : index
    %c0_3 = arith.constant 0 : index
    %3 = vector.load %arg18[%c0_2, %c0_3] : memref<3200x132xf32, #tpu.memory_space<vmem>>, vector<3200x132xf32>
    tpu.vector_store %arg18[%c0_2, %c0_3], %2 {strides = array<i32>} : memref<3200x132xf32, #tpu.memory_space<vmem>>, vector<3200x132xf32>,
    %cst_4 = arith.constant 0.000000e+00 : f32
    %4 = vector.broadcast %cst_4 : f32 to vector<1600x66xf32>
    %c0_5 = arith.constant 0 : index
    %c0_6 = arith.constant 0 : index
    %5 = vector.load %arg19[%c0_5, %c0_6] : memref<1600x66xf32, #tpu.memory_space<vmem>>, vector<1600x66xf32>
    tpu.vector_store %arg19[%c0_5, %c0_6], %4 {strides = array<i32>} : memref<1600x66xf32, #tpu.memory_space<vmem>>, vector<1600x66xf32>,
    %cst_7 = arith.constant 0.000000e+00 : f32
    %6 = vector.broadcast %cst_7 : f32 to vector<400x66xf32>
    %c0_8 = arith.constant 0 : index
    %c0_9 = arith.constant 0 : index
    %7 = vector.load %arg20[%c0_8, %c0_9] : memref<400x66xf32, #tpu.memory_space<vmem>>, vector<400x66xf32>
    tpu.vector_store %arg20[%c0_8, %c0_9], %6 {strides = array<i32>} : memref<400x66xf32, #tpu.memory_space<vmem>>, vector<400x66xf32>,
    %c0_10 = arith.constant 0 : index
    %c0_11 = arith.constant 0 : index
    %8 = vector.load %arg4[%c0_10, %c0_11] : memref<16x9xf32, #tpu.memory_space<vmem>>, vector<16x9xf32>
    %c0_12 = arith.constant 0 : index
    %c0_13 = arith.constant 0 : index
    %9 = vector.load %arg5[%c0_12, %c0_13] : memref<16x1xf32, #tpu.memory_space<vmem>>, vector<16x1xf32>
    %c0_i32 = arith.constant 0 : i32
    %c96_i32 = arith.constant 96 : i32
    %10 = arith.addi %c0_i32, %c96_i32 : i32
    %c1_i32 = arith.constant 1 : i32
    scf.for %arg21 = %c0_i32 to %10 step %c1_i32  : i32 {
      %cst_30 = arith.constant 0.000000e+00 : f32
      %15 = vector.broadcast %cst_30 : f32 to vector<16x128xf32>
      %c1_i32_31 = arith.constant 1 : i32
      %16 = arith.addi %arg21, %c1_i32_31 : i32
      %c0_i32_32 = arith.constant 0 : i32
      %17 = arith.addi %16, %c0_i32_32 : i32
      %c0_33 = arith.constant 0 : index
      %18 = arith.index_cast %17 : i32 to index
      %c0_34 = arith.constant 0 : index
      %19 = vector.load %arg1[%c0_33, %18, %c0_34] : memref<1x100x132xf32, #tpu.memory_space<vmem>>, vector<1x1x132xf32>
      %20 = vector.shape_cast %19 : vector<1x1x132xf32> to vector<1x132xf32>
      %21 = vector.extract_strided_slice %20 {offsets = [0, 1], sizes = [1, 128], strides = [1, 1]} : vector<1x132xf32> to vector<1x128xf32>
      %22 = vector.extract_strided_slice %8 {offsets = [0, 0], sizes = [16, 1], strides = [1, 1]} : vector<16x9xf32> to vector<16x1xf32>
      %23 = vector.broadcast %22 : vector<16x1xf32> to vector<16x128xf32>
      %24 = vector.broadcast %21 : vector<1x128xf32> to vector<16x128xf32>
      %25 = arith.mulf %23, %24 : vector<16x128xf32>
      %26 = arith.addf %15, %25 : vector<16x128xf32>
      %27 = vector.extract_strided_slice %20 {offsets = [0, 2], sizes = [1, 128], strides = [1, 1]} : vector<1x132xf32> to vector<1x128xf32>
      %28 = vector.extract_strided_slice %8 {offsets = [0, 1], sizes = [16, 1], strides = [1, 1]} : vector<16x9xf32> to vector<16x1xf32>
      %29 = vector.broadcast %28 : vector<16x1xf32> to vector<16x128xf32>
      %30 = vector.broadcast %27 : vector<1x128xf32> to vector<16x128xf32>
      %31 = arith.mulf %29, %30 : vector<16x128xf32>
      %32 = arith.addf %26, %31 : vector<16x128xf32>
      %33 = vector.extract_strided_slice %20 {offsets = [0, 3], sizes = [1, 128], strides = [1, 1]} : vector<1x132xf32> to vector<1x128xf32>
      %34 = vector.extract_strided_slice %8 {offsets = [0, 2], sizes = [16, 1], strides = [1, 1]} : vector<16x9xf32> to vector<16x1xf32>
      %35 = vector.broadcast %34 : vector<16x1xf32> to vector<16x128xf32>
      %36 = vector.broadcast %33 : vector<1x128xf32> to vector<16x128xf32>
      %37 = arith.mulf %35, %36 : vector<16x128xf32>
      %38 = arith.addf %32, %37 : vector<16x128xf32>
      %c1_i32_35 = arith.constant 1 : i32
      %39 = arith.addi %arg21, %c1_i32_35 : i32
      %c1_i32_36 = arith.constant 1 : i32
      %40 = arith.addi %39, %c1_i32_36 : i32
      %c0_37 = arith.constant 0 : index
      %41 = arith.index_cast %40 : i32 to index
      %c0_38 = arith.constant 0 : index
      %42 = vector.load %arg1[%c0_37, %41, %c0_38] : memref<1x100x132xf32, #tpu.memory_space<vmem>>, vector<1x1x132xf32>
      %43 = vector.shape_cast %42 : vector<1x1x132xf32> to vector<1x132xf32>
      %44 = vector.extract_strided_slice %43 {offsets = [0, 1], sizes = [1, 128], strides = [1, 1]} : vector<1x132xf32> to vector<1x128xf32>
      %45 = vector.extract_strided_slice %8 {offsets = [0, 3], sizes = [16, 1], strides = [1, 1]} : vector<16x9xf32> to vector<16x1xf32>
      %46 = vector.broadcast %45 : vector<16x1xf32> to vector<16x128xf32>
      %47 = vector.broadcast %44 : vector<1x128xf32> to vector<16x128xf32>
      %48 = arith.mulf %46, %47 : vector<16x128xf32>
      %49 = arith.addf %38, %48 : vector<16x128xf32>
      %50 = vector.extract_strided_slice %43 {offsets = [0, 2], sizes = [1, 128], strides = [1, 1]} : vector<1x132xf32> to vector<1x128xf32>
      %51 = vector.extract_strided_slice %8 {offsets = [0, 4], sizes = [16, 1], strides = [1, 1]} : vector<16x9xf32> to vector<16x1xf32>
      %52 = vector.broadcast %51 : vector<16x1xf32> to vector<16x128xf32>
      %53 = vector.broadcast %50 : vector<1x128xf32> to vector<16x128xf32>
      %54 = arith.mulf %52, %53 : vector<16x128xf32>
      %55 = arith.addf %49, %54 : vector<16x128xf32>
      %56 = vector.extract_strided_slice %43 {offsets = [0, 3], sizes = [1, 128], strides = [1, 1]} : vector<1x132xf32> to vector<1x128xf32>
      %57 = vector.extract_strided_slice %8 {offsets = [0, 5], sizes = [16, 1], strides = [1, 1]} : vector<16x9xf32> to vector<16x1xf32>
      %58 = vector.broadcast %57 : vector<16x1xf32> to vector<16x128xf32>
      %59 = vector.broadcast %56 : vector<1x128xf32> to vector<16x128xf32>
      %60 = arith.mulf %58, %59 : vector<16x128xf32>
      %61 = arith.addf %55, %60 : vector<16x128xf32>
      %c1_i32_39 = arith.constant 1 : i32
      %62 = arith.addi %arg21, %c1_i32_39 : i32
      %c2_i32 = arith.constant 2 : i32
      %63 = arith.addi %62, %c2_i32 : i32
      %c0_40 = arith.constant 0 : index
      %64 = arith.index_cast %63 : i32 to index
      %c0_41 = arith.constant 0 : index
      %65 = vector.load %arg1[%c0_40, %64, %c0_41] : memref<1x100x132xf32, #tpu.memory_space<vmem>>, vector<1x1x132xf32>
      %66 = vector.shape_cast %65 : vector<1x1x132xf32> to vector<1x132xf32>
      %67 = vector.extract_strided_slice %66 {offsets = [0, 1], sizes = [1, 128], strides = [1, 1]} : vector<1x132xf32> to vector<1x128xf32>
      %68 = vector.extract_strided_slice %8 {offsets = [0, 6], sizes = [16, 1], strides = [1, 1]} : vector<16x9xf32> to vector<16x1xf32>
      %69 = vector.broadcast %68 : vector<16x1xf32> to vector<16x128xf32>
      %70 = vector.broadcast %67 : vector<1x128xf32> to vector<16x128xf32>
      %71 = arith.mulf %69, %70 : vector<16x128xf32>
      %72 = arith.addf %61, %71 : vector<16x128xf32>
      %73 = vector.extract_strided_slice %66 {offsets = [0, 2], sizes = [1, 128], strides = [1, 1]} : vector<1x132xf32> to vector<1x128xf32>
      %74 = vector.extract_strided_slice %8 {offsets = [0, 7], sizes = [16, 1], strides = [1, 1]} : vector<16x9xf32> to vector<16x1xf32>
      %75 = vector.broadcast %74 : vector<16x1xf32> to vector<16x128xf32>
      %76 = vector.broadcast %73 : vector<1x128xf32> to vector<16x128xf32>
      %77 = arith.mulf %75, %76 : vector<16x128xf32>
      %78 = arith.addf %72, %77 : vector<16x128xf32>
      %79 = vector.extract_strided_slice %66 {offsets = [0, 3], sizes = [1, 128], strides = [1, 1]} : vector<1x132xf32> to vector<1x128xf32>
      %80 = vector.extract_strided_slice %8 {offsets = [0, 8], sizes = [16, 1], strides = [1, 1]} : vector<16x9xf32> to vector<16x1xf32>
      %81 = vector.broadcast %80 : vector<16x1xf32> to vector<16x128xf32>
      %82 = vector.broadcast %79 : vector<1x128xf32> to vector<16x128xf32>
      %83 = arith.mulf %81, %82 : vector<16x128xf32>
      %84 = arith.addf %78, %83 : vector<16x128xf32>
      %c2_i32_42 = arith.constant 2 : i32
      %85 = arith.addi %arg21, %c2_i32_42 : i32
      %c16_i32 = arith.constant 16 : i32
      %86 = arith.muli %85, %c16_i32 : i32
      %87 = tpu.assume_multiple %86, 8 : i32
      %88 = vector.broadcast %9 : vector<16x1xf32> to vector<16x128xf32>
      %89 = arith.addf %84, %88 : vector<16x128xf32>
      %cst_43 = arith.constant 0.000000e+00 : f32
      %90 = vector.broadcast %cst_43 : f32 to vector<16x128xf32>
      %91 = arith.cmpf oge, %89, %90 : vector<16x128xf32>
      %cst_44 = arith.constant 0.00999999977 : f32
      %92 = vector.broadcast %cst_44 : f32 to vector<16x128xf32>
      %93 = arith.mulf %92, %89 : vector<16x128xf32>
      %94 = arith.select %91, %89, %93 : vector<16x128xi1>, vector<16x128xf32>
      %95 = arith.index_cast %87 : i32 to index
      %c2 = arith.constant 2 : index
      %96 = vector.load %arg17[%95, %c2] : memref<1600x132xf32, #tpu.memory_space<vmem>>, vector<16x128xf32>
      tpu.vector_store %arg17[%95, %c2], %94 {strides = array<i32>} : memref<1600x132xf32, #tpu.memory_space<vmem>>, vector<16x128xf32>,
    }
    %c96_i32_14 = arith.constant 96 : i32
    %c0_i32_15 = arith.constant 0 : i32
    %c96_i32_16 = arith.constant 96 : i32
    %11 = arith.addi %c0_i32_15, %c96_i32_16 : i32
    %c1_i32_17 = arith.constant 1 : i32
    scf.for %arg21 = %c0_i32_15 to %11 step %c1_i32_17  : i32 {
      %c16_i32 = arith.constant 16 : i32
      %15 = arith.muli %arg21, %c16_i32 : i32
      %16 = tpu.assume_multiple %15, 8 : i32
      %cst_30 = arith.constant 0.000000e+00 : f32
      %17 = vector.broadcast %cst_30 : f32 to vector<32x128xf32>
      %18 = arith.index_cast %16 : i32 to index
      %c0_31 = arith.constant 0 : index
      %19 = vector.load %arg17[%18, %c0_31] : memref<1600x132xf32, #tpu.memory_space<vmem>>, vector<80x128xf32>
      %c0_32 = arith.constant 0 : index
      %c0_33 = arith.constant 0 : index
      %c0_34 = arith.constant 0 : index
      %20 = vector.load %arg6[%c0_32, %c0_33, %c0_34] : memref<5x32x80xf32, #tpu.memory_space<vmem>>, vector<1x32x80xf32>
      %21 = vector.shape_cast %20 : vector<1x32x80xf32> to vector<32x80xf32>
      %cst_35 = arith.constant dense<0.000000e+00> : vector<32x128xf32>
      %22 = tpu.matmul %21, %19, %cst_35 {dimension_numbers = #tpu.dot_dimension_numbers<[1], [0], [0], [1], [0, 0, 1, 1], [], []>} : vector<32x80xf32>, vector<80x128xf32>, vector<32x128xf32> -> vector<32x128xf32>
      %23 = arith.addf %17, %22 : vector<32x128xf32>
      %24 = arith.index_cast %16 : i32 to index
      %c1 = arith.constant 1 : index
      %25 = vector.load %arg17[%24, %c1] : memref<1600x132xf32, #tpu.memory_space<vmem>>, vector<80x128xf32>
      %c1_36 = arith.constant 1 : index
      %c0_37 = arith.constant 0 : index
      %c0_38 = arith.constant 0 : index
      %26 = vector.load %arg6[%c1_36, %c0_37, %c0_38] : memref<5x32x80xf32, #tpu.memory_space<vmem>>, vector<1x32x80xf32>
      %27 = vector.shape_cast %26 : vector<1x32x80xf32> to vector<32x80xf32>
      %cst_39 = arith.constant dense<0.000000e+00> : vector<32x128xf32>
      %28 = tpu.matmul %27, %25, %cst_39 {dimension_numbers = #tpu.dot_dimension_numbers<[1], [0], [0], [1], [0, 0, 1, 1], [], []>} : vector<32x80xf32>, vector<80x128xf32>, vector<32x128xf32> -> vector<32x128xf32>
      %29 = arith.addf %23, %28 : vector<32x128xf32>
      %30 = arith.index_cast %16 : i32 to index
      %c2 = arith.constant 2 : index
      %31 = vector.load %arg17[%30, %c2] : memref<1600x132xf32, #tpu.memory_space<vmem>>, vector<80x128xf32>
      %c2_40 = arith.constant 2 : index
      %c0_41 = arith.constant 0 : index
      %c0_42 = arith.constant 0 : index
      %32 = vector.load %arg6[%c2_40, %c0_41, %c0_42] : memref<5x32x80xf32, #tpu.memory_space<vmem>>, vector<1x32x80xf32>
      %33 = vector.shape_cast %32 : vector<1x32x80xf32> to vector<32x80xf32>
      %cst_43 = arith.constant dense<0.000000e+00> : vector<32x128xf32>
      %34 = tpu.matmul %33, %31, %cst_43 {dimension_numbers = #tpu.dot_dimension_numbers<[1], [0], [0], [1], [0, 0, 1, 1], [], []>} : vector<32x80xf32>, vector<80x128xf32>, vector<32x128xf32> -> vector<32x128xf32>
      %35 = arith.addf %29, %34 : vector<32x128xf32>
      %36 = arith.index_cast %16 : i32 to index
      %c3 = arith.constant 3 : index
      %37 = vector.load %arg17[%36, %c3] : memref<1600x132xf32, #tpu.memory_space<vmem>>, vector<80x128xf32>
      %c3_44 = arith.constant 3 : index
      %c0_45 = arith.constant 0 : index
      %c0_46 = arith.constant 0 : index
      %38 = vector.load %arg6[%c3_44, %c0_45, %c0_46] : memref<5x32x80xf32, #tpu.memory_space<vmem>>, vector<1x32x80xf32>
      %39 = vector.shape_cast %38 : vector<1x32x80xf32> to vector<32x80xf32>
      %cst_47 = arith.constant dense<0.000000e+00> : vector<32x128xf32>
      %40 = tpu.matmul %39, %37, %cst_47 {dimension_numbers = #tpu.dot_dimension_numbers<[1], [0], [0], [1], [0, 0, 1, 1], [], []>} : vector<32x80xf32>, vector<80x128xf32>, vector<32x128xf32> -> vector<32x128xf32>
      %41 = arith.addf %35, %40 : vector<32x128xf32>
      %42 = arith.index_cast %16 : i32 to index
      %c4 = arith.constant 4 : index
      %43 = vector.load %arg17[%42, %c4] : memref<1600x132xf32, #tpu.memory_space<vmem>>, vector<80x128xf32>
      %c4_48 = arith.constant 4 : index
      %c0_49 = arith.constant 0 : index
      %c0_50 = arith.constant 0 : index
      %44 = vector.load %arg6[%c4_48, %c0_49, %c0_50] : memref<5x32x80xf32, #tpu.memory_space<vmem>>, vector<1x32x80xf32>
      %45 = vector.shape_cast %44 : vector<1x32x80xf32> to vector<32x80xf32>
      %cst_51 = arith.constant dense<0.000000e+00> : vector<32x128xf32>
      %46 = tpu.matmul %45, %43, %cst_51 {dimension_numbers = #tpu.dot_dimension_numbers<[1], [0], [0], [1], [0, 0, 1, 1], [], []>} : vector<32x80xf32>, vector<80x128xf32>, vector<32x128xf32> -> vector<32x128xf32>
      %47 = arith.addf %41, %46 : vector<32x128xf32>
      %c0_52 = arith.constant 0 : index
      %c0_53 = arith.constant 0 : index
      %48 = vector.load %arg7[%c0_52, %c0_53] : memref<32x1xf32, #tpu.memory_space<vmem>>, vector<32x1xf32>
      %49 = vector.broadcast %48 : vector<32x1xf32> to vector<32x128xf32>
      %50 = arith.addf %47, %49 : vector<32x128xf32>
      %cst_54 = arith.constant 0.000000e+00 : f32
      %51 = vector.broadcast %cst_54 : f32 to vector<32x128xf32>
      %52 = arith.cmpf oge, %50, %51 : vector<32x128xf32>
      %cst_55 = arith.constant 0.00999999977 : f32
      %53 = vector.broadcast %cst_55 : f32 to vector<32x128xf32>
      %54 = arith.mulf %53, %50 : vector<32x128xf32>
      %55 = arith.select %52, %50, %54 : vector<32x128xi1>, vector<32x128xf32>
      %c2_i32 = arith.constant 2 : i32
      %56 = arith.addi %arg21, %c2_i32 : i32
      %c32_i32 = arith.constant 32 : i32
      %57 = arith.muli %56, %c32_i32 : i32
      %58 = tpu.assume_multiple %57, 8 : i32
      %59 = arith.index_cast %58 : i32 to index
      %c2_56 = arith.constant 2 : index
      %60 = vector.load %arg18[%59, %c2_56] : memref<3200x132xf32, #tpu.memory_space<vmem>>, vector<32x128xf32>
      tpu.vector_store %arg18[%59, %c2_56], %55 {strides = array<i32>} : memref<3200x132xf32, #tpu.memory_space<vmem>>, vector<32x128xf32>,
    }
    %c96_i32_18 = arith.constant 96 : i32
    %c0_i32_19 = arith.constant 0 : i32
    %c48_i32 = arith.constant 48 : i32
    %12 = arith.addi %c0_i32_19, %c48_i32 : i32
    %c1_i32_20 = arith.constant 1 : i32
    scf.for %arg21 = %c0_i32_19 to %12 step %c1_i32_20  : i32 {
      %c2_i32 = arith.constant 2 : i32
      %15 = arith.muli %c2_i32, %arg21 : i32
      %c0_i32_30 = arith.constant 0 : i32
      %16 = arith.addi %15, %c0_i32_30 : i32
      %c32_i32 = arith.constant 32 : i32
      %17 = arith.muli %16, %c32_i32 : i32
      %18 = tpu.assume_multiple %17, 8 : i32
      %cst_31 = arith.constant 0.000000e+00 : f32
      %19 = vector.broadcast %cst_31 : f32 to vector<32x128xf32>
      %20 = arith.index_cast %18 : i32 to index
      %c0_32 = arith.constant 0 : index
      %21 = vector.load %arg18[%20, %c0_32] : memref<3200x132xf32, #tpu.memory_space<vmem>>, vector<160x128xf32>
      %c0_33 = arith.constant 0 : index
      %c0_34 = arith.constant 0 : index
      %c0_35 = arith.constant 0 : index
      %22 = vector.load %arg8[%c0_33, %c0_34, %c0_35] : memref<5x32x160xf32, #tpu.memory_space<vmem>>, vector<1x32x160xf32>
      %23 = vector.shape_cast %22 : vector<1x32x160xf32> to vector<32x160xf32>
      %cst_36 = arith.constant dense<0.000000e+00> : vector<32x128xf32>
      %24 = tpu.matmul %23, %21, %cst_36 {dimension_numbers = #tpu.dot_dimension_numbers<[1], [0], [0], [1], [0, 0, 1, 1], [], []>} : vector<32x160xf32>, vector<160x128xf32>, vector<32x128xf32> -> vector<32x128xf32>
      %25 = arith.addf %19, %24 : vector<32x128xf32>
      %26 = arith.index_cast %18 : i32 to index
      %c1 = arith.constant 1 : index
      %27 = vector.load %arg18[%26, %c1] : memref<3200x132xf32, #tpu.memory_space<vmem>>, vector<160x128xf32>
      %c1_37 = arith.constant 1 : index
      %c0_38 = arith.constant 0 : index
      %c0_39 = arith.constant 0 : index
      %28 = vector.load %arg8[%c1_37, %c0_38, %c0_39] : memref<5x32x160xf32, #tpu.memory_space<vmem>>, vector<1x32x160xf32>
      %29 = vector.shape_cast %28 : vector<1x32x160xf32> to vector<32x160xf32>
      %cst_40 = arith.constant dense<0.000000e+00> : vector<32x128xf32>
      %30 = tpu.matmul %29, %27, %cst_40 {dimension_numbers = #tpu.dot_dimension_numbers<[1], [0], [0], [1], [0, 0, 1, 1], [], []>} : vector<32x160xf32>, vector<160x128xf32>, vector<32x128xf32> -> vector<32x128xf32>
      %31 = arith.addf %25, %30 : vector<32x128xf32>
      %32 = arith.index_cast %18 : i32 to index
      %c2 = arith.constant 2 : index
      %33 = vector.load %arg18[%32, %c2] : memref<3200x132xf32, #tpu.memory_space<vmem>>, vector<160x128xf32>
      %c2_41 = arith.constant 2 : index
      %c0_42 = arith.constant 0 : index
      %c0_43 = arith.constant 0 : index
      %34 = vector.load %arg8[%c2_41, %c0_42, %c0_43] : memref<5x32x160xf32, #tpu.memory_space<vmem>>, vector<1x32x160xf32>
      %35 = vector.shape_cast %34 : vector<1x32x160xf32> to vector<32x160xf32>
      %cst_44 = arith.constant dense<0.000000e+00> : vector<32x128xf32>
      %36 = tpu.matmul %35, %33, %cst_44 {dimension_numbers = #tpu.dot_dimension_numbers<[1], [0], [0], [1], [0, 0, 1, 1], [], []>} : vector<32x160xf32>, vector<160x128xf32>, vector<32x128xf32> -> vector<32x128xf32>
      %37 = arith.addf %31, %36 : vector<32x128xf32>
      %38 = arith.index_cast %18 : i32 to index
      %c3 = arith.constant 3 : index
      %39 = vector.load %arg18[%38, %c3] : memref<3200x132xf32, #tpu.memory_space<vmem>>, vector<160x128xf32>
      %c3_45 = arith.constant 3 : index
      %c0_46 = arith.constant 0 : index
      %c0_47 = arith.constant 0 : index
      %40 = vector.load %arg8[%c3_45, %c0_46, %c0_47] : memref<5x32x160xf32, #tpu.memory_space<vmem>>, vector<1x32x160xf32>
      %41 = vector.shape_cast %40 : vector<1x32x160xf32> to vector<32x160xf32>
      %cst_48 = arith.constant dense<0.000000e+00> : vector<32x128xf32>
      %42 = tpu.matmul %41, %39, %cst_48 {dimension_numbers = #tpu.dot_dimension_numbers<[1], [0], [0], [1], [0, 0, 1, 1], [], []>} : vector<32x160xf32>, vector<160x128xf32>, vector<32x128xf32> -> vector<32x128xf32>
      %43 = arith.addf %37, %42 : vector<32x128xf32>
      %44 = arith.index_cast %18 : i32 to index
      %c4 = arith.constant 4 : index
      %45 = vector.load %arg18[%44, %c4] : memref<3200x132xf32, #tpu.memory_space<vmem>>, vector<160x128xf32>
      %c4_49 = arith.constant 4 : index
      %c0_50 = arith.constant 0 : index
      %c0_51 = arith.constant 0 : index
      %46 = vector.load %arg8[%c4_49, %c0_50, %c0_51] : memref<5x32x160xf32, #tpu.memory_space<vmem>>, vector<1x32x160xf32>
      %47 = vector.shape_cast %46 : vector<1x32x160xf32> to vector<32x160xf32>
      %cst_52 = arith.constant dense<0.000000e+00> : vector<32x128xf32>
      %48 = tpu.matmul %47, %45, %cst_52 {dimension_numbers = #tpu.dot_dimension_numbers<[1], [0], [0], [1], [0, 0, 1, 1], [], []>} : vector<32x160xf32>, vector<160x128xf32>, vector<32x128xf32> -> vector<32x128xf32>
      %49 = arith.addf %43, %48 : vector<32x128xf32>
      %c0_53 = arith.constant 0 : index
      %c0_54 = arith.constant 0 : index
      %50 = vector.load %arg9[%c0_53, %c0_54] : memref<32x1xf32, #tpu.memory_space<vmem>>, vector<32x1xf32>
      %51 = vector.broadcast %50 : vector<32x1xf32> to vector<32x128xf32>
      %52 = arith.addf %49, %51 : vector<32x128xf32>
      %cst_55 = arith.constant 0.000000e+00 : f32
      %53 = vector.broadcast %cst_55 : f32 to vector<32x128xf32>
      %54 = arith.cmpf oge, %52, %53 : vector<32x128xf32>
      %cst_56 = arith.constant 0.00999999977 : f32
      %55 = vector.broadcast %cst_56 : f32 to vector<32x128xf32>
      %56 = arith.mulf %55, %52 : vector<32x128xf32>
      %57 = arith.select %54, %52, %56 : vector<32x128xi1>, vector<32x128xf32>
      %c2_i32_57 = arith.constant 2 : i32
      %58 = arith.muli %c2_i32_57, %arg21 : i32
      %c1_i32_58 = arith.constant 1 : i32
      %59 = arith.addi %58, %c1_i32_58 : i32
      %c32_i32_59 = arith.constant 32 : i32
      %60 = arith.muli %59, %c32_i32_59 : i32
      %61 = tpu.assume_multiple %60, 8 : i32
      %cst_60 = arith.constant 0.000000e+00 : f32
      %62 = vector.broadcast %cst_60 : f32 to vector<32x128xf32>
      %63 = arith.index_cast %61 : i32 to index
      %c0_61 = arith.constant 0 : index
      %64 = vector.load %arg18[%63, %c0_61] : memref<3200x132xf32, #tpu.memory_space<vmem>>, vector<160x128xf32>
      %c0_62 = arith.constant 0 : index
      %c0_63 = arith.constant 0 : index
      %c0_64 = arith.constant 0 : index
      %65 = vector.load %arg8[%c0_62, %c0_63, %c0_64] : memref<5x32x160xf32, #tpu.memory_space<vmem>>, vector<1x32x160xf32>
      %66 = vector.shape_cast %65 : vector<1x32x160xf32> to vector<32x160xf32>
      %cst_65 = arith.constant dense<0.000000e+00> : vector<32x128xf32>
      %67 = tpu.matmul %66, %64, %cst_65 {dimension_numbers = #tpu.dot_dimension_numbers<[1], [0], [0], [1], [0, 0, 1, 1], [], []>} : vector<32x160xf32>, vector<160x128xf32>, vector<32x128xf32> -> vector<32x128xf32>
      %68 = arith.addf %62, %67 : vector<32x128xf32>
      %69 = arith.index_cast %61 : i32 to index
      %c1_66 = arith.constant 1 : index
      %70 = vector.load %arg18[%69, %c1_66] : memref<3200x132xf32, #tpu.memory_space<vmem>>, vector<160x128xf32>
      %c1_67 = arith.constant 1 : index
      %c0_68 = arith.constant 0 : index
      %c0_69 = arith.constant 0 : index
      %71 = vector.load %arg8[%c1_67, %c0_68, %c0_69] : memref<5x32x160xf32, #tpu.memory_space<vmem>>, vector<1x32x160xf32>
      %72 = vector.shape_cast %71 : vector<1x32x160xf32> to vector<32x160xf32>
      %cst_70 = arith.constant dense<0.000000e+00> : vector<32x128xf32>
      %73 = tpu.matmul %72, %70, %cst_70 {dimension_numbers = #tpu.dot_dimension_numbers<[1], [0], [0], [1], [0, 0, 1, 1], [], []>} : vector<32x160xf32>, vector<160x128xf32>, vector<32x128xf32> -> vector<32x128xf32>
      %74 = arith.addf %68, %73 : vector<32x128xf32>
      %75 = arith.index_cast %61 : i32 to index
      %c2_71 = arith.constant 2 : index
      %76 = vector.load %arg18[%75, %c2_71] : memref<3200x132xf32, #tpu.memory_space<vmem>>, vector<160x128xf32>
      %c2_72 = arith.constant 2 : index
      %c0_73 = arith.constant 0 : index
      %c0_74 = arith.constant 0 : index
      %77 = vector.load %arg8[%c2_72, %c0_73, %c0_74] : memref<5x32x160xf32, #tpu.memory_space<vmem>>, vector<1x32x160xf32>
      %78 = vector.shape_cast %77 : vector<1x32x160xf32> to vector<32x160xf32>
      %cst_75 = arith.constant dense<0.000000e+00> : vector<32x128xf32>
      %79 = tpu.matmul %78, %76, %cst_75 {dimension_numbers = #tpu.dot_dimension_numbers<[1], [0], [0], [1], [0, 0, 1, 1], [], []>} : vector<32x160xf32>, vector<160x128xf32>, vector<32x128xf32> -> vector<32x128xf32>
      %80 = arith.addf %74, %79 : vector<32x128xf32>
      %81 = arith.index_cast %61 : i32 to index
      %c3_76 = arith.constant 3 : index
      %82 = vector.load %arg18[%81, %c3_76] : memref<3200x132xf32, #tpu.memory_space<vmem>>, vector<160x128xf32>
      %c3_77 = arith.constant 3 : index
      %c0_78 = arith.constant 0 : index
      %c0_79 = arith.constant 0 : index
      %83 = vector.load %arg8[%c3_77, %c0_78, %c0_79] : memref<5x32x160xf32, #tpu.memory_space<vmem>>, vector<1x32x160xf32>
      %84 = vector.shape_cast %83 : vector<1x32x160xf32> to vector<32x160xf32>
      %cst_80 = arith.constant dense<0.000000e+00> : vector<32x128xf32>
      %85 = tpu.matmul %84, %82, %cst_80 {dimension_numbers = #tpu.dot_dimension_numbers<[1], [0], [0], [1], [0, 0, 1, 1], [], []>} : vector<32x160xf32>, vector<160x128xf32>, vector<32x128xf32> -> vector<32x128xf32>
      %86 = arith.addf %80, %85 : vector<32x128xf32>
      %87 = arith.index_cast %61 : i32 to index
      %c4_81 = arith.constant 4 : index
      %88 = vector.load %arg18[%87, %c4_81] : memref<3200x132xf32, #tpu.memory_space<vmem>>, vector<160x128xf32>
      %c4_82 = arith.constant 4 : index
      %c0_83 = arith.constant 0 : index
      %c0_84 = arith.constant 0 : index
      %89 = vector.load %arg8[%c4_82, %c0_83, %c0_84] : memref<5x32x160xf32, #tpu.memory_space<vmem>>, vector<1x32x160xf32>
      %90 = vector.shape_cast %89 : vector<1x32x160xf32> to vector<32x160xf32>
      %cst_85 = arith.constant dense<0.000000e+00> : vector<32x128xf32>
      %91 = tpu.matmul %90, %88, %cst_85 {dimension_numbers = #tpu.dot_dimension_numbers<[1], [0], [0], [1], [0, 0, 1, 1], [], []>} : vector<32x160xf32>, vector<160x128xf32>, vector<32x128xf32> -> vector<32x128xf32>
      %92 = arith.addf %86, %91 : vector<32x128xf32>
      %c0_86 = arith.constant 0 : index
      %c0_87 = arith.constant 0 : index
      %93 = vector.load %arg9[%c0_86, %c0_87] : memref<32x1xf32, #tpu.memory_space<vmem>>, vector<32x1xf32>
      %94 = vector.broadcast %93 : vector<32x1xf32> to vector<32x128xf32>
      %95 = arith.addf %92, %94 : vector<32x128xf32>
      %cst_88 = arith.constant 0.000000e+00 : f32
      %96 = vector.broadcast %cst_88 : f32 to vector<32x128xf32>
      %97 = arith.cmpf oge, %95, %96 : vector<32x128xf32>
      %cst_89 = arith.constant 0.00999999977 : f32
      %98 = vector.broadcast %cst_89 : f32 to vector<32x128xf32>
      %99 = arith.mulf %98, %95 : vector<32x128xf32>
      %100 = arith.select %97, %95, %99 : vector<32x128xi1>, vector<32x128xf32>
      %101 = arith.maximumf %57, %100 : vector<32x128xf32>
      %c0_90 = arith.constant 0 : index
      %c0_91 = arith.constant 0 : index
      %102 = vector.load %arg2[%c0_90, %c0_91] : memref<128x64xf32, #tpu.memory_space<vmem>>, vector<128x64xf32>
      %cst_92 = arith.constant dense<0.000000e+00> : vector<32x64xf32>
      %103 = tpu.matmul %101, %102, %cst_92 {dimension_numbers = #tpu.dot_dimension_numbers<[1], [0], [0], [1], [0, 0, 1, 1], [], []>} : vector<32x128xf32>, vector<128x64xf32>, vector<32x64xf32> -> vector<32x64xf32>
      %c0_93 = arith.constant 0 : index
      %c0_94 = arith.constant 0 : index
      %104 = vector.load %arg3[%c0_93, %c0_94] : memref<128x64xf32, #tpu.memory_space<vmem>>, vector<128x64xf32>
      %cst_95 = arith.constant dense<0.000000e+00> : vector<32x64xf32>
      %105 = tpu.matmul %101, %104, %cst_95 {dimension_numbers = #tpu.dot_dimension_numbers<[1], [0], [0], [1], [0, 0, 1, 1], [], []>} : vector<32x128xf32>, vector<128x64xf32>, vector<32x64xf32> -> vector<32x64xf32>
      %106 = arith.maximumf %103, %105 : vector<32x64xf32>
      %c1_i32_96 = arith.constant 1 : i32
      %107 = arith.addi %arg21, %c1_i32_96 : i32
      %c32_i32_97 = arith.constant 32 : i32
      %108 = arith.muli %107, %c32_i32_97 : i32
      %109 = tpu.assume_multiple %108, 8 : i32
      %110 = arith.index_cast %109 : i32 to index
      %c1_98 = arith.constant 1 : index
      %111 = vector.load %arg19[%110, %c1_98] : memref<1600x66xf32, #tpu.memory_space<vmem>>, vector<32x64xf32>
      tpu.vector_store %arg19[%110, %c1_98], %106 {strides = array<i32>} : memref<1600x66xf32, #tpu.memory_space<vmem>>, vector<32x64xf32>,
    }
    %c48_i32_21 = arith.constant 48 : i32
    %c0_i32_22 = arith.constant 0 : i32
    %c48_i32_23 = arith.constant 48 : i32
    %13 = arith.addi %c0_i32_22, %c48_i32_23 : i32
    %c1_i32_24 = arith.constant 1 : i32
    scf.for %arg21 = %c0_i32_22 to %13 step %c1_i32_24  : i32 {
      %c32_i32 = arith.constant 32 : i32
      %15 = arith.muli %arg21, %c32_i32 : i32
      %16 = tpu.assume_multiple %15, 8 : i32
      %cst_30 = arith.constant 0.000000e+00 : f32
      %17 = vector.broadcast %cst_30 : f32 to vector<8x64xf32>
      %18 = arith.index_cast %16 : i32 to index
      %c0_31 = arith.constant 0 : index
      %19 = vector.load %arg19[%18, %c0_31] : memref<1600x66xf32, #tpu.memory_space<vmem>>, vector<96x64xf32>
      %c0_32 = arith.constant 0 : index
      %c0_33 = arith.constant 0 : index
      %c0_34 = arith.constant 0 : index
      %20 = vector.load %arg10[%c0_32, %c0_33, %c0_34] : memref<3x8x96xf32, #tpu.memory_space<vmem>>, vector<1x8x96xf32>
      %21 = vector.shape_cast %20 : vector<1x8x96xf32> to vector<8x96xf32>
      %cst_35 = arith.constant dense<0.000000e+00> : vector<8x64xf32>
      %22 = tpu.matmul %21, %19, %cst_35 {dimension_numbers = #tpu.dot_dimension_numbers<[1], [0], [0], [1], [0, 0, 1, 1], [], []>} : vector<8x96xf32>, vector<96x64xf32>, vector<8x64xf32> -> vector<8x64xf32>
      %23 = arith.addf %17, %22 : vector<8x64xf32>
      %24 = arith.index_cast %16 : i32 to index
      %c1 = arith.constant 1 : index
      %25 = vector.load %arg19[%24, %c1] : memref<1600x66xf32, #tpu.memory_space<vmem>>, vector<96x64xf32>
      %c1_36 = arith.constant 1 : index
      %c0_37 = arith.constant 0 : index
      %c0_38 = arith.constant 0 : index
      %26 = vector.load %arg10[%c1_36, %c0_37, %c0_38] : memref<3x8x96xf32, #tpu.memory_space<vmem>>, vector<1x8x96xf32>
      %27 = vector.shape_cast %26 : vector<1x8x96xf32> to vector<8x96xf32>
      %cst_39 = arith.constant dense<0.000000e+00> : vector<8x64xf32>
      %28 = tpu.matmul %27, %25, %cst_39 {dimension_numbers = #tpu.dot_dimension_numbers<[1], [0], [0], [1], [0, 0, 1, 1], [], []>} : vector<8x96xf32>, vector<96x64xf32>, vector<8x64xf32> -> vector<8x64xf32>
      %29 = arith.addf %23, %28 : vector<8x64xf32>
      %30 = arith.index_cast %16 : i32 to index
      %c2 = arith.constant 2 : index
      %31 = vector.load %arg19[%30, %c2] : memref<1600x66xf32, #tpu.memory_space<vmem>>, vector<96x64xf32>
      %c2_40 = arith.constant 2 : index
      %c0_41 = arith.constant 0 : index
      %c0_42 = arith.constant 0 : index
      %32 = vector.load %arg10[%c2_40, %c0_41, %c0_42] : memref<3x8x96xf32, #tpu.memory_space<vmem>>, vector<1x8x96xf32>
      %33 = vector.shape_cast %32 : vector<1x8x96xf32> to vector<8x96xf32>
      %cst_43 = arith.constant dense<0.000000e+00> : vector<8x64xf32>
      %34 = tpu.matmul %33, %31, %cst_43 {dimension_numbers = #tpu.dot_dimension_numbers<[1], [0], [0], [1], [0, 0, 1, 1], [], []>} : vector<8x96xf32>, vector<96x64xf32>, vector<8x64xf32> -> vector<8x64xf32>
      %35 = arith.addf %29, %34 : vector<8x64xf32>
      %c0_44 = arith.constant 0 : index
      %c0_45 = arith.constant 0 : index
      %36 = vector.load %arg11[%c0_44, %c0_45] : memref<8x1xf32, #tpu.memory_space<vmem>>, vector<8x1xf32>
      %37 = vector.broadcast %36 : vector<8x1xf32> to vector<8x64xf32>
      %38 = arith.addf %35, %37 : vector<8x64xf32>
      %cst_46 = arith.constant 0.000000e+00 : f32
      %39 = vector.broadcast %cst_46 : f32 to vector<8x64xf32>
      %40 = arith.cmpf oge, %38, %39 : vector<8x64xf32>
      %cst_47 = arith.constant 0.00999999977 : f32
      %41 = vector.broadcast %cst_47 : f32 to vector<8x64xf32>
      %42 = arith.mulf %41, %38 : vector<8x64xf32>
      %43 = arith.select %40, %38, %42 : vector<8x64xi1>, vector<8x64xf32>
      %c1_i32_48 = arith.constant 1 : i32
      %44 = arith.addi %arg21, %c1_i32_48 : i32
      %c8_i32 = arith.constant 8 : i32
      %45 = arith.muli %44, %c8_i32 : i32
      %46 = tpu.assume_multiple %45, 8 : i32
      %47 = arith.index_cast %46 : i32 to index
      %c1_49 = arith.constant 1 : index
      %48 = vector.load %arg20[%47, %c1_49] : memref<400x66xf32, #tpu.memory_space<vmem>>, vector<8x64xf32>
      tpu.vector_store %arg20[%47, %c1_49], %43 {strides = array<i32>} : memref<400x66xf32, #tpu.memory_space<vmem>>, vector<8x64xf32>,
    }
    %c48_i32_25 = arith.constant 48 : i32
    %c0_i32_26 = arith.constant 0 : i32
    %c48_i32_27 = arith.constant 48 : i32
    %14 = arith.addi %c0_i32_26, %c48_i32_27 : i32
    %c1_i32_28 = arith.constant 1 : i32
    scf.for %arg21 = %c0_i32_26 to %14 step %c1_i32_28  : i32 {
      %c8_i32 = arith.constant 8 : i32
      %15 = arith.muli %arg21, %c8_i32 : i32
      %16 = tpu.assume_multiple %15, 8 : i32
      %cst_30 = arith.constant 0.000000e+00 : f32
      %17 = vector.broadcast %cst_30 : f32 to vector<8x64xf32>
      %18 = arith.index_cast %16 : i32 to index
      %c0_31 = arith.constant 0 : index
      %19 = vector.load %arg20[%18, %c0_31] : memref<400x66xf32, #tpu.memory_space<vmem>>, vector<24x64xf32>
      %c0_32 = arith.constant 0 : index
      %c0_33 = arith.constant 0 : index
      %c0_34 = arith.constant 0 : index
      %20 = vector.load %arg12[%c0_32, %c0_33, %c0_34] : memref<3x8x24xf32, #tpu.memory_space<vmem>>, vector<1x8x24xf32>
      %21 = vector.shape_cast %20 : vector<1x8x24xf32> to vector<8x24xf32>
      %cst_35 = arith.constant dense<0.000000e+00> : vector<8x64xf32>
      %22 = tpu.matmul %21, %19, %cst_35 {dimension_numbers = #tpu.dot_dimension_numbers<[1], [0], [0], [1], [0, 0, 1, 1], [], []>} : vector<8x24xf32>, vector<24x64xf32>, vector<8x64xf32> -> vector<8x64xf32>
      %23 = arith.addf %17, %22 : vector<8x64xf32>
      %24 = arith.index_cast %16 : i32 to index
      %c1 = arith.constant 1 : index
      %25 = vector.load %arg20[%24, %c1] : memref<400x66xf32, #tpu.memory_space<vmem>>, vector<24x64xf32>
      %c1_36 = arith.constant 1 : index
      %c0_37 = arith.constant 0 : index
      %c0_38 = arith.constant 0 : index
      %26 = vector.load %arg12[%c1_36, %c0_37, %c0_38] : memref<3x8x24xf32, #tpu.memory_space<vmem>>, vector<1x8x24xf32>
      %27 = vector.shape_cast %26 : vector<1x8x24xf32> to vector<8x24xf32>
      %cst_39 = arith.constant dense<0.000000e+00> : vector<8x64xf32>
      %28 = tpu.matmul %27, %25, %cst_39 {dimension_numbers = #tpu.dot_dimension_numbers<[1], [0], [0], [1], [0, 0, 1, 1], [], []>} : vector<8x24xf32>, vector<24x64xf32>, vector<8x64xf32> -> vector<8x64xf32>
      %29 = arith.addf %23, %28 : vector<8x64xf32>
      %30 = arith.index_cast %16 : i32 to index
      %c2 = arith.constant 2 : index
      %31 = vector.load %arg20[%30, %c2] : memref<400x66xf32, #tpu.memory_space<vmem>>, vector<24x64xf32>
      %c2_40 = arith.constant 2 : index
      %c0_41 = arith.constant 0 : index
      %c0_42 = arith.constant 0 : index
      %32 = vector.load %arg12[%c2_40, %c0_41, %c0_42] : memref<3x8x24xf32, #tpu.memory_space<vmem>>, vector<1x8x24xf32>
      %33 = vector.shape_cast %32 : vector<1x8x24xf32> to vector<8x24xf32>
      %cst_43 = arith.constant dense<0.000000e+00> : vector<8x64xf32>
      %34 = tpu.matmul %33, %31, %cst_43 {dimension_numbers = #tpu.dot_dimension_numbers<[1], [0], [0], [1], [0, 0, 1, 1], [], []>} : vector<8x24xf32>, vector<24x64xf32>, vector<8x64xf32> -> vector<8x64xf32>
      %35 = arith.addf %29, %34 : vector<8x64xf32>
      %c0_44 = arith.constant 0 : index
      %c0_45 = arith.constant 0 : index
      %36 = vector.load %arg13[%c0_44, %c0_45] : memref<8x1xf32, #tpu.memory_space<vmem>>, vector<8x1xf32>
      %37 = vector.broadcast %36 : vector<8x1xf32> to vector<8x64xf32>
      %38 = arith.addf %35, %37 : vector<8x64xf32>
      %cst_46 = arith.constant 0.000000e+00 : f32
      %39 = vector.broadcast %cst_46 : f32 to vector<8x64xf32>
      %40 = arith.cmpf oge, %38, %39 : vector<8x64xf32>
      %cst_47 = arith.constant 0.00999999977 : f32
      %41 = vector.broadcast %cst_47 : f32 to vector<8x64xf32>
      %42 = arith.mulf %41, %38 : vector<8x64xf32>
      %43 = arith.select %40, %38, %42 : vector<8x64xi1>, vector<8x64xf32>
      %c0_48 = arith.constant 0 : index
      %c0_49 = arith.constant 0 : index
      %44 = vector.load %arg14[%c0_48, %c0_49] : memref<1x8xf32, #tpu.memory_space<vmem>>, vector<1x8xf32>
      %cst_50 = arith.constant dense<0.000000e+00> : vector<1x64xf32>
      %45 = tpu.matmul %44, %43, %cst_50 {dimension_numbers = #tpu.dot_dimension_numbers<[1], [0], [0], [1], [0, 0, 1, 1], [], []>} : vector<1x8xf32>, vector<8x64xf32>, vector<1x64xf32> -> vector<1x64xf32>
      %c0_51 = arith.constant 0 : index
      %c0_52 = arith.constant 0 : index
      %46 = vector.load %arg15[%c0_51, %c0_52] : memref<1x1xf32, #tpu.memory_space<vmem>>, vector<1x1xf32>
      %47 = vector.broadcast %46 : vector<1x1xf32> to vector<1x64xf32>
      %48 = arith.addf %45, %47 : vector<1x64xf32>
      %cst_53 = arith.constant 0.000000e+00 : f32
      %49 = vector.broadcast %cst_53 : f32 to vector<1x64xf32>
      %50 = arith.cmpf oge, %48, %49 : vector<1x64xf32>
      %cst_54 = arith.constant 0.00999999977 : f32
      %51 = vector.broadcast %cst_54 : f32 to vector<1x64xf32>
      %52 = arith.mulf %51, %48 : vector<1x64xf32>
      %53 = arith.select %50, %48, %52 : vector<1x64xi1>, vector<1x64xf32>
      %c0_55 = arith.constant 0 : index
      %54 = arith.index_cast %arg21 : i32 to index
      %c0_56 = arith.constant 0 : index
      %55 = vector.load %arg16[%c0_55, %54, %c0_56] : memref<1x48x64xf32, #tpu.memory_space<vmem>>, vector<1x1x64xf32>
      %56 = vector.shape_cast %55 : vector<1x1x64xf32> to vector<1x64xf32>
      %57 = vector.shape_cast %53 : vector<1x64xf32> to vector<1x1x64xf32>
      tpu.vector_store %arg16[%c0_55, %54, %c0_56], %57 {strides = array<i32>} : memref<1x48x64xf32, #tpu.memory_space<vmem>>, vector<1x1x64xf32>,
    }
    %c48_i32_29 = arith.constant 48 : i32
    return
  }
  func.func @transform_0(%arg0: i32) -> (i32, i32, i32) {
    %c0_i32 = arith.constant 0 : i32
    %c0_i32_0 = arith.constant 0 : i32
    %c0_i32_1 = arith.constant 0 : i32
    return %arg0, %c0_i32, %c0_i32_0 : i32, i32, i32
  }
  func.func @transform_1(%arg0: i32) -> (i32, i32) {
    %c0_i32 = arith.constant 0 : i32
    %c0_i32_0 = arith.constant 0 : i32
    %c0_i32_1 = arith.constant 0 : i32
    return %c0_i32, %c0_i32_0 : i32, i32
  }
  func.func @transform_2(%arg0: i32) -> (i32, i32) {
    %c0_i32 = arith.constant 0 : i32
    %c0_i32_0 = arith.constant 0 : i32
    %c0_i32_1 = arith.constant 0 : i32
    return %c0_i32, %c0_i32_0 : i32, i32
  }
  func.func @transform_3(%arg0: i32) -> (i32, i32) {
    %c0_i32 = arith.constant 0 : i32
    %c0_i32_0 = arith.constant 0 : i32
    %c0_i32_1 = arith.constant 0 : i32
    return %c0_i32, %c0_i32_0 : i32, i32
  }
  func.func @transform_4(%arg0: i32) -> (i32, i32) {
    %c0_i32 = arith.constant 0 : i32
    %c0_i32_0 = arith.constant 0 : i32
    %c0_i32_1 = arith.constant 0 : i32
    return %c0_i32, %c0_i32_0 : i32, i32
  }
  func.func @transform_5(%arg0: i32) -> (i32, i32, i32) {
    %c0_i32 = arith.constant 0 : i32
    %c0_i32_0 = arith.constant 0 : i32
    %c0_i32_1 = arith.constant 0 : i32
    %c0_i32_2 = arith.constant 0 : i32
    return %c0_i32, %c0_i32_0, %c0_i32_1 : i32, i32, i32
  }
  func.func @transform_6(%arg0: i32) -> (i32, i32) {
    %c0_i32 = arith.constant 0 : i32
    %c0_i32_0 = arith.constant 0 : i32
    %c0_i32_1 = arith.constant 0 : i32
    return %c0_i32, %c0_i32_0 : i32, i32
  }
  func.func @transform_7(%arg0: i32) -> (i32, i32, i32) {
    %c0_i32 = arith.constant 0 : i32
    %c0_i32_0 = arith.constant 0 : i32
    %c0_i32_1 = arith.constant 0 : i32
    %c0_i32_2 = arith.constant 0 : i32
    return %c0_i32, %c0_i32_0, %c0_i32_1 : i32, i32, i32
  }
  func.func @transform_8(%arg0: i32) -> (i32, i32) {
    %c0_i32 = arith.constant 0 : i32
    %c0_i32_0 = arith.constant 0 : i32
    %c0_i32_1 = arith.constant 0 : i32
    return %c0_i32, %c0_i32_0 : i32, i32
  }
  func.func @transform_9(%arg0: i32) -> (i32, i32, i32) {
    %c0_i32 = arith.constant 0 : i32
    %c0_i32_0 = arith.constant 0 : i32
    %c0_i32_1 = arith.constant 0 : i32
    %c0_i32_2 = arith.constant 0 : i32
    return %c0_i32, %c0_i32_0, %c0_i32_1 : i32, i32, i32
  }
  func.func @transform_10(%arg0: i32) -> (i32, i32) {
    %c0_i32 = arith.constant 0 : i32
    %c0_i32_0 = arith.constant 0 : i32
    %c0_i32_1 = arith.constant 0 : i32
    return %c0_i32, %c0_i32_0 : i32, i32
  }
  func.func @transform_11(%arg0: i32) -> (i32, i32, i32) {
    %c0_i32 = arith.constant 0 : i32
    %c0_i32_0 = arith.constant 0 : i32
    %c0_i32_1 = arith.constant 0 : i32
    %c0_i32_2 = arith.constant 0 : i32
    return %c0_i32, %c0_i32_0, %c0_i32_1 : i32, i32, i32
  }
  func.func @transform_12(%arg0: i32) -> (i32, i32) {
    %c0_i32 = arith.constant 0 : i32
    %c0_i32_0 = arith.constant 0 : i32
    %c0_i32_1 = arith.constant 0 : i32
    return %c0_i32, %c0_i32_0 : i32, i32
  }
  func.func @transform_13(%arg0: i32) -> (i32, i32) {
    %c0_i32 = arith.constant 0 : i32
    %c0_i32_0 = arith.constant 0 : i32
    %c0_i32_1 = arith.constant 0 : i32
    return %c0_i32, %c0_i32_0 : i32, i32
  }
  func.func @transform_14(%arg0: i32) -> (i32, i32) {
    %c0_i32 = arith.constant 0 : i32
    %c0_i32_0 = arith.constant 0 : i32
    %c0_i32_1 = arith.constant 0 : i32
    return %c0_i32, %c0_i32_0 : i32, i32
  }
  func.func @transform_15(%arg0: i32) -> (i32, i32, i32) {
    %c0_i32 = arith.constant 0 : i32
    %c0_i32_0 = arith.constant 0 : i32
    %c0_i32_1 = arith.constant 0 : i32
    return %arg0, %c0_i32, %c0_i32_0 : i32, i32, i32
  }
}

module attributes {stable_mosaic.version = 11 : i64} {
  func.func @mlp_kernel(%arg0: memref<2x1584xf32, #tpu.memory_space<vmem>>, %arg1: memref<1584x64xf32, #tpu.memory_space<vmem>>, %arg2: memref<1x64xf32, #tpu.memory_space<vmem>>, %arg3: memref<64x48xf32, #tpu.memory_space<vmem>>, %arg4: memref<1x48xf32, #tpu.memory_space<vmem>>, %arg5: memref<48x48xf32, #tpu.memory_space<vmem>>, %arg6: memref<1x48xf32, #tpu.memory_space<vmem>>, %arg7: memref<48x6xf32, #tpu.memory_space<vmem>>, %arg8: memref<1x6xf32, #tpu.memory_space<vmem>>, %arg9: memref<2x6xf32, #tpu.memory_space<vmem>>) attributes {dimension_semantics = [], scalar_prefetch = 0 : i64, scratch_operands = 0 : i64, tpu.core_type = #tpu.core_type<tc>} {
    %c0 = arith.constant 0 : index
    %c0_0 = arith.constant 0 : index
    %0 = vector.load %arg0[%c0, %c0_0] : memref<2x1584xf32, #tpu.memory_space<vmem>>, vector<2x1584xf32>
    %c0_1 = arith.constant 0 : index
    %c0_2 = arith.constant 0 : index
    %1 = vector.load %arg1[%c0_1, %c0_2] : memref<1584x64xf32, #tpu.memory_space<vmem>>, vector<1584x64xf32>
    %cst = arith.constant dense<0.000000e+00> : vector<2x64xf32>
    %2 = tpu.matmul %0, %1, %cst {dimension_numbers = #tpu.dot_dimension_numbers<[1], [0], [0], [1], [0, 0, 1, 1], [], []>} : vector<2x1584xf32>, vector<1584x64xf32>, vector<2x64xf32> -> vector<2x64xf32>
    %c0_3 = arith.constant 0 : index
    %c0_4 = arith.constant 0 : index
    %3 = vector.load %arg2[%c0_3, %c0_4] : memref<1x64xf32, #tpu.memory_space<vmem>>, vector<1x64xf32>
    %4 = vector.broadcast %3 : vector<1x64xf32> to vector<2x64xf32>
    %5 = arith.addf %2, %4 : vector<2x64xf32>
    %cst_5 = arith.constant 0.000000e+00 : f32
    %6 = vector.broadcast %cst_5 : f32 to vector<2x64xf32>
    %7 = arith.cmpf oge, %5, %6 : vector<2x64xf32>
    %cst_6 = arith.constant 0.00999999977 : f32
    %8 = vector.broadcast %cst_6 : f32 to vector<2x64xf32>
    %9 = arith.mulf %8, %5 : vector<2x64xf32>
    %10 = arith.select %7, %5, %9 : vector<2x64xi1>, vector<2x64xf32>
    %c0_7 = arith.constant 0 : index
    %c0_8 = arith.constant 0 : index
    %11 = vector.load %arg3[%c0_7, %c0_8] : memref<64x48xf32, #tpu.memory_space<vmem>>, vector<64x48xf32>
    %cst_9 = arith.constant dense<0.000000e+00> : vector<2x48xf32>
    %12 = tpu.matmul %10, %11, %cst_9 {dimension_numbers = #tpu.dot_dimension_numbers<[1], [0], [0], [1], [0, 0, 1, 1], [], []>} : vector<2x64xf32>, vector<64x48xf32>, vector<2x48xf32> -> vector<2x48xf32>
    %c0_10 = arith.constant 0 : index
    %c0_11 = arith.constant 0 : index
    %13 = vector.load %arg4[%c0_10, %c0_11] : memref<1x48xf32, #tpu.memory_space<vmem>>, vector<1x48xf32>
    %14 = vector.broadcast %13 : vector<1x48xf32> to vector<2x48xf32>
    %15 = arith.addf %12, %14 : vector<2x48xf32>
    %cst_12 = arith.constant 0.000000e+00 : f32
    %16 = vector.broadcast %cst_12 : f32 to vector<2x48xf32>
    %17 = arith.cmpf oge, %15, %16 : vector<2x48xf32>
    %cst_13 = arith.constant 0.00999999977 : f32
    %18 = vector.broadcast %cst_13 : f32 to vector<2x48xf32>
    %19 = arith.mulf %18, %15 : vector<2x48xf32>
    %20 = arith.select %17, %15, %19 : vector<2x48xi1>, vector<2x48xf32>
    %c0_14 = arith.constant 0 : index
    %c0_15 = arith.constant 0 : index
    %21 = vector.load %arg5[%c0_14, %c0_15] : memref<48x48xf32, #tpu.memory_space<vmem>>, vector<48x48xf32>
    %cst_16 = arith.constant dense<0.000000e+00> : vector<2x48xf32>
    %22 = tpu.matmul %20, %21, %cst_16 {dimension_numbers = #tpu.dot_dimension_numbers<[1], [0], [0], [1], [0, 0, 1, 1], [], []>} : vector<2x48xf32>, vector<48x48xf32>, vector<2x48xf32> -> vector<2x48xf32>
    %c0_17 = arith.constant 0 : index
    %c0_18 = arith.constant 0 : index
    %23 = vector.load %arg6[%c0_17, %c0_18] : memref<1x48xf32, #tpu.memory_space<vmem>>, vector<1x48xf32>
    %24 = vector.broadcast %23 : vector<1x48xf32> to vector<2x48xf32>
    %25 = arith.addf %22, %24 : vector<2x48xf32>
    %cst_19 = arith.constant 0.000000e+00 : f32
    %26 = vector.broadcast %cst_19 : f32 to vector<2x48xf32>
    %27 = arith.cmpf oge, %25, %26 : vector<2x48xf32>
    %cst_20 = arith.constant 0.00999999977 : f32
    %28 = vector.broadcast %cst_20 : f32 to vector<2x48xf32>
    %29 = arith.mulf %28, %25 : vector<2x48xf32>
    %30 = arith.select %27, %25, %29 : vector<2x48xi1>, vector<2x48xf32>
    %c0_21 = arith.constant 0 : index
    %c0_22 = arith.constant 0 : index
    %31 = vector.load %arg7[%c0_21, %c0_22] : memref<48x6xf32, #tpu.memory_space<vmem>>, vector<48x6xf32>
    %cst_23 = arith.constant dense<0.000000e+00> : vector<2x6xf32>
    %32 = tpu.matmul %30, %31, %cst_23 {dimension_numbers = #tpu.dot_dimension_numbers<[1], [0], [0], [1], [0, 0, 1, 1], [], []>} : vector<2x48xf32>, vector<48x6xf32>, vector<2x6xf32> -> vector<2x6xf32>
    %c0_24 = arith.constant 0 : index
    %c0_25 = arith.constant 0 : index
    %33 = vector.load %arg8[%c0_24, %c0_25] : memref<1x6xf32, #tpu.memory_space<vmem>>, vector<1x6xf32>
    %34 = vector.broadcast %33 : vector<1x6xf32> to vector<2x6xf32>
    %35 = arith.addf %32, %34 : vector<2x6xf32>
    %cst_26 = arith.constant dense<0xFF800000> : vector<2xf32>
    %36 = vector.multi_reduction <maximumf>, %35, %cst_26 [1] : vector<2x6xf32> to vector<2xf32>
    %37 = vector.shape_cast %36 : vector<2xf32> to vector<2x1xf32>
    %38 = vector.broadcast %37 : vector<2x1xf32> to vector<2x6xf32>
    %39 = arith.subf %35, %38 : vector<2x6xf32>
    %40 = math.exp %39 : vector<2x6xf32>
    %cst_27 = arith.constant dense<0.000000e+00> : vector<2xf32>
    %41 = vector.multi_reduction <add>, %40, %cst_27 [1] : vector<2x6xf32> to vector<2xf32>
    %42 = vector.shape_cast %41 : vector<2xf32> to vector<2x1xf32>
    %43 = math.log %42 : vector<2x1xf32>
    %44 = vector.broadcast %43 : vector<2x1xf32> to vector<2x6xf32>
    %45 = arith.subf %39, %44 : vector<2x6xf32>
    %c0_28 = arith.constant 0 : index
    %c0_29 = arith.constant 0 : index
    %46 = vector.load %arg9[%c0_28, %c0_29] : memref<2x6xf32, #tpu.memory_space<vmem>>, vector<2x6xf32>
    tpu.vector_store %arg9[%c0_28, %c0_29], %45 {strides = array<i32>} : memref<2x6xf32, #tpu.memory_space<vmem>>, vector<2x6xf32>,
    return
  }
}

</mosaic_0001>

<llo_original>
// kernel: forward.3
$region0: #{forward.3}
  #allocation0 [shape = 'u32[]', space=smem, size = 0x4, offset = 0x4, fixed_abs, tag = 'smem constant byte address 0x4 - core index']
  #allocation1 [shape = 'u32[72,128]{1,0:T(1,128)}', space=vmem, size = 0x9000, scoped, tag = 'internal scratch']
  %s0 = inlined_call_operand.vmem [shape: f32[2,1584], index: 0, kind: input, shape index: {}]
  %s1 = inlined_call_operand.vmem [shape: f32[1584,64], index: 1, kind: input, shape index: {}]
  %s2 = inlined_call_operand.vmem [shape: f32[1,64], index: 2, kind: input, shape index: {}]
  %s3 = inlined_call_operand.vmem [shape: f32[64,48], index: 3, kind: input, shape index: {}]
  %s4 = inlined_call_operand.vmem [shape: f32[1,48], index: 4, kind: input, shape index: {}]
  %s5 = inlined_call_operand.vmem [shape: f32[48,48], index: 5, kind: input, shape index: {}]
  %s6 = inlined_call_operand.vmem [shape: f32[1,48], index: 6, kind: input, shape index: {}]
  %s7 = inlined_call_operand.vmem [shape: f32[48,6], index: 7, kind: input, shape index: {}]
  %s8 = inlined_call_operand.vmem [shape: f32[1,6], index: 8, kind: input, shape index: {}]
  %s9 = inlined_call_operand.hbm [shape: f32[2,6], index: 9, kind: output, shape index: {}]
  %s10 = sld [smem:[#allocation0]]
  $region46: #{forward.3} parent=0
    _
  %s12 = ssub.s32 1, %s10
  %s13 = scalar_select 0, %s12, %s10
  $region1: #{forward.3} parent=0
    #allocation2 [shape = 'u8[1024]{0}', space=vmem, size = 0x400, scoped, tag = 'output window, operand 0, single buffered']
    #allocation3 [shape = 's32[1]{0}', space=sflag, size = 0x4, scoped, tag = 'scoped memory for forward.3']
    %14 = vsyncpa [#allocation3], 0
    // Predicated region
    $region2: #{forward.3} parent=1 // pred_check
      _
    $region3: #{forward.3} parent=1 // pred_check_branch
      %16 = sbr.rel (0) target = $region5
    $region4: #{forward.3} parent=1 // pred_region
      _
    $region5: #{forward.3} parent=1 // pred_fallthru
      _
    // Predicated region
    $region6: #{forward.3} parent=1 // pred_check
      _
    $region7: #{forward.3} parent=1 // pred_check_branch
      %18 = sbr.rel (0) target = $region9
    $region8: #{forward.3} parent=1 // pred_region
      _
    $region9: #{forward.3} parent=1 // pred_fallthru
      _
    // Predicated region
    $region10: #{forward.3} parent=1 // pred_check
      _
    $region11: #{forward.3} parent=1 // pred_check_branch
      %20 = sbr.rel (0) target = $region13
    $region12: #{forward.3} parent=1 // pred_region
      _
    $region13: #{forward.3} parent=1 // pred_fallthru
      _
    // Predicated region
    $region14: #{forward.3} parent=1 // pred_check
      _
    $region15: #{forward.3} parent=1 // pred_check_branch
      %22 = sbr.rel (0) target = $region17
    $region16: #{forward.3} parent=1 // pred_region
      _
    $region17: #{forward.3} parent=1 // pred_fallthru
      _
    // Predicated region
    $region18: #{forward.3} parent=1 // pred_check
      _
    $region19: #{forward.3} parent=1 // pred_check_branch
      %24 = sbr.rel (0) target = $region21
    $region20: #{forward.3} parent=1 // pred_region
      _
    $region21: #{forward.3} parent=1 // pred_fallthru
      _
    // Predicated region
    $region22: #{forward.3} parent=1 // pred_check
      _
    $region23: #{forward.3} parent=1 // pred_check_branch
      %26 = sbr.rel (0) target = $region25
    $region24: #{forward.3} parent=1 // pred_region
      _
    $region25: #{forward.3} parent=1 // pred_fallthru
      _
    // Predicated region
    $region26: #{forward.3} parent=1 // pred_check
      _
    $region27: #{forward.3} parent=1 // pred_check_branch
      %28 = sbr.rel (0) target = $region29
    $region28: #{forward.3} parent=1 // pred_region
      _
    $region29: #{forward.3} parent=1 // pred_fallthru
      _
    // Predicated region
    $region30: #{forward.3} parent=1 // pred_check
      _
    $region31: #{forward.3} parent=1 // pred_check_branch
      %30 = sbr.rel (0) target = $region33
    $region32: #{forward.3} parent=1 // pred_region
      _
    $region33: #{forward.3} parent=1 // pred_fallthru
      _
    // Predicated region
    $region34: #{forward.3} parent=1 // pred_check
      _
    $region35: #{forward.3} parent=1 // pred_check_branch
      %32 = sbr.rel (0) target = $region37
    $region36: #{forward.3} parent=1 // pred_region
      _
    $region37: #{forward.3} parent=1 // pred_fallthru
      _
    %v33 = vld [vmem:[%s0] sm:$0xff]
    %v34 = vld [vmem:[%s0 + $0x8] sm:$0xff]
    %v35 = vld [vmem:[%s0 + $0x10] sm:$0xff]
    %v36 = vld [vmem:[%s0 + $0x18] sm:$0x3]
    %v37 = vld [vmem:[%s1] sm:$0xff]
    %v38 = vld [vmem:[%s1 + $0x8] sm:$0xff]
    %v39 = vld [vmem:[%s1 + $0x10] sm:$0xff]
    %v40 = vld [vmem:[%s1 + $0x18] sm:$0xff]
    %v41 = vld [vmem:[%s1 + $0x20] sm:$0xff]
    %v42 = vld [vmem:[%s1 + $0x28] sm:$0xff]
    %v43 = vld [vmem:[%s1 + $0x30] sm:$0xff]
    %v44 = vld [vmem:[%s1 + $0x38] sm:$0xff]
    %v45 = vld [vmem:[%s1 + $0x40] sm:$0xff]
    %v46 = vld [vmem:[%s1 + $0x48] sm:$0xff]
    %v47 = vld [vmem:[%s1 + $0x50] sm:$0xff]
    %v48 = vld [vmem:[%s1 + $0x58] sm:$0xff]
    %v49 = vld [vmem:[%s1 + $0x60] sm:$0xff]
    %v50 = vld [vmem:[%s1 + $0x68] sm:$0xff]
    %v51 = vld [vmem:[%s1 + $0x70] sm:$0xff]
    %v52 = vld [vmem:[%s1 + $0x78] sm:$0xff]
    %v53 = vld [vmem:[%s1 + $0x80] sm:$0xff]
    %v54 = vld [vmem:[%s1 + $0x88] sm:$0xff]
    %v55 = vld [vmem:[%s1 + $0x90] sm:$0xff]
    %v56 = vld [vmem:[%s1 + $0x98] sm:$0xff]
    %v57 = vld [vmem:[%s1 + $0xa0] sm:$0xff]
    %v58 = vld [vmem:[%s1 + $0xa8] sm:$0xff]
    %v59 = vld [vmem:[%s1 + $0xb0] sm:$0xff]
    %v60 = vld [vmem:[%s1 + $0xb8] sm:$0xff]
    %v61 = vld [vmem:[%s1 + $0xc0] sm:$0xff]
    %v62 = vld [vmem:[%s1 + $0xc8] sm:$0xff]
    %v63 = vld [vmem:[%s1 + $0xd0] sm:$0xff]
    %v64 = vld [vmem:[%s1 + $0xd8] sm:$0xff]
    %v65 = vld [vmem:[%s1 + $0xe0] sm:$0xff]
    %v66 = vld [vmem:[%s1 + $0xe8] sm:$0xff]
    %v67 = vld [vmem:[%s1 + $0xf0] sm:$0xff]
    %v68 = vld [vmem:[%s1 + $0xf8] sm:$0xff]
    %v69 = vld [vmem:[%s1 + $0x100] sm:$0xff]
    %v70 = vld [vmem:[%s1 + $0x108] sm:$0xff]
    %v71 = vld [vmem:[%s1 + $0x110] sm:$0xff]
    %v72 = vld [vmem:[%s1 + $0x118] sm:$0xff]
    %v73 = vld [vmem:[%s1 + $0x120] sm:$0xff]
    %v74 = vld [vmem:[%s1 + $0x128] sm:$0xff]
    %v75 = vld [vmem:[%s1 + $0x130] sm:$0xff]
    %v76 = vld [vmem:[%s1 + $0x138] sm:$0xff]
    %v77 = vld [vmem:[%s1 + $0x140] sm:$0xff]
    %v78 = vld [vmem:[%s1 + $0x148] sm:$0xff]
    %v79 = vld [vmem:[%s1 + $0x150] sm:$0xff]
    %v80 = vld [vmem:[%s1 + $0x158] sm:$0xff]
    %v81 = vld [vmem:[%s1 + $0x160] sm:$0xff]
    %v82 = vld [vmem:[%s1 + $0x168] sm:$0xff]
    %v83 = vld [vmem:[%s1 + $0x170] sm:$0xff]
    %v84 = vld [vmem:[%s1 + $0x178] sm:$0xff]
    %v85 = vld [vmem:[%s1 + $0x180] sm:$0xff]
    %v86 = vld [vmem:[%s1 + $0x188] sm:$0xff]
    %v87 = vld [vmem:[%s1 + $0x190] sm:$0xff]
    %v88 = vld [vmem:[%s1 + $0x198] sm:$0xff]
    %v89 = vld [vmem:[%s1 + $0x1a0] sm:$0xff]
    %v90 = vld [vmem:[%s1 + $0x1a8] sm:$0xff]
    %v91 = vld [vmem:[%s1 + $0x1b0] sm:$0xff]
    %v92 = vld [vmem:[%s1 + $0x1b8] sm:$0xff]
    %v93 = vld [vmem:[%s1 + $0x1c0] sm:$0xff]
    %v94 = vld [vmem:[%s1 + $0x1c8] sm:$0xff]
    %v95 = vld [vmem:[%s1 + $0x1d0] sm:$0xff]
    %v96 = vld [vmem:[%s1 + $0x1d8] sm:$0xff]
    %v97 = vld [vmem:[%s1 + $0x1e0] sm:$0xff]
    %v98 = vld [vmem:[%s1 + $0x1e8] sm:$0xff]
    %v99 = vld [vmem:[%s1 + $0x1f0] sm:$0xff]
    %v100 = vld [vmem:[%s1 + $0x1f8] sm:$0xff]
    %v101 = vld [vmem:[%s1 + $0x200] sm:$0xff]
    %v102 = vld [vmem:[%s1 + $0x208] sm:$0xff]
    %v103 = vld [vmem:[%s1 + $0x210] sm:$0xff]
    %v104 = vld [vmem:[%s1 + $0x218] sm:$0xff]
    %v105 = vld [vmem:[%s1 + $0x220] sm:$0xff]
    %v106 = vld [vmem:[%s1 + $0x228] sm:$0xff]
    %v107 = vld [vmem:[%s1 + $0x230] sm:$0xff]
    %v108 = vld [vmem:[%s1 + $0x238] sm:$0xff]
    %v109 = vld [vmem:[%s1 + $0x240] sm:$0xff]
    %v110 = vld [vmem:[%s1 + $0x248] sm:$0xff]
    %v111 = vld [vmem:[%s1 + $0x250] sm:$0xff]
    %v112 = vld [vmem:[%s1 + $0x258] sm:$0xff]
    %v113 = vld [vmem:[%s1 + $0x260] sm:$0xff]
    %v114 = vld [vmem:[%s1 + $0x268] sm:$0xff]
    %v115 = vld [vmem:[%s1 + $0x270] sm:$0xff]
    %v116 = vld [vmem:[%s1 + $0x278] sm:$0xff]
    %v117 = vld [vmem:[%s1 + $0x280] sm:$0xff]
    %v118 = vld [vmem:[%s1 + $0x288] sm:$0xff]
    %v119 = vld [vmem:[%s1 + $0x290] sm:$0xff]
    %v120 = vld [vmem:[%s1 + $0x298] sm:$0xff]
    %v121 = vld [vmem:[%s1 + $0x2a0] sm:$0xff]
    %v122 = vld [vmem:[%s1 + $0x2a8] sm:$0xff]
    %v123 = vld [vmem:[%s1 + $0x2b0] sm:$0xff]
    %v124 = vld [vmem:[%s1 + $0x2b8] sm:$0xff]
    %v125 = vld [vmem:[%s1 + $0x2c0] sm:$0xff]
    %v126 = vld [vmem:[%s1 + $0x2c8] sm:$0xff]
    %v127 = vld [vmem:[%s1 + $0x2d0] sm:$0xff]
    %v128 = vld [vmem:[%s1 + $0x2d8] sm:$0xff]
    %v129 = vld [vmem:[%s1 + $0x2e0] sm:$0xff]
    %v130 = vld [vmem:[%s1 + $0x2e8] sm:$0xff]
    %v131 = vld [vmem:[%s1 + $0x2f0] sm:$0xff]
    %v132 = vld [vmem:[%s1 + $0x2f8] sm:$0xff]
    %v133 = vld [vmem:[%s1 + $0x300] sm:$0xff]
    %v134 = vld [vmem:[%s1 + $0x308] sm:$0xff]
    %v135 = vld [vmem:[%s1 + $0x310] sm:$0xff]
    %v136 = vld [vmem:[%s1 + $0x318] sm:$0xff]
    %v137 = vld [vmem:[%s1 + $0x320] sm:$0xff]
    %v138 = vld [vmem:[%s1 + $0x328] sm:$0xff]
    %v139 = vld [vmem:[%s1 + $0x330] sm:$0xff]
    %v140 = vld [vmem:[%s1 + $0x338] sm:$0xff]
    %v141 = vld [vmem:[%s1 + $0x340] sm:$0xff]
    %v142 = vld [vmem:[%s1 + $0x348] sm:$0xff]
    %v143 = vld [vmem:[%s1 + $0x350] sm:$0xff]
    %v144 = vld [vmem:[%s1 + $0x358] sm:$0xff]
    %v145 = vld [vmem:[%s1 + $0x360] sm:$0xff]
    %v146 = vld [vmem:[%s1 + $0x368] sm:$0xff]
    %v147 = vld [vmem:[%s1 + $0x370] sm:$0xff]
    %v148 = vld [vmem:[%s1 + $0x378] sm:$0xff]
    %v149 = vld [vmem:[%s1 + $0x380] sm:$0xff]
    %v150 = vld [vmem:[%s1 + $0x388] sm:$0xff]
    %v151 = vld [vmem:[%s1 + $0x390] sm:$0xff]
    %v152 = vld [vmem:[%s1 + $0x398] sm:$0xff]
    %v153 = vld [vmem:[%s1 + $0x3a0] sm:$0xff]
    %v154 = vld [vmem:[%s1 + $0x3a8] sm:$0xff]
    %v155 = vld [vmem:[%s1 + $0x3b0] sm:$0xff]
    %v156 = vld [vmem:[%s1 + $0x3b8] sm:$0xff]
    %v157 = vld [vmem:[%s1 + $0x3c0] sm:$0xff]
    %v158 = vld [vmem:[%s1 + $0x3c8] sm:$0xff]
    %v159 = vld [vmem:[%s1 + $0x3d0] sm:$0xff]
    %v160 = vld [vmem:[%s1 + $0x3d8] sm:$0xff]
    %v161 = vld [vmem:[%s1 + $0x3e0] sm:$0xff]
    %v162 = vld [vmem:[%s1 + $0x3e8] sm:$0xff]
    %v163 = vld [vmem:[%s1 + $0x3f0] sm:$0xff]
    %v164 = vld [vmem:[%s1 + $0x3f8] sm:$0xff]
    %v165 = vld [vmem:[%s1 + $0x400] sm:$0xff]
    %v166 = vld [vmem:[%s1 + $0x408] sm:$0xff]
    %v167 = vld [vmem:[%s1 + $0x410] sm:$0xff]
    %v168 = vld [vmem:[%s1 + $0x418] sm:$0xff]
    %v169 = vld [vmem:[%s1 + $0x420] sm:$0xff]
    %v170 = vld [vmem:[%s1 + $0x428] sm:$0xff]
    %v171 = vld [vmem:[%s1 + $0x430] sm:$0xff]
    %v172 = vld [vmem:[%s1 + $0x438] sm:$0xff]
    %v173 = vld [vmem:[%s1 + $0x440] sm:$0xff]
    %v174 = vld [vmem:[%s1 + $0x448] sm:$0xff]
    %v175 = vld [vmem:[%s1 + $0x450] sm:$0xff]
    %v176 = vld [vmem:[%s1 + $0x458] sm:$0xff]
    %v177 = vld [vmem:[%s1 + $0x460] sm:$0xff]
    %v178 = vld [vmem:[%s1 + $0x468] sm:$0xff]
    %v179 = vld [vmem:[%s1 + $0x470] sm:$0xff]
    %v180 = vld [vmem:[%s1 + $0x478] sm:$0xff]
    %v181 = vld [vmem:[%s1 + $0x480] sm:$0xff]
    %v182 = vld [vmem:[%s1 + $0x488] sm:$0xff]
    %v183 = vld [vmem:[%s1 + $0x490] sm:$0xff]
    %v184 = vld [vmem:[%s1 + $0x498] sm:$0xff]
    %v185 = vld [vmem:[%s1 + $0x4a0] sm:$0xff]
    %v186 = vld [vmem:[%s1 + $0x4a8] sm:$0xff]
    %v187 = vld [vmem:[%s1 + $0x4b0] sm:$0xff]
    %v188 = vld [vmem:[%s1 + $0x4b8] sm:$0xff]
    %v189 = vld [vmem:[%s1 + $0x4c0] sm:$0xff]
    %v190 = vld [vmem:[%s1 + $0x4c8] sm:$0xff]
    %v191 = vld [vmem:[%s1 + $0x4d0] sm:$0xff]
    %v192 = vld [vmem:[%s1 + $0x4d8] sm:$0xff]
    %v193 = vld [vmem:[%s1 + $0x4e0] sm:$0xff]
    %v194 = vld [vmem:[%s1 + $0x4e8] sm:$0xff]
    %v195 = vld [vmem:[%s1 + $0x4f0] sm:$0xff]
    %v196 = vld [vmem:[%s1 + $0x4f8] sm:$0xff]
    %v197 = vld [vmem:[%s1 + $0x500] sm:$0xff]
    %v198 = vld [vmem:[%s1 + $0x508] sm:$0xff]
    %v199 = vld [vmem:[%s1 + $0x510] sm:$0xff]
    %v200 = vld [vmem:[%s1 + $0x518] sm:$0xff]
    %v201 = vld [vmem:[%s1 + $0x520] sm:$0xff]
    %v202 = vld [vmem:[%s1 + $0x528] sm:$0xff]
    %v203 = vld [vmem:[%s1 + $0x530] sm:$0xff]
    %v204 = vld [vmem:[%s1 + $0x538] sm:$0xff]
    %v205 = vld [vmem:[%s1 + $0x540] sm:$0xff]
    %v206 = vld [vmem:[%s1 + $0x548] sm:$0xff]
    %v207 = vld [vmem:[%s1 + $0x550] sm:$0xff]
    %v208 = vld [vmem:[%s1 + $0x558] sm:$0xff]
    %v209 = vld [vmem:[%s1 + $0x560] sm:$0xff]
    %v210 = vld [vmem:[%s1 + $0x568] sm:$0xff]
    %v211 = vld [vmem:[%s1 + $0x570] sm:$0xff]
    %v212 = vld [vmem:[%s1 + $0x578] sm:$0xff]
    %v213 = vld [vmem:[%s1 + $0x580] sm:$0xff]
    %v214 = vld [vmem:[%s1 + $0x588] sm:$0xff]
    %v215 = vld [vmem:[%s1 + $0x590] sm:$0xff]
    %v216 = vld [vmem:[%s1 + $0x598] sm:$0xff]
    %v217 = vld [vmem:[%s1 + $0x5a0] sm:$0xff]
    %v218 = vld [vmem:[%s1 + $0x5a8] sm:$0xff]
    %v219 = vld [vmem:[%s1 + $0x5b0] sm:$0xff]
    %v220 = vld [vmem:[%s1 + $0x5b8] sm:$0xff]
    %v221 = vld [vmem:[%s1 + $0x5c0] sm:$0xff]
    %v222 = vld [vmem:[%s1 + $0x5c8] sm:$0xff]
    %v223 = vld [vmem:[%s1 + $0x5d0] sm:$0xff]
    %v224 = vld [vmem:[%s1 + $0x5d8] sm:$0xff]
    %v225 = vld [vmem:[%s1 + $0x5e0] sm:$0xff]
    %v226 = vld [vmem:[%s1 + $0x5e8] sm:$0xff]
    %v227 = vld [vmem:[%s1 + $0x5f0] sm:$0xff]
    %v228 = vld [vmem:[%s1 + $0x5f8] sm:$0xff]
    %v229 = vld [vmem:[%s1 + $0x600] sm:$0xff]
    %v230 = vld [vmem:[%s1 + $0x608] sm:$0xff]
    %v231 = vld [vmem:[%s1 + $0x610] sm:$0xff]
    %v232 = vld [vmem:[%s1 + $0x618] sm:$0xff]
    %v233 = vld [vmem:[%s1 + $0x620] sm:$0xff]
    %v234 = vld [vmem:[%s1 + $0x628] sm:$0xff]
    %v235 = vld [vmem:[%s2] sm:$0x1]
    %v237 = vperm.slane %v235, 0
    %243 = vst [vmem:[#allocation1] ss:$4 sm:$0xff] %v33
    %s244 = scalar_lea.vmem [#allocation1], 32
    %245 = vst [vmem:[%s244] ss:$4 sm:$0xff] %v34
    %v246 = vld.sshfl [vmem:[#allocation1] sm:$0xff pattern:$0x73625140]
    %v247 = vld.sshfl [vmem:[#allocation1 + $0x8] sm:$0xff pattern:$0x73625140]
    %v248 = vld.sshfl [vmem:[#allocation1 + $0x10] sm:$0xff pattern:$0x73625140]
    %v249 = vld.sshfl [vmem:[#allocation1 + $0x18] sm:$0xff pattern:$0x73625140]
    %v250 = vld.sshfl [vmem:[#allocation1 + $0x20] sm:$0xff pattern:$0x73625140]
    %v251 = vld.sshfl [vmem:[#allocation1 + $0x28] sm:$0xff pattern:$0x73625140]
    %v252 = vld.sshfl [vmem:[#allocation1 + $0x30] sm:$0xff pattern:$0x73625140]
    %v253 = vld.sshfl [vmem:[#allocation1 + $0x38] sm:$0xff pattern:$0x73625140]
    %254 = vst [vmem:[#allocation1] ss:$4 sm:$0xff] %v35
    %255 = vst [vmem:[%s244] ss:$4 sm:$0xff] %v36
    %v256 = vld.sshfl [vmem:[#allocation1] sm:$0xff pattern:$0x73625140]
    %v257 = vld.sshfl [vmem:[#allocation1 + $0x8] sm:$0xff pattern:$0x73625140]
    %v258 = vld.sshfl [vmem:[#allocation1 + $0x10] sm:$0xff pattern:$0x73625140]
    %v259 = vld.sshfl [vmem:[#allocation1 + $0x18] sm:$0xff pattern:$0x73625140]
    %v260 = vld.sshfl [vmem:[#allocation1 + $0x20] sm:$0xff pattern:$0x73625140]
    %vm273 = vcmask 392192
    %v274 = vsel %vm273, %v260, 0
    %276 = vmatpush.msra.mxu0 %v52
    %277 = vmatpush.msra.mxu0 %v51
    %278 = vmatpush.msra.mxu0 %v50
    %279 = vmatpush.msra.mxu0 %v49
    %280 = vmatpush.msra.mxu0 %v48
    %281 = vmatpush.msra.mxu0 %v47
    %282 = vmatpush.msra.mxu0 %v46
    %283 = vmatpush.msra.mxu0 %v45
    %284 = vmatpush.msra.mxu0 %v44
    %285 = vmatpush.msra.mxu0 %v43
    %286 = vmatpush.msra.mxu0 %v42
    %287 = vmatpush.msra.mxu0 %v41
    %288 = vmatpush.msra.mxu0 %v40
    %289 = vmatpush.msra.mxu0 %v39
    %290 = vmatpush.msra.mxu0 %v38
    %291 = vmatpush.msra.mxu0 %v37
    %292 = vmatmul.f32.gmra.mxu0 %v246
    %v293 = vpop.f32.mrf.mxu0
    %v294 = vadd.f32 %v237, %v293
    %295 = vdwg.mxu0
    %296 = vmatpush.msra.mxu0 %v68
    %297 = vmatpush.msra.mxu0 %v67
    %298 = vmatpush.msra.mxu0 %v66
    %299 = vmatpush.msra.mxu0 %v65
    %300 = vmatpush.msra.mxu0 %v64
    %301 = vmatpush.msra.mxu0 %v63
    %302 = vmatpush.msra.mxu0 %v62
    %303 = vmatpush.msra.mxu0 %v61
    %304 = vmatpush.msra.mxu0 %v60
    %305 = vmatpush.msra.mxu0 %v59
    %306 = vmatpush.msra.mxu0 %v58
    %307 = vmatpush.msra.mxu0 %v57
    %308 = vmatpush.msra.mxu0 %v56
    %309 = vmatpush.msra.mxu0 %v55
    %310 = vmatpush.msra.mxu0 %v54
    %311 = vmatpush.msra.mxu0 %v53
    %312 = vmatmul.f32.gmra.mxu0 %v247
    %v313 = vpop.f32.mrf.mxu0
    %v314 = vadd.f32 %v294, %v313
    %315 = vdwg.mxu0
    %316 = vmatpush.msra.mxu0 %v84
    %317 = vmatpush.msra.mxu0 %v83
    %318 = vmatpush.msra.mxu0 %v82
    %319 = vmatpush.msra.mxu0 %v81
    %320 = vmatpush.msra.mxu0 %v80
    %321 = vmatpush.msra.mxu0 %v79
    %322 = vmatpush.msra.mxu0 %v78
    %323 = vmatpush.msra.mxu0 %v77
    %324 = vmatpush.msra.mxu0 %v76
    %325 = vmatpush.msra.mxu0 %v75
    %326 = vmatpush.msra.mxu0 %v74
    %327 = vmatpush.msra.mxu0 %v73
    %328 = vmatpush.msra.mxu0 %v72
    %329 = vmatpush.msra.mxu0 %v71
    %330 = vmatpush.msra.mxu0 %v70
    %331 = vmatpush.msra.mxu0 %v69
    %332 = vmatmul.f32.gmra.mxu0 %v248
    %v333 = vpop.f32.mrf.mxu0
    %v334 = vadd.f32 %v314, %v333
    %335 = vdwg.mxu0
    %336 = vmatpush.msra.mxu0 %v100
    %337 = vmatpush.msra.mxu0 %v99
    %338 = vmatpush.msra.mxu0 %v98
    %339 = vmatpush.msra.mxu0 %v97
    %340 = vmatpush.msra.mxu0 %v96
    %341 = vmatpush.msra.mxu0 %v95
    %342 = vmatpush.msra.mxu0 %v94
    %343 = vmatpush.msra.mxu0 %v93
    %344 = vmatpush.msra.mxu0 %v92
    %345 = vmatpush.msra.mxu0 %v91
    %346 = vmatpush.msra.mxu0 %v90
    %347 = vmatpush.msra.mxu0 %v89
    %348 = vmatpush.msra.mxu0 %v88
    %349 = vmatpush.msra.mxu0 %v87
    %350 = vmatpush.msra.mxu0 %v86
    %351 = vmatpush.msra.mxu0 %v85
    %352 = vmatmul.f32.gmra.mxu0 %v249
    %v353 = vpop.f32.mrf.mxu0
    %v354 = vadd.f32 %v334, %v353
    %355 = vdwg.mxu0
    %356 = vmatpush.msra.mxu0 %v116
    %357 = vmatpush.msra.mxu0 %v115
    %358 = vmatpush.msra.mxu0 %v114
    %359 = vmatpush.msra.mxu0 %v113
    %360 = vmatpush.msra.mxu0 %v112
    %361 = vmatpush.msra.mxu0 %v111
    %362 = vmatpush.msra.mxu0 %v110
    %363 = vmatpush.msra.mxu0 %v109
    %364 = vmatpush.msra.mxu0 %v108
    %365 = vmatpush.msra.mxu0 %v107
    %366 = vmatpush.msra.mxu0 %v106
    %367 = vmatpush.msra.mxu0 %v105
    %368 = vmatpush.msra.mxu0 %v104
    %369 = vmatpush.msra.mxu0 %v103
    %370 = vmatpush.msra.mxu0 %v102
    %371 = vmatpush.msra.mxu0 %v101
    %372 = vmatmul.f32.gmra.mxu0 %v250
    %v373 = vpop.f32.mrf.mxu0
    %v374 = vadd.f32 %v354, %v373
    %375 = vdwg.mxu0
    %376 = vmatpush.msra.mxu0 %v132
    %377 = vmatpush.msra.mxu0 %v131
    %378 = vmatpush.msra.mxu0 %v130
    %379 = vmatpush.msra.mxu0 %v129
    %380 = vmatpush.msra.mxu0 %v128
    %381 = vmatpush.msra.mxu0 %v127
    %382 = vmatpush.msra.mxu0 %v126
    %383 = vmatpush.msra.mxu0 %v125
    %384 = vmatpush.msra.mxu0 %v124
    %385 = vmatpush.msra.mxu0 %v123
    %386 = vmatpush.msra.mxu0 %v122
    %387 = vmatpush.msra.mxu0 %v121
    %388 = vmatpush.msra.mxu0 %v120
    %389 = vmatpush.msra.mxu0 %v119
    %390 = vmatpush.msra.mxu0 %v118
    %391 = vmatpush.msra.mxu0 %v117
    %392 = vmatmul.f32.gmra.mxu0 %v251
    %v393 = vpop.f32.mrf.mxu0
    %v394 = vadd.f32 %v374, %v393
    %395 = vdwg.mxu0
    %396 = vmatpush.msra.mxu0 %v148
    %397 = vmatpush.msra.mxu0 %v147
    %398 = vmatpush.msra.mxu0 %v146
    %399 = vmatpush.msra.mxu0 %v145
    %400 = vmatpush.msra.mxu0 %v144
    %401 = vmatpush.msra.mxu0 %v143
    %402 = vmatpush.msra.mxu0 %v142
    %403 = vmatpush.msra.mxu0 %v141
    %404 = vmatpush.msra.mxu0 %v140
    %405 = vmatpush.msra.mxu0 %v139
    %406 = vmatpush.msra.mxu0 %v138
    %407 = vmatpush.msra.mxu0 %v137
    %408 = vmatpush.msra.mxu0 %v136
    %409 = vmatpush.msra.mxu0 %v135
    %410 = vmatpush.msra.mxu0 %v134
    %411 = vmatpush.msra.mxu0 %v133
    %412 = vmatmul.f32.gmra.mxu0 %v252
    %v413 = vpop.f32.mrf.mxu0
    %v414 = vadd.f32 %v394, %v413
    %415 = vdwg.mxu0
    %416 = vmatpush.msra.mxu0 %v164
    %417 = vmatpush.msra.mxu0 %v163
    %418 = vmatpush.msra.mxu0 %v162
    %419 = vmatpush.msra.mxu0 %v161
    %420 = vmatpush.msra.mxu0 %v160
    %421 = vmatpush.msra.mxu0 %v159
    %422 = vmatpush.msra.mxu0 %v158
    %423 = vmatpush.msra.mxu0 %v157
    %424 = vmatpush.msra.mxu0 %v156
    %425 = vmatpush.msra.mxu0 %v155
    %426 = vmatpush.msra.mxu0 %v154
    %427 = vmatpush.msra.mxu0 %v153
    %428 = vmatpush.msra.mxu0 %v152
    %429 = vmatpush.msra.mxu0 %v151
    %430 = vmatpush.msra.mxu0 %v150
    %431 = vmatpush.msra.mxu0 %v149
    %432 = vmatmul.f32.gmra.mxu0 %v253
    %v433 = vpop.f32.mrf.mxu0
    %v434 = vadd.f32 %v414, %v433
    %435 = vdwg.mxu0
    %436 = vmatpush.msra.mxu0 %v180
    %437 = vmatpush.msra.mxu0 %v179
    %438 = vmatpush.msra.mxu0 %v178
    %439 = vmatpush.msra.mxu0 %v177
    %440 = vmatpush.msra.mxu0 %v176
    %441 = vmatpush.msra.mxu0 %v175
    %442 = vmatpush.msra.mxu0 %v174
    %443 = vmatpush.msra.mxu0 %v173
    %444 = vmatpush.msra.mxu0 %v172
    %445 = vmatpush.msra.mxu0 %v171
    %446 = vmatpush.msra.mxu0 %v170
    %447 = vmatpush.msra.mxu0 %v169
    %448 = vmatpush.msra.mxu0 %v168
    %449 = vmatpush.msra.mxu0 %v167
    %450 = vmatpush.msra.mxu0 %v166
    %451 = vmatpush.msra.mxu0 %v165
    %452 = vmatmul.f32.gmra.mxu0 %v256
    %v453 = vpop.f32.mrf.mxu0
    %v454 = vadd.f32 %v434, %v453
    %455 = vdwg.mxu0
    %456 = vmatpush.msra.mxu0 %v196
    %457 = vmatpush.msra.mxu0 %v195
    %458 = vmatpush.msra.mxu0 %v194
    %459 = vmatpush.msra.mxu0 %v193
    %460 = vmatpush.msra.mxu0 %v192
    %461 = vmatpush.msra.mxu0 %v191
    %462 = vmatpush.msra.mxu0 %v190
    %463 = vmatpush.msra.mxu0 %v189
    %464 = vmatpush.msra.mxu0 %v188
    %465 = vmatpush.msra.mxu0 %v187
    %466 = vmatpush.msra.mxu0 %v186
    %467 = vmatpush.msra.mxu0 %v185
    %468 = vmatpush.msra.mxu0 %v184
    %469 = vmatpush.msra.mxu0 %v183
    %470 = vmatpush.msra.mxu0 %v182
    %471 = vmatpush.msra.mxu0 %v181
    %472 = vmatmul.f32.gmra.mxu0 %v257
    %v473 = vpop.f32.mrf.mxu0
    %v474 = vadd.f32 %v454, %v473
    %475 = vdwg.mxu0
    %476 = vmatpush.msra.mxu0 %v212
    %477 = vmatpush.msra.mxu0 %v211
    %478 = vmatpush.msra.mxu0 %v210
    %479 = vmatpush.msra.mxu0 %v209
    %480 = vmatpush.msra.mxu0 %v208
    %481 = vmatpush.msra.mxu0 %v207
    %482 = vmatpush.msra.mxu0 %v206
    %483 = vmatpush.msra.mxu0 %v205
    %484 = vmatpush.msra.mxu0 %v204
    %485 = vmatpush.msra.mxu0 %v203
    %486 = vmatpush.msra.mxu0 %v202
    %487 = vmatpush.msra.mxu0 %v201
    %488 = vmatpush.msra.mxu0 %v200
    %489 = vmatpush.msra.mxu0 %v199
    %490 = vmatpush.msra.mxu0 %v198
    %491 = vmatpush.msra.mxu0 %v197
    %492 = vmatmul.f32.gmra.mxu0 %v258
    %v493 = vpop.f32.mrf.mxu0
    %v494 = vadd.f32 %v474, %v493
    %495 = vdwg.mxu0
    %496 = vmatpush.msra.mxu0 %v228
    %497 = vmatpush.msra.mxu0 %v227
    %498 = vmatpush.msra.mxu0 %v226
    %499 = vmatpush.msra.mxu0 %v225
    %500 = vmatpush.msra.mxu0 %v224
    %501 = vmatpush.msra.mxu0 %v223
    %502 = vmatpush.msra.mxu0 %v222
    %503 = vmatpush.msra.mxu0 %v221
    %504 = vmatpush.msra.mxu0 %v220
    %505 = vmatpush.msra.mxu0 %v219
    %506 = vmatpush.msra.mxu0 %v218
    %507 = vmatpush.msra.mxu0 %v217
    %508 = vmatpush.msra.mxu0 %v216
    %509 = vmatpush.msra.mxu0 %v215
    %510 = vmatpush.msra.mxu0 %v214
    %511 = vmatpush.msra.mxu0 %v213
    %512 = vmatmul.f32.gmra.mxu0 %v259
    %v513 = vpop.f32.mrf.mxu0
    %v514 = vadd.f32 %v494, %v513
    %515 = vdwg.mxu0
    %516 = vmatpush.msra.mxu0 0.0
    %517 = vmatpush.msra.mxu0 0.0
    %518 = vmatpush.msra.mxu0 0.0
    %519 = vmatpush.msra.mxu0 0.0
    %520 = vmatpush.msra.mxu0 0.0
    %521 = vmatpush.msra.mxu0 0.0
    %522 = vmatpush.msra.mxu0 0.0
    %523 = vmatpush.msra.mxu0 0.0
    %524 = vmatpush.msra.mxu0 0.0
    %525 = vmatpush.msra.mxu0 0.0
    %526 = vmatpush.msra.mxu0 %v234
    %527 = vmatpush.msra.mxu0 %v233
    %528 = vmatpush.msra.mxu0 %v232
    %529 = vmatpush.msra.mxu0 %v231
    %530 = vmatpush.msra.mxu0 %v230
    %531 = vmatpush.msra.mxu0 %v229
    %532 = vmatmul.f32.gmra.mxu0 %v274
    %v533 = vpop.f32.mrf.mxu0
    %v534 = vadd.f32 %v514, %v533
    %535 = vdwg.mxu0
    %vm536 = vcmp.ge.f32.partialorder %v534, 0.0
    %v537 = vmul.f32 %v534, 0.01
    %v538 = vsel %vm536, %v534, %v537
    %v539 = vld [vmem:[%s3] sm:$0xff]
    %v540 = vld [vmem:[%s3 + $0x8] sm:$0xff]
    %v541 = vld [vmem:[%s3 + $0x10] sm:$0xff]
    %v542 = vld [vmem:[%s3 + $0x18] sm:$0xff]
    %v543 = vld [vmem:[%s3 + $0x20] sm:$0xff]
    %v544 = vld [vmem:[%s3 + $0x28] sm:$0xff]
    %v545 = vld [vmem:[%s3 + $0x30] sm:$0xff]
    %v546 = vld [vmem:[%s3 + $0x38] sm:$0xff]
    %v547 = vld [vmem:[%s4] sm:$0x1]
    %v549 = vperm.slane %v547, 0
    %vm551 = vcmask 523264
    %v553 = vsel %vm551, %v538, 0
    %555 = vmatpush.msra.mxu0 0.0
    %556 = vmatpush.msra.mxu0 0.0
    %557 = vmatpush.msra.mxu0 0.0
    %558 = vmatpush.msra.mxu0 0.0
    %559 = vmatpush.msra.mxu0 0.0
    %560 = vmatpush.msra.mxu0 0.0
    %561 = vmatpush.msra.mxu0 0.0
    %562 = vmatpush.msra.mxu0 0.0
    %563 = vmatpush.msra.mxu0 %v546
    %564 = vmatpush.msra.mxu0 %v545
    %565 = vmatpush.msra.mxu0 %v544
    %566 = vmatpush.msra.mxu0 %v543
    %567 = vmatpush.msra.mxu0 %v542
    %568 = vmatpush.msra.mxu0 %v541
    %569 = vmatpush.msra.mxu0 %v540
    %570 = vmatpush.msra.mxu0 %v539
    %571 = vmatmul.f32.gmra.mxu0 %v553
    %v572 = vpop.f32.mrf.mxu0
    %v573 = vadd.f32 %v549, %v572
    %574 = vdwg.mxu0
    %vm575 = vcmp.ge.f32.partialorder %v573, 0.0
    %v576 = vmul.f32 %v573, 0.01
    %v577 = vsel %vm575, %v573, %v576
    %v578 = vld [vmem:[%s5] sm:$0xff]
    %v579 = vld [vmem:[%s5 + $0x8] sm:$0xff]
    %v580 = vld [vmem:[%s5 + $0x10] sm:$0xff]
    %v581 = vld [vmem:[%s5 + $0x18] sm:$0xff]
    %v582 = vld [vmem:[%s5 + $0x20] sm:$0xff]
    %v583 = vld [vmem:[%s5 + $0x28] sm:$0xff]
    %v584 = vld [vmem:[%s6] sm:$0x1]
    %v586 = vperm.slane %v584, 0
    %v589 = vsel %vm273, %v577, 0
    %591 = vmatpush.msra.mxu0 0.0
    %592 = vmatpush.msra.mxu0 0.0
    %593 = vmatpush.msra.mxu0 0.0
    %594 = vmatpush.msra.mxu0 0.0
    %595 = vmatpush.msra.mxu0 0.0
    %596 = vmatpush.msra.mxu0 0.0
    %597 = vmatpush.msra.mxu0 0.0
    %598 = vmatpush.msra.mxu0 0.0
    %599 = vmatpush.msra.mxu0 0.0
    %600 = vmatpush.msra.mxu0 0.0
    %601 = vmatpush.msra.mxu0 %v583
    %602 = vmatpush.msra.mxu0 %v582
    %603 = vmatpush.msra.mxu0 %v581
    %604 = vmatpush.msra.mxu0 %v580
    %605 = vmatpush.msra.mxu0 %v579
    %606 = vmatpush.msra.mxu0 %v578
    %607 = vmatmul.f32.gmra.mxu0 %v589
    %v608 = vpop.f32.mrf.mxu0
    %v609 = vadd.f32 %v586, %v608
    %610 = vdwg.mxu0
    %vm611 = vcmp.ge.f32.partialorder %v609, 0.0
    %v612 = vmul.f32 %v609, 0.01
    %v613 = vsel %vm611, %v609, %v612
    %v614 = vld [vmem:[%s7] sm:$0xff]
    %v615 = vld [vmem:[%s7 + $0x8] sm:$0xff]
    %v616 = vld [vmem:[%s7 + $0x10] sm:$0xff]
    %v617 = vld [vmem:[%s7 + $0x18] sm:$0xff]
    %v618 = vld [vmem:[%s7 + $0x20] sm:$0xff]
    %v619 = vld [vmem:[%s7 + $0x28] sm:$0xff]
    %v620 = vld [vmem:[%s8] sm:$0x1]
    %v622 = vperm.slane %v620, 0
    %v625 = vsel %vm273, %v613, 0
    %627 = vmatpush.msra.mxu0 0.0
    %628 = vmatpush.msra.mxu0 0.0
    %629 = vmatpush.msra.mxu0 0.0
    %630 = vmatpush.msra.mxu0 0.0
    %631 = vmatpush.msra.mxu0 0.0
    %632 = vmatpush.msra.mxu0 0.0
    %633 = vmatpush.msra.mxu0 0.0
    %634 = vmatpush.msra.mxu0 0.0
    %635 = vmatpush.msra.mxu0 0.0
    %636 = vmatpush.msra.mxu0 0.0
    %637 = vmatpush.msra.mxu0 %v619
    %638 = vmatpush.msra.mxu0 %v618
    %639 = vmatpush.msra.mxu0 %v617
    %640 = vmatpush.msra.mxu0 %v616
    %641 = vmatpush.msra.mxu0 %v615
    %642 = vmatpush.msra.mxu0 %v614
    %643 = vmatmul.f32.gmra.mxu0 %v625
    %v644 = vpop.f32.mrf.mxu0
    %v645 = vadd.f32 %v622, %v644
    %646 = vdwg.mxu0
    %vm647 = vcmask 41984
    %v648 = vsel %vm647, %v645, -inf
    %649 = vmax.xlane.f32.xlu0 %v648
    %v650 = vpop.xlane.xlu0 %649
    %v651 = vsub.f32 %v645, %v650
    %v652 = vmul.f32 %v651, 1.442695
    %v653 = vpow.pop %v652
    %v654 = vsel %vm647, %v653, 0.0
    %655 = vadd.xlane.f32.xlu0 %v654
    %v656 = vpop.xlane.xlu0 %655
    %v657 = vlog2.pop %v656
    %v658 = vmul.f32 %v657, 0.6931472
    %v659 = vsub.f32 %v651, %v658
    %660 = vst.msk [vmem:[#allocation2] sm:$0x3] %vm647, %v659
    // Predicated region
    $region38: #{forward.3} parent=1 // pred_check
      _
    $region39: #{forward.3} parent=1 // pred_check_branch
      %662 = sbr.rel (0) target = $region41
    $region40: #{forward.3} parent=1 // pred_region
      %664 = vsyncadd [#allocation3], 0
      %s666 = sshll.u32 [#allocation2], 4
      %s667 = int_to_ptr.vmem [resolvable:$true] %s666
      %s668 = sshll.u32 %s9, 4
      %s669 = int_to_ptr.hbm [resolvable:$true] %s668
      %671 = dma.vmem_to_hbm [thread:$0]  %s667, 32, %s669, [#allocation3]
    $region41: #{forward.3} parent=1 // pred_fallthru
      _
    // Predicated region
    $region42: #{forward.3} parent=1 // pred_check
      _
    $region43: #{forward.3} parent=1 // pred_check_branch
      %673 = sbr.rel (0) target = $region45
    $region44: #{forward.3} parent=1 // pred_region
      %675 = dma.done [#allocation3], 32
    $region45: #{forward.3} parent=1 // pred_fallthru
      _
    %676 = vsyncpa [#allocation3], 1

// kernel: forward.2
$region0: #{forward.2}
  #allocation0 [shape = 'u32[]', space=smem, size = 0x4, offset = 0x4, fixed_abs, tag = 'smem constant byte address 0x4 - core index']
  #allocation1 [shape = 'u32[72,128]{1,0:T(1,128)}', space=vmem, size = 0x9000, scoped, tag = 'internal scratch']
  #allocation2 [shape = 'f32[1600,132]{1,0:T(8,128)}', space=vmem, size = 0x190000, scoped, tag = 'scratch operand']
  #allocation3 [shape = 'f32[3200,132]{1,0:T(8,128)}', space=vmem, size = 0x320000, scoped, tag = 'scratch operand']
  #allocation4 [shape = 'f32[1600,66]{1,0:T(8,128)}', space=vmem, size = 0xc8000, scoped, tag = 'scratch operand']
  #allocation5 [shape = 'f32[400,66]{1,0:T(8,128)}', space=vmem, size = 0x32000, scoped, tag = 'scratch operand']
  #allocation6 [shape = 'f32[1,1]{1,0:T(1,128)S(1)}', space=vmem, size = 0x200, scoped, tag = 'scoped memory for forward.2']
  %s0 = inlined_call_operand.vmem [shape: f32[2,100,132], index: 0, kind: input, shape index: {}]
  %s1 = inlined_call_operand.hbm [shape: f32[128,64], index: 1, kind: input, shape index: {}]
  %s2 = inlined_call_operand.vmem [shape: f32[128,64], index: 2, kind: input, shape index: {}]
  %s3 = inlined_call_operand.vmem [shape: f32[16,9], index: 3, kind: input, shape index: {}]
  %s4 = inlined_call_operand.vmem [shape: f32[16,1], index: 4, kind: input, shape index: {}]
  %s5 = inlined_call_operand.vmem [shape: f32[5,32,80], index: 5, kind: input, shape index: {}]
  %s6 = inlined_call_operand.vmem [shape: f32[32,1], index: 6, kind: input, shape index: {}]
  %s7 = inlined_call_operand.vmem [shape: f32[5,32,160], index: 7, kind: input, shape index: {}]
  %s8 = inlined_call_operand.vmem [shape: f32[32,1], index: 8, kind: input, shape index: {}]
  %s9 = inlined_call_operand.vmem [shape: f32[3,8,96], index: 9, kind: input, shape index: {}]
  %s10 = inlined_call_operand.vmem [shape: f32[8,1], index: 10, kind: input, shape index: {}]
  %s11 = inlined_call_operand.vmem [shape: f32[3,8,24], index: 11, kind: input, shape index: {}]
  %s12 = inlined_call_operand.vmem [shape: f32[8,1], index: 12, kind: input, shape index: {}]
  %s13 = inlined_call_operand.vmem [shape: f32[1,8], index: 13, kind: input, shape index: {}]
  %s14 = inlined_call_operand.<no memory space> [shape: f32[1,1], index: 14, kind: input, shape index: {}]
  %s15 = inlined_call_operand.vmem [shape: f32[2,48,64], index: 15, kind: output, shape index: {}]
  %s16 = sld [smem:[#allocation0]]
  $region132: #{forward.2} parent=0
    _
  %s18 = ssub.s32 1, %s16
  %s19 = scalar_select 0, %s18, %s16
  %v20 = vstv %s14
  %21 = vst [vmem:[#allocation6] sm:$0x1] %v20
  $region1: #{forward.2} parent=0
    #allocation7 [shape = 'u8[65536]{0}', space=vmem, size = 0x10000, scoped, tag = 'input window, operand 1, single buffered']
    #allocation8 [shape = 's32[2]{0}', space=sflag, size = 0x8, scoped, tag = 'scoped memory for forward.2']
    %22 = vsyncpa [#allocation8], 0
    loop: start=0, step=1, limit=4
    $region2: #{forward.2} parent=1 // loop_pre_header
      _
    $region3: #{forward.2} parent=1 // loop_header
      %s24 = sphi 0, %s28
      %p25 = scmp.ge.s32.totalorder %s24, 4
      %s34 = sphi 0, %s36
      %s37 = sphi 0, %s34
      %s38 = sphi 0, %s37
      %s54 = sphi 0, %s38
      %s58 = sphi 0, %s58
      %s60 = sphi 0, %s58
      %s61 = sphi 0, %s60
      %s75 = sphi 0, %s61
      %s79 = sphi 0, %s79
      %s81 = sphi 0, %s79
      %s82 = sphi 0, %s81
      %s96 = sphi 0, %s82
      %s100 = sphi 0, %s100
      %s102 = sphi 0, %s100
      %s103 = sphi 0, %s102
      %s117 = sphi 0, %s103
      %s121 = sphi 0, %s121
      %s123 = sphi 0, %s121
      %s124 = sphi 0, %s123
      %s138 = sphi 0, %s124
      %s142 = sphi 0, %s142
      %s144 = sphi 0, %s142
      %s145 = sphi 0, %s144
      %s159 = sphi 0, %s145
      %s163 = sphi 0, %s163
      %s165 = sphi 0, %s163
      %s166 = sphi 0, %s165
      %s180 = sphi 0, %s166
      %s184 = sphi 0, %s184
      %s186 = sphi 0, %s184
      %s187 = sphi 0, %s186
      %s201 = sphi 0, %s187
      %s205 = sphi 0, %s205
      %s207 = sphi 0, %s205
      %s208 = sphi 0, %s207
      %s222 = sphi 0, %s208
      %s226 = sphi 0, %s226
      %s228 = sphi 0, %s226
      %s229 = sphi 0, %s228
      %s243 = sphi 0, %s229
      %s247 = sphi 0, %s247
      %s249 = sphi 0, %s247
      %s250 = sphi 0, %s249
      %s264 = sphi 0, %s250
      %s268 = sphi 0, %s268
      %s270 = sphi 0, %s268
      %s271 = sphi 0, %s270
      %s285 = sphi 0, %s271
      %s289 = sphi 0, %s289
      %s291 = sphi 0, %s289
      %s292 = sphi 0, %s291
      %s306 = sphi 0, %s292
      %s310 = sphi 0, %s310
      %s312 = sphi 0, %s310
      %s313 = sphi 0, %s312
      %s327 = sphi 0, %s313
      %s331 = sphi 0, %s331
      %s333 = sphi 0, %s331
      %s334 = sphi 0, %s333
      %s348 = sphi 0, %s334
      %s354 = sphi 0, %s356
      %s357 = sphi 0, %s354
      %s358 = sphi 0, %s357
      %s374 = sphi 0, %s358
    $region4: #{forward.2} parent=1 // loop_header_branch
      %27 = sbr.rel (%p25) target = $region8
    $region5: #{forward.2} parent=1 // loop_body
      %s29 = ssub.s32 %s24, 1
      %s30 = ssub.s32 %s24, 2
      %s31 = sadd.s32 %s24, 1
      %s32 = ssub.s32 %s24, %s31
      %p33 = scmp.eq.s32.totalorder %s32, 0
      %s35 = sadd.s32 %s34, 1
      %s36 = scalar_select %p33, %s34, %s35
      %p39 = pneg %p33
      %p40 = scmp.eq.s32.totalorder %s24, 1
      %p41 = por %p39, %p40
      %p42 = scmp.ne.s32.totalorder %s34, %s37
      %p43 = scmp.eq.s32.totalorder %s24, 0
      %p44 = por %p42, %p43
      %p45 = scmp.ne.s32.totalorder %s34, %s37
      %p46 = scmp.eq.s32.totalorder %s29, 1
      %p47 = por %p45, %p46
      %p48 = scmp.ne.s32.totalorder %s37, %s38
      %p49 = scmp.eq.s32.totalorder %s29, 0
      %p50 = por %p48, %p49
      %p51 = scmp.ne.s32.totalorder %s37, %s38
      %p52 = scmp.eq.s32.totalorder %s30, 1
      %p53 = por %p51, %p52
      %p55 = scmp.ne.s32.totalorder %s38, %s54
      %p56 = scmp.eq.s32.totalorder %s30, 0
      %p57 = por %p55, %p56
      %s59 = sadd.s32 %s58, 1
      %p62 = scmp.eq.s32.totalorder %s24, 1
      %p63 = scmp.ne.s32.totalorder %s58, %s60
      %p64 = scmp.eq.s32.totalorder %s24, 0
      %p65 = por %p63, %p64
      %p66 = scmp.ne.s32.totalorder %s58, %s60
      %p67 = scmp.eq.s32.totalorder %s29, 1
      %p68 = por %p66, %p67
      %p69 = scmp.ne.s32.totalorder %s60, %s61
      %p70 = scmp.eq.s32.totalorder %s29, 0
      %p71 = por %p69, %p70
      %p72 = scmp.ne.s32.totalorder %s60, %s61
      %p73 = scmp.eq.s32.totalorder %s30, 1
      %p74 = por %p72, %p73
      %p76 = scmp.ne.s32.totalorder %s61, %s75
      %p77 = scmp.eq.s32.totalorder %s30, 0
      %p78 = por %p76, %p77
      %s80 = sadd.s32 %s79, 1
      %p83 = scmp.eq.s32.totalorder %s24, 1
      %p84 = scmp.ne.s32.totalorder %s79, %s81
      %p85 = scmp.eq.s32.totalorder %s24, 0
      %p86 = por %p84, %p85
      %p87 = scmp.ne.s32.totalorder %s79, %s81
      %p88 = scmp.eq.s32.totalorder %s29, 1
      %p89 = por %p87, %p88
      %p90 = scmp.ne.s32.totalorder %s81, %s82
      %p91 = scmp.eq.s32.totalorder %s29, 0
      %p92 = por %p90, %p91
      %p93 = scmp.ne.s32.totalorder %s81, %s82
      %p94 = scmp.eq.s32.totalorder %s30, 1
      %p95 = por %p93, %p94
      %p97 = scmp.ne.s32.totalorder %s82, %s96
      %p98 = scmp.eq.s32.totalorder %s30, 0
      %p99 = por %p97, %p98
      %s101 = sadd.s32 %s100, 1
      %p104 = scmp.eq.s32.totalorder %s24, 1
      %p105 = scmp.ne.s32.totalorder %s100, %s102
      %p106 = scmp.eq.s32.totalorder %s24, 0
      %p107 = por %p105, %p106
      %p108 = scmp.ne.s32.totalorder %s100, %s102
      %p109 = scmp.eq.s32.totalorder %s29, 1
      %p110 = por %p108, %p109
      %p111 = scmp.ne.s32.totalorder %s102, %s103
      %p112 = scmp.eq.s32.totalorder %s29, 0
      %p113 = por %p111, %p112
      %p114 = scmp.ne.s32.totalorder %s102, %s103
      %p115 = scmp.eq.s32.totalorder %s30, 1
      %p116 = por %p114, %p115
      %p118 = scmp.ne.s32.totalorder %s103, %s117
      %p119 = scmp.eq.s32.totalorder %s30, 0
      %p120 = por %p118, %p119
      %s122 = sadd.s32 %s121, 1
      %p125 = scmp.eq.s32.totalorder %s24, 1
      %p126 = scmp.ne.s32.totalorder %s121, %s123
      %p127 = scmp.eq.s32.totalorder %s24, 0
      %p128 = por %p126, %p127
      %p129 = scmp.ne.s32.totalorder %s121, %s123
      %p130 = scmp.eq.s32.totalorder %s29, 1
      %p131 = por %p129, %p130
      %p132 = scmp.ne.s32.totalorder %s123, %s124
      %p133 = scmp.eq.s32.totalorder %s29, 0
      %p134 = por %p132, %p133
      %p135 = scmp.ne.s32.totalorder %s123, %s124
      %p136 = scmp.eq.s32.totalorder %s30, 1
      %p137 = por %p135, %p136
      %p139 = scmp.ne.s32.totalorder %s124, %s138
      %p140 = scmp.eq.s32.totalorder %s30, 0
      %p141 = por %p139, %p140
      %s143 = sadd.s32 %s142, 1
      %p146 = scmp.eq.s32.totalorder %s24, 1
      %p147 = scmp.ne.s32.totalorder %s142, %s144
      %p148 = scmp.eq.s32.totalorder %s24, 0
      %p149 = por %p147, %p148
      %p150 = scmp.ne.s32.totalorder %s142, %s144
      %p151 = scmp.eq.s32.totalorder %s29, 1
      %p152 = por %p150, %p151
      %p153 = scmp.ne.s32.totalorder %s144, %s145
      %p154 = scmp.eq.s32.totalorder %s29, 0
      %p155 = por %p153, %p154
      %p156 = scmp.ne.s32.totalorder %s144, %s145
      %p157 = scmp.eq.s32.totalorder %s30, 1
      %p158 = por %p156, %p157
      %p160 = scmp.ne.s32.totalorder %s145, %s159
      %p161 = scmp.eq.s32.totalorder %s30, 0
      %p162 = por %p160, %p161
      %s164 = sadd.s32 %s163, 1
      %p167 = scmp.eq.s32.totalorder %s24, 1
      %p168 = scmp.ne.s32.totalorder %s163, %s165
      %p169 = scmp.eq.s32.totalorder %s24, 0
      %p170 = por %p168, %p169
      %p171 = scmp.ne.s32.totalorder %s163, %s165
      %p172 = scmp.eq.s32.totalorder %s29, 1
      %p173 = por %p171, %p172
      %p174 = scmp.ne.s32.totalorder %s165, %s166
      %p175 = scmp.eq.s32.totalorder %s29, 0
      %p176 = por %p174, %p175
      %p177 = scmp.ne.s32.totalorder %s165, %s166
      %p178 = scmp.eq.s32.totalorder %s30, 1
      %p179 = por %p177, %p178
      %p181 = scmp.ne.s32.totalorder %s166, %s180
      %p182 = scmp.eq.s32.totalorder %s30, 0
      %p183 = por %p181, %p182
      %s185 = sadd.s32 %s184, 1
      %p188 = scmp.eq.s32.totalorder %s24, 1
      %p189 = scmp.ne.s32.totalorder %s184, %s186
      %p190 = scmp.eq.s32.totalorder %s24, 0
      %p191 = por %p189, %p190
      %p192 = scmp.ne.s32.totalorder %s184, %s186
      %p193 = scmp.eq.s32.totalorder %s29, 1
      %p194 = por %p192, %p193
      %p195 = scmp.ne.s32.totalorder %s186, %s187
      %p196 = scmp.eq.s32.totalorder %s29, 0
      %p197 = por %p195, %p196
      %p198 = scmp.ne.s32.totalorder %s186, %s187
      %p199 = scmp.eq.s32.totalorder %s30, 1
      %p200 = por %p198, %p199
      %p202 = scmp.ne.s32.totalorder %s187, %s201
      %p203 = scmp.eq.s32.totalorder %s30, 0
      %p204 = por %p202, %p203
      %s206 = sadd.s32 %s205, 1
      %p209 = scmp.eq.s32.totalorder %s24, 1
      %p210 = scmp.ne.s32.totalorder %s205, %s207
      %p211 = scmp.eq.s32.totalorder %s24, 0
      %p212 = por %p210, %p211
      %p213 = scmp.ne.s32.totalorder %s205, %s207
      %p214 = scmp.eq.s32.totalorder %s29, 1
      %p215 = por %p213, %p214
      %p216 = scmp.ne.s32.totalorder %s207, %s208
      %p217 = scmp.eq.s32.totalorder %s29, 0
      %p218 = por %p216, %p217
      %p219 = scmp.ne.s32.totalorder %s207, %s208
      %p220 = scmp.eq.s32.totalorder %s30, 1
      %p221 = por %p219, %p220
      %p223 = scmp.ne.s32.totalorder %s208, %s222
      %p224 = scmp.eq.s32.totalorder %s30, 0
      %p225 = por %p223, %p224
      %s227 = sadd.s32 %s226, 1
      %p230 = scmp.eq.s32.totalorder %s24, 1
      %p231 = scmp.ne.s32.totalorder %s226, %s228
      %p232 = scmp.eq.s32.totalorder %s24, 0
      %p233 = por %p231, %p232
      %p234 = scmp.ne.s32.totalorder %s226, %s228
      %p235 = scmp.eq.s32.totalorder %s29, 1
      %p236 = por %p234, %p235
      %p237 = scmp.ne.s32.totalorder %s228, %s229
      %p238 = scmp.eq.s32.totalorder %s29, 0
      %p239 = por %p237, %p238
      %p240 = scmp.ne.s32.totalorder %s228, %s229
      %p241 = scmp.eq.s32.totalorder %s30, 1
      %p242 = por %p240, %p241
      %p244 = scmp.ne.s32.totalorder %s229, %s243
      %p245 = scmp.eq.s32.totalorder %s30, 0
      %p246 = por %p244, %p245
      %s248 = sadd.s32 %s247, 1
      %p251 = scmp.eq.s32.totalorder %s24, 1
      %p252 = scmp.ne.s32.totalorder %s247, %s249
      %p253 = scmp.eq.s32.totalorder %s24, 0
      %p254 = por %p252, %p253
      %p255 = scmp.ne.s32.totalorder %s247, %s249
      %p256 = scmp.eq.s32.totalorder %s29, 1
      %p257 = por %p255, %p256
      %p258 = scmp.ne.s32.totalorder %s249, %s250
      %p259 = scmp.eq.s32.totalorder %s29, 0
      %p260 = por %p258, %p259
      %p261 = scmp.ne.s32.totalorder %s249, %s250
      %p262 = scmp.eq.s32.totalorder %s30, 1
      %p263 = por %p261, %p262
      %p265 = scmp.ne.s32.totalorder %s250, %s264
      %p266 = scmp.eq.s32.totalorder %s30, 0
      %p267 = por %p265, %p266
      %s269 = sadd.s32 %s268, 1
      %p272 = scmp.eq.s32.totalorder %s24, 1
      %p273 = scmp.ne.s32.totalorder %s268, %s270
      %p274 = scmp.eq.s32.totalorder %s24, 0
      %p275 = por %p273, %p274
      %p276 = scmp.ne.s32.totalorder %s268, %s270
      %p277 = scmp.eq.s32.totalorder %s29, 1
      %p278 = por %p276, %p277
      %p279 = scmp.ne.s32.totalorder %s270, %s271
      %p280 = scmp.eq.s32.totalorder %s29, 0
      %p281 = por %p279, %p280
      %p282 = scmp.ne.s32.totalorder %s270, %s271
      %p283 = scmp.eq.s32.totalorder %s30, 1
      %p284 = por %p282, %p283
      %p286 = scmp.ne.s32.totalorder %s271, %s285
      %p287 = scmp.eq.s32.totalorder %s30, 0
      %p288 = por %p286, %p287
      %s290 = sadd.s32 %s289, 1
      %p293 = scmp.eq.s32.totalorder %s24, 1
      %p294 = scmp.ne.s32.totalorder %s289, %s291
      %p295 = scmp.eq.s32.totalorder %s24, 0
      %p296 = por %p294, %p295
      %p297 = scmp.ne.s32.totalorder %s289, %s291
      %p298 = scmp.eq.s32.totalorder %s29, 1
      %p299 = por %p297, %p298
      %p300 = scmp.ne.s32.totalorder %s291, %s292
      %p301 = scmp.eq.s32.totalorder %s29, 0
      %p302 = por %p300, %p301
      %p303 = scmp.ne.s32.totalorder %s291, %s292
      %p304 = scmp.eq.s32.totalorder %s30, 1
      %p305 = por %p303, %p304
      %p307 = scmp.ne.s32.totalorder %s292, %s306
      %p308 = scmp.eq.s32.totalorder %s30, 0
      %p309 = por %p307, %p308
      %s311 = sadd.s32 %s310, 1
      %p314 = scmp.eq.s32.totalorder %s24, 1
      %p315 = scmp.ne.s32.totalorder %s310, %s312
      %p316 = scmp.eq.s32.totalorder %s24, 0
      %p317 = por %p315, %p316
      %p318 = scmp.ne.s32.totalorder %s310, %s312
      %p319 = scmp.eq.s32.totalorder %s29, 1
      %p320 = por %p318, %p319
      %p321 = scmp.ne.s32.totalorder %s312, %s313
      %p322 = scmp.eq.s32.totalorder %s29, 0
      %p323 = por %p321, %p322
      %p324 = scmp.ne.s32.totalorder %s312, %s313
      %p325 = scmp.eq.s32.totalorder %s30, 1
      %p326 = por %p324, %p325
      %p328 = scmp.ne.s32.totalorder %s313, %s327
      %p329 = scmp.eq.s32.totalorder %s30, 0
      %p330 = por %p328, %p329
      %s332 = sadd.s32 %s331, 1
      %p335 = scmp.eq.s32.totalorder %s24, 1
      %p336 = scmp.ne.s32.totalorder %s331, %s333
      %p337 = scmp.eq.s32.totalorder %s24, 0
      %p338 = por %p336, %p337
      %p339 = scmp.ne.s32.totalorder %s331, %s333
      %p340 = scmp.eq.s32.totalorder %s29, 1
      %p341 = por %p339, %p340
      %p342 = scmp.ne.s32.totalorder %s333, %s334
      %p343 = scmp.eq.s32.totalorder %s29, 0
      %p344 = por %p342, %p343
      %p345 = scmp.ne.s32.totalorder %s333, %s334
      %p346 = scmp.eq.s32.totalorder %s30, 1
      %p347 = por %p345, %p346
      %p349 = scmp.ne.s32.totalorder %s334, %s348
      %p350 = scmp.eq.s32.totalorder %s30, 0
      %p351 = por %p349, %p350
      %s352 = ssub.s32 %s24, %s31
      %p353 = scmp.eq.s32.totalorder %s352, 0
      %s355 = sadd.s32 %s354, 1
      %s356 = scalar_select %p353, %s354, %s355
      %p359 = pneg %p353
      %p360 = scmp.eq.s32.totalorder %s24, 1
      %p361 = por %p359, %p360
      %p362 = scmp.ne.s32.totalorder %s354, %s357
      %p363 = scmp.eq.s32.totalorder %s24, 0
      %p364 = por %p362, %p363
      %p365 = scmp.ne.s32.totalorder %s354, %s357
      %p366 = scmp.eq.s32.totalorder %s29, 1
      %p367 = por %p365, %p366
      %p368 = scmp.ne.s32.totalorder %s357, %s358
      %p369 = scmp.eq.s32.totalorder %s29, 0
      %p370 = por %p368, %p369
      %p371 = scmp.ne.s32.totalorder %s357, %s358
      %p372 = scmp.eq.s32.totalorder %s30, 1
      %p373 = por %p371, %p372
      %p375 = scmp.ne.s32.totalorder %s358, %s374
      %p376 = scmp.eq.s32.totalorder %s30, 0
      %p377 = por %p375, %p376
      %p378 = scmp.le.s32.totalorder 1, %s24
      %p379 = scmp.lt.s32.totalorder %s24, 3
      %p380 = pnand %p378, %p379
      %p381 = pneg %p380
      // Predicated region
      $region9: #{forward.2} parent=5 // pred_check
        _
      $region10: #{forward.2} parent=5 // pred_check_branch
        %383 = sbr.rel (%p380) target = $region12
      $region11: #{forward.2} parent=5 // pred_region
        %s384 = ssub.s32 %s24, 1
        // Predicated region
        $region13: #{forward.2} parent=11 // pred_check
          %p385 = pneg %p71
        $region14: #{forward.2} parent=11 // pred_check_branch
          %387 = sbr.rel (%p385) target = $region16
        $region15: #{forward.2} parent=11 // pred_region
          %389 = vsyncadd [#allocation8], 0
          %s390 = sshll.u32 %s1, 4
          %s391 = int_to_ptr.hbm [resolvable:$true] %s390
          %s392 = sshll.u32 [#allocation7], 4
          %s393 = int_to_ptr.vmem [resolvable:$true] %s392
          %398 = dma.hbm_to_vmem [thread:$0]  %s391, 2048, %s393, [#allocation8], 128, 128, 8
        $region16: #{forward.2} parent=11 // pred_fallthru
          _
        // Predicated region
        $region17: #{forward.2} parent=11 // pred_check
          %p399 = pneg %p92
        $region18: #{forward.2} parent=11 // pred_check_branch
          %401 = sbr.rel (%p399) target = $region20
        $region19: #{forward.2} parent=11 // pred_region
          _
        $region20: #{forward.2} parent=11 // pred_fallthru
          _
        // Predicated region
        $region21: #{forward.2} parent=11 // pred_check
          %p402 = pneg %p113
        $region22: #{forward.2} parent=11 // pred_check_branch
          %404 = sbr.rel (%p402) target = $region24
        $region23: #{forward.2} parent=11 // pred_region
          _
        $region24: #{forward.2} parent=11 // pred_fallthru
          _
        // Predicated region
        $region25: #{forward.2} parent=11 // pred_check
          %p405 = pneg %p134
        $region26: #{forward.2} parent=11 // pred_check_branch
          %407 = sbr.rel (%p405) target = $region28
        $region27: #{forward.2} parent=11 // pred_region
          _
        $region28: #{forward.2} parent=11 // pred_fallthru
          _
        // Predicated region
        $region29: #{forward.2} parent=11 // pred_check
          %p408 = pneg %p155
        $region30: #{forward.2} parent=11 // pred_check_branch
          %410 = sbr.rel (%p408) target = $region32
        $region31: #{forward.2} parent=11 // pred_region
          _
        $region32: #{forward.2} parent=11 // pred_fallthru
          _
        // Predicated region
        $region33: #{forward.2} parent=11 // pred_check
          %p411 = pneg %p176
        $region34: #{forward.2} parent=11 // pred_check_branch
          %413 = sbr.rel (%p411) target = $region36
        $region35: #{forward.2} parent=11 // pred_region
          _
        $region36: #{forward.2} parent=11 // pred_fallthru
          _
        // Predicated region
        $region37: #{forward.2} parent=11 // pred_check
          %p414 = pneg %p197
        $region38: #{forward.2} parent=11 // pred_check_branch
          %416 = sbr.rel (%p414) target = $region40
        $region39: #{forward.2} parent=11 // pred_region
          _
        $region40: #{forward.2} parent=11 // pred_fallthru
          _
        // Predicated region
        $region41: #{forward.2} parent=11 // pred_check
          %p417 = pneg %p218
        $region42: #{forward.2} parent=11 // pred_check_branch
          %419 = sbr.rel (%p417) target = $region44
        $region43: #{forward.2} parent=11 // pred_region
          _
        $region44: #{forward.2} parent=11 // pred_fallthru
          _
        // Predicated region
        $region45: #{forward.2} parent=11 // pred_check
          %p420 = pneg %p239
        $region46: #{forward.2} parent=11 // pred_check_branch
          %422 = sbr.rel (%p420) target = $region48
        $region47: #{forward.2} parent=11 // pred_region
          _
        $region48: #{forward.2} parent=11 // pred_fallthru
          _
        // Predicated region
        $region49: #{forward.2} parent=11 // pred_check
          %p423 = pneg %p260
        $region50: #{forward.2} parent=11 // pred_check_branch
          %425 = sbr.rel (%p423) target = $region52
        $region51: #{forward.2} parent=11 // pred_region
          _
        $region52: #{forward.2} parent=11 // pred_fallthru
          _
        // Predicated region
        $region53: #{forward.2} parent=11 // pred_check
          %p426 = pneg %p281
        $region54: #{forward.2} parent=11 // pred_check_branch
          %428 = sbr.rel (%p426) target = $region56
        $region55: #{forward.2} parent=11 // pred_region
          _
        $region56: #{forward.2} parent=11 // pred_fallthru
          _
        // Predicated region
        $region57: #{forward.2} parent=11 // pred_check
          %p429 = pneg %p302
        $region58: #{forward.2} parent=11 // pred_check_branch
          %431 = sbr.rel (%p429) target = $region60
        $region59: #{forward.2} parent=11 // pred_region
          _
        $region60: #{forward.2} parent=11 // pred_fallthru
          _
        // Predicated region
        $region61: #{forward.2} parent=11 // pred_check
          %p432 = pneg %p323
        $region62: #{forward.2} parent=11 // pred_check_branch
          %434 = sbr.rel (%p432) target = $region64
        $region63: #{forward.2} parent=11 // pred_region
          _
        $region64: #{forward.2} parent=11 // pred_fallthru
          _
        // Predicated region
        $region65: #{forward.2} parent=11 // pred_check
          %p435 = pneg %p344
        $region66: #{forward.2} parent=11 // pred_check_branch
          %437 = sbr.rel (%p435) target = $region68
        $region67: #{forward.2} parent=11 // pred_region
          _
        $region68: #{forward.2} parent=11 // pred_fallthru
          _
      $region12: #{forward.2} parent=5 // pred_fallthru
        _
      %p438 = scmp.lt.s32.totalorder %s24, 2
      // Predicated region
      $region69: #{forward.2} parent=5 // pred_check
        %p439 = pneg %p438
      $region70: #{forward.2} parent=5 // pred_check_branch
        %441 = sbr.rel (%p439) target = $region72
      $region71: #{forward.2} parent=5 // pred_region
        // Predicated region
        $region73: #{forward.2} parent=71 // pred_check
          %p442 = pneg %p44
        $region74: #{forward.2} parent=71 // pred_check_branch
          %444 = sbr.rel (%p442) target = $region76
        $region75: #{forward.2} parent=71 // pred_region
          %p445 = scmp.lt.s32.totalorder %s24, 1
          %s446 = scalar_select %p445, %s24, 1
          %s447 = smul.addr %s446, 26
          %s448 = smul.addr %s447, 8
          %s449 = scalar_lea.vmem %s0, %s448
        $region76: #{forward.2} parent=71 // pred_fallthru
          _
      $region72: #{forward.2} parent=5 // pred_fallthru
        _
      %p450 = scmp.le.s32.totalorder 1, %s24
      %p451 = scmp.lt.s32.totalorder %s24, 3
      %p452 = pnand %p450, %p451
      %p453 = pneg %p452
      // Predicated region
      $region77: #{forward.2} parent=5 // pred_check
        _
      $region78: #{forward.2} parent=5 // pred_check_branch
        %455 = sbr.rel (%p452) target = $region80
      $region79: #{forward.2} parent=5 // pred_region
        %s456 = ssub.s32 %s24, 1
        // Predicated region
        $region81: #{forward.2} parent=79 // pred_check
          %p457 = pneg %p71
        $region82: #{forward.2} parent=79 // pred_check_branch
          %459 = sbr.rel (%p457) target = $region84
        $region83: #{forward.2} parent=79 // pred_region
          %461 = dma.done [#allocation8], 2048
        $region84: #{forward.2} parent=79 // pred_fallthru
          _
        %p462 = scmp.lt.s32.totalorder %s29, 1
        %s463 = scalar_select %p462, %s29, 1
        %s464 = smul.addr %s463, 26
        %s465 = smul.addr %s464, 8
        %s466 = scalar_lea.vmem %s0, %s465
        %p467 = pneg %p50
        %p468 = pneg %p47
        %p469 = pneg %p71
        %p470 = pneg %p68
        %p471 = pneg %p92
        %p472 = pneg %p89
        %p473 = pneg %p113
        %p474 = pneg %p110
        %p475 = pneg %p134
        %p476 = pneg %p131
        %p477 = pneg %p155
        %p478 = pneg %p152
        %p479 = pneg %p176
        %p480 = pneg %p173
        %p481 = pneg %p197
        %p482 = pneg %p194
        %p483 = pneg %p218
        %p484 = pneg %p215
        %p485 = pneg %p239
        %p486 = pneg %p236
        %p487 = pneg %p260
        %p488 = pneg %p257
        %p489 = pneg %p281
        %p490 = pneg %p278
        %p491 = pneg %p302
        %p492 = pneg %p299
        %p493 = pneg %p323
        %p494 = pneg %p320
        %p495 = pneg %p344
        %p496 = pneg %p341
        %p497 = pneg %p370
        %p498 = pneg %p367
        %p499 = scmp.lt.s32.totalorder %s29, 1
        %s500 = scalar_select %p499, %s29, 1
        %s501 = smul.addr %s500, 6
        %s502 = smul.addr %s501, 8
        %s503 = scalar_lea.vmem %s15, %s502
        %p504 = scmp.lt.s32.totalorder %s29, 1
        %s505 = scalar_select %p504, %s29, 1
        %s506 = smul.addr %s505, 26
        %s507 = smul.addr %s506, 8
        %s508 = scalar_lea.vmem %s0, %s507
        %p509 = scmp.lt.s32.totalorder %s29, 1
        %s510 = scalar_select %p509, %s29, 1
        %s511 = smul.addr %s510, 6
        %s512 = smul.addr %s511, 8
        %s513 = scalar_lea.vmem %s15, %s512
        %514 = vst [vmem:[#allocation2] sm:$0xff] 0.0
        %vm515 = vcmask 31744
        %516 = vst.msk [vmem:[#allocation2 + $0x8] sm:$0xff] %vm515, 0.0
        %517 = vst [vmem:[#allocation2 + $0x10] sm:$0xff] 0.0
        %518 = vst.msk [vmem:[#allocation2 + $0x18] sm:$0xff] %vm515, 0.0
        %519 = vst [vmem:[#allocation2 + $0x20] sm:$0xff] 0.0
        %520 = vst.msk [vmem:[#allocation2 + $0x28] sm:$0xff] %vm515, 0.0
        %521 = vst [vmem:[#allocation2 + $0x30] sm:$0xff] 0.0
        %522 = vst.msk [vmem:[#allocation2 + $0x38] sm:$0xff] %vm515, 0.0
        %523 = vst [vmem:[#allocation2 + $0x40] sm:$0xff] 0.0
        %524 = vst.msk [vmem:[#allocation2 + $0x48] sm:$0xff] %vm515, 0.0
        %525 = vst [vmem:[#allocation2 + $0x50] sm:$0xff] 0.0
        %526 = vst.msk [vmem:[#allocation2 + $0x58] sm:$0xff] %vm515, 0.0
        %527 = vst [vmem:[#allocation2 + $0x60] sm:$0xff] 0.0
        %528 = vst.msk [vmem:[#allocation2 + $0x68] sm:$0xff] %vm515, 0.0
        %529 = vst [vmem:[#allocation2 + $0x70] sm:$0xff] 0.0
        %530 = vst.msk [vmem:[#allocation2 + $0x78] sm:$0xff] %vm515, 0.0
        %531 = vst [vmem:[#allocation2 + $0x80] sm:$0xff] 0.0
        %532 = vst.msk [vmem:[#allocation2 + $0x88] sm:$0xff] %vm515, 0.0
        %533 = vst [vmem:[#allocation2 + $0x90] sm:$0xff] 0.0
        %534 = vst.msk [vmem:[#allocation2 + $0x98] sm:$0xff] %vm515, 0.0
        %535 = vst [vmem:[#allocation2 + $0xa0] sm:$0xff] 0.0
        %536 = vst.msk [vmem:[#allocation2 + $0xa8] sm:$0xff] %vm515, 0.0
        %537 = vst [vmem:[#allocation2 + $0xb0] sm:$0xff] 0.0
        %538 = vst.msk [vmem:[#allocation2 + $0xb8] sm:$0xff] %vm515, 0.0
        %539 = vst [vmem:[#allocation2 + $0xc0] sm:$0xff] 0.0
        %540 = vst.msk [vmem:[#allocation2 + $0xc8] sm:$0xff] %vm515, 0.0
        %541 = vst [vmem:[#allocation2 + $0xd0] sm:$0xff] 0.0
        %542 = vst.msk [vmem:[#allocation2 + $0xd8] sm:$0xff] %vm515, 0.0
        %543 = vst [vmem:[#allocation2 + $0xe0] sm:$0xff] 0.0
        %544 = vst.msk [vmem:[#allocation2 + $0xe8] sm:$0xff] %vm515, 0.0
        %545 = vst [vmem:[#allocation2 + $0xf0] sm:$0xff] 0.0
        %546 = vst.msk [vmem:[#allocation2 + $0xf8] sm:$0xff] %vm515, 0.0
        %547 = vst [vmem:[#allocation2 + $0x100] sm:$0xff] 0.0
        %548 = vst.msk [vmem:[#allocation2 + $0x108] sm:$0xff] %vm515, 0.0
        %549 = vst [vmem:[#allocation2 + $0x110] sm:$0xff] 0.0
        %550 = vst.msk [vmem:[#allocation2 + $0x118] sm:$0xff] %vm515, 0.0
        %551 = vst [vmem:[#allocation2 + $0x120] sm:$0xff] 0.0
        %552 = vst.msk [vmem:[#allocation2 + $0x128] sm:$0xff] %vm515, 0.0
        %553 = vst [vmem:[#allocation2 + $0x130] sm:$0xff] 0.0
        %554 = vst.msk [vmem:[#allocation2 + $0x138] sm:$0xff] %vm515, 0.0
        %555 = vst [vmem:[#allocation2 + $0x140] sm:$0xff] 0.0
        %556 = vst.msk [vmem:[#allocation2 + $0x148] sm:$0xff] %vm515, 0.0
        %557 = vst [vmem:[#allocation2 + $0x150] sm:$0xff] 0.0
        %558 = vst.msk [vmem:[#allocation2 + $0x158] sm:$0xff] %vm515, 0.0
        %559 = vst [vmem:[#allocation2 + $0x160] sm:$0xff] 0.0
        %560 = vst.msk [vmem:[#allocation2 + $0x168] sm:$0xff] %vm515, 0.0
        %561 = vst [vmem:[#allocation2 + $0x170] sm:$0xff] 0.0
        %562 = vst.msk [vmem:[#allocation2 + $0x178] sm:$0xff] %vm515, 0.0
        %563 = vst [vmem:[#allocation2 + $0x180] sm:$0xff] 0.0
        %564 = vst.msk [vmem:[#allocation2 + $0x188] sm:$0xff] %vm515, 0.0
        %565 = vst [vmem:[#allocation2 + $0x190] sm:$0xff] 0.0
        %566 = vst.msk [vmem:[#allocation2 + $0x198] sm:$0xff] %vm515, 0.0
        %567 = vst [vmem:[#allocation2 + $0x1a0] sm:$0xff] 0.0
        %568 = vst.msk [vmem:[#allocation2 + $0x1a8] sm:$0xff] %vm515, 0.0
        %569 = vst [vmem:[#allocation2 + $0x1b0] sm:$0xff] 0.0
        %570 = vst.msk [vmem:[#allocation2 + $0x1b8] sm:$0xff] %vm515, 0.0
        %571 = vst [vmem:[#allocation2 + $0x1c0] sm:$0xff] 0.0
        %572 = vst.msk [vmem:[#allocation2 + $0x1c8] sm:$0xff] %vm515, 0.0
        %573 = vst [vmem:[#allocation2 + $0x1d0] sm:$0xff] 0.0
        %574 = vst.msk [vmem:[#allocation2 + $0x1d8] sm:$0xff] %vm515, 0.0
        %575 = vst [vmem:[#allocation2 + $0x1e0] sm:$0xff] 0.0
        %576 = vst.msk [vmem:[#allocation2 + $0x1e8] sm:$0xff] %vm515, 0.0
        %577 = vst [vmem:[#allocation2 + $0x1f0] sm:$0xff] 0.0
        %578 = vst.msk [vmem:[#allocation2 + $0x1f8] sm:$0xff] %vm515, 0.0
        %579 = vst [vmem:[#allocation2 + $0x200] sm:$0xff] 0.0
        %580 = vst.msk [vmem:[#allocation2 + $0x208] sm:$0xff] %vm515, 0.0
        %581 = vst [vmem:[#allocation2 + $0x210] sm:$0xff] 0.0
        %582 = vst.msk [vmem:[#allocation2 + $0x218] sm:$0xff] %vm515, 0.0
        %583 = vst [vmem:[#allocation2 + $0x220] sm:$0xff] 0.0
        %584 = vst.msk [vmem:[#allocation2 + $0x228] sm:$0xff] %vm515, 0.0
        %585 = vst [vmem:[#allocation2 + $0x230] sm:$0xff] 0.0
        %586 = vst.msk [vmem:[#allocation2 + $0x238] sm:$0xff] %vm515, 0.0
        %587 = vst [vmem:[#allocation2 + $0x240] sm:$0xff] 0.0
        %588 = vst.msk [vmem:[#allocation2 + $0x248] sm:$0xff] %vm515, 0.0
        %589 = vst [vmem:[#allocation2 + $0x250] sm:$0xff] 0.0
        %590 = vst.msk [vmem:[#allocation2 + $0x258] sm:$0xff] %vm515, 0.0
        %591 = vst [vmem:[#allocation2 + $0x260] sm:$0xff] 0.0
        %592 = vst.msk [vmem:[#allocation2 + $0x268] sm:$0xff] %vm515, 0.0
        %593 = vst [vmem:[#allocation2 + $0x270] sm:$0xff] 0.0
        %594 = vst.msk [vmem:[#allocation2 + $0x278] sm:$0xff] %vm515, 0.0
        %595 = vst [vmem:[#allocation2 + $0x280] sm:$0xff] 0.0
        %596 = vst.msk [vmem:[#allocation2 + $0x288] sm:$0xff] %vm515, 0.0
        %597 = vst [vmem:[#allocation2 + $0x290] sm:$0xff] 0.0
        %598 = vst.msk [vmem:[#allocation2 + $0x298] sm:$0xff] %vm515, 0.0
        %599 = vst [vmem:[#allocation2 + $0x2a0] sm:$0xff] 0.0
        %600 = vst.msk [vmem:[#allocation2 + $0x2a8] sm:$0xff] %vm515, 0.0
        %601 = vst [vmem:[#allocation2 + $0x2b0] sm:$0xff] 0.0
        %602 = vst.msk [vmem:[#allocation2 + $0x2b8] sm:$0xff] %vm515, 0.0
        %603 = vst [vmem:[#allocation2 + $0x2c0] sm:$0xff] 0.0
        %604 = vst.msk [vmem:[#allocation2 + $0x2c8] sm:$0xff] %vm515, 0.0
        %605 = vst [vmem:[#allocation2 + $0x2d0] sm:$0xff] 0.0
        %606 = vst.msk [vmem:[#allocation2 + $0x2d8] sm:$0xff] %vm515, 0.0
        %607 = vst [vmem:[#allocation2 + $0x2e0] sm:$0xff] 0.0
        %608 = vst.msk [vmem:[#allocation2 + $0x2e8] sm:$0xff] %vm515, 0.0
        %609 = vst [vmem:[#allocation2 + $0x2f0] sm:$0xff] 0.0
        %610 = vst.msk [vmem:[#allocation2 + $0x2f8] sm:$0xff] %vm515, 0.0
        %611 = vst [vmem:[#allocation2 + $0x300] sm:$0xff] 0.0
        %612 = vst.msk [vmem:[#allocation2 + $0x308] sm:$0xff] %vm515, 0.0
        %613 = vst [vmem:[#allocation2 + $0x310] sm:$0xff] 0.0
        %614 = vst.msk [vmem:[#allocation2 + $0x318] sm:$0xff] %vm515, 0.0
        %615 = vst [vmem:[#allocation2 + $0x320] sm:$0xff] 0.0
        %616 = vst.msk [vmem:[#allocation2 + $0x328] sm:$0xff] %vm515, 0.0
        %617 = vst [vmem:[#allocation2 + $0x330] sm:$0xff] 0.0
        %618 = vst.msk [vmem:[#allocation2 + $0x338] sm:$0xff] %vm515, 0.0
        %619 = vst [vmem:[#allocation2 + $0x340] sm:$0xff] 0.0
        %620 = vst.msk [vmem:[#allocation2 + $0x348] sm:$0xff] %vm515, 0.0
        %621 = vst [vmem:[#allocation2 + $0x350] sm:$0xff] 0.0
        %622 = vst.msk [vmem:[#allocation2 + $0x358] sm:$0xff] %vm515, 0.0
        %623 = vst [vmem:[#allocation2 + $0x360] sm:$0xff] 0.0
        %624 = vst.msk [vmem:[#allocation2 + $0x368] sm:$0xff] %vm515, 0.0
        %625 = vst [vmem:[#allocation2 + $0x370] sm:$0xff] 0.0
        %626 = vst.msk [vmem:[#allocation2 + $0x378] sm:$0xff] %vm515, 0.0
        %627 = vst [vmem:[#allocation2 + $0x380] sm:$0xff] 0.0
        %628 = vst.msk [vmem:[#allocation2 + $0x388] sm:$0xff] %vm515, 0.0
        %629 = vst [vmem:[#allocation2 + $0x390] sm:$0xff] 0.0
        %630 = vst.msk [vmem:[#allocation2 + $0x398] sm:$0xff] %vm515, 0.0
        %631 = vst [vmem:[#allocation2 + $0x3a0] sm:$0xff] 0.0
        %632 = vst.msk [vmem:[#allocation2 + $0x3a8] sm:$0xff] %vm515, 0.0
        %633 = vst [vmem:[#allocation2 + $0x3b0] sm:$0xff] 0.0
        %634 = vst.msk [vmem:[#allocation2 + $0x3b8] sm:$0xff] %vm515, 0.0
        %635 = vst [vmem:[#allocation2 + $0x3c0] sm:$0xff] 0.0
        %636 = vst.msk [vmem:[#allocation2 + $0x3c8] sm:$0xff] %vm515, 0.0
        %637 = vst [vmem:[#allocation2 + $0x3d0] sm:$0xff] 0.0
        %638 = vst.msk [vmem:[#allocation2 + $0x3d8] sm:$0xff] %vm515, 0.0
        %639 = vst [vmem:[#allocation2 + $0x3e0] sm:$0xff] 0.0
        %640 = vst.msk [vmem:[#allocation2 + $0x3e8] sm:$0xff] %vm515, 0.0
        %641 = vst [vmem:[#allocation2 + $0x3f0] sm:$0xff] 0.0
        %642 = vst.msk [vmem:[#allocation2 + $0x3f8] sm:$0xff] %vm515, 0.0
        %643 = vst [vmem:[#allocation2 + $0x400] sm:$0xff] 0.0
        %644 = vst.msk [vmem:[#allocation2 + $0x408] sm:$0xff] %vm515, 0.0
        %645 = vst [vmem:[#allocation2 + $0x410] sm:$0xff] 0.0
        %646 = vst.msk [vmem:[#allocation2 + $0x418] sm:$0xff] %vm515, 0.0
        %647 = vst [vmem:[#allocation2 + $0x420] sm:$0xff] 0.0
        %648 = vst.msk [vmem:[#allocation2 + $0x428] sm:$0xff] %vm515, 0.0
        %649 = vst [vmem:[#allocation2 + $0x430] sm:$0xff] 0.0
        %650 = vst.msk [vmem:[#allocation2 + $0x438] sm:$0xff] %vm515, 0.0
        %651 = vst [vmem:[#allocation2 + $0x440] sm:$0xff] 0.0
        %652 = vst.msk [vmem:[#allocation2 + $0x448] sm:$0xff] %vm515, 0.0
        %653 = vst [vmem:[#allocation2 + $0x450] sm:$0xff] 0.0
        %654 = vst.msk [vmem:[#allocation2 + $0x458] sm:$0xff] %vm515, 0.0
        %655 = vst [vmem:[#allocation2 + $0x460] sm:$0xff] 0.0
        %656 = vst.msk [vmem:[#allocation2 + $0x468] sm:$0xff] %vm515, 0.0
        %657 = vst [vmem:[#allocation2 + $0x470] sm:$0xff] 0.0
        %658 = vst.msk [vmem:[#allocation2 + $0x478] sm:$0xff] %vm515, 0.0
        %659 = vst [vmem:[#allocation2 + $0x480] sm:$0xff] 0.0
        %660 = vst.msk [vmem:[#allocation2 + $0x488] sm:$0xff] %vm515, 0.0
        %661 = vst [vmem:[#allocation2 + $0x490] sm:$0xff] 0.0
        %662 = vst.msk [vmem:[#allocation2 + $0x498] sm:$0xff] %vm515, 0.0
        %663 = vst [vmem:[#allocation2 + $0x4a0] sm:$0xff] 0.0
        %664 = vst.msk [vmem:[#allocation2 + $0x4a8] sm:$0xff] %vm515, 0.0
        %665 = vst [vmem:[#allocation2 + $0x4b0] sm:$0xff] 0.0
        %666 = vst.msk [vmem:[#allocation2 + $0x4b8] sm:$0xff] %vm515, 0.0
        %667 = vst [vmem:[#allocation2 + $0x4c0] sm:$0xff] 0.0
        %668 = vst.msk [vmem:[#allocation2 + $0x4c8] sm:$0xff] %vm515, 0.0
        %669 = vst [vmem:[#allocation2 + $0x4d0] sm:$0xff] 0.0
        %670 = vst.msk [vmem:[#allocation2 + $0x4d8] sm:$0xff] %vm515, 0.0
        %671 = vst [vmem:[#allocation2 + $0x4e0] sm:$0xff] 0.0
        %672 = vst.msk [vmem:[#allocation2 + $0x4e8] sm:$0xff] %vm515, 0.0
        %673 = vst [vmem:[#allocation2 + $0x4f0] sm:$0xff] 0.0
        %674 = vst.msk [vmem:[#allocation2 + $0x4f8] sm:$0xff] %vm515, 0.0
        %675 = vst [vmem:[#allocation2 + $0x500] sm:$0xff] 0.0
        %676 = vst.msk [vmem:[#allocation2 + $0x508] sm:$0xff] %vm515, 0.0
        %677 = vst [vmem:[#allocation2 + $0x510] sm:$0xff] 0.0
        %678 = vst.msk [vmem:[#allocation2 + $0x518] sm:$0xff] %vm515, 0.0
        %679 = vst [vmem:[#allocation2 + $0x520] sm:$0xff] 0.0
        %680 = vst.msk [vmem:[#allocation2 + $0x528] sm:$0xff] %vm515, 0.0
        %681 = vst [vmem:[#allocation2 + $0x530] sm:$0xff] 0.0
        %682 = vst.msk [vmem:[#allocation2 + $0x538] sm:$0xff] %vm515, 0.0
        %683 = vst [vmem:[#allocation2 + $0x540] sm:$0xff] 0.0
        %684 = vst.msk [vmem:[#allocation2 + $0x548] sm:$0xff] %vm515, 0.0
        %685 = vst [vmem:[#allocation2 + $0x550] sm:$0xff] 0.0
        %686 = vst.msk [vmem:[#allocation2 + $0x558] sm:$0xff] %vm515, 0.0
        %687 = vst [vmem:[#allocation2 + $0x560] sm:$0xff] 0.0
        %688 = vst.msk [vmem:[#allocation2 + $0x568] sm:$0xff] %vm515, 0.0
        %689 = vst [vmem:[#allocation2 + $0x570] sm:$0xff] 0.0
        %690 = vst.msk [vmem:[#allocation2 + $0x578] sm:$0xff] %vm515, 0.0
        %691 = vst [vmem:[#allocation2 + $0x580] sm:$0xff] 0.0
        %692 = vst.msk [vmem:[#allocation2 + $0x588] sm:$0xff] %vm515, 0.0
        %693 = vst [vmem:[#allocation2 + $0x590] sm:$0xff] 0.0
        %694 = vst.msk [vmem:[#allocation2 + $0x598] sm:$0xff] %vm515, 0.0
        %695 = vst [vmem:[#allocation2 + $0x5a0] sm:$0xff] 0.0
        %696 = vst.msk [vmem:[#allocation2 + $0x5a8] sm:$0xff] %vm515, 0.0
        %697 = vst [vmem:[#allocation2 + $0x5b0] sm:$0xff] 0.0
        %698 = vst.msk [vmem:[#allocation2 + $0x5b8] sm:$0xff] %vm515, 0.0
        %699 = vst [vmem:[#allocation2 + $0x5c0] sm:$0xff] 0.0
        %700 = vst.msk [vmem:[#allocation2 + $0x5c8] sm:$0xff] %vm515, 0.0
        %701 = vst [vmem:[#allocation2 + $0x5d0] sm:$0xff] 0.0
        %702 = vst.msk [vmem:[#allocation2 + $0x5d8] sm:$0xff] %vm515, 0.0
        %703 = vst [vmem:[#allocation2 + $0x5e0] sm:$0xff] 0.0
        %704 = vst.msk [vmem:[#allocation2 + $0x5e8] sm:$0xff] %vm515, 0.0
        %705 = vst [vmem:[#allocation2 + $0x5f0] sm:$0xff] 0.0
        %706 = vst.msk [vmem:[#allocation2 + $0x5f8] sm:$0xff] %vm515, 0.0
        %707 = vst [vmem:[#allocation2 + $0x600] sm:$0xff] 0.0
        %708 = vst.msk [vmem:[#allocation2 + $0x608] sm:$0xff] %vm515, 0.0
        %709 = vst [vmem:[#allocation2 + $0x610] sm:$0xff] 0.0
        %710 = vst.msk [vmem:[#allocation2 + $0x618] sm:$0xff] %vm515, 0.0
        %711 = vst [vmem:[#allocation2 + $0x620] sm:$0xff] 0.0
        %712 = vst.msk [vmem:[#allocation2 + $0x628] sm:$0xff] %vm515, 0.0
        %713 = vst [vmem:[#allocation2 + $0x630] sm:$0xff] 0.0
        %714 = vst.msk [vmem:[#allocation2 + $0x638] sm:$0xff] %vm515, 0.0
        %715 = vst [vmem:[#allocation2 + $0x640] sm:$0xff] 0.0
        %716 = vst.msk [vmem:[#allocation2 + $0x648] sm:$0xff] %vm515, 0.0
        %717 = vst [vmem:[#allocation2 + $0x650] sm:$0xff] 0.0
        %718 = vst.msk [vmem:[#allocation2 + $0x658] sm:$0xff] %vm515, 0.0
        %719 = vst [vmem:[#allocation2 + $0x660] sm:$0xff] 0.0
        %720 = vst.msk [vmem:[#allocation2 + $0x668] sm:$0xff] %vm515, 0.0
        %721 = vst [vmem:[#allocation2 + $0x670] sm:$0xff] 0.0
        %722 = vst.msk [vmem:[#allocation2 + $0x678] sm:$0xff] %vm515, 0.0
        %723 = vst [vmem:[#allocation2 + $0x680] sm:$0xff] 0.0
        %724 = vst.msk [vmem:[#allocation2 + $0x688] sm:$0xff] %vm515, 0.0
        %725 = vst [vmem:[#allocation2 + $0x690] sm:$0xff] 0.0
        %726 = vst.msk [vmem:[#allocation2 + $0x698] sm:$0xff] %vm515, 0.0
        %727 = vst [vmem:[#allocation2 + $0x6a0] sm:$0xff] 0.0
        %728 = vst.msk [vmem:[#allocation2 + $0x6a8] sm:$0xff] %vm515, 0.0
        %729 = vst [vmem:[#allocation2 + $0x6b0] sm:$0xff] 0.0
        %730 = vst.msk [vmem:[#allocation2 + $0x6b8] sm:$0xff] %vm515, 0.0
        %731 = vst [vmem:[#allocation2 + $0x6c0] sm:$0xff] 0.0
        %732 = vst.msk [vmem:[#allocation2 + $0x6c8] sm:$0xff] %vm515, 0.0
        %733 = vst [vmem:[#allocation2 + $0x6d0] sm:$0xff] 0.0
        %734 = vst.msk [vmem:[#allocation2 + $0x6d8] sm:$0xff] %vm515, 0.0
        %735 = vst [vmem:[#allocation2 + $0x6e0] sm:$0xff] 0.0
        %736 = vst.msk [vmem:[#allocation2 + $0x6e8] sm:$0xff] %vm515, 0.0
        %737 = vst [vmem:[#allocation2 + $0x6f0] sm:$0xff] 0.0
        %738 = vst.msk [vmem:[#allocation2 + $0x6f8] sm:$0xff] %vm515, 0.0
        %739 = vst [vmem:[#allocation2 + $0x700] sm:$0xff] 0.0
        %740 = vst.msk [vmem:[#allocation2 + $0x708] sm:$0xff] %vm515, 0.0
        %741 = vst [vmem:[#allocation2 + $0x710] sm:$0xff] 0.0
        %742 = vst.msk [vmem:[#allocation2 + $0x718] sm:$0xff] %vm515, 0.0
        %743 = vst [vmem:[#allocation2 + $0x720] sm:$0xff] 0.0
        %744 = vst.msk [vmem:[#allocation2 + $0x728] sm:$0xff] %vm515, 0.0
        %745 = vst [vmem:[#allocation2 + $0x730] sm:$0xff] 0.0
        %746 = vst.msk [vmem:[#allocation2 + $0x738] sm:$0xff] %vm515, 0.0
        %747 = vst [vmem:[#allocation2 + $0x740] sm:$0xff] 0.0
        %748 = vst.msk [vmem:[#allocation2 + $0x748] sm:$0xff] %vm515, 0.0
        %749 = vst [vmem:[#allocation2 + $0x750] sm:$0xff] 0.0
        %750 = vst.msk [vmem:[#allocation2 + $0x758] sm:$0xff] %vm515, 0.0
        %751 = vst [vmem:[#allocation2 + $0x760] sm:$0xff] 0.0
        %752 = vst.msk [vmem:[#allocation2 + $0x768] sm:$0xff] %vm515, 0.0
        %753 = vst [vmem:[#allocation2 + $0x770] sm:$0xff] 0.0
        %754 = vst.msk [vmem:[#allocation2 + $0x778] sm:$0xff] %vm515, 0.0
        %755 = vst [vmem:[#allocation2 + $0x780] sm:$0xff] 0.0
        %756 = vst.msk [vmem:[#allocation2 + $0x788] sm:$0xff] %vm515, 0.0
        %757 = vst [vmem:[#allocation2 + $0x790] sm:$0xff] 0.0
        %758 = vst.msk [vmem:[#allocation2 + $0x798] sm:$0xff] %vm515, 0.0
        %759 = vst [vmem:[#allocation2 + $0x7a0] sm:$0xff] 0.0
        %760 = vst.msk [vmem:[#allocation2 + $0x7a8] sm:$0xff] %vm515, 0.0
        %761 = vst [vmem:[#allocation2 + $0x7b0] sm:$0xff] 0.0
        %762 = vst.msk [vmem:[#allocation2 + $0x7b8] sm:$0xff] %vm515, 0.0
        %763 = vst [vmem:[#allocation2 + $0x7c0] sm:$0xff] 0.0
        %764 = vst.msk [vmem:[#allocation2 + $0x7c8] sm:$0xff] %vm515, 0.0
        %765 = vst [vmem:[#allocation2 + $0x7d0] sm:$0xff] 0.0
        %766 = vst.msk [vmem:[#allocation2 + $0x7d8] sm:$0xff] %vm515, 0.0
        %767 = vst [vmem:[#allocation2 + $0x7e0] sm:$0xff] 0.0
        %768 = vst.msk [vmem:[#allocation2 + $0x7e8] sm:$0xff] %vm515, 0.0
        %769 = vst [vmem:[#allocation2 + $0x7f0] sm:$0xff] 0.0
        %770 = vst.msk [vmem:[#allocation2 + $0x7f8] sm:$0xff] %vm515, 0.0
        %771 = vst [vmem:[#allocation2 + $0x800] sm:$0xff] 0.0
        %772 = vst.msk [vmem:[#allocation2 + $0x808] sm:$0xff] %vm515, 0.0
        %773 = vst [vmem:[#allocation2 + $0x810] sm:$0xff] 0.0
        %774 = vst.msk [vmem:[#allocation2 + $0x818] sm:$0xff] %vm515, 0.0
        %775 = vst [vmem:[#allocation2 + $0x820] sm:$0xff] 0.0
        %776 = vst.msk [vmem:[#allocation2 + $0x828] sm:$0xff] %vm515, 0.0
        %777 = vst [vmem:[#allocation2 + $0x830] sm:$0xff] 0.0
        %778 = vst.msk [vmem:[#allocation2 + $0x838] sm:$0xff] %vm515, 0.0
        %779 = vst [vmem:[#allocation2 + $0x840] sm:$0xff] 0.0
        %780 = vst.msk [vmem:[#allocation2 + $0x848] sm:$0xff] %vm515, 0.0
        %781 = vst [vmem:[#allocation2 + $0x850] sm:$0xff] 0.0
        %782 = vst.msk [vmem:[#allocation2 + $0x858] sm:$0xff] %vm515, 0.0
        %783 = vst [vmem:[#allocation2 + $0x860] sm:$0xff] 0.0
        %784 = vst.msk [vmem:[#allocation2 + $0x868] sm:$0xff] %vm515, 0.0
        %785 = vst [vmem:[#allocation2 + $0x870] sm:$0xff] 0.0
        %786 = vst.msk [vmem:[#allocation2 + $0x878] sm:$0xff] %vm515, 0.0
        %787 = vst [vmem:[#allocation2 + $0x880] sm:$0xff] 0.0
        %788 = vst.msk [vmem:[#allocation2 + $0x888] sm:$0xff] %vm515, 0.0
        %789 = vst [vmem:[#allocation2 + $0x890] sm:$0xff] 0.0
        %790 = vst.msk [vmem:[#allocation2 + $0x898] sm:$0xff] %vm515, 0.0
        %791 = vst [vmem:[#allocation2 + $0x8a0] sm:$0xff] 0.0
        %792 = vst.msk [vmem:[#allocation2 + $0x8a8] sm:$0xff] %vm515, 0.0
        %793 = vst [vmem:[#allocation2 + $0x8b0] sm:$0xff] 0.0
        %794 = vst.msk [vmem:[#allocation2 + $0x8b8] sm:$0xff] %vm515, 0.0
        %795 = vst [vmem:[#allocation2 + $0x8c0] sm:$0xff] 0.0
        %796 = vst.msk [vmem:[#allocation2 + $0x8c8] sm:$0xff] %vm515, 0.0
        %797 = vst [vmem:[#allocation2 + $0x8d0] sm:$0xff] 0.0
        %798 = vst.msk [vmem:[#allocation2 + $0x8d8] sm:$0xff] %vm515, 0.0
        %799 = vst [vmem:[#allocation2 + $0x8e0] sm:$0xff] 0.0
        %800 = vst.msk [vmem:[#allocation2 + $0x8e8] sm:$0xff] %vm515, 0.0
        %801 = vst [vmem:[#allocation2 + $0x8f0] sm:$0xff] 0.0
        %802 = vst.msk [vmem:[#allocation2 + $0x8f8] sm:$0xff] %vm515, 0.0
        %803 = vst [vmem:[#allocation2 + $0x900] sm:$0xff] 0.0
        %804 = vst.msk [vmem:[#allocation2 + $0x908] sm:$0xff] %vm515, 0.0
        %805 = vst [vmem:[#allocation2 + $0x910] sm:$0xff] 0.0
        %806 = vst.msk [vmem:[#allocation2 + $0x918] sm:$0xff] %vm515, 0.0
        %807 = vst [vmem:[#allocation2 + $0x920] sm:$0xff] 0.0
        %808 = vst.msk [vmem:[#allocation2 + $0x928] sm:$0xff] %vm515, 0.0
        %809 = vst [vmem:[#allocation2 + $0x930] sm:$0xff] 0.0
        %810 = vst.msk [vmem:[#allocation2 + $0x938] sm:$0xff] %vm515, 0.0
        %811 = vst [vmem:[#allocation2 + $0x940] sm:$0xff] 0.0
        %812 = vst.msk [vmem:[#allocation2 + $0x948] sm:$0xff] %vm515, 0.0
        %813 = vst [vmem:[#allocation2 + $0x950] sm:$0xff] 0.0
        %814 = vst.msk [vmem:[#allocation2 + $0x958] sm:$0xff] %vm515, 0.0
        %815 = vst [vmem:[#allocation2 + $0x960] sm:$0xff] 0.0
        %816 = vst.msk [vmem:[#allocation2 + $0x968] sm:$0xff] %vm515, 0.0
        %817 = vst [vmem:[#allocation2 + $0x970] sm:$0xff] 0.0
        %818 = vst.msk [vmem:[#allocation2 + $0x978] sm:$0xff] %vm515, 0.0
        %819 = vst [vmem:[#allocation2 + $0x980] sm:$0xff] 0.0
        %820 = vst.msk [vmem:[#allocation2 + $0x988] sm:$0xff] %vm515, 0.0
        %821 = vst [vmem:[#allocation2 + $0x990] sm:$0xff] 0.0
        %822 = vst.msk [vmem:[#allocation2 + $0x998] sm:$0xff] %vm515, 0.0
        %823 = vst [vmem:[#allocation2 + $0x9a0] sm:$0xff] 0.0
        %824 = vst.msk [vmem:[#allocation2 + $0x9a8] sm:$0xff] %vm515, 0.0
        %825 = vst [vmem:[#allocation2 + $0x9b0] sm:$0xff] 0.0
        %826 = vst.msk [vmem:[#allocation2 + $0x9b8] sm:$0xff] %vm515, 0.0
        %827 = vst [vmem:[#allocation2 + $0x9c0] sm:$0xff] 0.0
        %828 = vst.msk [vmem:[#allocation2 + $0x9c8] sm:$0xff] %vm515, 0.0
        %829 = vst [vmem:[#allocation2 + $0x9d0] sm:$0xff] 0.0
        %830 = vst.msk [vmem:[#allocation2 + $0x9d8] sm:$0xff] %vm515, 0.0
        %831 = vst [vmem:[#allocation2 + $0x9e0] sm:$0xff] 0.0
        %832 = vst.msk [vmem:[#allocation2 + $0x9e8] sm:$0xff] %vm515, 0.0
        %833 = vst [vmem:[#allocation2 + $0x9f0] sm:$0xff] 0.0
        %834 = vst.msk [vmem:[#allocation2 + $0x9f8] sm:$0xff] %vm515, 0.0
        %835 = vst [vmem:[#allocation2 + $0xa00] sm:$0xff] 0.0
        %836 = vst.msk [vmem:[#allocation2 + $0xa08] sm:$0xff] %vm515, 0.0
        %837 = vst [vmem:[#allocation2 + $0xa10] sm:$0xff] 0.0
        %838 = vst.msk [vmem:[#allocation2 + $0xa18] sm:$0xff] %vm515, 0.0
        %839 = vst [vmem:[#allocation2 + $0xa20] sm:$0xff] 0.0
        %840 = vst.msk [vmem:[#allocation2 + $0xa28] sm:$0xff] %vm515, 0.0
        %841 = vst [vmem:[#allocation2 + $0xa30] sm:$0xff] 0.0
        %842 = vst.msk [vmem:[#allocation2 + $0xa38] sm:$0xff] %vm515, 0.0
        %843 = vst [vmem:[#allocation2 + $0xa40] sm:$0xff] 0.0
        %844 = vst.msk [vmem:[#allocation2 + $0xa48] sm:$0xff] %vm515, 0.0
        %845 = vst [vmem:[#allocation2 + $0xa50] sm:$0xff] 0.0
        %846 = vst.msk [vmem:[#allocation2 + $0xa58] sm:$0xff] %vm515, 0.0
        %847 = vst [vmem:[#allocation2 + $0xa60] sm:$0xff] 0.0
        %848 = vst.msk [vmem:[#allocation2 + $0xa68] sm:$0xff] %vm515, 0.0
        %849 = vst [vmem:[#allocation2 + $0xa70] sm:$0xff] 0.0
        %850 = vst.msk [vmem:[#allocation2 + $0xa78] sm:$0xff] %vm515, 0.0
        %851 = vst [vmem:[#allocation2 + $0xa80] sm:$0xff] 0.0
        %852 = vst.msk [vmem:[#allocation2 + $0xa88] sm:$0xff] %vm515, 0.0
        %853 = vst [vmem:[#allocation2 + $0xa90] sm:$0xff] 0.0
        %854 = vst.msk [vmem:[#allocation2 + $0xa98] sm:$0xff] %vm515, 0.0
        %855 = vst [vmem:[#allocation2 + $0xaa0] sm:$0xff] 0.0
        %856 = vst.msk [vmem:[#allocation2 + $0xaa8] sm:$0xff] %vm515, 0.0
        %857 = vst [vmem:[#allocation2 + $0xab0] sm:$0xff] 0.0
        %858 = vst.msk [vmem:[#allocation2 + $0xab8] sm:$0xff] %vm515, 0.0
        %859 = vst [vmem:[#allocation2 + $0xac0] sm:$0xff] 0.0
        %860 = vst.msk [vmem:[#allocation2 + $0xac8] sm:$0xff] %vm515, 0.0
        %861 = vst [vmem:[#allocation2 + $0xad0] sm:$0xff] 0.0
        %862 = vst.msk [vmem:[#allocation2 + $0xad8] sm:$0xff] %vm515, 0.0
        %863 = vst [vmem:[#allocation2 + $0xae0] sm:$0xff] 0.0
        %864 = vst.msk [vmem:[#allocation2 + $0xae8] sm:$0xff] %vm515, 0.0
        %865 = vst [vmem:[#allocation2 + $0xaf0] sm:$0xff] 0.0
        %866 = vst.msk [vmem:[#allocation2 + $0xaf8] sm:$0xff] %vm515, 0.0
        %867 = vst [vmem:[#allocation2 + $0xb00] sm:$0xff] 0.0
        %868 = vst.msk [vmem:[#allocation2 + $0xb08] sm:$0xff] %vm515, 0.0
        %869 = vst [vmem:[#allocation2 + $0xb10] sm:$0xff] 0.0
        %870 = vst.msk [vmem:[#allocation2 + $0xb18] sm:$0xff] %vm515, 0.0
        %871 = vst [vmem:[#allocation2 + $0xb20] sm:$0xff] 0.0
        %872 = vst.msk [vmem:[#allocation2 + $0xb28] sm:$0xff] %vm515, 0.0
        %873 = vst [vmem:[#allocation2 + $0xb30] sm:$0xff] 0.0
        %874 = vst.msk [vmem:[#allocation2 + $0xb38] sm:$0xff] %vm515, 0.0
        %875 = vst [vmem:[#allocation2 + $0xb40] sm:$0xff] 0.0
        %876 = vst.msk [vmem:[#allocation2 + $0xb48] sm:$0xff] %vm515, 0.0
        %877 = vst [vmem:[#allocation2 + $0xb50] sm:$0xff] 0.0
        %878 = vst.msk [vmem:[#allocation2 + $0xb58] sm:$0xff] %vm515, 0.0
        %879 = vst [vmem:[#allocation2 + $0xb60] sm:$0xff] 0.0
        %880 = vst.msk [vmem:[#allocation2 + $0xb68] sm:$0xff] %vm515, 0.0
        %881 = vst [vmem:[#allocation2 + $0xb70] sm:$0xff] 0.0
        %882 = vst.msk [vmem:[#allocation2 + $0xb78] sm:$0xff] %vm515, 0.0
        %883 = vst [vmem:[#allocation2 + $0xb80] sm:$0xff] 0.0
        %884 = vst.msk [vmem:[#allocation2 + $0xb88] sm:$0xff] %vm515, 0.0
        %885 = vst [vmem:[#allocation2 + $0xb90] sm:$0xff] 0.0
        %886 = vst.msk [vmem:[#allocation2 + $0xb98] sm:$0xff] %vm515, 0.0
        %887 = vst [vmem:[#allocation2 + $0xba0] sm:$0xff] 0.0
        %888 = vst.msk [vmem:[#allocation2 + $0xba8] sm:$0xff] %vm515, 0.0
        %889 = vst [vmem:[#allocation2 + $0xbb0] sm:$0xff] 0.0
        %890 = vst.msk [vmem:[#allocation2 + $0xbb8] sm:$0xff] %vm515, 0.0
        %891 = vst [vmem:[#allocation2 + $0xbc0] sm:$0xff] 0.0
        %892 = vst.msk [vmem:[#allocation2 + $0xbc8] sm:$0xff] %vm515, 0.0
        %893 = vst [vmem:[#allocation2 + $0xbd0] sm:$0xff] 0.0
        %894 = vst.msk [vmem:[#allocation2 + $0xbd8] sm:$0xff] %vm515, 0.0
        %895 = vst [vmem:[#allocation2 + $0xbe0] sm:$0xff] 0.0
        %896 = vst.msk [vmem:[#allocation2 + $0xbe8] sm:$0xff] %vm515, 0.0
        %897 = vst [vmem:[#allocation2 + $0xbf0] sm:$0xff] 0.0
        %898 = vst.msk [vmem:[#allocation2 + $0xbf8] sm:$0xff] %vm515, 0.0
        %899 = vst [vmem:[#allocation2 + $0xc00] sm:$0xff] 0.0
        %900 = vst.msk [vmem:[#allocation2 + $0xc08] sm:$0xff] %vm515, 0.0
        %901 = vst [vmem:[#allocation2 + $0xc10] sm:$0xff] 0.0
        %902 = vst.msk [vmem:[#allocation2 + $0xc18] sm:$0xff] %vm515, 0.0
        %903 = vst [vmem:[#allocation2 + $0xc20] sm:$0xff] 0.0
        %904 = vst.msk [vmem:[#allocation2 + $0xc28] sm:$0xff] %vm515, 0.0
        %905 = vst [vmem:[#allocation2 + $0xc30] sm:$0xff] 0.0
        %906 = vst.msk [vmem:[#allocation2 + $0xc38] sm:$0xff] %vm515, 0.0
        %907 = vst [vmem:[#allocation2 + $0xc40] sm:$0xff] 0.0
        %908 = vst.msk [vmem:[#allocation2 + $0xc48] sm:$0xff] %vm515, 0.0
        %909 = vst [vmem:[#allocation2 + $0xc50] sm:$0xff] 0.0
        %910 = vst.msk [vmem:[#allocation2 + $0xc58] sm:$0xff] %vm515, 0.0
        %911 = vst [vmem:[#allocation2 + $0xc60] sm:$0xff] 0.0
        %912 = vst.msk [vmem:[#allocation2 + $0xc68] sm:$0xff] %vm515, 0.0
        %913 = vst [vmem:[#allocation2 + $0xc70] sm:$0xff] 0.0
        %914 = vst.msk [vmem:[#allocation2 + $0xc78] sm:$0xff] %vm515, 0.0
        %915 = vst [vmem:[#allocation3] sm:$0xff] 0.0
        %916 = vst.msk [vmem:[#allocation3 + $0x8] sm:$0xff] %vm515, 0.0
        %917 = vst [vmem:[#allocation3 + $0x10] sm:$0xff] 0.0
        %918 = vst.msk [vmem:[#allocation3 + $0x18] sm:$0xff] %vm515, 0.0
        %919 = vst [vmem:[#allocation3 + $0x20] sm:$0xff] 0.0
        %920 = vst.msk [vmem:[#allocation3 + $0x28] sm:$0xff] %vm515, 0.0
        %921 = vst [vmem:[#allocation3 + $0x30] sm:$0xff] 0.0
        %922 = vst.msk [vmem:[#allocation3 + $0x38] sm:$0xff] %vm515, 0.0
        %923 = vst [vmem:[#allocation3 + $0x40] sm:$0xff] 0.0
        %924 = vst.msk [vmem:[#allocation3 + $0x48] sm:$0xff] %vm515, 0.0
        %925 = vst [vmem:[#allocation3 + $0x50] sm:$0xff] 0.0
        %926 = vst.msk [vmem:[#allocation3 + $0x58] sm:$0xff] %vm515, 0.0
        %927 = vst [vmem:[#allocation3 + $0x60] sm:$0xff] 0.0
        %928 = vst.msk [vmem:[#allocation3 + $0x68] sm:$0xff] %vm515, 0.0
        %929 = vst [vmem:[#allocation3 + $0x70] sm:$0xff] 0.0
        %930 = vst.msk [vmem:[#allocation3 + $0x78] sm:$0xff] %vm515, 0.0
        %931 = vst [vmem:[#allocation3 + $0x80] sm:$0xff] 0.0
        %932 = vst.msk [vmem:[#allocation3 + $0x88] sm:$0xff] %vm515, 0.0
        %933 = vst [vmem:[#allocation3 + $0x90] sm:$0xff] 0.0
        %934 = vst.msk [vmem:[#allocation3 + $0x98] sm:$0xff] %vm515, 0.0
        %935 = vst [vmem:[#allocation3 + $0xa0] sm:$0xff] 0.0
        %936 = vst.msk [vmem:[#allocation3 + $0xa8] sm:$0xff] %vm515, 0.0
        %937 = vst [vmem:[#allocation3 + $0xb0] sm:$0xff] 0.0
        %938 = vst.msk [vmem:[#allocation3 + $0xb8] sm:$0xff] %vm515, 0.0
        %939 = vst [vmem:[#allocation3 + $0xc0] sm:$0xff] 0.0
        %940 = vst.msk [vmem:[#allocation3 + $0xc8] sm:$0xff] %vm515, 0.0
        %941 = vst [vmem:[#allocation3 + $0xd0] sm:$0xff] 0.0
        %942 = vst.msk [vmem:[#allocation3 + $0xd8] sm:$0xff] %vm515, 0.0
        %943 = vst [vmem:[#allocation3 + $0xe0] sm:$0xff] 0.0
        %944 = vst.msk [vmem:[#allocation3 + $0xe8] sm:$0xff] %vm515, 0.0
        %945 = vst [vmem:[#allocation3 + $0xf0] sm:$0xff] 0.0
        %946 = vst.msk [vmem:[#allocation3 + $0xf8] sm:$0xff] %vm515, 0.0
        %947 = vst [vmem:[#allocation3 + $0x100] sm:$0xff] 0.0
        %948 = vst.msk [vmem:[#allocation3 + $0x108] sm:$0xff] %vm515, 0.0
        %949 = vst [vmem:[#allocation3 + $0x110] sm:$0xff] 0.0
        %950 = vst.msk [vmem:[#allocation3 + $0x118] sm:$0xff] %vm515, 0.0
        %951 = vst [vmem:[#allocation3 + $0x120] sm:$0xff] 0.0
        %952 = vst.msk [vmem:[#allocation3 + $0x128] sm:$0xff] %vm515, 0.0
        %953 = vst [vmem:[#allocation3 + $0x130] sm:$0xff] 0.0
        %954 = vst.msk [vmem:[#allocation3 + $0x138] sm:$0xff] %vm515, 0.0
        %955 = vst [vmem:[#allocation3 + $0x140] sm:$0xff] 0.0
        %956 = vst.msk [vmem:[#allocation3 + $0x148] sm:$0xff] %vm515, 0.0
        %957 = vst [vmem:[#allocation3 + $0x150] sm:$0xff] 0.0
        %958 = vst.msk [vmem:[#allocation3 + $0x158] sm:$0xff] %vm515, 0.0
        %959 = vst [vmem:[#allocation3 + $0x160] sm:$0xff] 0.0
        %960 = vst.msk [vmem:[#allocation3 + $0x168] sm:$0xff] %vm515, 0.0
        %961 = vst [vmem:[#allocation3 + $0x170] sm:$0xff] 0.0
        %962 = vst.msk [vmem:[#allocation3 + $0x178] sm:$0xff] %vm515, 0.0
        %963 = vst [vmem:[#allocation3 + $0x180] sm:$0xff] 0.0
        %964 = vst.msk [vmem:[#allocation3 + $0x188] sm:$0xff] %vm515, 0.0
        %965 = vst [vmem:[#allocation3 + $0x190] sm:$0xff] 0.0
        %966 = vst.msk [vmem:[#allocation3 + $0x198] sm:$0xff] %vm515, 0.0
        %967 = vst [vmem:[#allocation3 + $0x1a0] sm:$0xff] 0.0
        %968 = vst.msk [vmem:[#allocation3 + $0x1a8] sm:$0xff] %vm515, 0.0
        %969 = vst [vmem:[#allocation3 + $0x1b0] sm:$0xff] 0.0
        %970 = vst.msk [vmem:[#allocation3 + $0x1b8] sm:$0xff] %vm515, 0.0
        %971 = vst [vmem:[#allocation3 + $0x1c0] sm:$0xff] 0.0
        %972 = vst.msk [vmem:[#allocation3 + $0x1c8] sm:$0xff] %vm515, 0.0
        %973 = vst [vmem:[#allocation3 + $0x1d0] sm:$0xff] 0.0
        %974 = vst.msk [vmem:[#allocation3 + $0x1d8] sm:$0xff] %vm515, 0.0
        %975 = vst [vmem:[#allocation3 + $0x1e0] sm:$0xff] 0.0
        %976 = vst.msk [vmem:[#allocation3 + $0x1e8] sm:$0xff] %vm515, 0.0
        %977 = vst [vmem:[#allocation3 + $0x1f0] sm:$0xff] 0.0
        %978 = vst.msk [vmem:[#allocation3 + $0x1f8] sm:$0xff] %vm515, 0.0
        %979 = vst [vmem:[#allocation3 + $0x200] sm:$0xff] 0.0
        %980 = vst.msk [vmem:[#allocation3 + $0x208] sm:$0xff] %vm515, 0.0
        %981 = vst [vmem:[#allocation3 + $0x210] sm:$0xff] 0.0
        %982 = vst.msk [vmem:[#allocation3 + $0x218] sm:$0xff] %vm515, 0.0
        %983 = vst [vmem:[#allocation3 + $0x220] sm:$0xff] 0.0
        %984 = vst.msk [vmem:[#allocation3 + $0x228] sm:$0xff] %vm515, 0.0
        %985 = vst [vmem:[#allocation3 + $0x230] sm:$0xff] 0.0
        %986 = vst.msk [vmem:[#allocation3 + $0x238] sm:$0xff] %vm515, 0.0
        %987 = vst [vmem:[#allocation3 + $0x240] sm:$0xff] 0.0
        %988 = vst.msk [vmem:[#allocation3 + $0x248] sm:$0xff] %vm515, 0.0
        %989 = vst [vmem:[#allocation3 + $0x250] sm:$0xff] 0.0
        %990 = vst.msk [vmem:[#allocation3 + $0x258] sm:$0xff] %vm515, 0.0
        %991 = vst [vmem:[#allocation3 + $0x260] sm:$0xff] 0.0
        %992 = vst.msk [vmem:[#allocation3 + $0x268] sm:$0xff] %vm515, 0.0
        %993 = vst [vmem:[#allocation3 + $0x270] sm:$0xff] 0.0
        %994 = vst.msk [vmem:[#allocation3 + $0x278] sm:$0xff] %vm515, 0.0
        %995 = vst [vmem:[#allocation3 + $0x280] sm:$0xff] 0.0
        %996 = vst.msk [vmem:[#allocation3 + $0x288] sm:$0xff] %vm515, 0.0
        %997 = vst [vmem:[#allocation3 + $0x290] sm:$0xff] 0.0
        %998 = vst.msk [vmem:[#allocation3 + $0x298] sm:$0xff] %vm515, 0.0
        %999 = vst [vmem:[#allocation3 + $0x2a0] sm:$0xff] 0.0
        %1000 = vst.msk [vmem:[#allocation3 + $0x2a8] sm:$0xff] %vm515, 0.0
        %1001 = vst [vmem:[#allocation3 + $0x2b0] sm:$0xff] 0.0
        %1002 = vst.msk [vmem:[#allocation3 + $0x2b8] sm:$0xff] %vm515, 0.0
        %1003 = vst [vmem:[#allocation3 + $0x2c0] sm:$0xff] 0.0
        %1004 = vst.msk [vmem:[#allocation3 + $0x2c8] sm:$0xff] %vm515, 0.0
        %1005 = vst [vmem:[#allocation3 + $0x2d0] sm:$0xff] 0.0
        %1006 = vst.msk [vmem:[#allocation3 + $0x2d8] sm:$0xff] %vm515, 0.0
        %1007 = vst [vmem:[#allocation3 + $0x2e0] sm:$0xff] 0.0
        %1008 = vst.msk [vmem:[#allocation3 + $0x2e8] sm:$0xff] %vm515, 0.0
        %1009 = vst [vmem:[#allocation3 + $0x2f0] sm:$0xff] 0.0
        %1010 = vst.msk [vmem:[#allocation3 + $0x2f8] sm:$0xff] %vm515, 0.0
        %1011 = vst [vmem:[#allocation3 + $0x300] sm:$0xff] 0.0
        %1012 = vst.msk [vmem:[#allocation3 + $0x308] sm:$0xff] %vm515, 0.0
        %1013 = vst [vmem:[#allocation3 + $0x310] sm:$0xff] 0.0
        %1014 = vst.msk [vmem:[#allocation3 + $0x318] sm:$0xff] %vm515, 0.0
        %1015 = vst [vmem:[#allocation3 + $0x320] sm:$0xff] 0.0
        %1016 = vst.msk [vmem:[#allocation3 + $0x328] sm:$0xff] %vm515, 0.0
        %1017 = vst [vmem:[#allocation3 + $0x330] sm:$0xff] 0.0
        %1018 = vst.msk [vmem:[#allocation3 + $0x338] sm:$0xff] %vm515, 0.0
        %1019 = vst [vmem:[#allocation3 + $0x340] sm:$0xff] 0.0
        %1020 = vst.msk [vmem:[#allocation3 + $0x348] sm:$0xff] %vm515, 0.0
        %1021 = vst [vmem:[#allocation3 + $0x350] sm:$0xff] 0.0
        %1022 = vst.msk [vmem:[#allocation3 + $0x358] sm:$0xff] %vm515, 0.0
        %1023 = vst [vmem:[#allocation3 + $0x360] sm:$0xff] 0.0
        %1024 = vst.msk [vmem:[#allocation3 + $0x368] sm:$0xff] %vm515, 0.0
        %1025 = vst [vmem:[#allocation3 + $0x370] sm:$0xff] 0.0
        %1026 = vst.msk [vmem:[#allocation3 + $0x378] sm:$0xff] %vm515, 0.0
        %1027 = vst [vmem:[#allocation3 + $0x380] sm:$0xff] 0.0
        %1028 = vst.msk [vmem:[#allocation3 + $0x388] sm:$0xff] %vm515, 0.0
        %1029 = vst [vmem:[#allocation3 + $0x390] sm:$0xff] 0.0
        %1030 = vst.msk [vmem:[#allocation3 + $0x398] sm:$0xff] %vm515, 0.0
        %1031 = vst [vmem:[#allocation3 + $0x3a0] sm:$0xff] 0.0
        %1032 = vst.msk [vmem:[#allocation3 + $0x3a8] sm:$0xff] %vm515, 0.0
        %1033 = vst [vmem:[#allocation3 + $0x3b0] sm:$0xff] 0.0
        %1034 = vst.msk [vmem:[#allocation3 + $0x3b8] sm:$0xff] %vm515, 0.0
        %1035 = vst [vmem:[#allocation3 + $0x3c0] sm:$0xff] 0.0
        %1036 = vst.msk [vmem:[#allocation3 + $0x3c8] sm:$0xff] %vm515, 0.0
        %1037 = vst [vmem:[#allocation3 + $0x3d0] sm:$0xff] 0.0
        %1038 = vst.msk [vmem:[#allocation3 + $0x3d8] sm:$0xff] %vm515, 0.0
        %1039 = vst [vmem:[#allocation3 + $0x3e0] sm:$0xff] 0.0
        %1040 = vst.msk [vmem:[#allocation3 + $0x3e8] sm:$0xff] %vm515, 0.0
        %1041 = vst [vmem:[#allocation3 + $0x3f0] sm:$0xff] 0.0
        %1042 = vst.msk [vmem:[#allocation3 + $0x3f8] sm:$0xff] %vm515, 0.0
        %1043 = vst [vmem:[#allocation3 + $0x400] sm:$0xff] 0.0
        %1044 = vst.msk [vmem:[#allocation3 + $0x408] sm:$0xff] %vm515, 0.0
        %1045 = vst [vmem:[#allocation3 + $0x410] sm:$0xff] 0.0
        %1046 = vst.msk [vmem:[#allocation3 + $0x418] sm:$0xff] %vm515, 0.0
        %1047 = vst [vmem:[#allocation3 + $0x420] sm:$0xff] 0.0
        %1048 = vst.msk [vmem:[#allocation3 + $0x428] sm:$0xff] %vm515, 0.0
        %1049 = vst [vmem:[#allocation3 + $0x430] sm:$0xff] 0.0
        %1050 = vst.msk [vmem:[#allocation3 + $0x438] sm:$0xff] %vm515, 0.0
        %1051 = vst [vmem:[#allocation3 + $0x440] sm:$0xff] 0.0
        %1052 = vst.msk [vmem:[#allocation3 + $0x448] sm:$0xff] %vm515, 0.0
        %1053 = vst [vmem:[#allocation3 + $0x450] sm:$0xff] 0.0
        %1054 = vst.msk [vmem:[#allocation3 + $0x458] sm:$0xff] %vm515, 0.0
        %1055 = vst [vmem:[#allocation3 + $0x460] sm:$0xff] 0.0
        %1056 = vst.msk [vmem:[#allocation3 + $0x468] sm:$0xff] %vm515, 0.0
        %1057 = vst [vmem:[#allocation3 + $0x470] sm:$0xff] 0.0
        %1058 = vst.msk [vmem:[#allocation3 + $0x478] sm:$0xff] %vm515, 0.0
        %1059 = vst [vmem:[#allocation3 + $0x480] sm:$0xff] 0.0
        %1060 = vst.msk [vmem:[#allocation3 + $0x488] sm:$0xff] %vm515, 0.0
        %1061 = vst [vmem:[#allocation3 + $0x490] sm:$0xff] 0.0
        %1062 = vst.msk [vmem:[#allocation3 + $0x498] sm:$0xff] %vm515, 0.0
        %1063 = vst [vmem:[#allocation3 + $0x4a0] sm:$0xff] 0.0
        %1064 = vst.msk [vmem:[#allocation3 + $0x4a8] sm:$0xff] %vm515, 0.0
        %1065 = vst [vmem:[#allocation3 + $0x4b0] sm:$0xff] 0.0
        %1066 = vst.msk [vmem:[#allocation3 + $0x4b8] sm:$0xff] %vm515, 0.0
        %1067 = vst [vmem:[#allocation3 + $0x4c0] sm:$0xff] 0.0
        %1068 = vst.msk [vmem:[#allocation3 + $0x4c8] sm:$0xff] %vm515, 0.0
        %1069 = vst [vmem:[#allocation3 + $0x4d0] sm:$0xff] 0.0
        %1070 = vst.msk [vmem:[#allocation3 + $0x4d8] sm:$0xff] %vm515, 0.0
        %1071 = vst [vmem:[#allocation3 + $0x4e0] sm:$0xff] 0.0
        %1072 = vst.msk [vmem:[#allocation3 + $0x4e8] sm:$0xff] %vm515, 0.0
        %1073 = vst [vmem:[#allocation3 + $0x4f0] sm:$0xff] 0.0
        %1074 = vst.msk [vmem:[#allocation3 + $0x4f8] sm:$0xff] %vm515, 0.0
        %1075 = vst [vmem:[#allocation3 + $0x500] sm:$0xff] 0.0
        %1076 = vst.msk [vmem:[#allocation3 + $0x508] sm:$0xff] %vm515, 0.0
        %1077 = vst [vmem:[#allocation3 + $0x510] sm:$0xff] 0.0
        %1078 = vst.msk [vmem:[#allocation3 + $0x518] sm:$0xff] %vm515, 0.0
        %1079 = vst [vmem:[#allocation3 + $0x520] sm:$0xff] 0.0
        %1080 = vst.msk [vmem:[#allocation3 + $0x528] sm:$0xff] %vm515, 0.0
        %1081 = vst [vmem:[#allocation3 + $0x530] sm:$0xff] 0.0
        %1082 = vst.msk [vmem:[#allocation3 + $0x538] sm:$0xff] %vm515, 0.0
        %1083 = vst [vmem:[#allocation3 + $0x540] sm:$0xff] 0.0
        %1084 = vst.msk [vmem:[#allocation3 + $0x548] sm:$0xff] %vm515, 0.0
        %1085 = vst [vmem:[#allocation3 + $0x550] sm:$0xff] 0.0
        %1086 = vst.msk [vmem:[#allocation3 + $0x558] sm:$0xff] %vm515, 0.0
        %1087 = vst [vmem:[#allocation3 + $0x560] sm:$0xff] 0.0
        %1088 = vst.msk [vmem:[#allocation3 + $0x568] sm:$0xff] %vm515, 0.0
        %1089 = vst [vmem:[#allocation3 + $0x570] sm:$0xff] 0.0
        %1090 = vst.msk [vmem:[#allocation3 + $0x578] sm:$0xff] %vm515, 0.0
        %1091 = vst [vmem:[#allocation3 + $0x580] sm:$0xff] 0.0
        %1092 = vst.msk [vmem:[#allocation3 + $0x588] sm:$0xff] %vm515, 0.0
        %1093 = vst [vmem:[#allocation3 + $0x590] sm:$0xff] 0.0
        %1094 = vst.msk [vmem:[#allocation3 + $0x598] sm:$0xff] %vm515, 0.0
        %1095 = vst [vmem:[#allocation3 + $0x5a0] sm:$0xff] 0.0
        %1096 = vst.msk [vmem:[#allocation3 + $0x5a8] sm:$0xff] %vm515, 0.0
        %1097 = vst [vmem:[#allocation3 + $0x5b0] sm:$0xff] 0.0
        %1098 = vst.msk [vmem:[#allocation3 + $0x5b8] sm:$0xff] %vm515, 0.0
        %1099 = vst [vmem:[#allocation3 + $0x5c0] sm:$0xff] 0.0
        %1100 = vst.msk [vmem:[#allocation3 + $0x5c8] sm:$0xff] %vm515, 0.0
        %1101 = vst [vmem:[#allocation3 + $0x5d0] sm:$0xff] 0.0
        %1102 = vst.msk [vmem:[#allocation3 + $0x5d8] sm:$0xff] %vm515, 0.0
        %1103 = vst [vmem:[#allocation3 + $0x5e0] sm:$0xff] 0.0
        %1104 = vst.msk [vmem:[#allocation3 + $0x5e8] sm:$0xff] %vm515, 0.0
        %1105 = vst [vmem:[#allocation3 + $0x5f0] sm:$0xff] 0.0
        %1106 = vst.msk [vmem:[#allocation3 + $0x5f8] sm:$0xff] %vm515, 0.0
        %1107 = vst [vmem:[#allocation3 + $0x600] sm:$0xff] 0.0
        %1108 = vst.msk [vmem:[#allocation3 + $0x608] sm:$0xff] %vm515, 0.0
        %1109 = vst [vmem:[#allocation3 + $0x610] sm:$0xff] 0.0
        %1110 = vst.msk [vmem:[#allocation3 + $0x618] sm:$0xff] %vm515, 0.0
        %1111 = vst [vmem:[#allocation3 + $0x620] sm:$0xff] 0.0
        %1112 = vst.msk [vmem:[#allocation3 + $0x628] sm:$0xff] %vm515, 0.0
        %1113 = vst [vmem:[#allocation3 + $0x630] sm:$0xff] 0.0
        %1114 = vst.msk [vmem:[#allocation3 + $0x638] sm:$0xff] %vm515, 0.0
        %1115 = vst [vmem:[#allocation3 + $0x640] sm:$0xff] 0.0
        %1116 = vst.msk [vmem:[#allocation3 + $0x648] sm:$0xff] %vm515, 0.0
        %1117 = vst [vmem:[#allocation3 + $0x650] sm:$0xff] 0.0
        %1118 = vst.msk [vmem:[#allocation3 + $0x658] sm:$0xff] %vm515, 0.0
        %1119 = vst [vmem:[#allocation3 + $0x660] sm:$0xff] 0.0
        %1120 = vst.msk [vmem:[#allocation3 + $0x668] sm:$0xff] %vm515, 0.0
        %1121 = vst [vmem:[#allocation3 + $0x670] sm:$0xff] 0.0
        %1122 = vst.msk [vmem:[#allocation3 + $0x678] sm:$0xff] %vm515, 0.0
        %1123 = vst [vmem:[#allocation3 + $0x680] sm:$0xff] 0.0
        %1124 = vst.msk [vmem:[#allocation3 + $0x688] sm:$0xff] %vm515, 0.0
        %1125 = vst [vmem:[#allocation3 + $0x690] sm:$0xff] 0.0
        %1126 = vst.msk [vmem:[#allocation3 + $0x698] sm:$0xff] %vm515, 0.0
        %1127 = vst [vmem:[#allocation3 + $0x6a0] sm:$0xff] 0.0
        %1128 = vst.msk [vmem:[#allocation3 + $0x6a8] sm:$0xff] %vm515, 0.0
        %1129 = vst [vmem:[#allocation3 + $0x6b0] sm:$0xff] 0.0
        %1130 = vst.msk [vmem:[#allocation3 + $0x6b8] sm:$0xff] %vm515, 0.0
        %1131 = vst [vmem:[#allocation3 + $0x6c0] sm:$0xff] 0.0
        %1132 = vst.msk [vmem:[#allocation3 + $0x6c8] sm:$0xff] %vm515, 0.0
        %1133 = vst [vmem:[#allocation3 + $0x6d0] sm:$0xff] 0.0
        %1134 = vst.msk [vmem:[#allocation3 + $0x6d8] sm:$0xff] %vm515, 0.0
        %1135 = vst [vmem:[#allocation3 + $0x6e0] sm:$0xff] 0.0
        %1136 = vst.msk [vmem:[#allocation3 + $0x6e8] sm:$0xff] %vm515, 0.0
        %1137 = vst [vmem:[#allocation3 + $0x6f0] sm:$0xff] 0.0
        %1138 = vst.msk [vmem:[#allocation3 + $0x6f8] sm:$0xff] %vm515, 0.0
        %1139 = vst [vmem:[#allocation3 + $0x700] sm:$0xff] 0.0
        %1140 = vst.msk [vmem:[#allocation3 + $0x708] sm:$0xff] %vm515, 0.0
        %1141 = vst [vmem:[#allocation3 + $0x710] sm:$0xff] 0.0
        %1142 = vst.msk [vmem:[#allocation3 + $0x718] sm:$0xff] %vm515, 0.0
        %1143 = vst [vmem:[#allocation3 + $0x720] sm:$0xff] 0.0
        %1144 = vst.msk [vmem:[#allocation3 + $0x728] sm:$0xff] %vm515, 0.0
        %1145 = vst [vmem:[#allocation3 + $0x730] sm:$0xff] 0.0
        %1146 = vst.msk [vmem:[#allocation3 + $0x738] sm:$0xff] %vm515, 0.0
        %1147 = vst [vmem:[#allocation3 + $0x740] sm:$0xff] 0.0
        %1148 = vst.msk [vmem:[#allocation3 + $0x748] sm:$0xff] %vm515, 0.0
        %1149 = vst [vmem:[#allocation3 + $0x750] sm:$0xff] 0.0
        %1150 = vst.msk [vmem:[#allocation3 + $0x758] sm:$0xff] %vm515, 0.0
        %1151 = vst [vmem:[#allocation3 + $0x760] sm:$0xff] 0.0
        %1152 = vst.msk [vmem:[#allocation3 + $0x768] sm:$0xff] %vm515, 0.0
        %1153 = vst [vmem:[#allocation3 + $0x770] sm:$0xff] 0.0
        %1154 = vst.msk [vmem:[#allocation3 + $0x778] sm:$0xff] %vm515, 0.0
        %1155 = vst [vmem:[#allocation3 + $0x780] sm:$0xff] 0.0
        %1156 = vst.msk [vmem:[#allocation3 + $0x788] sm:$0xff] %vm515, 0.0
        %1157 = vst [vmem:[#allocation3 + $0x790] sm:$0xff] 0.0
        %1158 = vst.msk [vmem:[#allocation3 + $0x798] sm:$0xff] %vm515, 0.0
        %1159 = vst [vmem:[#allocation3 + $0x7a0] sm:$0xff] 0.0
        %1160 = vst.msk [vmem:[#allocation3 + $0x7a8] sm:$0xff] %vm515, 0.0
        %1161 = vst [vmem:[#allocation3 + $0x7b0] sm:$0xff] 0.0
        %1162 = vst.msk [vmem:[#allocation3 + $0x7b8] sm:$0xff] %vm515, 0.0
        %1163 = vst [vmem:[#allocation3 + $0x7c0] sm:$0xff] 0.0
        %1164 = vst.msk [vmem:[#allocation3 + $0x7c8] sm:$0xff] %vm515, 0.0
        %1165 = vst [vmem:[#allocation3 + $0x7d0] sm:$0xff] 0.0
        %1166 = vst.msk [vmem:[#allocation3 + $0x7d8] sm:$0xff] %vm515, 0.0
        %1167 = vst [vmem:[#allocation3 + $0x7e0] sm:$0xff] 0.0
        %1168 = vst.msk [vmem:[#allocation3 + $0x7e8] sm:$0xff] %vm515, 0.0
        %1169 = vst [vmem:[#allocation3 + $0x7f0] sm:$0xff] 0.0
        %1170 = vst.msk [vmem:[#allocation3 + $0x7f8] sm:$0xff] %vm515, 0.0
        %1171 = vst [vmem:[#allocation3 + $0x800] sm:$0xff] 0.0
        %1172 = vst.msk [vmem:[#allocation3 + $0x808] sm:$0xff] %vm515, 0.0
        %1173 = vst [vmem:[#allocation3 + $0x810] sm:$0xff] 0.0
        %1174 = vst.msk [vmem:[#allocation3 + $0x818] sm:$0xff] %vm515, 0.0
        %1175 = vst [vmem:[#allocation3 + $0x820] sm:$0xff] 0.0
        %1176 = vst.msk [vmem:[#allocation3 + $0x828] sm:$0xff] %vm515, 0.0
        %1177 = vst [vmem:[#allocation3 + $0x830] sm:$0xff] 0.0
        %1178 = vst.msk [vmem:[#allocation3 + $0x838] sm:$0xff] %vm515, 0.0
        %1179 = vst [vmem:[#allocation3 + $0x840] sm:$0xff] 0.0
        %1180 = vst.msk [vmem:[#allocation3 + $0x848] sm:$0xff] %vm515, 0.0
        %1181 = vst [vmem:[#allocation3 + $0x850] sm:$0xff] 0.0
        %1182 = vst.msk [vmem:[#allocation3 + $0x858] sm:$0xff] %vm515, 0.0
        %1183 = vst [vmem:[#allocation3 + $0x860] sm:$0xff] 0.0
        %1184 = vst.msk [vmem:[#allocation3 + $0x868] sm:$0xff] %vm515, 0.0
        %1185 = vst [vmem:[#allocation3 + $0x870] sm:$0xff] 0.0
        %1186 = vst.msk [vmem:[#allocation3 + $0x878] sm:$0xff] %vm515, 0.0
        %1187 = vst [vmem:[#allocation3 + $0x880] sm:$0xff] 0.0
        %1188 = vst.msk [vmem:[#allocation3 + $0x888] sm:$0xff] %vm515, 0.0
        %1189 = vst [vmem:[#allocation3 + $0x890] sm:$0xff] 0.0
        %1190 = vst.msk [vmem:[#allocation3 + $0x898] sm:$0xff] %vm515, 0.0
        %1191 = vst [vmem:[#allocation3 + $0x8a0] sm:$0xff] 0.0
        %1192 = vst.msk [vmem:[#allocation3 + $0x8a8] sm:$0xff] %vm515, 0.0
        %1193 = vst [vmem:[#allocation3 + $0x8b0] sm:$0xff] 0.0
        %1194 = vst.msk [vmem:[#allocation3 + $0x8b8] sm:$0xff] %vm515, 0.0
        %1195 = vst [vmem:[#allocation3 + $0x8c0] sm:$0xff] 0.0
        %1196 = vst.msk [vmem:[#allocation3 + $0x8c8] sm:$0xff] %vm515, 0.0
        %1197 = vst [vmem:[#allocation3 + $0x8d0] sm:$0xff] 0.0
        %1198 = vst.msk [vmem:[#allocation3 + $0x8d8] sm:$0xff] %vm515, 0.0
        %1199 = vst [vmem:[#allocation3 + $0x8e0] sm:$0xff] 0.0
        %1200 = vst.msk [vmem:[#allocation3 + $0x8e8] sm:$0xff] %vm515, 0.0
        %1201 = vst [vmem:[#allocation3 + $0x8f0] sm:$0xff] 0.0
        %1202 = vst.msk [vmem:[#allocation3 + $0x8f8] sm:$0xff] %vm515, 0.0
        %1203 = vst [vmem:[#allocation3 + $0x900] sm:$0xff] 0.0
        %1204 = vst.msk [vmem:[#allocation3 + $0x908] sm:$0xff] %vm515, 0.0
        %1205 = vst [vmem:[#allocation3 + $0x910] sm:$0xff] 0.0
        %1206 = vst.msk [vmem:[#allocation3 + $0x918] sm:$0xff] %vm515, 0.0
        %1207 = vst [vmem:[#allocation3 + $0x920] sm:$0xff] 0.0
        %1208 = vst.msk [vmem:[#allocation3 + $0x928] sm:$0xff] %vm515, 0.0
        %1209 = vst [vmem:[#allocation3 + $0x930] sm:$0xff] 0.0
        %1210 = vst.msk [vmem:[#allocation3 + $0x938] sm:$0xff] %vm515, 0.0
        %1211 = vst [vmem:[#allocation3 + $0x940] sm:$0xff] 0.0
        %1212 = vst.msk [vmem:[#allocation3 + $0x948] sm:$0xff] %vm515, 0.0
        %1213 = vst [vmem:[#allocation3 + $0x950] sm:$0xff] 0.0
        %1214 = vst.msk [vmem:[#allocation3 + $0x958] sm:$0xff] %vm515, 0.0
        %1215 = vst [vmem:[#allocation3 + $0x960] sm:$0xff] 0.0
        %1216 = vst.msk [vmem:[#allocation3 + $0x968] sm:$0xff] %vm515, 0.0
        %1217 = vst [vmem:[#allocation3 + $0x970] sm:$0xff] 0.0
        %1218 = vst.msk [vmem:[#allocation3 + $0x978] sm:$0xff] %vm515, 0.0
        %1219 = vst [vmem:[#allocation3 + $0x980] sm:$0xff] 0.0
        %1220 = vst.msk [vmem:[#allocation3 + $0x988] sm:$0xff] %vm515, 0.0
        %1221 = vst [vmem:[#allocation3 + $0x990] sm:$0xff] 0.0
        %1222 = vst.msk [vmem:[#allocation3 + $0x998] sm:$0xff] %vm515, 0.0
        %1223 = vst [vmem:[#allocation3 + $0x9a0] sm:$0xff] 0.0
        %1224 = vst.msk [vmem:[#allocation3 + $0x9a8] sm:$0xff] %vm515, 0.0
        %1225 = vst [vmem:[#allocation3 + $0x9b0] sm:$0xff] 0.0
        %1226 = vst.msk [vmem:[#allocation3 + $0x9b8] sm:$0xff] %vm515, 0.0
        %1227 = vst [vmem:[#allocation3 + $0x9c0] sm:$0xff] 0.0
        %1228 = vst.msk [vmem:[#allocation3 + $0x9c8] sm:$0xff] %vm515, 0.0
        %1229 = vst [vmem:[#allocation3 + $0x9d0] sm:$0xff] 0.0
        %1230 = vst.msk [vmem:[#allocation3 + $0x9d8] sm:$0xff] %vm515, 0.0
        %1231 = vst [vmem:[#allocation3 + $0x9e0] sm:$0xff] 0.0
        %1232 = vst.msk [vmem:[#allocation3 + $0x9e8] sm:$0xff] %vm515, 0.0
        %1233 = vst [vmem:[#allocation3 + $0x9f0] sm:$0xff] 0.0
        %1234 = vst.msk [vmem:[#allocation3 + $0x9f8] sm:$0xff] %vm515, 0.0
        %1235 = vst [vmem:[#allocation3 + $0xa00] sm:$0xff] 0.0
        %1236 = vst.msk [vmem:[#allocation3 + $0xa08] sm:$0xff] %vm515, 0.0
        %1237 = vst [vmem:[#allocation3 + $0xa10] sm:$0xff] 0.0
        %1238 = vst.msk [vmem:[#allocation3 + $0xa18] sm:$0xff] %vm515, 0.0
        %1239 = vst [vmem:[#allocation3 + $0xa20] sm:$0xff] 0.0
        %1240 = vst.msk [vmem:[#allocation3 + $0xa28] sm:$0xff] %vm515, 0.0
        %1241 = vst [vmem:[#allocation3 + $0xa30] sm:$0xff] 0.0
        %1242 = vst.msk [vmem:[#allocation3 + $0xa38] sm:$0xff] %vm515, 0.0
        %1243 = vst [vmem:[#allocation3 + $0xa40] sm:$0xff] 0.0
        %1244 = vst.msk [vmem:[#allocation3 + $0xa48] sm:$0xff] %vm515, 0.0
        %1245 = vst [vmem:[#allocation3 + $0xa50] sm:$0xff] 0.0
        %1246 = vst.msk [vmem:[#allocation3 + $0xa58] sm:$0xff] %vm515, 0.0
        %1247 = vst [vmem:[#allocation3 + $0xa60] sm:$0xff] 0.0
        %1248 = vst.msk [vmem:[#allocation3 + $0xa68] sm:$0xff] %vm515, 0.0
        %1249 = vst [vmem:[#allocation3 + $0xa70] sm:$0xff] 0.0
        %1250 = vst.msk [vmem:[#allocation3 + $0xa78] sm:$0xff] %vm515, 0.0
        %1251 = vst [vmem:[#allocation3 + $0xa80] sm:$0xff] 0.0
        %1252 = vst.msk [vmem:[#allocation3 + $0xa88] sm:$0xff] %vm515, 0.0
        %1253 = vst [vmem:[#allocation3 + $0xa90] sm:$0xff] 0.0
        %1254 = vst.msk [vmem:[#allocation3 + $0xa98] sm:$0xff] %vm515, 0.0
        %1255 = vst [vmem:[#allocation3 + $0xaa0] sm:$0xff] 0.0
        %1256 = vst.msk [vmem:[#allocation3 + $0xaa8] sm:$0xff] %vm515, 0.0
        %1257 = vst [vmem:[#allocation3 + $0xab0] sm:$0xff] 0.0
        %1258 = vst.msk [vmem:[#allocation3 + $0xab8] sm:$0xff] %vm515, 0.0
        %1259 = vst [vmem:[#allocation3 + $0xac0] sm:$0xff] 0.0
        %1260 = vst.msk [vmem:[#allocation3 + $0xac8] sm:$0xff] %vm515, 0.0
        %1261 = vst [vmem:[#allocation3 + $0xad0] sm:$0xff] 0.0
        %1262 = vst.msk [vmem:[#allocation3 + $0xad8] sm:$0xff] %vm515, 0.0
        %1263 = vst [vmem:[#allocation3 + $0xae0] sm:$0xff] 0.0
        %1264 = vst.msk [vmem:[#allocation3 + $0xae8] sm:$0xff] %vm515, 0.0
        %1265 = vst [vmem:[#allocation3 + $0xaf0] sm:$0xff] 0.0
        %1266 = vst.msk [vmem:[#allocation3 + $0xaf8] sm:$0xff] %vm515, 0.0
        %1267 = vst [vmem:[#allocation3 + $0xb00] sm:$0xff] 0.0
        %1268 = vst.msk [vmem:[#allocation3 + $0xb08] sm:$0xff] %vm515, 0.0
        %1269 = vst [vmem:[#allocation3 + $0xb10] sm:$0xff] 0.0
        %1270 = vst.msk [vmem:[#allocation3 + $0xb18] sm:$0xff] %vm515, 0.0
        %1271 = vst [vmem:[#allocation3 + $0xb20] sm:$0xff] 0.0
        %1272 = vst.msk [vmem:[#allocation3 + $0xb28] sm:$0xff] %vm515, 0.0
        %1273 = vst [vmem:[#allocation3 + $0xb30] sm:$0xff] 0.0
        %1274 = vst.msk [vmem:[#allocation3 + $0xb38] sm:$0xff] %vm515, 0.0
        %1275 = vst [vmem:[#allocation3 + $0xb40] sm:$0xff] 0.0
        %1276 = vst.msk [vmem:[#allocation3 + $0xb48] sm:$0xff] %vm515, 0.0
        %1277 = vst [vmem:[#allocation3 + $0xb50] sm:$0xff] 0.0
        %1278 = vst.msk [vmem:[#allocation3 + $0xb58] sm:$0xff] %vm515, 0.0
        %1279 = vst [vmem:[#allocation3 + $0xb60] sm:$0xff] 0.0
        %1280 = vst.msk [vmem:[#allocation3 + $0xb68] sm:$0xff] %vm515, 0.0
        %1281 = vst [vmem:[#allocation3 + $0xb70] sm:$0xff] 0.0
        %1282 = vst.msk [vmem:[#allocation3 + $0xb78] sm:$0xff] %vm515, 0.0
        %1283 = vst [vmem:[#allocation3 + $0xb80] sm:$0xff] 0.0
        %1284 = vst.msk [vmem:[#allocation3 + $0xb88] sm:$0xff] %vm515, 0.0
        %1285 = vst [vmem:[#allocation3 + $0xb90] sm:$0xff] 0.0
        %1286 = vst.msk [vmem:[#allocation3 + $0xb98] sm:$0xff] %vm515, 0.0
        %1287 = vst [vmem:[#allocation3 + $0xba0] sm:$0xff] 0.0
        %1288 = vst.msk [vmem:[#allocation3 + $0xba8] sm:$0xff] %vm515, 0.0
        %1289 = vst [vmem:[#allocation3 + $0xbb0] sm:$0xff] 0.0
        %1290 = vst.msk [vmem:[#allocation3 + $0xbb8] sm:$0xff] %vm515, 0.0
        %1291 = vst [vmem:[#allocation3 + $0xbc0] sm:$0xff] 0.0
        %1292 = vst.msk [vmem:[#allocation3 + $0xbc8] sm:$0xff] %vm515, 0.0
        %1293 = vst [vmem:[#allocation3 + $0xbd0] sm:$0xff] 0.0
        %1294 = vst.msk [vmem:[#allocation3 + $0xbd8] sm:$0xff] %vm515, 0.0
        %1295 = vst [vmem:[#allocation3 + $0xbe0] sm:$0xff] 0.0
        %1296 = vst.msk [vmem:[#allocation3 + $0xbe8] sm:$0xff] %vm515, 0.0
        %1297 = vst [vmem:[#allocation3 + $0xbf0] sm:$0xff] 0.0
        %1298 = vst.msk [vmem:[#allocation3 + $0xbf8] sm:$0xff] %vm515, 0.0
        %1299 = vst [vmem:[#allocation3 + $0xc00] sm:$0xff] 0.0
        %1300 = vst.msk [vmem:[#allocation3 + $0xc08] sm:$0xff] %vm515, 0.0
        %1301 = vst [vmem:[#allocation3 + $0xc10] sm:$0xff] 0.0
        %1302 = vst.msk [vmem:[#allocation3 + $0xc18] sm:$0xff] %vm515, 0.0
        %1303 = vst [vmem:[#allocation3 + $0xc20] sm:$0xff] 0.0
        %1304 = vst.msk [vmem:[#allocation3 + $0xc28] sm:$0xff] %vm515, 0.0
        %1305 = vst [vmem:[#allocation3 + $0xc30] sm:$0xff] 0.0
        %1306 = vst.msk [vmem:[#allocation3 + $0xc38] sm:$0xff] %vm515, 0.0
        %1307 = vst [vmem:[#allocation3 + $0xc40] sm:$0xff] 0.0
        %1308 = vst.msk [vmem:[#allocation3 + $0xc48] sm:$0xff] %vm515, 0.0
        %1309 = vst [vmem:[#allocation3 + $0xc50] sm:$0xff] 0.0
        %1310 = vst.msk [vmem:[#allocation3 + $0xc58] sm:$0xff] %vm515, 0.0
        %1311 = vst [vmem:[#allocation3 + $0xc60] sm:$0xff] 0.0
        %1312 = vst.msk [vmem:[#allocation3 + $0xc68] sm:$0xff] %vm515, 0.0
        %1313 = vst [vmem:[#allocation3 + $0xc70] sm:$0xff] 0.0
        %1314 = vst.msk [vmem:[#allocation3 + $0xc78] sm:$0xff] %vm515, 0.0
        %1315 = vst [vmem:[#allocation3 + $0xc80] sm:$0xff] 0.0
        %1316 = vst.msk [vmem:[#allocation3 + $0xc88] sm:$0xff] %vm515, 0.0
        %1317 = vst [vmem:[#allocation3 + $0xc90] sm:$0xff] 0.0
        %1318 = vst.msk [vmem:[#allocation3 + $0xc98] sm:$0xff] %vm515, 0.0
        %1319 = vst [vmem:[#allocation3 + $0xca0] sm:$0xff] 0.0
        %1320 = vst.msk [vmem:[#allocation3 + $0xca8] sm:$0xff] %vm515, 0.0
        %1321 = vst [vmem:[#allocation3 + $0xcb0] sm:$0xff] 0.0
        %1322 = vst.msk [vmem:[#allocation3 + $0xcb8] sm:$0xff] %vm515, 0.0
        %1323 = vst [vmem:[#allocation3 + $0xcc0] sm:$0xff] 0.0
        %1324 = vst.msk [vmem:[#allocation3 + $0xcc8] sm:$0xff] %vm515, 0.0
        %1325 = vst [vmem:[#allocation3 + $0xcd0] sm:$0xff] 0.0
        %1326 = vst.msk [vmem:[#allocation3 + $0xcd8] sm:$0xff] %vm515, 0.0
        %1327 = vst [vmem:[#allocation3 + $0xce0] sm:$0xff] 0.0
        %1328 = vst.msk [vmem:[#allocation3 + $0xce8] sm:$0xff] %vm515, 0.0
        %1329 = vst [vmem:[#allocation3 + $0xcf0] sm:$0xff] 0.0
        %1330 = vst.msk [vmem:[#allocation3 + $0xcf8] sm:$0xff] %vm515, 0.0
        %1331 = vst [vmem:[#allocation3 + $0xd00] sm:$0xff] 0.0
        %1332 = vst.msk [vmem:[#allocation3 + $0xd08] sm:$0xff] %vm515, 0.0
        %1333 = vst [vmem:[#allocation3 + $0xd10] sm:$0xff] 0.0
        %1334 = vst.msk [vmem:[#allocation3 + $0xd18] sm:$0xff] %vm515, 0.0
        %1335 = vst [vmem:[#allocation3 + $0xd20] sm:$0xff] 0.0
        %1336 = vst.msk [vmem:[#allocation3 + $0xd28] sm:$0xff] %vm515, 0.0
        %1337 = vst [vmem:[#allocation3 + $0xd30] sm:$0xff] 0.0
        %1338 = vst.msk [vmem:[#allocation3 + $0xd38] sm:$0xff] %vm515, 0.0
        %1339 = vst [vmem:[#allocation3 + $0xd40] sm:$0xff] 0.0
        %1340 = vst.msk [vmem:[#allocation3 + $0xd48] sm:$0xff] %vm515, 0.0
        %1341 = vst [vmem:[#allocation3 + $0xd50] sm:$0xff] 0.0
        %1342 = vst.msk [vmem:[#allocation3 + $0xd58] sm:$0xff] %vm515, 0.0
        %1343 = vst [vmem:[#allocation3 + $0xd60] sm:$0xff] 0.0
        %1344 = vst.msk [vmem:[#allocation3 + $0xd68] sm:$0xff] %vm515, 0.0
        %1345 = vst [vmem:[#allocation3 + $0xd70] sm:$0xff] 0.0
        %1346 = vst.msk [vmem:[#allocation3 + $0xd78] sm:$0xff] %vm515, 0.0
        %1347 = vst [vmem:[#allocation3 + $0xd80] sm:$0xff] 0.0
        %1348 = vst.msk [vmem:[#allocation3 + $0xd88] sm:$0xff] %vm515, 0.0
        %1349 = vst [vmem:[#allocation3 + $0xd90] sm:$0xff] 0.0
        %1350 = vst.msk [vmem:[#allocation3 + $0xd98] sm:$0xff] %vm515, 0.0
        %1351 = vst [vmem:[#allocation3 + $0xda0] sm:$0xff] 0.0
        %1352 = vst.msk [vmem:[#allocation3 + $0xda8] sm:$0xff] %vm515, 0.0
        %1353 = vst [vmem:[#allocation3 + $0xdb0] sm:$0xff] 0.0
        %1354 = vst.msk [vmem:[#allocation3 + $0xdb8] sm:$0xff] %vm515, 0.0
        %1355 = vst [vmem:[#allocation3 + $0xdc0] sm:$0xff] 0.0
        %1356 = vst.msk [vmem:[#allocation3 + $0xdc8] sm:$0xff] %vm515, 0.0
        %1357 = vst [vmem:[#allocation3 + $0xdd0] sm:$0xff] 0.0
        %1358 = vst.msk [vmem:[#allocation3 + $0xdd8] sm:$0xff] %vm515, 0.0
        %1359 = vst [vmem:[#allocation3 + $0xde0] sm:$0xff] 0.0
        %1360 = vst.msk [vmem:[#allocation3 + $0xde8] sm:$0xff] %vm515, 0.0
        %1361 = vst [vmem:[#allocation3 + $0xdf0] sm:$0xff] 0.0
        %1362 = vst.msk [vmem:[#allocation3 + $0xdf8] sm:$0xff] %vm515, 0.0
        %1363 = vst [vmem:[#allocation3 + $0xe00] sm:$0xff] 0.0
        %1364 = vst.msk [vmem:[#allocation3 + $0xe08] sm:$0xff] %vm515, 0.0
        %1365 = vst [vmem:[#allocation3 + $0xe10] sm:$0xff] 0.0
        %1366 = vst.msk [vmem:[#allocation3 + $0xe18] sm:$0xff] %vm515, 0.0
        %1367 = vst [vmem:[#allocation3 + $0xe20] sm:$0xff] 0.0
        %1368 = vst.msk [vmem:[#allocation3 + $0xe28] sm:$0xff] %vm515, 0.0
        %1369 = vst [vmem:[#allocation3 + $0xe30] sm:$0xff] 0.0
        %1370 = vst.msk [vmem:[#allocation3 + $0xe38] sm:$0xff] %vm515, 0.0
        %1371 = vst [vmem:[#allocation3 + $0xe40] sm:$0xff] 0.0
        %1372 = vst.msk [vmem:[#allocation3 + $0xe48] sm:$0xff] %vm515, 0.0
        %1373 = vst [vmem:[#allocation3 + $0xe50] sm:$0xff] 0.0
        %1374 = vst.msk [vmem:[#allocation3 + $0xe58] sm:$0xff] %vm515, 0.0
        %1375 = vst [vmem:[#allocation3 + $0xe60] sm:$0xff] 0.0
        %1376 = vst.msk [vmem:[#allocation3 + $0xe68] sm:$0xff] %vm515, 0.0
        %1377 = vst [vmem:[#allocation3 + $0xe70] sm:$0xff] 0.0
        %1378 = vst.msk [vmem:[#allocation3 + $0xe78] sm:$0xff] %vm515, 0.0
        %1379 = vst [vmem:[#allocation3 + $0xe80] sm:$0xff] 0.0
        %1380 = vst.msk [vmem:[#allocation3 + $0xe88] sm:$0xff] %vm515, 0.0
        %1381 = vst [vmem:[#allocation3 + $0xe90] sm:$0xff] 0.0
        %1382 = vst.msk [vmem:[#allocation3 + $0xe98] sm:$0xff] %vm515, 0.0
        %1383 = vst [vmem:[#allocation3 + $0xea0] sm:$0xff] 0.0
        %1384 = vst.msk [vmem:[#allocation3 + $0xea8] sm:$0xff] %vm515, 0.0
        %1385 = vst [vmem:[#allocation3 + $0xeb0] sm:$0xff] 0.0
        %1386 = vst.msk [vmem:[#allocation3 + $0xeb8] sm:$0xff] %vm515, 0.0
        %1387 = vst [vmem:[#allocation3 + $0xec0] sm:$0xff] 0.0
        %1388 = vst.msk [vmem:[#allocation3 + $0xec8] sm:$0xff] %vm515, 0.0
        %1389 = vst [vmem:[#allocation3 + $0xed0] sm:$0xff] 0.0
        %1390 = vst.msk [vmem:[#allocation3 + $0xed8] sm:$0xff] %vm515, 0.0
        %1391 = vst [vmem:[#allocation3 + $0xee0] sm:$0xff] 0.0
        %1392 = vst.msk [vmem:[#allocation3 + $0xee8] sm:$0xff] %vm515, 0.0
        %1393 = vst [vmem:[#allocation3 + $0xef0] sm:$0xff] 0.0
        %1394 = vst.msk [vmem:[#allocation3 + $0xef8] sm:$0xff] %vm515, 0.0
        %1395 = vst [vmem:[#allocation3 + $0xf00] sm:$0xff] 0.0
        %1396 = vst.msk [vmem:[#allocation3 + $0xf08] sm:$0xff] %vm515, 0.0
        %1397 = vst [vmem:[#allocation3 + $0xf10] sm:$0xff] 0.0
        %1398 = vst.msk [vmem:[#allocation3 + $0xf18] sm:$0xff] %vm515, 0.0
        %1399 = vst [vmem:[#allocation3 + $0xf20] sm:$0xff] 0.0
        %1400 = vst.msk [vmem:[#allocation3 + $0xf28] sm:$0xff] %vm515, 0.0
        %1401 = vst [vmem:[#allocation3 + $0xf30] sm:$0xff] 0.0
        %1402 = vst.msk [vmem:[#allocation3 + $0xf38] sm:$0xff] %vm515, 0.0
        %1403 = vst [vmem:[#allocation3 + $0xf40] sm:$0xff] 0.0
        %1404 = vst.msk [vmem:[#allocation3 + $0xf48] sm:$0xff] %vm515, 0.0
        %1405 = vst [vmem:[#allocation3 + $0xf50] sm:$0xff] 0.0
        %1406 = vst.msk [vmem:[#allocation3 + $0xf58] sm:$0xff] %vm515, 0.0
        %1407 = vst [vmem:[#allocation3 + $0xf60] sm:$0xff] 0.0
        %1408 = vst.msk [vmem:[#allocation3 + $0xf68] sm:$0xff] %vm515, 0.0
        %1409 = vst [vmem:[#allocation3 + $0xf70] sm:$0xff] 0.0
        %1410 = vst.msk [vmem:[#allocation3 + $0xf78] sm:$0xff] %vm515, 0.0
        %1411 = vst [vmem:[#allocation3 + $0xf80] sm:$0xff] 0.0
        %1412 = vst.msk [vmem:[#allocation3 + $0xf88] sm:$0xff] %vm515, 0.0
        %1413 = vst [vmem:[#allocation3 + $0xf90] sm:$0xff] 0.0
        %1414 = vst.msk [vmem:[#allocation3 + $0xf98] sm:$0xff] %vm515, 0.0
        %1415 = vst [vmem:[#allocation3 + $0xfa0] sm:$0xff] 0.0
        %1416 = vst.msk [vmem:[#allocation3 + $0xfa8] sm:$0xff] %vm515, 0.0
        %1417 = vst [vmem:[#allocation3 + $0xfb0] sm:$0xff] 0.0
        %1418 = vst.msk [vmem:[#allocation3 + $0xfb8] sm:$0xff] %vm515, 0.0
        %1419 = vst [vmem:[#allocation3 + $0xfc0] sm:$0xff] 0.0
        %1420 = vst.msk [vmem:[#allocation3 + $0xfc8] sm:$0xff] %vm515, 0.0
        %1421 = vst [vmem:[#allocation3 + $0xfd0] sm:$0xff] 0.0
        %1422 = vst.msk [vmem:[#allocation3 + $0xfd8] sm:$0xff] %vm515, 0.0
        %1423 = vst [vmem:[#allocation3 + $0xfe0] sm:$0xff] 0.0
        %1424 = vst.msk [vmem:[#allocation3 + $0xfe8] sm:$0xff] %vm515, 0.0
        %1425 = vst [vmem:[#allocation3 + $0xff0] sm:$0xff] 0.0
        %1426 = vst.msk [vmem:[#allocation3 + $0xff8] sm:$0xff] %vm515, 0.0
        %1427 = vst [vmem:[#allocation3 + $0x1000] sm:$0xff] 0.0
        %1428 = vst.msk [vmem:[#allocation3 + $0x1008] sm:$0xff] %vm515, 0.0
        %1429 = vst [vmem:[#allocation3 + $0x1010] sm:$0xff] 0.0
        %1430 = vst.msk [vmem:[#allocation3 + $0x1018] sm:$0xff] %vm515, 0.0
        %1431 = vst [vmem:[#allocation3 + $0x1020] sm:$0xff] 0.0
        %1432 = vst.msk [vmem:[#allocation3 + $0x1028] sm:$0xff] %vm515, 0.0
        %1433 = vst [vmem:[#allocation3 + $0x1030] sm:$0xff] 0.0
        %1434 = vst.msk [vmem:[#allocation3 + $0x1038] sm:$0xff] %vm515, 0.0
        %1435 = vst [vmem:[#allocation3 + $0x1040] sm:$0xff] 0.0
        %1436 = vst.msk [vmem:[#allocation3 + $0x1048] sm:$0xff] %vm515, 0.0
        %1437 = vst [vmem:[#allocation3 + $0x1050] sm:$0xff] 0.0
        %1438 = vst.msk [vmem:[#allocation3 + $0x1058] sm:$0xff] %vm515, 0.0
        %1439 = vst [vmem:[#allocation3 + $0x1060] sm:$0xff] 0.0
        %1440 = vst.msk [vmem:[#allocation3 + $0x1068] sm:$0xff] %vm515, 0.0
        %1441 = vst [vmem:[#allocation3 + $0x1070] sm:$0xff] 0.0
        %1442 = vst.msk [vmem:[#allocation3 + $0x1078] sm:$0xff] %vm515, 0.0
        %1443 = vst [vmem:[#allocation3 + $0x1080] sm:$0xff] 0.0
        %1444 = vst.msk [vmem:[#allocation3 + $0x1088] sm:$0xff] %vm515, 0.0
        %1445 = vst [vmem:[#allocation3 + $0x1090] sm:$0xff] 0.0
        %1446 = vst.msk [vmem:[#allocation3 + $0x1098] sm:$0xff] %vm515, 0.0
        %1447 = vst [vmem:[#allocation3 + $0x10a0] sm:$0xff] 0.0
        %1448 = vst.msk [vmem:[#allocation3 + $0x10a8] sm:$0xff] %vm515, 0.0
        %1449 = vst [vmem:[#allocation3 + $0x10b0] sm:$0xff] 0.0
        %1450 = vst.msk [vmem:[#allocation3 + $0x10b8] sm:$0xff] %vm515, 0.0
        %1451 = vst [vmem:[#allocation3 + $0x10c0] sm:$0xff] 0.0
        %1452 = vst.msk [vmem:[#allocation3 + $0x10c8] sm:$0xff] %vm515, 0.0
        %1453 = vst [vmem:[#allocation3 + $0x10d0] sm:$0xff] 0.0
        %1454 = vst.msk [vmem:[#allocation3 + $0x10d8] sm:$0xff] %vm515, 0.0
        %1455 = vst [vmem:[#allocation3 + $0x10e0] sm:$0xff] 0.0
        %1456 = vst.msk [vmem:[#allocation3 + $0x10e8] sm:$0xff] %vm515, 0.0
        %1457 = vst [vmem:[#allocation3 + $0x10f0] sm:$0xff] 0.0
        %1458 = vst.msk [vmem:[#allocation3 + $0x10f8] sm:$0xff] %vm515, 0.0
        %1459 = vst [vmem:[#allocation3 + $0x1100] sm:$0xff] 0.0
        %1460 = vst.msk [vmem:[#allocation3 + $0x1108] sm:$0xff] %vm515, 0.0
        %1461 = vst [vmem:[#allocation3 + $0x1110] sm:$0xff] 0.0
        %1462 = vst.msk [vmem:[#allocation3 + $0x1118] sm:$0xff] %vm515, 0.0
        %1463 = vst [vmem:[#allocation3 + $0x1120] sm:$0xff] 0.0
        %1464 = vst.msk [vmem:[#allocation3 + $0x1128] sm:$0xff] %vm515, 0.0
        %1465 = vst [vmem:[#allocation3 + $0x1130] sm:$0xff] 0.0
        %1466 = vst.msk [vmem:[#allocation3 + $0x1138] sm:$0xff] %vm515, 0.0
        %1467 = vst [vmem:[#allocation3 + $0x1140] sm:$0xff] 0.0
        %1468 = vst.msk [vmem:[#allocation3 + $0x1148] sm:$0xff] %vm515, 0.0
        %1469 = vst [vmem:[#allocation3 + $0x1150] sm:$0xff] 0.0
        %1470 = vst.msk [vmem:[#allocation3 + $0x1158] sm:$0xff] %vm515, 0.0
        %1471 = vst [vmem:[#allocation3 + $0x1160] sm:$0xff] 0.0
        %1472 = vst.msk [vmem:[#allocation3 + $0x1168] sm:$0xff] %vm515, 0.0
        %1473 = vst [vmem:[#allocation3 + $0x1170] sm:$0xff] 0.0
        %1474 = vst.msk [vmem:[#allocation3 + $0x1178] sm:$0xff] %vm515, 0.0
        %1475 = vst [vmem:[#allocation3 + $0x1180] sm:$0xff] 0.0
        %1476 = vst.msk [vmem:[#allocation3 + $0x1188] sm:$0xff] %vm515, 0.0
        %1477 = vst [vmem:[#allocation3 + $0x1190] sm:$0xff] 0.0
        %1478 = vst.msk [vmem:[#allocation3 + $0x1198] sm:$0xff] %vm515, 0.0
        %1479 = vst [vmem:[#allocation3 + $0x11a0] sm:$0xff] 0.0
        %1480 = vst.msk [vmem:[#allocation3 + $0x11a8] sm:$0xff] %vm515, 0.0
        %1481 = vst [vmem:[#allocation3 + $0x11b0] sm:$0xff] 0.0
        %1482 = vst.msk [vmem:[#allocation3 + $0x11b8] sm:$0xff] %vm515, 0.0
        %1483 = vst [vmem:[#allocation3 + $0x11c0] sm:$0xff] 0.0
        %1484 = vst.msk [vmem:[#allocation3 + $0x11c8] sm:$0xff] %vm515, 0.0
        %1485 = vst [vmem:[#allocation3 + $0x11d0] sm:$0xff] 0.0
        %1486 = vst.msk [vmem:[#allocation3 + $0x11d8] sm:$0xff] %vm515, 0.0
        %1487 = vst [vmem:[#allocation3 + $0x11e0] sm:$0xff] 0.0
        %1488 = vst.msk [vmem:[#allocation3 + $0x11e8] sm:$0xff] %vm515, 0.0
        %1489 = vst [vmem:[#allocation3 + $0x11f0] sm:$0xff] 0.0
        %1490 = vst.msk [vmem:[#allocation3 + $0x11f8] sm:$0xff] %vm515, 0.0
        %1491 = vst [vmem:[#allocation3 + $0x1200] sm:$0xff] 0.0
        %1492 = vst.msk [vmem:[#allocation3 + $0x1208] sm:$0xff] %vm515, 0.0
        %1493 = vst [vmem:[#allocation3 + $0x1210] sm:$0xff] 0.0
        %1494 = vst.msk [vmem:[#allocation3 + $0x1218] sm:$0xff] %vm515, 0.0
        %1495 = vst [vmem:[#allocation3 + $0x1220] sm:$0xff] 0.0
        %1496 = vst.msk [vmem:[#allocation3 + $0x1228] sm:$0xff] %vm515, 0.0
        %1497 = vst [vmem:[#allocation3 + $0x1230] sm:$0xff] 0.0
        %1498 = vst.msk [vmem:[#allocation3 + $0x1238] sm:$0xff] %vm515, 0.0
        %1499 = vst [vmem:[#allocation3 + $0x1240] sm:$0xff] 0.0
        %1500 = vst.msk [vmem:[#allocation3 + $0x1248] sm:$0xff] %vm515, 0.0
        %1501 = vst [vmem:[#allocation3 + $0x1250] sm:$0xff] 0.0
        %1502 = vst.msk [vmem:[#allocation3 + $0x1258] sm:$0xff] %vm515, 0.0
        %1503 = vst [vmem:[#allocation3 + $0x1260] sm:$0xff] 0.0
        %1504 = vst.msk [vmem:[#allocation3 + $0x1268] sm:$0xff] %vm515, 0.0
        %1505 = vst [vmem:[#allocation3 + $0x1270] sm:$0xff] 0.0
        %1506 = vst.msk [vmem:[#allocation3 + $0x1278] sm:$0xff] %vm515, 0.0
        %1507 = vst [vmem:[#allocation3 + $0x1280] sm:$0xff] 0.0
        %1508 = vst.msk [vmem:[#allocation3 + $0x1288] sm:$0xff] %vm515, 0.0
        %1509 = vst [vmem:[#allocation3 + $0x1290] sm:$0xff] 0.0
        %1510 = vst.msk [vmem:[#allocation3 + $0x1298] sm:$0xff] %vm515, 0.0
        %1511 = vst [vmem:[#allocation3 + $0x12a0] sm:$0xff] 0.0
        %1512 = vst.msk [vmem:[#allocation3 + $0x12a8] sm:$0xff] %vm515, 0.0
        %1513 = vst [vmem:[#allocation3 + $0x12b0] sm:$0xff] 0.0
        %1514 = vst.msk [vmem:[#allocation3 + $0x12b8] sm:$0xff] %vm515, 0.0
        %1515 = vst [vmem:[#allocation3 + $0x12c0] sm:$0xff] 0.0
        %1516 = vst.msk [vmem:[#allocation3 + $0x12c8] sm:$0xff] %vm515, 0.0
        %1517 = vst [vmem:[#allocation3 + $0x12d0] sm:$0xff] 0.0
        %1518 = vst.msk [vmem:[#allocation3 + $0x12d8] sm:$0xff] %vm515, 0.0
        %1519 = vst [vmem:[#allocation3 + $0x12e0] sm:$0xff] 0.0
        %1520 = vst.msk [vmem:[#allocation3 + $0x12e8] sm:$0xff] %vm515, 0.0
        %1521 = vst [vmem:[#allocation3 + $0x12f0] sm:$0xff] 0.0
        %1522 = vst.msk [vmem:[#allocation3 + $0x12f8] sm:$0xff] %vm515, 0.0
        %1523 = vst [vmem:[#allocation3 + $0x1300] sm:$0xff] 0.0
        %1524 = vst.msk [vmem:[#allocation3 + $0x1308] sm:$0xff] %vm515, 0.0
        %1525 = vst [vmem:[#allocation3 + $0x1310] sm:$0xff] 0.0
        %1526 = vst.msk [vmem:[#allocation3 + $0x1318] sm:$0xff] %vm515, 0.0
        %1527 = vst [vmem:[#allocation3 + $0x1320] sm:$0xff] 0.0
        %1528 = vst.msk [vmem:[#allocation3 + $0x1328] sm:$0xff] %vm515, 0.0
        %1529 = vst [vmem:[#allocation3 + $0x1330] sm:$0xff] 0.0
        %1530 = vst.msk [vmem:[#allocation3 + $0x1338] sm:$0xff] %vm515, 0.0
        %1531 = vst [vmem:[#allocation3 + $0x1340] sm:$0xff] 0.0
        %1532 = vst.msk [vmem:[#allocation3 + $0x1348] sm:$0xff] %vm515, 0.0
        %1533 = vst [vmem:[#allocation3 + $0x1350] sm:$0xff] 0.0
        %1534 = vst.msk [vmem:[#allocation3 + $0x1358] sm:$0xff] %vm515, 0.0
        %1535 = vst [vmem:[#allocation3 + $0x1360] sm:$0xff] 0.0
        %1536 = vst.msk [vmem:[#allocation3 + $0x1368] sm:$0xff] %vm515, 0.0
        %1537 = vst [vmem:[#allocation3 + $0x1370] sm:$0xff] 0.0
        %1538 = vst.msk [vmem:[#allocation3 + $0x1378] sm:$0xff] %vm515, 0.0
        %1539 = vst [vmem:[#allocation3 + $0x1380] sm:$0xff] 0.0
        %1540 = vst.msk [vmem:[#allocation3 + $0x1388] sm:$0xff] %vm515, 0.0
        %1541 = vst [vmem:[#allocation3 + $0x1390] sm:$0xff] 0.0
        %1542 = vst.msk [vmem:[#allocation3 + $0x1398] sm:$0xff] %vm515, 0.0
        %1543 = vst [vmem:[#allocation3 + $0x13a0] sm:$0xff] 0.0
        %1544 = vst.msk [vmem:[#allocation3 + $0x13a8] sm:$0xff] %vm515, 0.0
        %1545 = vst [vmem:[#allocation3 + $0x13b0] sm:$0xff] 0.0
        %1546 = vst.msk [vmem:[#allocation3 + $0x13b8] sm:$0xff] %vm515, 0.0
        %1547 = vst [vmem:[#allocation3 + $0x13c0] sm:$0xff] 0.0
        %1548 = vst.msk [vmem:[#allocation3 + $0x13c8] sm:$0xff] %vm515, 0.0
        %1549 = vst [vmem:[#allocation3 + $0x13d0] sm:$0xff] 0.0
        %1550 = vst.msk [vmem:[#allocation3 + $0x13d8] sm:$0xff] %vm515, 0.0
        %1551 = vst [vmem:[#allocation3 + $0x13e0] sm:$0xff] 0.0
        %1552 = vst.msk [vmem:[#allocation3 + $0x13e8] sm:$0xff] %vm515, 0.0
        %1553 = vst [vmem:[#allocation3 + $0x13f0] sm:$0xff] 0.0
        %1554 = vst.msk [vmem:[#allocation3 + $0x13f8] sm:$0xff] %vm515, 0.0
        %1555 = vst [vmem:[#allocation3 + $0x1400] sm:$0xff] 0.0
        %1556 = vst.msk [vmem:[#allocation3 + $0x1408] sm:$0xff] %vm515, 0.0
        %1557 = vst [vmem:[#allocation3 + $0x1410] sm:$0xff] 0.0
        %1558 = vst.msk [vmem:[#allocation3 + $0x1418] sm:$0xff] %vm515, 0.0
        %1559 = vst [vmem:[#allocation3 + $0x1420] sm:$0xff] 0.0
        %1560 = vst.msk [vmem:[#allocation3 + $0x1428] sm:$0xff] %vm515, 0.0
        %1561 = vst [vmem:[#allocation3 + $0x1430] sm:$0xff] 0.0
        %1562 = vst.msk [vmem:[#allocation3 + $0x1438] sm:$0xff] %vm515, 0.0
        %1563 = vst [vmem:[#allocation3 + $0x1440] sm:$0xff] 0.0
        %1564 = vst.msk [vmem:[#allocation3 + $0x1448] sm:$0xff] %vm515, 0.0
        %1565 = vst [vmem:[#allocation3 + $0x1450] sm:$0xff] 0.0
        %1566 = vst.msk [vmem:[#allocation3 + $0x1458] sm:$0xff] %vm515, 0.0
        %1567 = vst [vmem:[#allocation3 + $0x1460] sm:$0xff] 0.0
        %1568 = vst.msk [vmem:[#allocation3 + $0x1468] sm:$0xff] %vm515, 0.0
        %1569 = vst [vmem:[#allocation3 + $0x1470] sm:$0xff] 0.0
        %1570 = vst.msk [vmem:[#allocation3 + $0x1478] sm:$0xff] %vm515, 0.0
        %1571 = vst [vmem:[#allocation3 + $0x1480] sm:$0xff] 0.0
        %1572 = vst.msk [vmem:[#allocation3 + $0x1488] sm:$0xff] %vm515, 0.0
        %1573 = vst [vmem:[#allocation3 + $0x1490] sm:$0xff] 0.0
        %1574 = vst.msk [vmem:[#allocation3 + $0x1498] sm:$0xff] %vm515, 0.0
        %1575 = vst [vmem:[#allocation3 + $0x14a0] sm:$0xff] 0.0
        %1576 = vst.msk [vmem:[#allocation3 + $0x14a8] sm:$0xff] %vm515, 0.0
        %1577 = vst [vmem:[#allocation3 + $0x14b0] sm:$0xff] 0.0
        %1578 = vst.msk [vmem:[#allocation3 + $0x14b8] sm:$0xff] %vm515, 0.0
        %1579 = vst [vmem:[#allocation3 + $0x14c0] sm:$0xff] 0.0
        %1580 = vst.msk [vmem:[#allocation3 + $0x14c8] sm:$0xff] %vm515, 0.0
        %1581 = vst [vmem:[#allocation3 + $0x14d0] sm:$0xff] 0.0
        %1582 = vst.msk [vmem:[#allocation3 + $0x14d8] sm:$0xff] %vm515, 0.0
        %1583 = vst [vmem:[#allocation3 + $0x14e0] sm:$0xff] 0.0
        %1584 = vst.msk [vmem:[#allocation3 + $0x14e8] sm:$0xff] %vm515, 0.0
        %1585 = vst [vmem:[#allocation3 + $0x14f0] sm:$0xff] 0.0
        %1586 = vst.msk [vmem:[#allocation3 + $0x14f8] sm:$0xff] %vm515, 0.0
        %1587 = vst [vmem:[#allocation3 + $0x1500] sm:$0xff] 0.0
        %1588 = vst.msk [vmem:[#allocation3 + $0x1508] sm:$0xff] %vm515, 0.0
        %1589 = vst [vmem:[#allocation3 + $0x1510] sm:$0xff] 0.0
        %1590 = vst.msk [vmem:[#allocation3 + $0x1518] sm:$0xff] %vm515, 0.0
        %1591 = vst [vmem:[#allocation3 + $0x1520] sm:$0xff] 0.0
        %1592 = vst.msk [vmem:[#allocation3 + $0x1528] sm:$0xff] %vm515, 0.0
        %1593 = vst [vmem:[#allocation3 + $0x1530] sm:$0xff] 0.0
        %1594 = vst.msk [vmem:[#allocation3 + $0x1538] sm:$0xff] %vm515, 0.0
        %1595 = vst [vmem:[#allocation3 + $0x1540] sm:$0xff] 0.0
        %1596 = vst.msk [vmem:[#allocation3 + $0x1548] sm:$0xff] %vm515, 0.0
        %1597 = vst [vmem:[#allocation3 + $0x1550] sm:$0xff] 0.0
        %1598 = vst.msk [vmem:[#allocation3 + $0x1558] sm:$0xff] %vm515, 0.0
        %1599 = vst [vmem:[#allocation3 + $0x1560] sm:$0xff] 0.0
        %1600 = vst.msk [vmem:[#allocation3 + $0x1568] sm:$0xff] %vm515, 0.0
        %1601 = vst [vmem:[#allocation3 + $0x1570] sm:$0xff] 0.0
        %1602 = vst.msk [vmem:[#allocation3 + $0x1578] sm:$0xff] %vm515, 0.0
        %1603 = vst [vmem:[#allocation3 + $0x1580] sm:$0xff] 0.0
        %1604 = vst.msk [vmem:[#allocation3 + $0x1588] sm:$0xff] %vm515, 0.0
        %1605 = vst [vmem:[#allocation3 + $0x1590] sm:$0xff] 0.0
        %1606 = vst.msk [vmem:[#allocation3 + $0x1598] sm:$0xff] %vm515, 0.0
        %1607 = vst [vmem:[#allocation3 + $0x15a0] sm:$0xff] 0.0
        %1608 = vst.msk [vmem:[#allocation3 + $0x15a8] sm:$0xff] %vm515, 0.0
        %1609 = vst [vmem:[#allocation3 + $0x15b0] sm:$0xff] 0.0
        %1610 = vst.msk [vmem:[#allocation3 + $0x15b8] sm:$0xff] %vm515, 0.0
        %1611 = vst [vmem:[#allocation3 + $0x15c0] sm:$0xff] 0.0
        %1612 = vst.msk [vmem:[#allocation3 + $0x15c8] sm:$0xff] %vm515, 0.0
        %1613 = vst [vmem:[#allocation3 + $0x15d0] sm:$0xff] 0.0
        %1614 = vst.msk [vmem:[#allocation3 + $0x15d8] sm:$0xff] %vm515, 0.0
        %1615 = vst [vmem:[#allocation3 + $0x15e0] sm:$0xff] 0.0
        %1616 = vst.msk [vmem:[#allocation3 + $0x15e8] sm:$0xff] %vm515, 0.0
        %1617 = vst [vmem:[#allocation3 + $0x15f0] sm:$0xff] 0.0
        %1618 = vst.msk [vmem:[#allocation3 + $0x15f8] sm:$0xff] %vm515, 0.0
        %1619 = vst [vmem:[#allocation3 + $0x1600] sm:$0xff] 0.0
        %1620 = vst.msk [vmem:[#allocation3 + $0x1608] sm:$0xff] %vm515, 0.0
        %1621 = vst [vmem:[#allocation3 + $0x1610] sm:$0xff] 0.0
        %1622 = vst.msk [vmem:[#allocation3 + $0x1618] sm:$0xff] %vm515, 0.0
        %1623 = vst [vmem:[#allocation3 + $0x1620] sm:$0xff] 0.0
        %1624 = vst.msk [vmem:[#allocation3 + $0x1628] sm:$0xff] %vm515, 0.0
        %1625 = vst [vmem:[#allocation3 + $0x1630] sm:$0xff] 0.0
        %1626 = vst.msk [vmem:[#allocation3 + $0x1638] sm:$0xff] %vm515, 0.0
        %1627 = vst [vmem:[#allocation3 + $0x1640] sm:$0xff] 0.0
        %1628 = vst.msk [vmem:[#allocation3 + $0x1648] sm:$0xff] %vm515, 0.0
        %1629 = vst [vmem:[#allocation3 + $0x1650] sm:$0xff] 0.0
        %1630 = vst.msk [vmem:[#allocation3 + $0x1658] sm:$0xff] %vm515, 0.0
        %1631 = vst [vmem:[#allocation3 + $0x1660] sm:$0xff] 0.0
        %1632 = vst.msk [vmem:[#allocation3 + $0x1668] sm:$0xff] %vm515, 0.0
        %1633 = vst [vmem:[#allocation3 + $0x1670] sm:$0xff] 0.0
        %1634 = vst.msk [vmem:[#allocation3 + $0x1678] sm:$0xff] %vm515, 0.0
        %1635 = vst [vmem:[#allocation3 + $0x1680] sm:$0xff] 0.0
        %1636 = vst.msk [vmem:[#allocation3 + $0x1688] sm:$0xff] %vm515, 0.0
        %1637 = vst [vmem:[#allocation3 + $0x1690] sm:$0xff] 0.0
        %1638 = vst.msk [vmem:[#allocation3 + $0x1698] sm:$0xff] %vm515, 0.0
        %1639 = vst [vmem:[#allocation3 + $0x16a0] sm:$0xff] 0.0
        %1640 = vst.msk [vmem:[#allocation3 + $0x16a8] sm:$0xff] %vm515, 0.0
        %1641 = vst [vmem:[#allocation3 + $0x16b0] sm:$0xff] 0.0
        %1642 = vst.msk [vmem:[#allocation3 + $0x16b8] sm:$0xff] %vm515, 0.0
        %1643 = vst [vmem:[#allocation3 + $0x16c0] sm:$0xff] 0.0
        %1644 = vst.msk [vmem:[#allocation3 + $0x16c8] sm:$0xff] %vm515, 0.0
        %1645 = vst [vmem:[#allocation3 + $0x16d0] sm:$0xff] 0.0
        %1646 = vst.msk [vmem:[#allocation3 + $0x16d8] sm:$0xff] %vm515, 0.0
        %1647 = vst [vmem:[#allocation3 + $0x16e0] sm:$0xff] 0.0
        %1648 = vst.msk [vmem:[#allocation3 + $0x16e8] sm:$0xff] %vm515, 0.0
        %1649 = vst [vmem:[#allocation3 + $0x16f0] sm:$0xff] 0.0
        %1650 = vst.msk [vmem:[#allocation3 + $0x16f8] sm:$0xff] %vm515, 0.0
        %1651 = vst [vmem:[#allocation3 + $0x1700] sm:$0xff] 0.0
        %1652 = vst.msk [vmem:[#allocation3 + $0x1708] sm:$0xff] %vm515, 0.0
        %1653 = vst [vmem:[#allocation3 + $0x1710] sm:$0xff] 0.0
        %1654 = vst.msk [vmem:[#allocation3 + $0x1718] sm:$0xff] %vm515, 0.0
        %1655 = vst [vmem:[#allocation3 + $0x1720] sm:$0xff] 0.0
        %1656 = vst.msk [vmem:[#allocation3 + $0x1728] sm:$0xff] %vm515, 0.0
        %1657 = vst [vmem:[#allocation3 + $0x1730] sm:$0xff] 0.0
        %1658 = vst.msk [vmem:[#allocation3 + $0x1738] sm:$0xff] %vm515, 0.0
        %1659 = vst [vmem:[#allocation3 + $0x1740] sm:$0xff] 0.0
        %1660 = vst.msk [vmem:[#allocation3 + $0x1748] sm:$0xff] %vm515, 0.0
        %1661 = vst [vmem:[#allocation3 + $0x1750] sm:$0xff] 0.0
        %1662 = vst.msk [vmem:[#allocation3 + $0x1758] sm:$0xff] %vm515, 0.0
        %1663 = vst [vmem:[#allocation3 + $0x1760] sm:$0xff] 0.0
        %1664 = vst.msk [vmem:[#allocation3 + $0x1768] sm:$0xff] %vm515, 0.0
        %1665 = vst [vmem:[#allocation3 + $0x1770] sm:$0xff] 0.0
        %1666 = vst.msk [vmem:[#allocation3 + $0x1778] sm:$0xff] %vm515, 0.0
        %1667 = vst [vmem:[#allocation3 + $0x1780] sm:$0xff] 0.0
        %1668 = vst.msk [vmem:[#allocation3 + $0x1788] sm:$0xff] %vm515, 0.0
        %1669 = vst [vmem:[#allocation3 + $0x1790] sm:$0xff] 0.0
        %1670 = vst.msk [vmem:[#allocation3 + $0x1798] sm:$0xff] %vm515, 0.0
        %1671 = vst [vmem:[#allocation3 + $0x17a0] sm:$0xff] 0.0
        %1672 = vst.msk [vmem:[#allocation3 + $0x17a8] sm:$0xff] %vm515, 0.0
        %1673 = vst [vmem:[#allocation3 + $0x17b0] sm:$0xff] 0.0
        %1674 = vst.msk [vmem:[#allocation3 + $0x17b8] sm:$0xff] %vm515, 0.0
        %1675 = vst [vmem:[#allocation3 + $0x17c0] sm:$0xff] 0.0
        %1676 = vst.msk [vmem:[#allocation3 + $0x17c8] sm:$0xff] %vm515, 0.0
        %1677 = vst [vmem:[#allocation3 + $0x17d0] sm:$0xff] 0.0
        %1678 = vst.msk [vmem:[#allocation3 + $0x17d8] sm:$0xff] %vm515, 0.0
        %1679 = vst [vmem:[#allocation3 + $0x17e0] sm:$0xff] 0.0
        %1680 = vst.msk [vmem:[#allocation3 + $0x17e8] sm:$0xff] %vm515, 0.0
        %1681 = vst [vmem:[#allocation3 + $0x17f0] sm:$0xff] 0.0
        %1682 = vst.msk [vmem:[#allocation3 + $0x17f8] sm:$0xff] %vm515, 0.0
        %1683 = vst [vmem:[#allocation3 + $0x1800] sm:$0xff] 0.0
        %1684 = vst.msk [vmem:[#allocation3 + $0x1808] sm:$0xff] %vm515, 0.0
        %1685 = vst [vmem:[#allocation3 + $0x1810] sm:$0xff] 0.0
        %1686 = vst.msk [vmem:[#allocation3 + $0x1818] sm:$0xff] %vm515, 0.0
        %1687 = vst [vmem:[#allocation3 + $0x1820] sm:$0xff] 0.0
        %1688 = vst.msk [vmem:[#allocation3 + $0x1828] sm:$0xff] %vm515, 0.0
        %1689 = vst [vmem:[#allocation3 + $0x1830] sm:$0xff] 0.0
        %1690 = vst.msk [vmem:[#allocation3 + $0x1838] sm:$0xff] %vm515, 0.0
        %1691 = vst [vmem:[#allocation3 + $0x1840] sm:$0xff] 0.0
        %1692 = vst.msk [vmem:[#allocation3 + $0x1848] sm:$0xff] %vm515, 0.0
        %1693 = vst [vmem:[#allocation3 + $0x1850] sm:$0xff] 0.0
        %1694 = vst.msk [vmem:[#allocation3 + $0x1858] sm:$0xff] %vm515, 0.0
        %1695 = vst [vmem:[#allocation3 + $0x1860] sm:$0xff] 0.0
        %1696 = vst.msk [vmem:[#allocation3 + $0x1868] sm:$0xff] %vm515, 0.0
        %1697 = vst [vmem:[#allocation3 + $0x1870] sm:$0xff] 0.0
        %1698 = vst.msk [vmem:[#allocation3 + $0x1878] sm:$0xff] %vm515, 0.0
        %1699 = vst [vmem:[#allocation3 + $0x1880] sm:$0xff] 0.0
        %1700 = vst.msk [vmem:[#allocation3 + $0x1888] sm:$0xff] %vm515, 0.0
        %1701 = vst [vmem:[#allocation3 + $0x1890] sm:$0xff] 0.0
        %1702 = vst.msk [vmem:[#allocation3 + $0x1898] sm:$0xff] %vm515, 0.0
        %1703 = vst [vmem:[#allocation3 + $0x18a0] sm:$0xff] 0.0
        %1704 = vst.msk [vmem:[#allocation3 + $0x18a8] sm:$0xff] %vm515, 0.0
        %1705 = vst [vmem:[#allocation3 + $0x18b0] sm:$0xff] 0.0
        %1706 = vst.msk [vmem:[#allocation3 + $0x18b8] sm:$0xff] %vm515, 0.0
        %1707 = vst [vmem:[#allocation3 + $0x18c0] sm:$0xff] 0.0
        %1708 = vst.msk [vmem:[#allocation3 + $0x18c8] sm:$0xff] %vm515, 0.0
        %1709 = vst [vmem:[#allocation3 + $0x18d0] sm:$0xff] 0.0
        %1710 = vst.msk [vmem:[#allocation3 + $0x18d8] sm:$0xff] %vm515, 0.0
        %1711 = vst [vmem:[#allocation3 + $0x18e0] sm:$0xff] 0.0
        %1712 = vst.msk [vmem:[#allocation3 + $0x18e8] sm:$0xff] %vm515, 0.0
        %1713 = vst [vmem:[#allocation3 + $0x18f0] sm:$0xff] 0.0
        %1714 = vst.msk [vmem:[#allocation3 + $0x18f8] sm:$0xff] %vm515, 0.0
        %vm1715 = vcmask 539648
        %1716 = vst.msk [vmem:[#allocation4] sm:$0xff] %vm1715, 0.0
        %1717 = vst.msk [vmem:[#allocation4 + $0x8] sm:$0xff] %vm1715, 0.0
        %1718 = vst.msk [vmem:[#allocation4 + $0x10] sm:$0xff] %vm1715, 0.0
        %1719 = vst.msk [vmem:[#allocation4 + $0x18] sm:$0xff] %vm1715, 0.0
        %1720 = vst.msk [vmem:[#allocation4 + $0x20] sm:$0xff] %vm1715, 0.0
        %1721 = vst.msk [vmem:[#allocation4 + $0x28] sm:$0xff] %vm1715, 0.0
        %1722 = vst.msk [vmem:[#allocation4 + $0x30] sm:$0xff] %vm1715, 0.0
        %1723 = vst.msk [vmem:[#allocation4 + $0x38] sm:$0xff] %vm1715, 0.0
        %1724 = vst.msk [vmem:[#allocation4 + $0x40] sm:$0xff] %vm1715, 0.0
        %1725 = vst.msk [vmem:[#allocation4 + $0x48] sm:$0xff] %vm1715, 0.0
        %1726 = vst.msk [vmem:[#allocation4 + $0x50] sm:$0xff] %vm1715, 0.0
        %1727 = vst.msk [vmem:[#allocation4 + $0x58] sm:$0xff] %vm1715, 0.0
        %1728 = vst.msk [vmem:[#allocation4 + $0x60] sm:$0xff] %vm1715, 0.0
        %1729 = vst.msk [vmem:[#allocation4 + $0x68] sm:$0xff] %vm1715, 0.0
        %1730 = vst.msk [vmem:[#allocation4 + $0x70] sm:$0xff] %vm1715, 0.0
        %1731 = vst.msk [vmem:[#allocation4 + $0x78] sm:$0xff] %vm1715, 0.0
        %1732 = vst.msk [vmem:[#allocation4 + $0x80] sm:$0xff] %vm1715, 0.0
        %1733 = vst.msk [vmem:[#allocation4 + $0x88] sm:$0xff] %vm1715, 0.0
        %1734 = vst.msk [vmem:[#allocation4 + $0x90] sm:$0xff] %vm1715, 0.0
        %1735 = vst.msk [vmem:[#allocation4 + $0x98] sm:$0xff] %vm1715, 0.0
        %1736 = vst.msk [vmem:[#allocation4 + $0xa0] sm:$0xff] %vm1715, 0.0
        %1737 = vst.msk [vmem:[#allocation4 + $0xa8] sm:$0xff] %vm1715, 0.0
        %1738 = vst.msk [vmem:[#allocation4 + $0xb0] sm:$0xff] %vm1715, 0.0
        %1739 = vst.msk [vmem:[#allocation4 + $0xb8] sm:$0xff] %vm1715, 0.0
        %1740 = vst.msk [vmem:[#allocation4 + $0xc0] sm:$0xff] %vm1715, 0.0
        %1741 = vst.msk [vmem:[#allocation4 + $0xc8] sm:$0xff] %vm1715, 0.0
        %1742 = vst.msk [vmem:[#allocation4 + $0xd0] sm:$0xff] %vm1715, 0.0
        %1743 = vst.msk [vmem:[#allocation4 + $0xd8] sm:$0xff] %vm1715, 0.0
        %1744 = vst.msk [vmem:[#allocation4 + $0xe0] sm:$0xff] %vm1715, 0.0
        %1745 = vst.msk [vmem:[#allocation4 + $0xe8] sm:$0xff] %vm1715, 0.0
        %1746 = vst.msk [vmem:[#allocation4 + $0xf0] sm:$0xff] %vm1715, 0.0
        %1747 = vst.msk [vmem:[#allocation4 + $0xf8] sm:$0xff] %vm1715, 0.0
        %1748 = vst.msk [vmem:[#allocation4 + $0x100] sm:$0xff] %vm1715, 0.0
        %1749 = vst.msk [vmem:[#allocation4 + $0x108] sm:$0xff] %vm1715, 0.0
        %1750 = vst.msk [vmem:[#allocation4 + $0x110] sm:$0xff] %vm1715, 0.0
        %1751 = vst.msk [vmem:[#allocation4 + $0x118] sm:$0xff] %vm1715, 0.0
        %1752 = vst.msk [vmem:[#allocation4 + $0x120] sm:$0xff] %vm1715, 0.0
        %1753 = vst.msk [vmem:[#allocation4 + $0x128] sm:$0xff] %vm1715, 0.0
        %1754 = vst.msk [vmem:[#allocation4 + $0x130] sm:$0xff] %vm1715, 0.0
        %1755 = vst.msk [vmem:[#allocation4 + $0x138] sm:$0xff] %vm1715, 0.0
        %1756 = vst.msk [vmem:[#allocation4 + $0x140] sm:$0xff] %vm1715, 0.0
        %1757 = vst.msk [vmem:[#allocation4 + $0x148] sm:$0xff] %vm1715, 0.0
        %1758 = vst.msk [vmem:[#allocation4 + $0x150] sm:$0xff] %vm1715, 0.0
        %1759 = vst.msk [vmem:[#allocation4 + $0x158] sm:$0xff] %vm1715, 0.0
        %1760 = vst.msk [vmem:[#allocation4 + $0x160] sm:$0xff] %vm1715, 0.0
        %1761 = vst.msk [vmem:[#allocation4 + $0x168] sm:$0xff] %vm1715, 0.0
        %1762 = vst.msk [vmem:[#allocation4 + $0x170] sm:$0xff] %vm1715, 0.0
        %1763 = vst.msk [vmem:[#allocation4 + $0x178] sm:$0xff] %vm1715, 0.0
        %1764 = vst.msk [vmem:[#allocation4 + $0x180] sm:$0xff] %vm1715, 0.0
        %1765 = vst.msk [vmem:[#allocation4 + $0x188] sm:$0xff] %vm1715, 0.0
        %1766 = vst.msk [vmem:[#allocation4 + $0x190] sm:$0xff] %vm1715, 0.0
        %1767 = vst.msk [vmem:[#allocation4 + $0x198] sm:$0xff] %vm1715, 0.0
        %1768 = vst.msk [vmem:[#allocation4 + $0x1a0] sm:$0xff] %vm1715, 0.0
        %1769 = vst.msk [vmem:[#allocation4 + $0x1a8] sm:$0xff] %vm1715, 0.0
        %1770 = vst.msk [vmem:[#allocation4 + $0x1b0] sm:$0xff] %vm1715, 0.0
        %1771 = vst.msk [vmem:[#allocation4 + $0x1b8] sm:$0xff] %vm1715, 0.0
        %1772 = vst.msk [vmem:[#allocation4 + $0x1c0] sm:$0xff] %vm1715, 0.0
        %1773 = vst.msk [vmem:[#allocation4 + $0x1c8] sm:$0xff] %vm1715, 0.0
        %1774 = vst.msk [vmem:[#allocation4 + $0x1d0] sm:$0xff] %vm1715, 0.0
        %1775 = vst.msk [vmem:[#allocation4 + $0x1d8] sm:$0xff] %vm1715, 0.0
        %1776 = vst.msk [vmem:[#allocation4 + $0x1e0] sm:$0xff] %vm1715, 0.0
        %1777 = vst.msk [vmem:[#allocation4 + $0x1e8] sm:$0xff] %vm1715, 0.0
        %1778 = vst.msk [vmem:[#allocation4 + $0x1f0] sm:$0xff] %vm1715, 0.0
        %1779 = vst.msk [vmem:[#allocation4 + $0x1f8] sm:$0xff] %vm1715, 0.0
        %1780 = vst.msk [vmem:[#allocation4 + $0x200] sm:$0xff] %vm1715, 0.0
        %1781 = vst.msk [vmem:[#allocation4 + $0x208] sm:$0xff] %vm1715, 0.0
        %1782 = vst.msk [vmem:[#allocation4 + $0x210] sm:$0xff] %vm1715, 0.0
        %1783 = vst.msk [vmem:[#allocation4 + $0x218] sm:$0xff] %vm1715, 0.0
        %1784 = vst.msk [vmem:[#allocation4 + $0x220] sm:$0xff] %vm1715, 0.0
        %1785 = vst.msk [vmem:[#allocation4 + $0x228] sm:$0xff] %vm1715, 0.0
        %1786 = vst.msk [vmem:[#allocation4 + $0x230] sm:$0xff] %vm1715, 0.0
        %1787 = vst.msk [vmem:[#allocation4 + $0x238] sm:$0xff] %vm1715, 0.0
        %1788 = vst.msk [vmem:[#allocation4 + $0x240] sm:$0xff] %vm1715, 0.0
        %1789 = vst.msk [vmem:[#allocation4 + $0x248] sm:$0xff] %vm1715, 0.0
        %1790 = vst.msk [vmem:[#allocation4 + $0x250] sm:$0xff] %vm1715, 0.0
        %1791 = vst.msk [vmem:[#allocation4 + $0x258] sm:$0xff] %vm1715, 0.0
        %1792 = vst.msk [vmem:[#allocation4 + $0x260] sm:$0xff] %vm1715, 0.0
        %1793 = vst.msk [vmem:[#allocation4 + $0x268] sm:$0xff] %vm1715, 0.0
        %1794 = vst.msk [vmem:[#allocation4 + $0x270] sm:$0xff] %vm1715, 0.0
        %1795 = vst.msk [vmem:[#allocation4 + $0x278] sm:$0xff] %vm1715, 0.0
        %1796 = vst.msk [vmem:[#allocation4 + $0x280] sm:$0xff] %vm1715, 0.0
        %1797 = vst.msk [vmem:[#allocation4 + $0x288] sm:$0xff] %vm1715, 0.0
        %1798 = vst.msk [vmem:[#allocation4 + $0x290] sm:$0xff] %vm1715, 0.0
        %1799 = vst.msk [vmem:[#allocation4 + $0x298] sm:$0xff] %vm1715, 0.0
        %1800 = vst.msk [vmem:[#allocation4 + $0x2a0] sm:$0xff] %vm1715, 0.0
        %1801 = vst.msk [vmem:[#allocation4 + $0x2a8] sm:$0xff] %vm1715, 0.0
        %1802 = vst.msk [vmem:[#allocation4 + $0x2b0] sm:$0xff] %vm1715, 0.0
        %1803 = vst.msk [vmem:[#allocation4 + $0x2b8] sm:$0xff] %vm1715, 0.0
        %1804 = vst.msk [vmem:[#allocation4 + $0x2c0] sm:$0xff] %vm1715, 0.0
        %1805 = vst.msk [vmem:[#allocation4 + $0x2c8] sm:$0xff] %vm1715, 0.0
        %1806 = vst.msk [vmem:[#allocation4 + $0x2d0] sm:$0xff] %vm1715, 0.0
        %1807 = vst.msk [vmem:[#allocation4 + $0x2d8] sm:$0xff] %vm1715, 0.0
        %1808 = vst.msk [vmem:[#allocation4 + $0x2e0] sm:$0xff] %vm1715, 0.0
        %1809 = vst.msk [vmem:[#allocation4 + $0x2e8] sm:$0xff] %vm1715, 0.0
        %1810 = vst.msk [vmem:[#allocation4 + $0x2f0] sm:$0xff] %vm1715, 0.0
        %1811 = vst.msk [vmem:[#allocation4 + $0x2f8] sm:$0xff] %vm1715, 0.0
        %1812 = vst.msk [vmem:[#allocation4 + $0x300] sm:$0xff] %vm1715, 0.0
        %1813 = vst.msk [vmem:[#allocation4 + $0x308] sm:$0xff] %vm1715, 0.0
        %1814 = vst.msk [vmem:[#allocation4 + $0x310] sm:$0xff] %vm1715, 0.0
        %1815 = vst.msk [vmem:[#allocation4 + $0x318] sm:$0xff] %vm1715, 0.0
        %1816 = vst.msk [vmem:[#allocation4 + $0x320] sm:$0xff] %vm1715, 0.0
        %1817 = vst.msk [vmem:[#allocation4 + $0x328] sm:$0xff] %vm1715, 0.0
        %1818 = vst.msk [vmem:[#allocation4 + $0x330] sm:$0xff] %vm1715, 0.0
        %1819 = vst.msk [vmem:[#allocation4 + $0x338] sm:$0xff] %vm1715, 0.0
        %1820 = vst.msk [vmem:[#allocation4 + $0x340] sm:$0xff] %vm1715, 0.0
        %1821 = vst.msk [vmem:[#allocation4 + $0x348] sm:$0xff] %vm1715, 0.0
        %1822 = vst.msk [vmem:[#allocation4 + $0x350] sm:$0xff] %vm1715, 0.0
        %1823 = vst.msk [vmem:[#allocation4 + $0x358] sm:$0xff] %vm1715, 0.0
        %1824 = vst.msk [vmem:[#allocation4 + $0x360] sm:$0xff] %vm1715, 0.0
        %1825 = vst.msk [vmem:[#allocation4 + $0x368] sm:$0xff] %vm1715, 0.0
        %1826 = vst.msk [vmem:[#allocation4 + $0x370] sm:$0xff] %vm1715, 0.0
        %1827 = vst.msk [vmem:[#allocation4 + $0x378] sm:$0xff] %vm1715, 0.0
        %1828 = vst.msk [vmem:[#allocation4 + $0x380] sm:$0xff] %vm1715, 0.0
        %1829 = vst.msk [vmem:[#allocation4 + $0x388] sm:$0xff] %vm1715, 0.0
        %1830 = vst.msk [vmem:[#allocation4 + $0x390] sm:$0xff] %vm1715, 0.0
        %1831 = vst.msk [vmem:[#allocation4 + $0x398] sm:$0xff] %vm1715, 0.0
        %1832 = vst.msk [vmem:[#allocation4 + $0x3a0] sm:$0xff] %vm1715, 0.0
        %1833 = vst.msk [vmem:[#allocation4 + $0x3a8] sm:$0xff] %vm1715, 0.0
        %1834 = vst.msk [vmem:[#allocation4 + $0x3b0] sm:$0xff] %vm1715, 0.0
        %1835 = vst.msk [vmem:[#allocation4 + $0x3b8] sm:$0xff] %vm1715, 0.0
        %1836 = vst.msk [vmem:[#allocation4 + $0x3c0] sm:$0xff] %vm1715, 0.0
        %1837 = vst.msk [vmem:[#allocation4 + $0x3c8] sm:$0xff] %vm1715, 0.0
        %1838 = vst.msk [vmem:[#allocation4 + $0x3d0] sm:$0xff] %vm1715, 0.0
        %1839 = vst.msk [vmem:[#allocation4 + $0x3d8] sm:$0xff] %vm1715, 0.0
        %1840 = vst.msk [vmem:[#allocation4 + $0x3e0] sm:$0xff] %vm1715, 0.0
        %1841 = vst.msk [vmem:[#allocation4 + $0x3e8] sm:$0xff] %vm1715, 0.0
        %1842 = vst.msk [vmem:[#allocation4 + $0x3f0] sm:$0xff] %vm1715, 0.0
        %1843 = vst.msk [vmem:[#allocation4 + $0x3f8] sm:$0xff] %vm1715, 0.0
        %1844 = vst.msk [vmem:[#allocation4 + $0x400] sm:$0xff] %vm1715, 0.0
        %1845 = vst.msk [vmem:[#allocation4 + $0x408] sm:$0xff] %vm1715, 0.0
        %1846 = vst.msk [vmem:[#allocation4 + $0x410] sm:$0xff] %vm1715, 0.0
        %1847 = vst.msk [vmem:[#allocation4 + $0x418] sm:$0xff] %vm1715, 0.0
        %1848 = vst.msk [vmem:[#allocation4 + $0x420] sm:$0xff] %vm1715, 0.0
        %1849 = vst.msk [vmem:[#allocation4 + $0x428] sm:$0xff] %vm1715, 0.0
        %1850 = vst.msk [vmem:[#allocation4 + $0x430] sm:$0xff] %vm1715, 0.0
        %1851 = vst.msk [vmem:[#allocation4 + $0x438] sm:$0xff] %vm1715, 0.0
        %1852 = vst.msk [vmem:[#allocation4 + $0x440] sm:$0xff] %vm1715, 0.0
        %1853 = vst.msk [vmem:[#allocation4 + $0x448] sm:$0xff] %vm1715, 0.0
        %1854 = vst.msk [vmem:[#allocation4 + $0x450] sm:$0xff] %vm1715, 0.0
        %1855 = vst.msk [vmem:[#allocation4 + $0x458] sm:$0xff] %vm1715, 0.0
        %1856 = vst.msk [vmem:[#allocation4 + $0x460] sm:$0xff] %vm1715, 0.0
        %1857 = vst.msk [vmem:[#allocation4 + $0x468] sm:$0xff] %vm1715, 0.0
        %1858 = vst.msk [vmem:[#allocation4 + $0x470] sm:$0xff] %vm1715, 0.0
        %1859 = vst.msk [vmem:[#allocation4 + $0x478] sm:$0xff] %vm1715, 0.0
        %1860 = vst.msk [vmem:[#allocation4 + $0x480] sm:$0xff] %vm1715, 0.0
        %1861 = vst.msk [vmem:[#allocation4 + $0x488] sm:$0xff] %vm1715, 0.0
        %1862 = vst.msk [vmem:[#allocation4 + $0x490] sm:$0xff] %vm1715, 0.0
        %1863 = vst.msk [vmem:[#allocation4 + $0x498] sm:$0xff] %vm1715, 0.0
        %1864 = vst.msk [vmem:[#allocation4 + $0x4a0] sm:$0xff] %vm1715, 0.0
        %1865 = vst.msk [vmem:[#allocation4 + $0x4a8] sm:$0xff] %vm1715, 0.0
        %1866 = vst.msk [vmem:[#allocation4 + $0x4b0] sm:$0xff] %vm1715, 0.0
        %1867 = vst.msk [vmem:[#allocation4 + $0x4b8] sm:$0xff] %vm1715, 0.0
        %1868 = vst.msk [vmem:[#allocation4 + $0x4c0] sm:$0xff] %vm1715, 0.0
        %1869 = vst.msk [vmem:[#allocation4 + $0x4c8] sm:$0xff] %vm1715, 0.0
        %1870 = vst.msk [vmem:[#allocation4 + $0x4d0] sm:$0xff] %vm1715, 0.0
        %1871 = vst.msk [vmem:[#allocation4 + $0x4d8] sm:$0xff] %vm1715, 0.0
        %1872 = vst.msk [vmem:[#allocation4 + $0x4e0] sm:$0xff] %vm1715, 0.0
        %1873 = vst.msk [vmem:[#allocation4 + $0x4e8] sm:$0xff] %vm1715, 0.0
        %1874 = vst.msk [vmem:[#allocation4 + $0x4f0] sm:$0xff] %vm1715, 0.0
        %1875 = vst.msk [vmem:[#allocation4 + $0x4f8] sm:$0xff] %vm1715, 0.0
        %1876 = vst.msk [vmem:[#allocation4 + $0x500] sm:$0xff] %vm1715, 0.0
        %1877 = vst.msk [vmem:[#allocation4 + $0x508] sm:$0xff] %vm1715, 0.0
        %1878 = vst.msk [vmem:[#allocation4 + $0x510] sm:$0xff] %vm1715, 0.0
        %1879 = vst.msk [vmem:[#allocation4 + $0x518] sm:$0xff] %vm1715, 0.0
        %1880 = vst.msk [vmem:[#allocation4 + $0x520] sm:$0xff] %vm1715, 0.0
        %1881 = vst.msk [vmem:[#allocation4 + $0x528] sm:$0xff] %vm1715, 0.0
        %1882 = vst.msk [vmem:[#allocation4 + $0x530] sm:$0xff] %vm1715, 0.0
        %1883 = vst.msk [vmem:[#allocation4 + $0x538] sm:$0xff] %vm1715, 0.0
        %1884 = vst.msk [vmem:[#allocation4 + $0x540] sm:$0xff] %vm1715, 0.0
        %1885 = vst.msk [vmem:[#allocation4 + $0x548] sm:$0xff] %vm1715, 0.0
        %1886 = vst.msk [vmem:[#allocation4 + $0x550] sm:$0xff] %vm1715, 0.0
        %1887 = vst.msk [vmem:[#allocation4 + $0x558] sm:$0xff] %vm1715, 0.0
        %1888 = vst.msk [vmem:[#allocation4 + $0x560] sm:$0xff] %vm1715, 0.0
        %1889 = vst.msk [vmem:[#allocation4 + $0x568] sm:$0xff] %vm1715, 0.0
        %1890 = vst.msk [vmem:[#allocation4 + $0x570] sm:$0xff] %vm1715, 0.0
        %1891 = vst.msk [vmem:[#allocation4 + $0x578] sm:$0xff] %vm1715, 0.0
        %1892 = vst.msk [vmem:[#allocation4 + $0x580] sm:$0xff] %vm1715, 0.0
        %1893 = vst.msk [vmem:[#allocation4 + $0x588] sm:$0xff] %vm1715, 0.0
        %1894 = vst.msk [vmem:[#allocation4 + $0x590] sm:$0xff] %vm1715, 0.0
        %1895 = vst.msk [vmem:[#allocation4 + $0x598] sm:$0xff] %vm1715, 0.0
        %1896 = vst.msk [vmem:[#allocation4 + $0x5a0] sm:$0xff] %vm1715, 0.0
        %1897 = vst.msk [vmem:[#allocation4 + $0x5a8] sm:$0xff] %vm1715, 0.0
        %1898 = vst.msk [vmem:[#allocation4 + $0x5b0] sm:$0xff] %vm1715, 0.0
        %1899 = vst.msk [vmem:[#allocation4 + $0x5b8] sm:$0xff] %vm1715, 0.0
        %1900 = vst.msk [vmem:[#allocation4 + $0x5c0] sm:$0xff] %vm1715, 0.0
        %1901 = vst.msk [vmem:[#allocation4 + $0x5c8] sm:$0xff] %vm1715, 0.0
        %1902 = vst.msk [vmem:[#allocation4 + $0x5d0] sm:$0xff] %vm1715, 0.0
        %1903 = vst.msk [vmem:[#allocation4 + $0x5d8] sm:$0xff] %vm1715, 0.0
        %1904 = vst.msk [vmem:[#allocation4 + $0x5e0] sm:$0xff] %vm1715, 0.0
        %1905 = vst.msk [vmem:[#allocation4 + $0x5e8] sm:$0xff] %vm1715, 0.0
        %1906 = vst.msk [vmem:[#allocation4 + $0x5f0] sm:$0xff] %vm1715, 0.0
        %1907 = vst.msk [vmem:[#allocation4 + $0x5f8] sm:$0xff] %vm1715, 0.0
        %1908 = vst.msk [vmem:[#allocation4 + $0x600] sm:$0xff] %vm1715, 0.0
        %1909 = vst.msk [vmem:[#allocation4 + $0x608] sm:$0xff] %vm1715, 0.0
        %1910 = vst.msk [vmem:[#allocation4 + $0x610] sm:$0xff] %vm1715, 0.0
        %1911 = vst.msk [vmem:[#allocation4 + $0x618] sm:$0xff] %vm1715, 0.0
        %1912 = vst.msk [vmem:[#allocation4 + $0x620] sm:$0xff] %vm1715, 0.0
        %1913 = vst.msk [vmem:[#allocation4 + $0x628] sm:$0xff] %vm1715, 0.0
        %1914 = vst.msk [vmem:[#allocation4 + $0x630] sm:$0xff] %vm1715, 0.0
        %1915 = vst.msk [vmem:[#allocation4 + $0x638] sm:$0xff] %vm1715, 0.0
        %1916 = vst.msk [vmem:[#allocation5] sm:$0xff] %vm1715, 0.0
        %1917 = vst.msk [vmem:[#allocation5 + $0x8] sm:$0xff] %vm1715, 0.0
        %1918 = vst.msk [vmem:[#allocation5 + $0x10] sm:$0xff] %vm1715, 0.0
        %1919 = vst.msk [vmem:[#allocation5 + $0x18] sm:$0xff] %vm1715, 0.0
        %1920 = vst.msk [vmem:[#allocation5 + $0x20] sm:$0xff] %vm1715, 0.0
        %1921 = vst.msk [vmem:[#allocation5 + $0x28] sm:$0xff] %vm1715, 0.0
        %1922 = vst.msk [vmem:[#allocation5 + $0x30] sm:$0xff] %vm1715, 0.0
        %1923 = vst.msk [vmem:[#allocation5 + $0x38] sm:$0xff] %vm1715, 0.0
        %1924 = vst.msk [vmem:[#allocation5 + $0x40] sm:$0xff] %vm1715, 0.0
        %1925 = vst.msk [vmem:[#allocation5 + $0x48] sm:$0xff] %vm1715, 0.0
        %1926 = vst.msk [vmem:[#allocation5 + $0x50] sm:$0xff] %vm1715, 0.0
        %1927 = vst.msk [vmem:[#allocation5 + $0x58] sm:$0xff] %vm1715, 0.0
        %1928 = vst.msk [vmem:[#allocation5 + $0x60] sm:$0xff] %vm1715, 0.0
        %1929 = vst.msk [vmem:[#allocation5 + $0x68] sm:$0xff] %vm1715, 0.0
        %1930 = vst.msk [vmem:[#allocation5 + $0x70] sm:$0xff] %vm1715, 0.0
        %1931 = vst.msk [vmem:[#allocation5 + $0x78] sm:$0xff] %vm1715, 0.0
        %1932 = vst.msk [vmem:[#allocation5 + $0x80] sm:$0xff] %vm1715, 0.0
        %1933 = vst.msk [vmem:[#allocation5 + $0x88] sm:$0xff] %vm1715, 0.0
        %1934 = vst.msk [vmem:[#allocation5 + $0x90] sm:$0xff] %vm1715, 0.0
        %1935 = vst.msk [vmem:[#allocation5 + $0x98] sm:$0xff] %vm1715, 0.0
        %1936 = vst.msk [vmem:[#allocation5 + $0xa0] sm:$0xff] %vm1715, 0.0
        %1937 = vst.msk [vmem:[#allocation5 + $0xa8] sm:$0xff] %vm1715, 0.0
        %1938 = vst.msk [vmem:[#allocation5 + $0xb0] sm:$0xff] %vm1715, 0.0
        %1939 = vst.msk [vmem:[#allocation5 + $0xb8] sm:$0xff] %vm1715, 0.0
        %1940 = vst.msk [vmem:[#allocation5 + $0xc0] sm:$0xff] %vm1715, 0.0
        %1941 = vst.msk [vmem:[#allocation5 + $0xc8] sm:$0xff] %vm1715, 0.0
        %1942 = vst.msk [vmem:[#allocation5 + $0xd0] sm:$0xff] %vm1715, 0.0
        %1943 = vst.msk [vmem:[#allocation5 + $0xd8] sm:$0xff] %vm1715, 0.0
        %1944 = vst.msk [vmem:[#allocation5 + $0xe0] sm:$0xff] %vm1715, 0.0
        %1945 = vst.msk [vmem:[#allocation5 + $0xe8] sm:$0xff] %vm1715, 0.0
        %1946 = vst.msk [vmem:[#allocation5 + $0xf0] sm:$0xff] %vm1715, 0.0
        %1947 = vst.msk [vmem:[#allocation5 + $0xf8] sm:$0xff] %vm1715, 0.0
        %1948 = vst.msk [vmem:[#allocation5 + $0x100] sm:$0xff] %vm1715, 0.0
        %1949 = vst.msk [vmem:[#allocation5 + $0x108] sm:$0xff] %vm1715, 0.0
        %1950 = vst.msk [vmem:[#allocation5 + $0x110] sm:$0xff] %vm1715, 0.0
        %1951 = vst.msk [vmem:[#allocation5 + $0x118] sm:$0xff] %vm1715, 0.0
        %1952 = vst.msk [vmem:[#allocation5 + $0x120] sm:$0xff] %vm1715, 0.0
        %1953 = vst.msk [vmem:[#allocation5 + $0x128] sm:$0xff] %vm1715, 0.0
        %1954 = vst.msk [vmem:[#allocation5 + $0x130] sm:$0xff] %vm1715, 0.0
        %1955 = vst.msk [vmem:[#allocation5 + $0x138] sm:$0xff] %vm1715, 0.0
        %1956 = vst.msk [vmem:[#allocation5 + $0x140] sm:$0xff] %vm1715, 0.0
        %1957 = vst.msk [vmem:[#allocation5 + $0x148] sm:$0xff] %vm1715, 0.0
        %1958 = vst.msk [vmem:[#allocation5 + $0x150] sm:$0xff] %vm1715, 0.0
        %1959 = vst.msk [vmem:[#allocation5 + $0x158] sm:$0xff] %vm1715, 0.0
        %1960 = vst.msk [vmem:[#allocation5 + $0x160] sm:$0xff] %vm1715, 0.0
        %1961 = vst.msk [vmem:[#allocation5 + $0x168] sm:$0xff] %vm1715, 0.0
        %1962 = vst.msk [vmem:[#allocation5 + $0x170] sm:$0xff] %vm1715, 0.0
        %1963 = vst.msk [vmem:[#allocation5 + $0x178] sm:$0xff] %vm1715, 0.0
        %1964 = vst.msk [vmem:[#allocation5 + $0x180] sm:$0xff] %vm1715, 0.0
        %1965 = vst.msk [vmem:[#allocation5 + $0x188] sm:$0xff] %vm1715, 0.0
        %v1966 = vld [vmem:[%s3] sm:$0xff]
        %v1967 = vld [vmem:[%s3 + $0x8] sm:$0xff]
        %v1968 = vld [vmem:[%s4] sm:$0xff]
        %v1969 = vld [vmem:[%s4 + $0x8] sm:$0xff]
        loop: start=0, step=1, limit=96
        $region85: #{forward.2} parent=79 // loop_pre_header
          _
        $region86: #{forward.2} parent=79 // loop_header
          %s1971 = sphi 0, %s1975
          %p1972 = scmp.ge.s32.totalorder %s1971, 96
        $region87: #{forward.2} parent=79 // loop_header_branch
          %1974 = sbr.rel (%p1972) target = $region91
        $region88: #{forward.2} parent=79 // loop_body
          %s1976 = sadd.s32 %s1971, 1
          %s1977 = sshra.s32 %s1976, 3
          %s1978 = sand.u32 %s1976, 7
          %s1979 = sshra.s32 %s1976, 3
          %s1980 = sand.u32 %s1976, 7
          %s1981 = smul.u32 %s1977, 2
          %s1982 = smul.u32 %s1981, 8
          %s1983 = sadd.s32 %s1982, %s1980
          %s1984 = scalar_lea.vmem %s508, %s1983
          %v1985 = vld [vmem:[%s1984] ss:$8 sm:$0x3]
          %1987 = vset.pattern.permute.xlu0 0
          %1988 = vperm.xlu0 %1987, %v1966
          %v1989 = vpop.permute.xlu0 %1988
          %1992 = vset.pattern.permute.xlu0 0
          %1993 = vperm.xlu0 %1992, %v1967
          %v1994 = vpop.permute.xlu0 %1993
          %v1997 = vperm.slane %v1985, 0
          %v1998 = vperm.slane %v1985, 1
          %v2001 = vmul.f32 %v1989, %v1997
          %v2002 = vmul.f32 %v1989, %v1998
          %v2003 = vmul.f32 %v1994, %v1997
          %v2004 = vmul.f32 %v1994, %v1998
          %v2005 = vadd.f32 %v2001, 0.0
          %v2006 = vadd.f32 %v2002, 0.0
          %v2007 = vadd.f32 %v2003, 0.0
          %v2008 = vadd.f32 %v2004, 0.0
          %2009 = vset.pattern.permute.xlu0 1
          %2010 = vperm.xlu0 %2009, %v1966
          %v2011 = vpop.permute.xlu0 %2010
          %2013 = vset.pattern.permute.xlu0 1
          %2014 = vperm.xlu0 %2013, %v1967
          %v2015 = vpop.permute.xlu0 %2014
          %v2017 = vmul.f32 %v2011, %v1997
          %v2018 = vmul.f32 %v2011, %v1998
          %v2019 = vmul.f32 %v2015, %v1997
          %v2020 = vmul.f32 %v2015, %v1998
          %2025 = vrot.lane.b32.xlu0 %v2017, 127
          %v2026 = vpop.permute.xlu0 %2025
          %2027 = vrot.lane.b32.xlu0 %v2018, 127
          %v2028 = vpop.permute.xlu0 %2027
          %2029 = vrot.lane.b32.xlu0 %v2019, 127
          %v2030 = vpop.permute.xlu0 %2029
          %2031 = vrot.lane.b32.xlu0 %v2020, 127
          %v2032 = vpop.permute.xlu0 %2031
          %vm2033 = vcmask 1039360
          %v2034 = vsel %vm2033, %v2026, %v2028
          %v2035 = vsel %vm2033, %v2030, %v2032
          %v2040 = vadd.f32 %v2005, %v2034
          %v2041 = vadd.f32 %v2006, %v2028
          %v2042 = vadd.f32 %v2007, %v2035
          %v2043 = vadd.f32 %v2008, %v2032
          %2044 = vset.pattern.permute.xlu0 2
          %2045 = vperm.xlu0 %2044, %v1966
          %v2046 = vpop.permute.xlu0 %2045
          %2048 = vset.pattern.permute.xlu0 2
          %2049 = vperm.xlu0 %2048, %v1967
          %v2050 = vpop.permute.xlu0 %2049
          %v2052 = vmul.f32 %v2046, %v1997
          %v2053 = vmul.f32 %v2046, %v1998
          %v2054 = vmul.f32 %v2050, %v1997
          %v2055 = vmul.f32 %v2050, %v1998
          %2060 = vrot.lane.b32.xlu0 %v2052, 126
          %v2061 = vpop.permute.xlu0 %2060
          %2062 = vrot.lane.b32.xlu0 %v2053, 126
          %v2063 = vpop.permute.xlu0 %2062
          %2064 = vrot.lane.b32.xlu0 %v2054, 126
          %v2065 = vpop.permute.xlu0 %2064
          %2066 = vrot.lane.b32.xlu0 %v2055, 126
          %v2067 = vpop.permute.xlu0 %2066
          %vm2068 = vcmask 1031168
          %v2069 = vsel %vm2068, %v2061, %v2063
          %v2070 = vsel %vm2068, %v2065, %v2067
          %v2075 = vadd.f32 %v2040, %v2069
          %v2076 = vadd.f32 %v2041, %v2063
          %v2077 = vadd.f32 %v2042, %v2070
          %v2078 = vadd.f32 %v2043, %v2067
          %s2079 = sadd.s32 %s1971, 2
          %s2080 = sshra.s32 %s2079, 3
          %s2081 = sand.u32 %s2079, 7
          %s2082 = sshra.s32 %s2079, 3
          %s2083 = sand.u32 %s2079, 7
          %s2084 = smul.u32 %s2080, 2
          %s2085 = smul.u32 %s2084, 8
          %s2086 = sadd.s32 %s2085, %s2083
          %s2087 = scalar_lea.vmem %s508, %s2086
          %v2088 = vld [vmem:[%s2087] ss:$8 sm:$0x3]
          %2089 = vset.pattern.permute.xlu0 3
          %2090 = vperm.xlu0 %2089, %v1966
          %v2091 = vpop.permute.xlu0 %2090
          %2093 = vset.pattern.permute.xlu0 3
          %2094 = vperm.xlu0 %2093, %v1967
          %v2095 = vpop.permute.xlu0 %2094
          %v2098 = vperm.slane %v2088, 0
          %v2099 = vperm.slane %v2088, 1
          %v2102 = vmul.f32 %v2091, %v2098
          %v2103 = vmul.f32 %v2091, %v2099
          %v2104 = vmul.f32 %v2095, %v2098
          %v2105 = vmul.f32 %v2095, %v2099
          %v2106 = vadd.f32 %v2075, %v2102
          %v2107 = vadd.f32 %v2076, %v2103
          %v2108 = vadd.f32 %v2077, %v2104
          %v2109 = vadd.f32 %v2078, %v2105
          %2110 = vset.pattern.permute.xlu0 4
          %2111 = vperm.xlu0 %2110, %v1966
          %v2112 = vpop.permute.xlu0 %2111
          %2114 = vset.pattern.permute.xlu0 4
          %2115 = vperm.xlu0 %2114, %v1967
          %v2116 = vpop.permute.xlu0 %2115
          %v2118 = vmul.f32 %v2112, %v2098
          %v2119 = vmul.f32 %v2112, %v2099
          %v2120 = vmul.f32 %v2116, %v2098
          %v2121 = vmul.f32 %v2116, %v2099
          %2126 = vrot.lane.b32.xlu0 %v2118, 127
          %v2127 = vpop.permute.xlu0 %2126
          %2128 = vrot.lane.b32.xlu0 %v2119, 127
          %v2129 = vpop.permute.xlu0 %2128
          %2130 = vrot.lane.b32.xlu0 %v2120, 127
          %v2131 = vpop.permute.xlu0 %2130
          %2132 = vrot.lane.b32.xlu0 %v2121, 127
          %v2133 = vpop.permute.xlu0 %2132
          %v2134 = vsel %vm2033, %v2127, %v2129
          %v2135 = vsel %vm2033, %v2131, %v2133
          %v2140 = vadd.f32 %v2106, %v2134
          %v2141 = vadd.f32 %v2107, %v2129
          %v2142 = vadd.f32 %v2108, %v2135
          %v2143 = vadd.f32 %v2109, %v2133
          %2144 = vset.pattern.permute.xlu0 5
          %2145 = vperm.xlu0 %2144, %v1966
          %v2146 = vpop.permute.xlu0 %2145
          %2148 = vset.pattern.permute.xlu0 5
          %2149 = vperm.xlu0 %2148, %v1967
          %v2150 = vpop.permute.xlu0 %2149
          %v2152 = vmul.f32 %v2146, %v2098
          %v2153 = vmul.f32 %v2146, %v2099
          %v2154 = vmul.f32 %v2150, %v2098
          %v2155 = vmul.f32 %v2150, %v2099
          %2160 = vrot.lane.b32.xlu0 %v2152, 126
          %v2161 = vpop.permute.xlu0 %2160
          %2162 = vrot.lane.b32.xlu0 %v2153, 126
          %v2163 = vpop.permute.xlu0 %2162
          %2164 = vrot.lane.b32.xlu0 %v2154, 126
          %v2165 = vpop.permute.xlu0 %2164
          %2166 = vrot.lane.b32.xlu0 %v2155, 126
          %v2167 = vpop.permute.xlu0 %2166
          %v2168 = vsel %vm2068, %v2161, %v2163
          %v2169 = vsel %vm2068, %v2165, %v2167
          %v2174 = vadd.f32 %v2140, %v2168
          %v2175 = vadd.f32 %v2141, %v2163
          %v2176 = vadd.f32 %v2142, %v2169
          %v2177 = vadd.f32 %v2143, %v2167
          %s2178 = sadd.s32 %s1971, 3
          %s2179 = sshra.s32 %s2178, 3
          %s2180 = sand.u32 %s2178, 7
          %s2181 = sshra.s32 %s2178, 3
          %s2182 = sand.u32 %s2178, 7
          %s2183 = smul.u32 %s2179, 2
          %s2184 = smul.u32 %s2183, 8
          %s2185 = sadd.s32 %s2184, %s2182
          %s2186 = scalar_lea.vmem %s508, %s2185
          %v2187 = vld [vmem:[%s2186] ss:$8 sm:$0x3]
          %2188 = vset.pattern.permute.xlu0 6
          %2189 = vperm.xlu0 %2188, %v1966
          %v2190 = vpop.permute.xlu0 %2189
          %2192 = vset.pattern.permute.xlu0 6
          %2193 = vperm.xlu0 %2192, %v1967
          %v2194 = vpop.permute.xlu0 %2193
          %v2197 = vperm.slane %v2187, 0
          %v2198 = vperm.slane %v2187, 1
          %v2201 = vmul.f32 %v2190, %v2197
          %v2202 = vmul.f32 %v2190, %v2198
          %v2203 = vmul.f32 %v2194, %v2197
          %v2204 = vmul.f32 %v2194, %v2198
          %v2205 = vadd.f32 %v2174, %v2201
          %v2206 = vadd.f32 %v2175, %v2202
          %v2207 = vadd.f32 %v2176, %v2203
          %v2208 = vadd.f32 %v2177, %v2204
          %2209 = vset.pattern.permute.xlu0 7
          %2210 = vperm.xlu0 %2209, %v1966
          %v2211 = vpop.permute.xlu0 %2210
          %2213 = vset.pattern.permute.xlu0 7
          %2214 = vperm.xlu0 %2213, %v1967
          %v2215 = vpop.permute.xlu0 %2214
          %v2217 = vmul.f32 %v2211, %v2197
          %v2218 = vmul.f32 %v2211, %v2198
          %v2219 = vmul.f32 %v2215, %v2197
          %v2220 = vmul.f32 %v2215, %v2198
          %2225 = vrot.lane.b32.xlu0 %v2217, 127
          %v2226 = vpop.permute.xlu0 %2225
          %2227 = vrot.lane.b32.xlu0 %v2218, 127
          %v2228 = vpop.permute.xlu0 %2227
          %2229 = vrot.lane.b32.xlu0 %v2219, 127
          %v2230 = vpop.permute.xlu0 %2229
          %2231 = vrot.lane.b32.xlu0 %v2220, 127
          %v2232 = vpop.permute.xlu0 %2231
          %v2233 = vsel %vm2033, %v2226, %v2228
          %v2234 = vsel %vm2033, %v2230, %v2232
          %v2239 = vadd.f32 %v2205, %v2233
          %v2240 = vadd.f32 %v2206, %v2228
          %v2241 = vadd.f32 %v2207, %v2234
          %v2242 = vadd.f32 %v2208, %v2232
          %2243 = vset.pattern.permute.xlu0 8
          %2244 = vperm.xlu0 %2243, %v1966
          %v2245 = vpop.permute.xlu0 %2244
          %2247 = vset.pattern.permute.xlu0 8
          %2248 = vperm.xlu0 %2247, %v1967
          %v2249 = vpop.permute.xlu0 %2248
          %v2251 = vmul.f32 %v2245, %v2197
          %v2252 = vmul.f32 %v2245, %v2198
          %v2253 = vmul.f32 %v2249, %v2197
          %v2254 = vmul.f32 %v2249, %v2198
          %2259 = vrot.lane.b32.xlu0 %v2251, 126
          %v2260 = vpop.permute.xlu0 %2259
          %2261 = vrot.lane.b32.xlu0 %v2252, 126
          %v2262 = vpop.permute.xlu0 %2261
          %2263 = vrot.lane.b32.xlu0 %v2253, 126
          %v2264 = vpop.permute.xlu0 %2263
          %2265 = vrot.lane.b32.xlu0 %v2254, 126
          %v2266 = vpop.permute.xlu0 %2265
          %v2267 = vsel %vm2068, %v2260, %v2262
          %v2268 = vsel %vm2068, %v2264, %v2266
          %v2273 = vadd.f32 %v2239, %v2267
          %v2274 = vadd.f32 %v2240, %v2262
          %v2275 = vadd.f32 %v2241, %v2268
          %v2276 = vadd.f32 %v2242, %v2266
          %s2277 = smul.u32 %s2079, 16
          %2279 = vset.pattern.permute.xlu0 0
          %2280 = vperm.xlu0 %2279, %v1968
          %v2281 = vpop.permute.xlu0 %2280
          %2284 = vset.pattern.permute.xlu0 0
          %2285 = vperm.xlu0 %2284, %v1969
          %v2286 = vpop.permute.xlu0 %2285
          %v2288 = vadd.f32 %v2273, %v2281
          %v2289 = vadd.f32 %v2274, %v2281
          %v2290 = vadd.f32 %v2275, %v2286
          %v2291 = vadd.f32 %v2276, %v2286
          %vm2292 = vcmp.ge.f32.partialorder %v2288, 0.0
          %vm2293 = vcmp.ge.f32.partialorder %v2289, 0.0
          %vm2294 = vcmp.ge.f32.partialorder %v2290, 0.0
          %vm2295 = vcmp.ge.f32.partialorder %v2291, 0.0
          %v2296 = vmul.f32 %v2288, 0.01
          %v2297 = vmul.f32 %v2289, 0.01
          %v2298 = vmul.f32 %v2290, 0.01
          %v2299 = vmul.f32 %v2291, 0.01
          %v2300 = vsel %vm2292, %v2288, %v2296
          %v2301 = vsel %vm2293, %v2289, %v2297
          %v2302 = vsel %vm2294, %v2290, %v2298
          %v2303 = vsel %vm2295, %v2291, %v2299
          %2308 = vrot.lane.b32.xlu0 %v2300, 1
          %v2309 = vpop.permute.xlu0 %2308
          %2310 = vrot.lane.b32.xlu0 %v2301, 1
          %v2311 = vpop.permute.xlu0 %2310
          %2312 = vrot.lane.b32.xlu0 %v2302, 1
          %v2313 = vpop.permute.xlu0 %2312
          %2314 = vrot.lane.b32.xlu0 %v2303, 1
          %v2315 = vpop.permute.xlu0 %2314
          %vm2316 = vcmask 7168
          %v2317 = vsel %vm2316, %v2309, %v2311
          %v2318 = vsel %vm2316, %v2313, %v2315
          %s2323 = sshra.s32 %s2277, 3
          %s2324 = sand.u32 %s2277, 7
          %s2325 = smul.u32 %s2323, 2
          %s2326 = smul.addr %s2325, 8
          %s2327 = scalar_lea.vmem [#allocation2], %s2326
          %vm2328 = vcmask 1047568
          %2329 = vst.msk [vmem:[%s2327] sm:$0xff] %vm2328, %v2309
          %vm2330 = vcmask 15360
          %2331 = vst.msk [vmem:[%s2327 + $0x8] sm:$0xff] %vm2330, %v2317
          %2332 = vst.msk [vmem:[%s2327 + $0x10] sm:$0xff] %vm2328, %v2313
          %2333 = vst.msk [vmem:[%s2327 + $0x18] sm:$0xff] %vm2330, %v2318
        $region89: #{forward.2} parent=79 // loop_footer
          %s1975 = sadd.s32 1, %s1971
        $region90: #{forward.2} parent=79 // loop_footer_branch
          %1970 = sbr.rel target = $region86
        $region91: #{forward.2} parent=79 // loop_exit
          _
        loop: start=0, step=1, limit=96
        $region92: #{forward.2} parent=79 // loop_pre_header
          _
        $region93: #{forward.2} parent=79 // loop_header
          %s2335 = sphi 0, %s2339
          %p2336 = scmp.ge.s32.totalorder %s2335, 96
        $region94: #{forward.2} parent=79 // loop_header_branch
          %2338 = sbr.rel (%p2336) target = $region98
        $region95: #{forward.2} parent=79 // loop_body
          %s2340 = smul.u32 %s2335, 16
          %s2341 = sshra.s32 %s2340, 3
          %s2342 = sand.u32 %s2340, 7
          %s2343 = smul.u32 %s2341, 2
          %s2344 = smul.addr %s2343, 8
          %s2345 = scalar_lea.vmem [#allocation2], %s2344
          %v2346 = vld [vmem:[%s2345] sm:$0xff]
          %v2347 = vld [vmem:[%s2345 + $0x10] sm:$0xff]
          %v2348 = vld [vmem:[%s2345 + $0x20] sm:$0xff]
          %v2349 = vld [vmem:[%s2345 + $0x30] sm:$0xff]
          %v2350 = vld [vmem:[%s2345 + $0x40] sm:$0xff]
          %v2351 = vld [vmem:[%s2345 + $0x50] sm:$0xff]
          %v2352 = vld [vmem:[%s2345 + $0x60] sm:$0xff]
          %v2353 = vld [vmem:[%s2345 + $0x70] sm:$0xff]
          %v2354 = vld [vmem:[%s2345 + $0x80] sm:$0xff]
          %v2355 = vld [vmem:[%s2345 + $0x90] sm:$0xff]
          %v2356 = vld [vmem:[%s5] sm:$0xff]
          %v2357 = vld [vmem:[%s5 + $0x8] sm:$0xff]
          %v2358 = vld [vmem:[%s5 + $0x10] sm:$0xff]
          %v2359 = vld [vmem:[%s5 + $0x18] sm:$0xff]
          %v2360 = vld [vmem:[%s2345 + $0x8] sm:$0xff]
          %v2361 = vld [vmem:[%s2345 + $0x18] sm:$0xff]
          %v2362 = vld [vmem:[%s2345 + $0x28] sm:$0xff]
          %v2363 = vld [vmem:[%s2345 + $0x38] sm:$0xff]
          %v2364 = vld [vmem:[%s2345 + $0x48] sm:$0xff]
          %v2365 = vld [vmem:[%s2345 + $0x58] sm:$0xff]
          %v2366 = vld [vmem:[%s2345 + $0x68] sm:$0xff]
          %v2367 = vld [vmem:[%s2345 + $0x78] sm:$0xff]
          %v2368 = vld [vmem:[%s2345 + $0x88] sm:$0xff]
          %v2369 = vld [vmem:[%s2345 + $0x98] sm:$0xff]
          %s2370 = scalar_lea.vmem %s5, 32
          %v2371 = vld [vmem:[%s2370] sm:$0xff]
          %v2372 = vld [vmem:[%s2370 + $0x8] sm:$0xff]
          %v2373 = vld [vmem:[%s2370 + $0x10] sm:$0xff]
          %v2374 = vld [vmem:[%s2370 + $0x18] sm:$0xff]
          %2395 = vrot.lane.b32.xlu0 %v2346, 127
          %v2396 = vpop.permute.xlu0 %2395
          %2397 = vrot.lane.b32.xlu0 %v2360, 127
          %v2398 = vpop.permute.xlu0 %2397
          %2399 = vrot.lane.b32.xlu0 %v2347, 127
          %v2400 = vpop.permute.xlu0 %2399
          %2401 = vrot.lane.b32.xlu0 %v2361, 127
          %v2402 = vpop.permute.xlu0 %2401
          %2403 = vrot.lane.b32.xlu0 %v2348, 127
          %v2404 = vpop.permute.xlu0 %2403
          %2405 = vrot.lane.b32.xlu0 %v2362, 127
          %v2406 = vpop.permute.xlu0 %2405
          %2407 = vrot.lane.b32.xlu0 %v2349, 127
          %v2408 = vpop.permute.xlu0 %2407
          %2409 = vrot.lane.b32.xlu0 %v2363, 127
          %v2410 = vpop.permute.xlu0 %2409
          %2411 = vrot.lane.b32.xlu0 %v2350, 127
          %v2412 = vpop.permute.xlu0 %2411
          %2413 = vrot.lane.b32.xlu0 %v2364, 127
          %v2414 = vpop.permute.xlu0 %2413
          %2415 = vrot.lane.b32.xlu0 %v2351, 127
          %v2416 = vpop.permute.xlu0 %2415
          %2417 = vrot.lane.b32.xlu0 %v2365, 127
          %v2418 = vpop.permute.xlu0 %2417
          %2419 = vrot.lane.b32.xlu0 %v2352, 127
          %v2420 = vpop.permute.xlu0 %2419
          %2421 = vrot.lane.b32.xlu0 %v2366, 127
          %v2422 = vpop.permute.xlu0 %2421
          %2423 = vrot.lane.b32.xlu0 %v2353, 127
          %v2424 = vpop.permute.xlu0 %2423
          %2425 = vrot.lane.b32.xlu0 %v2367, 127
          %v2426 = vpop.permute.xlu0 %2425
          %2427 = vrot.lane.b32.xlu0 %v2354, 127
          %v2428 = vpop.permute.xlu0 %2427
          %2429 = vrot.lane.b32.xlu0 %v2368, 127
          %v2430 = vpop.permute.xlu0 %2429
          %2431 = vrot.lane.b32.xlu0 %v2355, 127
          %v2432 = vpop.permute.xlu0 %2431
          %2433 = vrot.lane.b32.xlu0 %v2369, 127
          %v2434 = vpop.permute.xlu0 %2433
          %vm2435 = vcmask 1039360
          %v2436 = vsel %vm2435, %v2396, %v2398
          %v2437 = vsel %vm2435, %v2400, %v2402
          %v2438 = vsel %vm2435, %v2404, %v2406
          %v2439 = vsel %vm2435, %v2408, %v2410
          %v2440 = vsel %vm2435, %v2412, %v2414
          %v2441 = vsel %vm2435, %v2416, %v2418
          %v2442 = vsel %vm2435, %v2420, %v2422
          %v2443 = vsel %vm2435, %v2424, %v2426
          %v2444 = vsel %vm2435, %v2428, %v2430
          %v2445 = vsel %vm2435, %v2432, %v2434
          %vm2456 = vcmask 654336
          %v2458 = vsel %vm2456, %v2371, 0
          %v2461 = vsel %vm2456, %v2372, 0
          %v2464 = vsel %vm2456, %v2373, 0
          %v2467 = vsel %vm2456, %v2374, 0
          %2469 = vmatpush.msra.mxu0 0.0
          %2470 = vmatpush.msra.mxu0 0.0
          %2471 = vmatpush.msra.mxu0 0.0
          %2472 = vmatpush.msra.mxu0 0.0
          %2473 = vmatpush.msra.mxu0 0.0
          %2474 = vmatpush.msra.mxu0 0.0
          %2475 = vmatpush.msra.mxu0 %v2445
          %2476 = vmatpush.msra.mxu0 %v2444
          %2477 = vmatpush.msra.mxu0 %v2443
          %2478 = vmatpush.msra.mxu0 %v2442
          %2479 = vmatpush.msra.mxu0 %v2441
          %2480 = vmatpush.msra.mxu0 %v2440
          %2481 = vmatpush.msra.mxu0 %v2439
          %2482 = vmatpush.msra.mxu0 %v2438
          %2483 = vmatpush.msra.mxu0 %v2437
          %2484 = vmatpush.msra.mxu0 %v2436
          %2485 = vmatmul.f32.gmra.mxu0 %v2458
          %v2486 = vpop.f32.mrf.mxu0
          %v2487 = vadd.f32 0.0, %v2486
          %2488 = vmatmul.f32.gmra.mxu0 %v2461
          %v2489 = vpop.f32.mrf.mxu0
          %v2490 = vadd.f32 0.0, %v2489
          %2491 = vmatmul.f32.gmra.mxu0 %v2464
          %v2492 = vpop.f32.mrf.mxu0
          %v2493 = vadd.f32 0.0, %v2492
          %2494 = vmatmul.f32.gmra.mxu0 %v2467
          %v2495 = vpop.f32.mrf.mxu0
          %v2496 = vadd.f32 0.0, %v2495
          %2497 = vdwg.mxu0
          %v2499 = vsel %vm2456, %v2356, 0
          %v2502 = vsel %vm2456, %v2357, 0
          %v2505 = vsel %vm2456, %v2358, 0
          %v2508 = vsel %vm2456, %v2359, 0
          %2510 = vmatpush.msra.mxu0 0.0
          %2511 = vmatpush.msra.mxu0 0.0
          %2512 = vmatpush.msra.mxu0 0.0
          %2513 = vmatpush.msra.mxu0 0.0
          %2514 = vmatpush.msra.mxu0 0.0
          %2515 = vmatpush.msra.mxu0 0.0
          %2516 = vmatpush.msra.mxu0 %v2355
          %2517 = vmatpush.msra.mxu0 %v2354
          %2518 = vmatpush.msra.mxu0 %v2353
          %2519 = vmatpush.msra.mxu0 %v2352
          %2520 = vmatpush.msra.mxu0 %v2351
          %2521 = vmatpush.msra.mxu0 %v2350
          %2522 = vmatpush.msra.mxu0 %v2349
          %2523 = vmatpush.msra.mxu0 %v2348
          %2524 = vmatpush.msra.mxu0 %v2347
          %2525 = vmatpush.msra.mxu0 %v2346
          %2526 = vmatmul.f32.gmra.mxu0 %v2499
          %v2527 = vpop.f32.mrf.mxu0
          %v2528 = vadd.f32 %v2487, %v2527
          %2529 = vmatmul.f32.gmra.mxu0 %v2502
          %v2530 = vpop.f32.mrf.mxu0
          %v2531 = vadd.f32 %v2490, %v2530
          %2532 = vmatmul.f32.gmra.mxu0 %v2505
          %v2533 = vpop.f32.mrf.mxu0
          %v2534 = vadd.f32 %v2493, %v2533
          %2535 = vmatmul.f32.gmra.mxu0 %v2508
          %v2536 = vpop.f32.mrf.mxu0
          %v2537 = vadd.f32 %v2496, %v2536
          %2538 = vdwg.mxu0
          %s2539 = scalar_lea.vmem %s5, 64
          %v2540 = vld [vmem:[%s2539] sm:$0xff]
          %v2541 = vld [vmem:[%s2539 + $0x8] sm:$0xff]
          %v2542 = vld [vmem:[%s2539 + $0x10] sm:$0xff]
          %v2543 = vld [vmem:[%s2539 + $0x18] sm:$0xff]
          %2544 = vrot.lane.b32.xlu0 %v2346, 126
          %v2545 = vpop.permute.xlu0 %2544
          %2546 = vrot.lane.b32.xlu0 %v2360, 126
          %v2547 = vpop.permute.xlu0 %2546
          %2548 = vrot.lane.b32.xlu0 %v2347, 126
          %v2549 = vpop.permute.xlu0 %2548
          %2550 = vrot.lane.b32.xlu0 %v2361, 126
          %v2551 = vpop.permute.xlu0 %2550
          %2552 = vrot.lane.b32.xlu0 %v2348, 126
          %v2553 = vpop.permute.xlu0 %2552
          %2554 = vrot.lane.b32.xlu0 %v2362, 126
          %v2555 = vpop.permute.xlu0 %2554
          %2556 = vrot.lane.b32.xlu0 %v2349, 126
          %v2557 = vpop.permute.xlu0 %2556
          %2558 = vrot.lane.b32.xlu0 %v2363, 126
          %v2559 = vpop.permute.xlu0 %2558
          %2560 = vrot.lane.b32.xlu0 %v2350, 126
          %v2561 = vpop.permute.xlu0 %2560
          %2562 = vrot.lane.b32.xlu0 %v2364, 126
          %v2563 = vpop.permute.xlu0 %2562
          %2564 = vrot.lane.b32.xlu0 %v2351, 126
          %v2565 = vpop.permute.xlu0 %2564
          %2566 = vrot.lane.b32.xlu0 %v2365, 126
          %v2567 = vpop.permute.xlu0 %2566
          %2568 = vrot.lane.b32.xlu0 %v2352, 126
          %v2569 = vpop.permute.xlu0 %2568
          %2570 = vrot.lane.b32.xlu0 %v2366, 126
          %v2571 = vpop.permute.xlu0 %2570
          %2572 = vrot.lane.b32.xlu0 %v2353, 126
          %v2573 = vpop.permute.xlu0 %2572
          %2574 = vrot.lane.b32.xlu0 %v2367, 126
          %v2575 = vpop.permute.xlu0 %2574
          %2576 = vrot.lane.b32.xlu0 %v2354, 126
          %v2577 = vpop.permute.xlu0 %2576
          %2578 = vrot.lane.b32.xlu0 %v2368, 126
          %v2579 = vpop.permute.xlu0 %2578
          %2580 = vrot.lane.b32.xlu0 %v2355, 126
          %v2581 = vpop.permute.xlu0 %2580
          %2582 = vrot.lane.b32.xlu0 %v2369, 126
          %v2583 = vpop.permute.xlu0 %2582
          %vm2584 = vcmask 1031168
          %v2585 = vsel %vm2584, %v2545, %v2547
          %v2586 = vsel %vm2584, %v2549, %v2551
          %v2587 = vsel %vm2584, %v2553, %v2555
          %v2588 = vsel %vm2584, %v2557, %v2559
          %v2589 = vsel %vm2584, %v2561, %v2563
          %v2590 = vsel %vm2584, %v2565, %v2567
          %v2591 = vsel %vm2584, %v2569, %v2571
          %v2592 = vsel %vm2584, %v2573, %v2575
          %v2593 = vsel %vm2584, %v2577, %v2579
          %v2594 = vsel %vm2584, %v2581, %v2583
          %v2606 = vsel %vm2456, %v2540, 0
          %v2609 = vsel %vm2456, %v2541, 0
          %v2612 = vsel %vm2456, %v2542, 0
          %v2615 = vsel %vm2456, %v2543, 0
          %2617 = vmatpush.msra.mxu0 0.0
          %2618 = vmatpush.msra.mxu0 0.0
          %2619 = vmatpush.msra.mxu0 0.0
          %2620 = vmatpush.msra.mxu0 0.0
          %2621 = vmatpush.msra.mxu0 0.0
          %2622 = vmatpush.msra.mxu0 0.0
          %2623 = vmatpush.msra.mxu0 %v2594
          %2624 = vmatpush.msra.mxu0 %v2593
          %2625 = vmatpush.msra.mxu0 %v2592
          %2626 = vmatpush.msra.mxu0 %v2591
          %2627 = vmatpush.msra.mxu0 %v2590
          %2628 = vmatpush.msra.mxu0 %v2589
          %2629 = vmatpush.msra.mxu0 %v2588
          %2630 = vmatpush.msra.mxu0 %v2587
          %2631 = vmatpush.msra.mxu0 %v2586
          %2632 = vmatpush.msra.mxu0 %v2585
          %2633 = vmatmul.f32.gmra.mxu0 %v2606
          %v2634 = vpop.f32.mrf.mxu0
          %v2635 = vadd.f32 0.0, %v2634
          %2636 = vmatmul.f32.gmra.mxu0 %v2609
          %v2637 = vpop.f32.mrf.mxu0
          %v2638 = vadd.f32 0.0, %v2637
          %2639 = vmatmul.f32.gmra.mxu0 %v2612
          %v2640 = vpop.f32.mrf.mxu0
          %v2641 = vadd.f32 0.0, %v2640
          %2642 = vmatmul.f32.gmra.mxu0 %v2615
          %v2643 = vpop.f32.mrf.mxu0
          %v2644 = vadd.f32 0.0, %v2643
          %2645 = vdwg.mxu0
          %v2646 = vadd.f32 %v2528, %v2635
          %v2647 = vadd.f32 %v2531, %v2638
          %v2648 = vadd.f32 %v2534, %v2641
          %v2649 = vadd.f32 %v2537, %v2644
          %s2650 = scalar_lea.vmem %s5, 96
          %v2651 = vld [vmem:[%s2650] sm:$0xff]
          %v2652 = vld [vmem:[%s2650 + $0x8] sm:$0xff]
          %v2653 = vld [vmem:[%s2650 + $0x10] sm:$0xff]
          %v2654 = vld [vmem:[%s2650 + $0x18] sm:$0xff]
          %2655 = vrot.lane.b32.xlu0 %v2346, 125
          %v2656 = vpop.permute.xlu0 %2655
          %2657 = vrot.lane.b32.xlu0 %v2360, 125
          %v2658 = vpop.permute.xlu0 %2657
          %2659 = vrot.lane.b32.xlu0 %v2347, 125
          %v2660 = vpop.permute.xlu0 %2659
          %2661 = vrot.lane.b32.xlu0 %v2361, 125
          %v2662 = vpop.permute.xlu0 %2661
          %2663 = vrot.lane.b32.xlu0 %v2348, 125
          %v2664 = vpop.permute.xlu0 %2663
          %2665 = vrot.lane.b32.xlu0 %v2362, 125
          %v2666 = vpop.permute.xlu0 %2665
          %2667 = vrot.lane.b32.xlu0 %v2349, 125
          %v2668 = vpop.permute.xlu0 %2667
          %2669 = vrot.lane.b32.xlu0 %v2363, 125
          %v2670 = vpop.permute.xlu0 %2669
          %2671 = vrot.lane.b32.xlu0 %v2350, 125
          %v2672 = vpop.permute.xlu0 %2671
          %2673 = vrot.lane.b32.xlu0 %v2364, 125
          %v2674 = vpop.permute.xlu0 %2673
          %2675 = vrot.lane.b32.xlu0 %v2351, 125
          %v2676 = vpop.permute.xlu0 %2675
          %2677 = vrot.lane.b32.xlu0 %v2365, 125
          %v2678 = vpop.permute.xlu0 %2677
          %2679 = vrot.lane.b32.xlu0 %v2352, 125
          %v2680 = vpop.permute.xlu0 %2679
          %2681 = vrot.lane.b32.xlu0 %v2366, 125
          %v2682 = vpop.permute.xlu0 %2681
          %2683 = vrot.lane.b32.xlu0 %v2353, 125
          %v2684 = vpop.permute.xlu0 %2683
          %2685 = vrot.lane.b32.xlu0 %v2367, 125
          %v2686 = vpop.permute.xlu0 %2685
          %2687 = vrot.lane.b32.xlu0 %v2354, 125
          %v2688 = vpop.permute.xlu0 %2687
          %2689 = vrot.lane.b32.xlu0 %v2368, 125
          %v2690 = vpop.permute.xlu0 %2689
          %2691 = vrot.lane.b32.xlu0 %v2355, 125
          %v2692 = vpop.permute.xlu0 %2691
          %2693 = vrot.lane.b32.xlu0 %v2369, 125
          %v2694 = vpop.permute.xlu0 %2693
          %vm2695 = vcmask 1022976
          %v2696 = vsel %vm2695, %v2656, %v2658
          %v2697 = vsel %vm2695, %v2660, %v2662
          %v2698 = vsel %vm2695, %v2664, %v2666
          %v2699 = vsel %vm2695, %v2668, %v2670
          %v2700 = vsel %vm2695, %v2672, %v2674
          %v2701 = vsel %vm2695, %v2676, %v2678
          %v2702 = vsel %vm2695, %v2680, %v2682
          %v2703 = vsel %vm2695, %v2684, %v2686
          %v2704 = vsel %vm2695, %v2688, %v2690
          %v2705 = vsel %vm2695, %v2692, %v2694
          %v2717 = vsel %vm2456, %v2651, 0
          %v2720 = vsel %vm2456, %v2652, 0
          %v2723 = vsel %vm2456, %v2653, 0
          %v2726 = vsel %vm2456, %v2654, 0
          %2728 = vmatpush.msra.mxu0 0.0
          %2729 = vmatpush.msra.mxu0 0.0
          %2730 = vmatpush.msra.mxu0 0.0
          %2731 = vmatpush.msra.mxu0 0.0
          %2732 = vmatpush.msra.mxu0 0.0
          %2733 = vmatpush.msra.mxu0 0.0
          %2734 = vmatpush.msra.mxu0 %v2705
          %2735 = vmatpush.msra.mxu0 %v2704
          %2736 = vmatpush.msra.mxu0 %v2703
          %2737 = vmatpush.msra.mxu0 %v2702
          %2738 = vmatpush.msra.mxu0 %v2701
          %2739 = vmatpush.msra.mxu0 %v2700
          %2740 = vmatpush.msra.mxu0 %v2699
          %2741 = vmatpush.msra.mxu0 %v2698
          %2742 = vmatpush.msra.mxu0 %v2697
          %2743 = vmatpush.msra.mxu0 %v2696
          %2744 = vmatmul.f32.gmra.mxu0 %v2717
          %v2745 = vpop.f32.mrf.mxu0
          %v2746 = vadd.f32 0.0, %v2745
          %2747 = vmatmul.f32.gmra.mxu0 %v2720
          %v2748 = vpop.f32.mrf.mxu0
          %v2749 = vadd.f32 0.0, %v2748
          %2750 = vmatmul.f32.gmra.mxu0 %v2723
          %v2751 = vpop.f32.mrf.mxu0
          %v2752 = vadd.f32 0.0, %v2751
          %2753 = vmatmul.f32.gmra.mxu0 %v2726
          %v2754 = vpop.f32.mrf.mxu0
          %v2755 = vadd.f32 0.0, %v2754
          %2756 = vdwg.mxu0
          %v2757 = vadd.f32 %v2646, %v2746
          %v2758 = vadd.f32 %v2647, %v2749
          %v2759 = vadd.f32 %v2648, %v2752
          %v2760 = vadd.f32 %v2649, %v2755
          %s2761 = scalar_lea.vmem %s5, 128
          %v2762 = vld [vmem:[%s2761] sm:$0xff]
          %v2763 = vld [vmem:[%s2761 + $0x8] sm:$0xff]
          %v2764 = vld [vmem:[%s2761 + $0x10] sm:$0xff]
          %v2765 = vld [vmem:[%s2761 + $0x18] sm:$0xff]
          %2766 = vrot.lane.b32.xlu0 %v2346, 124
          %v2767 = vpop.permute.xlu0 %2766
          %2768 = vrot.lane.b32.xlu0 %v2360, 124
          %v2769 = vpop.permute.xlu0 %2768
          %2770 = vrot.lane.b32.xlu0 %v2347, 124
          %v2771 = vpop.permute.xlu0 %2770
          %2772 = vrot.lane.b32.xlu0 %v2361, 124
          %v2773 = vpop.permute.xlu0 %2772
          %2774 = vrot.lane.b32.xlu0 %v2348, 124
          %v2775 = vpop.permute.xlu0 %2774
          %2776 = vrot.lane.b32.xlu0 %v2362, 124
          %v2777 = vpop.permute.xlu0 %2776
          %2778 = vrot.lane.b32.xlu0 %v2349, 124
          %v2779 = vpop.permute.xlu0 %2778
          %2780 = vrot.lane.b32.xlu0 %v2363, 124
          %v2781 = vpop.permute.xlu0 %2780
          %2782 = vrot.lane.b32.xlu0 %v2350, 124
          %v2783 = vpop.permute.xlu0 %2782
          %2784 = vrot.lane.b32.xlu0 %v2364, 124
          %v2785 = vpop.permute.xlu0 %2784
          %2786 = vrot.lane.b32.xlu0 %v2351, 124
          %v2787 = vpop.permute.xlu0 %2786
          %2788 = vrot.lane.b32.xlu0 %v2365, 124
          %v2789 = vpop.permute.xlu0 %2788
          %2790 = vrot.lane.b32.xlu0 %v2352, 124
          %v2791 = vpop.permute.xlu0 %2790
          %2792 = vrot.lane.b32.xlu0 %v2366, 124
          %v2793 = vpop.permute.xlu0 %2792
          %2794 = vrot.lane.b32.xlu0 %v2353, 124
          %v2795 = vpop.permute.xlu0 %2794
          %2796 = vrot.lane.b32.xlu0 %v2367, 124
          %v2797 = vpop.permute.xlu0 %2796
          %2798 = vrot.lane.b32.xlu0 %v2354, 124
          %v2799 = vpop.permute.xlu0 %2798
          %2800 = vrot.lane.b32.xlu0 %v2368, 124
          %v2801 = vpop.permute.xlu0 %2800
          %2802 = vrot.lane.b32.xlu0 %v2355, 124
          %v2803 = vpop.permute.xlu0 %2802
          %2804 = vrot.lane.b32.xlu0 %v2369, 124
          %v2805 = vpop.permute.xlu0 %2804
          %vm2806 = vcmask 1014784
          %v2807 = vsel %vm2806, %v2767, %v2769
          %v2808 = vsel %vm2806, %v2771, %v2773
          %v2809 = vsel %vm2806, %v2775, %v2777
          %v2810 = vsel %vm2806, %v2779, %v2781
          %v2811 = vsel %vm2806, %v2783, %v2785
          %v2812 = vsel %vm2806, %v2787, %v2789
          %v2813 = vsel %vm2806, %v2791, %v2793
          %v2814 = vsel %vm2806, %v2795, %v2797
          %v2815 = vsel %vm2806, %v2799, %v2801
          %v2816 = vsel %vm2806, %v2803, %v2805
          %v2828 = vsel %vm2456, %v2762, 0
          %v2831 = vsel %vm2456, %v2763, 0
          %v2834 = vsel %vm2456, %v2764, 0
          %v2837 = vsel %vm2456, %v2765, 0
          %2839 = vmatpush.msra.mxu0 0.0
          %2840 = vmatpush.msra.mxu0 0.0
          %2841 = vmatpush.msra.mxu0 0.0
          %2842 = vmatpush.msra.mxu0 0.0
          %2843 = vmatpush.msra.mxu0 0.0
          %2844 = vmatpush.msra.mxu0 0.0
          %2845 = vmatpush.msra.mxu0 %v2816
          %2846 = vmatpush.msra.mxu0 %v2815
          %2847 = vmatpush.msra.mxu0 %v2814
          %2848 = vmatpush.msra.mxu0 %v2813
          %2849 = vmatpush.msra.mxu0 %v2812
          %2850 = vmatpush.msra.mxu0 %v2811
          %2851 = vmatpush.msra.mxu0 %v2810
          %2852 = vmatpush.msra.mxu0 %v2809
          %2853 = vmatpush.msra.mxu0 %v2808
          %2854 = vmatpush.msra.mxu0 %v2807
          %2855 = vmatmul.f32.gmra.mxu0 %v2828
          %v2856 = vpop.f32.mrf.mxu0
          %v2857 = vadd.f32 0.0, %v2856
          %2858 = vmatmul.f32.gmra.mxu0 %v2831
          %v2859 = vpop.f32.mrf.mxu0
          %v2860 = vadd.f32 0.0, %v2859
          %2861 = vmatmul.f32.gmra.mxu0 %v2834
          %v2862 = vpop.f32.mrf.mxu0
          %v2863 = vadd.f32 0.0, %v2862
          %2864 = vmatmul.f32.gmra.mxu0 %v2837
          %v2865 = vpop.f32.mrf.mxu0
          %v2866 = vadd.f32 0.0, %v2865
          %2867 = vdwg.mxu0
          %v2868 = vadd.f32 %v2757, %v2857
          %v2869 = vadd.f32 %v2758, %v2860
          %v2870 = vadd.f32 %v2759, %v2863
          %v2871 = vadd.f32 %v2760, %v2866
          %v2872 = vld [vmem:[%s6] sm:$0xff]
          %v2873 = vld [vmem:[%s6 + $0x8] sm:$0xff]
          %v2874 = vld [vmem:[%s6 + $0x10] sm:$0xff]
          %v2875 = vld [vmem:[%s6 + $0x18] sm:$0xff]
          %2877 = vset.pattern.permute.xlu0 0
          %2878 = vperm.xlu0 %2877, %v2872
          %v2879 = vpop.permute.xlu0 %2878
          %2882 = vset.pattern.permute.xlu0 0
          %2883 = vperm.xlu0 %2882, %v2873
          %v2884 = vpop.permute.xlu0 %2883
          %2887 = vset.pattern.permute.xlu0 0
          %2888 = vperm.xlu0 %2887, %v2874
          %v2889 = vpop.permute.xlu0 %2888
          %2892 = vset.pattern.permute.xlu0 0
          %2893 = vperm.xlu0 %2892, %v2875
          %v2894 = vpop.permute.xlu0 %2893
          %v2896 = vadd.f32 %v2868, %v2879
          %v2897 = vadd.f32 %v2869, %v2884
          %v2898 = vadd.f32 %v2870, %v2889
          %v2899 = vadd.f32 %v2871, %v2894
          %vm2900 = vcmp.ge.f32.partialorder %v2896, 0.0
          %vm2901 = vcmp.ge.f32.partialorder %v2897, 0.0
          %vm2902 = vcmp.ge.f32.partialorder %v2898, 0.0
          %vm2903 = vcmp.ge.f32.partialorder %v2899, 0.0
          %v2904 = vmul.f32 %v2896, 0.01
          %v2905 = vmul.f32 %v2897, 0.01
          %v2906 = vmul.f32 %v2898, 0.01
          %v2907 = vmul.f32 %v2899, 0.01
          %v2908 = vsel %vm2900, %v2896, %v2904
          %v2909 = vsel %vm2901, %v2897, %v2905
          %v2910 = vsel %vm2902, %v2898, %v2906
          %v2911 = vsel %vm2903, %v2899, %v2907
          %s2912 = sadd.s32 %s2335, 2
          %s2913 = smul.u32 %s2912, 32
          %2918 = vrot.lane.b32.xlu0 %v2908, 2
          %v2919 = vpop.permute.xlu0 %2918
          %2920 = vrot.lane.b32.xlu0 %v2909, 2
          %v2921 = vpop.permute.xlu0 %2920
          %2922 = vrot.lane.b32.xlu0 %v2910, 2
          %v2923 = vpop.permute.xlu0 %2922
          %2924 = vrot.lane.b32.xlu0 %v2911, 2
          %v2925 = vpop.permute.xlu0 %2924
          %s2930 = sshra.s32 %s2913, 3
          %s2931 = sand.u32 %s2913, 7
          %s2932 = smul.u32 %s2930, 2
          %s2933 = smul.addr %s2932, 8
          %s2934 = scalar_lea.vmem [#allocation3], %s2933
          %vm2935 = vcmask 1047568
          %2936 = vst.msk [vmem:[%s2934] sm:$0xff] %vm2935, %v2919
          %vm2937 = vcmask 15360
          %2938 = vst.msk [vmem:[%s2934 + $0x8] sm:$0xff] %vm2937, %v2919
          %2939 = vst.msk [vmem:[%s2934 + $0x10] sm:$0xff] %vm2935, %v2921
          %2940 = vst.msk [vmem:[%s2934 + $0x18] sm:$0xff] %vm2937, %v2921
          %2941 = vst.msk [vmem:[%s2934 + $0x20] sm:$0xff] %vm2935, %v2923
          %2942 = vst.msk [vmem:[%s2934 + $0x28] sm:$0xff] %vm2937, %v2923
          %2943 = vst.msk [vmem:[%s2934 + $0x30] sm:$0xff] %vm2935, %v2925
          %2944 = vst.msk [vmem:[%s2934 + $0x38] sm:$0xff] %vm2937, %v2925
        $region96: #{forward.2} parent=79 // loop_footer
          %s2339 = sadd.s32 1, %s2335
        $region97: #{forward.2} parent=79 // loop_footer_branch
          %2334 = sbr.rel target = $region93
        $region98: #{forward.2} parent=79 // loop_exit
          _
        loop: start=0, step=1, limit=48
        $region99: #{forward.2} parent=79 // loop_pre_header
          _
        $region100: #{forward.2} parent=79 // loop_header
          %s2946 = sphi 0, %s2950
          %p2947 = scmp.ge.s32.totalorder %s2946, 48
        $region101: #{forward.2} parent=79 // loop_header_branch
          %2949 = sbr.rel (%p2947) target = $region105
        $region102: #{forward.2} parent=79 // loop_body
          %s2951 = smul.u32 %s2946, 64
          %s2952 = sshra.s32 %s2951, 3
          %s2953 = sand.u32 %s2951, 7
          %s2954 = smul.u32 %s2952, 2
          %s2955 = smul.addr %s2954, 8
          %s2956 = scalar_lea.vmem [#allocation3], %s2955
          %v2957 = vld [vmem:[%s2956] sm:$0xff]
          %v2958 = vld [vmem:[%s2956 + $0x10] sm:$0xff]
          %v2959 = vld [vmem:[%s2956 + $0x20] sm:$0xff]
          %v2960 = vld [vmem:[%s2956 + $0x30] sm:$0xff]
          %v2961 = vld [vmem:[%s2956 + $0x40] sm:$0xff]
          %v2962 = vld [vmem:[%s2956 + $0x50] sm:$0xff]
          %v2963 = vld [vmem:[%s2956 + $0x60] sm:$0xff]
          %v2964 = vld [vmem:[%s2956 + $0x70] sm:$0xff]
          %v2965 = vld [vmem:[%s2956 + $0x80] sm:$0xff]
          %v2966 = vld [vmem:[%s2956 + $0x90] sm:$0xff]
          %v2967 = vld [vmem:[%s2956 + $0xa0] sm:$0xff]
          %v2968 = vld [vmem:[%s2956 + $0xb0] sm:$0xff]
          %v2969 = vld [vmem:[%s2956 + $0xc0] sm:$0xff]
          %v2970 = vld [vmem:[%s2956 + $0xd0] sm:$0xff]
          %v2971 = vld [vmem:[%s2956 + $0xe0] sm:$0xff]
          %v2972 = vld [vmem:[%s2956 + $0xf0] sm:$0xff]
          %v2973 = vld [vmem:[%s2956 + $0x100] sm:$0xff]
          %v2974 = vld [vmem:[%s2956 + $0x110] sm:$0xff]
          %v2975 = vld [vmem:[%s2956 + $0x120] sm:$0xff]
          %v2976 = vld [vmem:[%s2956 + $0x130] sm:$0xff]
          %v2977 = vld [vmem:[%s7] sm:$0xff]
          %v2978 = vld [vmem:[%s7 + $0x8] sm:$0xff]
          %v2979 = vld [vmem:[%s7 + $0x10] sm:$0xff]
          %v2980 = vld [vmem:[%s7 + $0x18] sm:$0xff]
          %v2981 = vld [vmem:[%s7 + $0x20] sm:$0xff]
          %v2982 = vld [vmem:[%s7 + $0x28] sm:$0xff]
          %v2983 = vld [vmem:[%s7 + $0x30] sm:$0xff]
          %v2984 = vld [vmem:[%s7 + $0x38] sm:$0xff]
          %v2985 = vld [vmem:[%s2956 + $0x8] sm:$0xff]
          %v2986 = vld [vmem:[%s2956 + $0x18] sm:$0xff]
          %v2987 = vld [vmem:[%s2956 + $0x28] sm:$0xff]
          %v2988 = vld [vmem:[%s2956 + $0x38] sm:$0xff]
          %v2989 = vld [vmem:[%s2956 + $0x48] sm:$0xff]
          %v2990 = vld [vmem:[%s2956 + $0x58] sm:$0xff]
          %v2991 = vld [vmem:[%s2956 + $0x68] sm:$0xff]
          %v2992 = vld [vmem:[%s2956 + $0x78] sm:$0xff]
          %v2993 = vld [vmem:[%s2956 + $0x88] sm:$0xff]
          %v2994 = vld [vmem:[%s2956 + $0x98] sm:$0xff]
          %v2995 = vld [vmem:[%s2956 + $0xa8] sm:$0xff]
          %v2996 = vld [vmem:[%s2956 + $0xb8] sm:$0xff]
          %v2997 = vld [vmem:[%s2956 + $0xc8] sm:$0xff]
          %v2998 = vld [vmem:[%s2956 + $0xd8] sm:$0xff]
          %v2999 = vld [vmem:[%s2956 + $0xe8] sm:$0xff]
          %v3000 = vld [vmem:[%s2956 + $0xf8] sm:$0xff]
          %v3001 = vld [vmem:[%s2956 + $0x108] sm:$0xff]
          %v3002 = vld [vmem:[%s2956 + $0x118] sm:$0xff]
          %v3003 = vld [vmem:[%s2956 + $0x128] sm:$0xff]
          %v3004 = vld [vmem:[%s2956 + $0x138] sm:$0xff]
          %s3005 = scalar_lea.vmem %s7, 64
          %v3006 = vld [vmem:[%s3005] sm:$0xff]
          %v3007 = vld [vmem:[%s3005 + $0x8] sm:$0xff]
          %v3008 = vld [vmem:[%s3005 + $0x10] sm:$0xff]
          %v3009 = vld [vmem:[%s3005 + $0x18] sm:$0xff]
          %v3010 = vld [vmem:[%s3005 + $0x20] sm:$0xff]
          %v3011 = vld [vmem:[%s3005 + $0x28] sm:$0xff]
          %v3012 = vld [vmem:[%s3005 + $0x30] sm:$0xff]
          %v3013 = vld [vmem:[%s3005 + $0x38] sm:$0xff]
          %3054 = vrot.lane.b32.xlu0 %v2957, 127
          %v3055 = vpop.permute.xlu0 %3054
          %3056 = vrot.lane.b32.xlu0 %v2985, 127
          %v3057 = vpop.permute.xlu0 %3056
          %3058 = vrot.lane.b32.xlu0 %v2958, 127
          %v3059 = vpop.permute.xlu0 %3058
          %3060 = vrot.lane.b32.xlu0 %v2986, 127
          %v3061 = vpop.permute.xlu0 %3060
          %3062 = vrot.lane.b32.xlu0 %v2959, 127
          %v3063 = vpop.permute.xlu0 %3062
          %3064 = vrot.lane.b32.xlu0 %v2987, 127
          %v3065 = vpop.permute.xlu0 %3064
          %3066 = vrot.lane.b32.xlu0 %v2960, 127
          %v3067 = vpop.permute.xlu0 %3066
          %3068 = vrot.lane.b32.xlu0 %v2988, 127
          %v3069 = vpop.permute.xlu0 %3068
          %3070 = vrot.lane.b32.xlu0 %v2961, 127
          %v3071 = vpop.permute.xlu0 %3070
          %3072 = vrot.lane.b32.xlu0 %v2989, 127
          %v3073 = vpop.permute.xlu0 %3072
          %3074 = vrot.lane.b32.xlu0 %v2962, 127
          %v3075 = vpop.permute.xlu0 %3074
          %3076 = vrot.lane.b32.xlu0 %v2990, 127
          %v3077 = vpop.permute.xlu0 %3076
          %3078 = vrot.lane.b32.xlu0 %v2963, 127
          %v3079 = vpop.permute.xlu0 %3078
          %3080 = vrot.lane.b32.xlu0 %v2991, 127
          %v3081 = vpop.permute.xlu0 %3080
          %3082 = vrot.lane.b32.xlu0 %v2964, 127
          %v3083 = vpop.permute.xlu0 %3082
          %3084 = vrot.lane.b32.xlu0 %v2992, 127
          %v3085 = vpop.permute.xlu0 %3084
          %3086 = vrot.lane.b32.xlu0 %v2965, 127
          %v3087 = vpop.permute.xlu0 %3086
          %3088 = vrot.lane.b32.xlu0 %v2993, 127
          %v3089 = vpop.permute.xlu0 %3088
          %3090 = vrot.lane.b32.xlu0 %v2966, 127
          %v3091 = vpop.permute.xlu0 %3090
          %3092 = vrot.lane.b32.xlu0 %v2994, 127
          %v3093 = vpop.permute.xlu0 %3092
          %3094 = vrot.lane.b32.xlu0 %v2967, 127
          %v3095 = vpop.permute.xlu0 %3094
          %3096 = vrot.lane.b32.xlu0 %v2995, 127
          %v3097 = vpop.permute.xlu0 %3096
          %3098 = vrot.lane.b32.xlu0 %v2968, 127
          %v3099 = vpop.permute.xlu0 %3098
          %3100 = vrot.lane.b32.xlu0 %v2996, 127
          %v3101 = vpop.permute.xlu0 %3100
          %3102 = vrot.lane.b32.xlu0 %v2969, 127
          %v3103 = vpop.permute.xlu0 %3102
          %3104 = vrot.lane.b32.xlu0 %v2997, 127
          %v3105 = vpop.permute.xlu0 %3104
          %3106 = vrot.lane.b32.xlu0 %v2970, 127
          %v3107 = vpop.permute.xlu0 %3106
          %3108 = vrot.lane.b32.xlu0 %v2998, 127
          %v3109 = vpop.permute.xlu0 %3108
          %3110 = vrot.lane.b32.xlu0 %v2971, 127
          %v3111 = vpop.permute.xlu0 %3110
          %3112 = vrot.lane.b32.xlu0 %v2999, 127
          %v3113 = vpop.permute.xlu0 %3112
          %3114 = vrot.lane.b32.xlu0 %v2972, 127
          %v3115 = vpop.permute.xlu0 %3114
          %3116 = vrot.lane.b32.xlu0 %v3000, 127
          %v3117 = vpop.permute.xlu0 %3116
          %3118 = vrot.lane.b32.xlu0 %v2973, 127
          %v3119 = vpop.permute.xlu0 %3118
          %3120 = vrot.lane.b32.xlu0 %v3001, 127
          %v3121 = vpop.permute.xlu0 %3120
          %3122 = vrot.lane.b32.xlu0 %v2974, 127
          %v3123 = vpop.permute.xlu0 %3122
          %3124 = vrot.lane.b32.xlu0 %v3002, 127
          %v3125 = vpop.permute.xlu0 %3124
          %3126 = vrot.lane.b32.xlu0 %v2975, 127
          %v3127 = vpop.permute.xlu0 %3126
          %3128 = vrot.lane.b32.xlu0 %v3003, 127
          %v3129 = vpop.permute.xlu0 %3128
          %3130 = vrot.lane.b32.xlu0 %v2976, 127
          %v3131 = vpop.permute.xlu0 %3130
          %3132 = vrot.lane.b32.xlu0 %v3004, 127
          %v3133 = vpop.permute.xlu0 %3132
          %vm3134 = vcmask 1039360
          %v3135 = vsel %vm3134, %v3055, %v3057
          %v3136 = vsel %vm3134, %v3059, %v3061
          %v3137 = vsel %vm3134, %v3063, %v3065
          %v3138 = vsel %vm3134, %v3067, %v3069
          %v3139 = vsel %vm3134, %v3071, %v3073
          %v3140 = vsel %vm3134, %v3075, %v3077
          %v3141 = vsel %vm3134, %v3079, %v3081
          %v3142 = vsel %vm3134, %v3083, %v3085
          %v3143 = vsel %vm3134, %v3087, %v3089
          %v3144 = vsel %vm3134, %v3091, %v3093
          %v3145 = vsel %vm3134, %v3095, %v3097
          %v3146 = vsel %vm3134, %v3099, %v3101
          %v3147 = vsel %vm3134, %v3103, %v3105
          %v3148 = vsel %vm3134, %v3107, %v3109
          %v3149 = vsel %vm3134, %v3111, %v3113
          %v3150 = vsel %vm3134, %v3115, %v3117
          %v3151 = vsel %vm3134, %v3119, %v3121
          %v3152 = vsel %vm3134, %v3123, %v3125
          %v3153 = vsel %vm3134, %v3127, %v3129
          %v3154 = vsel %vm3134, %v3131, %v3133
          %vm3175 = vcmask 261120
          %v3177 = vsel %vm3175, %v3007, 0
          %v3180 = vsel %vm3175, %v3009, 0
          %v3183 = vsel %vm3175, %v3011, 0
          %v3186 = vsel %vm3175, %v3013, 0
          %3188 = vmatpush.msra.mxu0 %v3150
          %3189 = vmatpush.msra.mxu0 %v3149
          %3190 = vmatpush.msra.mxu0 %v3148
          %3191 = vmatpush.msra.mxu0 %v3147
          %3192 = vmatpush.msra.mxu0 %v3146
          %3193 = vmatpush.msra.mxu0 %v3145
          %3194 = vmatpush.msra.mxu0 %v3144
          %3195 = vmatpush.msra.mxu0 %v3143
          %3196 = vmatpush.msra.mxu0 %v3142
          %3197 = vmatpush.msra.mxu0 %v3141
          %3198 = vmatpush.msra.mxu0 %v3140
          %3199 = vmatpush.msra.mxu0 %v3139
          %3200 = vmatpush.msra.mxu0 %v3138
          %3201 = vmatpush.msra.mxu0 %v3137
          %3202 = vmatpush.msra.mxu0 %v3136
          %3203 = vmatpush.msra.mxu0 %v3135
          %3204 = vmatmul.f32.gmra.mxu0 %v3006
          %v3205 = vpop.f32.mrf.mxu0
          %v3206 = vadd.f32 0.0, %v3205
          %3207 = vmatmul.f32.gmra.mxu0 %v3008
          %v3208 = vpop.f32.mrf.mxu0
          %v3209 = vadd.f32 0.0, %v3208
          %3210 = vmatmul.f32.gmra.mxu0 %v3010
          %v3211 = vpop.f32.mrf.mxu0
          %v3212 = vadd.f32 0.0, %v3211
          %3213 = vmatmul.f32.gmra.mxu0 %v3012
          %v3214 = vpop.f32.mrf.mxu0
          %v3215 = vadd.f32 0.0, %v3214
          %3216 = vdwg.mxu0
          %3217 = vmatpush.msra.mxu0 0.0
          %3218 = vmatpush.msra.mxu0 0.0
          %3219 = vmatpush.msra.mxu0 0.0
          %3220 = vmatpush.msra.mxu0 0.0
          %3221 = vmatpush.msra.mxu0 0.0
          %3222 = vmatpush.msra.mxu0 0.0
          %3223 = vmatpush.msra.mxu0 0.0
          %3224 = vmatpush.msra.mxu0 0.0
          %3225 = vmatpush.msra.mxu0 0.0
          %3226 = vmatpush.msra.mxu0 0.0
          %3227 = vmatpush.msra.mxu0 0.0
          %3228 = vmatpush.msra.mxu0 0.0
          %3229 = vmatpush.msra.mxu0 %v3154
          %3230 = vmatpush.msra.mxu0 %v3153
          %3231 = vmatpush.msra.mxu0 %v3152
          %3232 = vmatpush.msra.mxu0 %v3151
          %3233 = vmatmul.f32.gmra.mxu0 %v3177
          %v3234 = vpop.f32.mrf.mxu0
          %v3235 = vadd.f32 %v3206, %v3234
          %3236 = vmatmul.f32.gmra.mxu0 %v3180
          %v3237 = vpop.f32.mrf.mxu0
          %v3238 = vadd.f32 %v3209, %v3237
          %3239 = vmatmul.f32.gmra.mxu0 %v3183
          %v3240 = vpop.f32.mrf.mxu0
          %v3241 = vadd.f32 %v3212, %v3240
          %3242 = vmatmul.f32.gmra.mxu0 %v3186
          %v3243 = vpop.f32.mrf.mxu0
          %v3244 = vadd.f32 %v3215, %v3243
          %3245 = vdwg.mxu0
          %v3247 = vsel %vm3175, %v2978, 0
          %v3250 = vsel %vm3175, %v2980, 0
          %v3253 = vsel %vm3175, %v2982, 0
          %v3256 = vsel %vm3175, %v2984, 0
          %3258 = vmatpush.msra.mxu0 %v2972
          %3259 = vmatpush.msra.mxu0 %v2971
          %3260 = vmatpush.msra.mxu0 %v2970
          %3261 = vmatpush.msra.mxu0 %v2969
          %3262 = vmatpush.msra.mxu0 %v2968
          %3263 = vmatpush.msra.mxu0 %v2967
          %3264 = vmatpush.msra.mxu0 %v2966
          %3265 = vmatpush.msra.mxu0 %v2965
          %3266 = vmatpush.msra.mxu0 %v2964
          %3267 = vmatpush.msra.mxu0 %v2963
          %3268 = vmatpush.msra.mxu0 %v2962
          %3269 = vmatpush.msra.mxu0 %v2961
          %3270 = vmatpush.msra.mxu0 %v2960
          %3271 = vmatpush.msra.mxu0 %v2959
          %3272 = vmatpush.msra.mxu0 %v2958
          %3273 = vmatpush.msra.mxu0 %v2957
          %3274 = vmatmul.f32.gmra.mxu0 %v2977
          %v3275 = vpop.f32.mrf.mxu0
          %v3276 = vadd.f32 %v3235, %v3275
          %3277 = vmatmul.f32.gmra.mxu0 %v2979
          %v3278 = vpop.f32.mrf.mxu0
          %v3279 = vadd.f32 %v3238, %v3278
          %3280 = vmatmul.f32.gmra.mxu0 %v2981
          %v3281 = vpop.f32.mrf.mxu0
          %v3282 = vadd.f32 %v3241, %v3281
          %3283 = vmatmul.f32.gmra.mxu0 %v2983
          %v3284 = vpop.f32.mrf.mxu0
          %v3285 = vadd.f32 %v3244, %v3284
          %3286 = vdwg.mxu0
          %3287 = vmatpush.msra.mxu0 0.0
          %3288 = vmatpush.msra.mxu0 0.0
          %3289 = vmatpush.msra.mxu0 0.0
          %3290 = vmatpush.msra.mxu0 0.0
          %3291 = vmatpush.msra.mxu0 0.0
          %3292 = vmatpush.msra.mxu0 0.0
          %3293 = vmatpush.msra.mxu0 0.0
          %3294 = vmatpush.msra.mxu0 0.0
          %3295 = vmatpush.msra.mxu0 0.0
          %3296 = vmatpush.msra.mxu0 0.0
          %3297 = vmatpush.msra.mxu0 0.0
          %3298 = vmatpush.msra.mxu0 0.0
          %3299 = vmatpush.msra.mxu0 %v2976
          %3300 = vmatpush.msra.mxu0 %v2975
          %3301 = vmatpush.msra.mxu0 %v2974
          %3302 = vmatpush.msra.mxu0 %v2973
          %3303 = vmatmul.f32.gmra.mxu0 %v3247
          %v3304 = vpop.f32.mrf.mxu0
          %v3305 = vadd.f32 %v3276, %v3304
          %3306 = vmatmul.f32.gmra.mxu0 %v3250
          %v3307 = vpop.f32.mrf.mxu0
          %v3308 = vadd.f32 %v3279, %v3307
          %3309 = vmatmul.f32.gmra.mxu0 %v3253
          %v3310 = vpop.f32.mrf.mxu0
          %v3311 = vadd.f32 %v3282, %v3310
          %3312 = vmatmul.f32.gmra.mxu0 %v3256
          %v3313 = vpop.f32.mrf.mxu0
          %v3314 = vadd.f32 %v3285, %v3313
          %3315 = vdwg.mxu0
          %s3316 = scalar_lea.vmem %s7, 128
          %v3317 = vld [vmem:[%s3316] sm:$0xff]
          %v3318 = vld [vmem:[%s3316 + $0x8] sm:$0xff]
          %v3319 = vld [vmem:[%s3316 + $0x10] sm:$0xff]
          %v3320 = vld [vmem:[%s3316 + $0x18] sm:$0xff]
          %v3321 = vld [vmem:[%s3316 + $0x20] sm:$0xff]
          %v3322 = vld [vmem:[%s3316 + $0x28] sm:$0xff]
          %v3323 = vld [vmem:[%s3316 + $0x30] sm:$0xff]
          %v3324 = vld [vmem:[%s3316 + $0x38] sm:$0xff]
          %3325 = vrot.lane.b32.xlu0 %v2957, 126
          %v3326 = vpop.permute.xlu0 %3325
          %3327 = vrot.lane.b32.xlu0 %v2985, 126
          %v3328 = vpop.permute.xlu0 %3327
          %3329 = vrot.lane.b32.xlu0 %v2958, 126
          %v3330 = vpop.permute.xlu0 %3329
          %3331 = vrot.lane.b32.xlu0 %v2986, 126
          %v3332 = vpop.permute.xlu0 %3331
          %3333 = vrot.lane.b32.xlu0 %v2959, 126
          %v3334 = vpop.permute.xlu0 %3333
          %3335 = vrot.lane.b32.xlu0 %v2987, 126
          %v3336 = vpop.permute.xlu0 %3335
          %3337 = vrot.lane.b32.xlu0 %v2960, 126
          %v3338 = vpop.permute.xlu0 %3337
          %3339 = vrot.lane.b32.xlu0 %v2988, 126
          %v3340 = vpop.permute.xlu0 %3339
          %3341 = vrot.lane.b32.xlu0 %v2961, 126
          %v3342 = vpop.permute.xlu0 %3341
          %3343 = vrot.lane.b32.xlu0 %v2989, 126
          %v3344 = vpop.permute.xlu0 %3343
          %3345 = vrot.lane.b32.xlu0 %v2962, 126
          %v3346 = vpop.permute.xlu0 %3345
          %3347 = vrot.lane.b32.xlu0 %v2990, 126
          %v3348 = vpop.permute.xlu0 %3347
          %3349 = vrot.lane.b32.xlu0 %v2963, 126
          %v3350 = vpop.permute.xlu0 %3349
          %3351 = vrot.lane.b32.xlu0 %v2991, 126
          %v3352 = vpop.permute.xlu0 %3351
          %3353 = vrot.lane.b32.xlu0 %v2964, 126
          %v3354 = vpop.permute.xlu0 %3353
          %3355 = vrot.lane.b32.xlu0 %v2992, 126
          %v3356 = vpop.permute.xlu0 %3355
          %3357 = vrot.lane.b32.xlu0 %v2965, 126
          %v3358 = vpop.permute.xlu0 %3357
          %3359 = vrot.lane.b32.xlu0 %v2993, 126
          %v3360 = vpop.permute.xlu0 %3359
          %3361 = vrot.lane.b32.xlu0 %v2966, 126
          %v3362 = vpop.permute.xlu0 %3361
          %3363 = vrot.lane.b32.xlu0 %v2994, 126
          %v3364 = vpop.permute.xlu0 %3363
          %3365 = vrot.lane.b32.xlu0 %v2967, 126
          %v3366 = vpop.permute.xlu0 %3365
          %3367 = vrot.lane.b32.xlu0 %v2995, 126
          %v3368 = vpop.permute.xlu0 %3367
          %3369 = vrot.lane.b32.xlu0 %v2968, 126
          %v3370 = vpop.permute.xlu0 %3369
          %3371 = vrot.lane.b32.xlu0 %v2996, 126
          %v3372 = vpop.permute.xlu0 %3371
          %3373 = vrot.lane.b32.xlu0 %v2969, 126
          %v3374 = vpop.permute.xlu0 %3373
          %3375 = vrot.lane.b32.xlu0 %v2997, 126
          %v3376 = vpop.permute.xlu0 %3375
          %3377 = vrot.lane.b32.xlu0 %v2970, 126
          %v3378 = vpop.permute.xlu0 %3377
          %3379 = vrot.lane.b32.xlu0 %v2998, 126
          %v3380 = vpop.permute.xlu0 %3379
          %3381 = vrot.lane.b32.xlu0 %v2971, 126
          %v3382 = vpop.permute.xlu0 %3381
          %3383 = vrot.lane.b32.xlu0 %v2999, 126
          %v3384 = vpop.permute.xlu0 %3383
          %3385 = vrot.lane.b32.xlu0 %v2972, 126
          %v3386 = vpop.permute.xlu0 %3385
          %3387 = vrot.lane.b32.xlu0 %v3000, 126
          %v3388 = vpop.permute.xlu0 %3387
          %3389 = vrot.lane.b32.xlu0 %v2973, 126
          %v3390 = vpop.permute.xlu0 %3389
          %3391 = vrot.lane.b32.xlu0 %v3001, 126
          %v3392 = vpop.permute.xlu0 %3391
          %3393 = vrot.lane.b32.xlu0 %v2974, 126
          %v3394 = vpop.permute.xlu0 %3393
          %3395 = vrot.lane.b32.xlu0 %v3002, 126
          %v3396 = vpop.permute.xlu0 %3395
          %3397 = vrot.lane.b32.xlu0 %v2975, 126
          %v3398 = vpop.permute.xlu0 %3397
          %3399 = vrot.lane.b32.xlu0 %v3003, 126
          %v3400 = vpop.permute.xlu0 %3399
          %3401 = vrot.lane.b32.xlu0 %v2976, 126
          %v3402 = vpop.permute.xlu0 %3401
          %3403 = vrot.lane.b32.xlu0 %v3004, 126
          %v3404 = vpop.permute.xlu0 %3403
          %vm3405 = vcmask 1031168
          %v3406 = vsel %vm3405, %v3326, %v3328
          %v3407 = vsel %vm3405, %v3330, %v3332
          %v3408 = vsel %vm3405, %v3334, %v3336
          %v3409 = vsel %vm3405, %v3338, %v3340
          %v3410 = vsel %vm3405, %v3342, %v3344
          %v3411 = vsel %vm3405, %v3346, %v3348
          %v3412 = vsel %vm3405, %v3350, %v3352
          %v3413 = vsel %vm3405, %v3354, %v3356
          %v3414 = vsel %vm3405, %v3358, %v3360
          %v3415 = vsel %vm3405, %v3362, %v3364
          %v3416 = vsel %vm3405, %v3366, %v3368
          %v3417 = vsel %vm3405, %v3370, %v3372
          %v3418 = vsel %vm3405, %v3374, %v3376
          %v3419 = vsel %vm3405, %v3378, %v3380
          %v3420 = vsel %vm3405, %v3382, %v3384
          %v3421 = vsel %vm3405, %v3386, %v3388
          %v3422 = vsel %vm3405, %v3390, %v3392
          %v3423 = vsel %vm3405, %v3394, %v3396
          %v3424 = vsel %vm3405, %v3398, %v3400
          %v3425 = vsel %vm3405, %v3402, %v3404
          %v3447 = vsel %vm3175, %v3318, 0
          %v3450 = vsel %vm3175, %v3320, 0
          %v3453 = vsel %vm3175, %v3322, 0
          %v3456 = vsel %vm3175, %v3324, 0
          %3458 = vmatpush.msra.mxu0 %v3421
          %3459 = vmatpush.msra.mxu0 %v3420
          %3460 = vmatpush.msra.mxu0 %v3419
          %3461 = vmatpush.msra.mxu0 %v3418
          %3462 = vmatpush.msra.mxu0 %v3417
          %3463 = vmatpush.msra.mxu0 %v3416
          %3464 = vmatpush.msra.mxu0 %v3415
          %3465 = vmatpush.msra.mxu0 %v3414
          %3466 = vmatpush.msra.mxu0 %v3413
          %3467 = vmatpush.msra.mxu0 %v3412
          %3468 = vmatpush.msra.mxu0 %v3411
          %3469 = vmatpush.msra.mxu0 %v3410
          %3470 = vmatpush.msra.mxu0 %v3409
          %3471 = vmatpush.msra.mxu0 %v3408
          %3472 = vmatpush.msra.mxu0 %v3407
          %3473 = vmatpush.msra.mxu0 %v3406
          %3474 = vmatmul.f32.gmra.mxu0 %v3317
          %v3475 = vpop.f32.mrf.mxu0
          %v3476 = vadd.f32 0.0, %v3475
          %3477 = vmatmul.f32.gmra.mxu0 %v3319
          %v3478 = vpop.f32.mrf.mxu0
          %v3479 = vadd.f32 0.0, %v3478
          %3480 = vmatmul.f32.gmra.mxu0 %v3321
          %v3481 = vpop.f32.mrf.mxu0
          %v3482 = vadd.f32 0.0, %v3481
          %3483 = vmatmul.f32.gmra.mxu0 %v3323
          %v3484 = vpop.f32.mrf.mxu0
          %v3485 = vadd.f32 0.0, %v3484
          %3486 = vdwg.mxu0
          %3487 = vmatpush.msra.mxu0 0.0
          %3488 = vmatpush.msra.mxu0 0.0
          %3489 = vmatpush.msra.mxu0 0.0
          %3490 = vmatpush.msra.mxu0 0.0
          %3491 = vmatpush.msra.mxu0 0.0
          %3492 = vmatpush.msra.mxu0 0.0
          %3493 = vmatpush.msra.mxu0 0.0
          %3494 = vmatpush.msra.mxu0 0.0
          %3495 = vmatpush.msra.mxu0 0.0
          %3496 = vmatpush.msra.mxu0 0.0
          %3497 = vmatpush.msra.mxu0 0.0
          %3498 = vmatpush.msra.mxu0 0.0
          %3499 = vmatpush.msra.mxu0 %v3425
          %3500 = vmatpush.msra.mxu0 %v3424
          %3501 = vmatpush.msra.mxu0 %v3423
          %3502 = vmatpush.msra.mxu0 %v3422
          %3503 = vmatmul.f32.gmra.mxu0 %v3447
          %v3504 = vpop.f32.mrf.mxu0
          %v3505 = vadd.f32 %v3476, %v3504
          %3506 = vmatmul.f32.gmra.mxu0 %v3450
          %v3507 = vpop.f32.mrf.mxu0
          %v3508 = vadd.f32 %v3479, %v3507
          %3509 = vmatmul.f32.gmra.mxu0 %v3453
          %v3510 = vpop.f32.mrf.mxu0
          %v3511 = vadd.f32 %v3482, %v3510
          %3512 = vmatmul.f32.gmra.mxu0 %v3456
          %v3513 = vpop.f32.mrf.mxu0
          %v3514 = vadd.f32 %v3485, %v3513
          %3515 = vdwg.mxu0
          %v3516 = vadd.f32 %v3305, %v3505
          %v3517 = vadd.f32 %v3308, %v3508
          %v3518 = vadd.f32 %v3311, %v3511
          %v3519 = vadd.f32 %v3314, %v3514
          %s3520 = scalar_lea.vmem %s7, 192
          %v3521 = vld [vmem:[%s3520] sm:$0xff]
          %v3522 = vld [vmem:[%s3520 + $0x8] sm:$0xff]
          %v3523 = vld [vmem:[%s3520 + $0x10] sm:$0xff]
          %v3524 = vld [vmem:[%s3520 + $0x18] sm:$0xff]
          %v3525 = vld [vmem:[%s3520 + $0x20] sm:$0xff]
          %v3526 = vld [vmem:[%s3520 + $0x28] sm:$0xff]
          %v3527 = vld [vmem:[%s3520 + $0x30] sm:$0xff]
          %v3528 = vld [vmem:[%s3520 + $0x38] sm:$0xff]
          %3529 = vrot.lane.b32.xlu0 %v2957, 125
          %v3530 = vpop.permute.xlu0 %3529
          %3531 = vrot.lane.b32.xlu0 %v2985, 125
          %v3532 = vpop.permute.xlu0 %3531
          %3533 = vrot.lane.b32.xlu0 %v2958, 125
          %v3534 = vpop.permute.xlu0 %3533
          %3535 = vrot.lane.b32.xlu0 %v2986, 125
          %v3536 = vpop.permute.xlu0 %3535
          %3537 = vrot.lane.b32.xlu0 %v2959, 125
          %v3538 = vpop.permute.xlu0 %3537
          %3539 = vrot.lane.b32.xlu0 %v2987, 125
          %v3540 = vpop.permute.xlu0 %3539
          %3541 = vrot.lane.b32.xlu0 %v2960, 125
          %v3542 = vpop.permute.xlu0 %3541
          %3543 = vrot.lane.b32.xlu0 %v2988, 125
          %v3544 = vpop.permute.xlu0 %3543
          %3545 = vrot.lane.b32.xlu0 %v2961, 125
          %v3546 = vpop.permute.xlu0 %3545
          %3547 = vrot.lane.b32.xlu0 %v2989, 125
          %v3548 = vpop.permute.xlu0 %3547
          %3549 = vrot.lane.b32.xlu0 %v2962, 125
          %v3550 = vpop.permute.xlu0 %3549
          %3551 = vrot.lane.b32.xlu0 %v2990, 125
          %v3552 = vpop.permute.xlu0 %3551
          %3553 = vrot.lane.b32.xlu0 %v2963, 125
          %v3554 = vpop.permute.xlu0 %3553
          %3555 = vrot.lane.b32.xlu0 %v2991, 125
          %v3556 = vpop.permute.xlu0 %3555
          %3557 = vrot.lane.b32.xlu0 %v2964, 125
          %v3558 = vpop.permute.xlu0 %3557
          %3559 = vrot.lane.b32.xlu0 %v2992, 125
          %v3560 = vpop.permute.xlu0 %3559
          %3561 = vrot.lane.b32.xlu0 %v2965, 125
          %v3562 = vpop.permute.xlu0 %3561
          %3563 = vrot.lane.b32.xlu0 %v2993, 125
          %v3564 = vpop.permute.xlu0 %3563
          %3565 = vrot.lane.b32.xlu0 %v2966, 125
          %v3566 = vpop.permute.xlu0 %3565
          %3567 = vrot.lane.b32.xlu0 %v2994, 125
          %v3568 = vpop.permute.xlu0 %3567
          %3569 = vrot.lane.b32.xlu0 %v2967, 125
          %v3570 = vpop.permute.xlu0 %3569
          %3571 = vrot.lane.b32.xlu0 %v2995, 125
          %v3572 = vpop.permute.xlu0 %3571
          %3573 = vrot.lane.b32.xlu0 %v2968, 125
          %v3574 = vpop.permute.xlu0 %3573
          %3575 = vrot.lane.b32.xlu0 %v2996, 125
          %v3576 = vpop.permute.xlu0 %3575
          %3577 = vrot.lane.b32.xlu0 %v2969, 125
          %v3578 = vpop.permute.xlu0 %3577
          %3579 = vrot.lane.b32.xlu0 %v2997, 125
          %v3580 = vpop.permute.xlu0 %3579
          %3581 = vrot.lane.b32.xlu0 %v2970, 125
          %v3582 = vpop.permute.xlu0 %3581
          %3583 = vrot.lane.b32.xlu0 %v2998, 125
          %v3584 = vpop.permute.xlu0 %3583
          %3585 = vrot.lane.b32.xlu0 %v2971, 125
          %v3586 = vpop.permute.xlu0 %3585
          %3587 = vrot.lane.b32.xlu0 %v2999, 125
          %v3588 = vpop.permute.xlu0 %3587
          %3589 = vrot.lane.b32.xlu0 %v2972, 125
          %v3590 = vpop.permute.xlu0 %3589
          %3591 = vrot.lane.b32.xlu0 %v3000, 125
          %v3592 = vpop.permute.xlu0 %3591
          %3593 = vrot.lane.b32.xlu0 %v2973, 125
          %v3594 = vpop.permute.xlu0 %3593
          %3595 = vrot.lane.b32.xlu0 %v3001, 125
          %v3596 = vpop.permute.xlu0 %3595
          %3597 = vrot.lane.b32.xlu0 %v2974, 125
          %v3598 = vpop.permute.xlu0 %3597
          %3599 = vrot.lane.b32.xlu0 %v3002, 125
          %v3600 = vpop.permute.xlu0 %3599
          %3601 = vrot.lane.b32.xlu0 %v2975, 125
          %v3602 = vpop.permute.xlu0 %3601
          %3603 = vrot.lane.b32.xlu0 %v3003, 125
          %v3604 = vpop.permute.xlu0 %3603
          %3605 = vrot.lane.b32.xlu0 %v2976, 125
          %v3606 = vpop.permute.xlu0 %3605
          %3607 = vrot.lane.b32.xlu0 %v3004, 125
          %v3608 = vpop.permute.xlu0 %3607
          %vm3609 = vcmask 1022976
          %v3610 = vsel %vm3609, %v3530, %v3532
          %v3611 = vsel %vm3609, %v3534, %v3536
          %v3612 = vsel %vm3609, %v3538, %v3540
          %v3613 = vsel %vm3609, %v3542, %v3544
          %v3614 = vsel %vm3609, %v3546, %v3548
          %v3615 = vsel %vm3609, %v3550, %v3552
          %v3616 = vsel %vm3609, %v3554, %v3556
          %v3617 = vsel %vm3609, %v3558, %v3560
          %v3618 = vsel %vm3609, %v3562, %v3564
          %v3619 = vsel %vm3609, %v3566, %v3568
          %v3620 = vsel %vm3609, %v3570, %v3572
          %v3621 = vsel %vm3609, %v3574, %v3576
          %v3622 = vsel %vm3609, %v3578, %v3580
          %v3623 = vsel %vm3609, %v3582, %v3584
          %v3624 = vsel %vm3609, %v3586, %v3588
          %v3625 = vsel %vm3609, %v3590, %v3592
          %v3626 = vsel %vm3609, %v3594, %v3596
          %v3627 = vsel %vm3609, %v3598, %v3600
          %v3628 = vsel %vm3609, %v3602, %v3604
          %v3629 = vsel %vm3609, %v3606, %v3608
          %v3651 = vsel %vm3175, %v3522, 0
          %v3654 = vsel %vm3175, %v3524, 0
          %v3657 = vsel %vm3175, %v3526, 0
          %v3660 = vsel %vm3175, %v3528, 0
          %3662 = vmatpush.msra.mxu0 %v3625
          %3663 = vmatpush.msra.mxu0 %v3624
          %3664 = vmatpush.msra.mxu0 %v3623
          %3665 = vmatpush.msra.mxu0 %v3622
          %3666 = vmatpush.msra.mxu0 %v3621
          %3667 = vmatpush.msra.mxu0 %v3620
          %3668 = vmatpush.msra.mxu0 %v3619
          %3669 = vmatpush.msra.mxu0 %v3618
          %3670 = vmatpush.msra.mxu0 %v3617
          %3671 = vmatpush.msra.mxu0 %v3616
          %3672 = vmatpush.msra.mxu0 %v3615
          %3673 = vmatpush.msra.mxu0 %v3614
          %3674 = vmatpush.msra.mxu0 %v3613
          %3675 = vmatpush.msra.mxu0 %v3612
          %3676 = vmatpush.msra.mxu0 %v3611
          %3677 = vmatpush.msra.mxu0 %v3610
          %3678 = vmatmul.f32.gmra.mxu0 %v3521
          %v3679 = vpop.f32.mrf.mxu0
          %v3680 = vadd.f32 0.0, %v3679
          %3681 = vmatmul.f32.gmra.mxu0 %v3523
          %v3682 = vpop.f32.mrf.mxu0
          %v3683 = vadd.f32 0.0, %v3682
          %3684 = vmatmul.f32.gmra.mxu0 %v3525
          %v3685 = vpop.f32.mrf.mxu0
          %v3686 = vadd.f32 0.0, %v3685
          %3687 = vmatmul.f32.gmra.mxu0 %v3527
          %v3688 = vpop.f32.mrf.mxu0
          %v3689 = vadd.f32 0.0, %v3688
          %3690 = vdwg.mxu0
          %3691 = vmatpush.msra.mxu0 0.0
          %3692 = vmatpush.msra.mxu0 0.0
          %3693 = vmatpush.msra.mxu0 0.0
          %3694 = vmatpush.msra.mxu0 0.0
          %3695 = vmatpush.msra.mxu0 0.0
          %3696 = vmatpush.msra.mxu0 0.0
          %3697 = vmatpush.msra.mxu0 0.0
          %3698 = vmatpush.msra.mxu0 0.0
          %3699 = vmatpush.msra.mxu0 0.0
          %3700 = vmatpush.msra.mxu0 0.0
          %3701 = vmatpush.msra.mxu0 0.0
          %3702 = vmatpush.msra.mxu0 0.0
          %3703 = vmatpush.msra.mxu0 %v3629
          %3704 = vmatpush.msra.mxu0 %v3628
          %3705 = vmatpush.msra.mxu0 %v3627
          %3706 = vmatpush.msra.mxu0 %v3626
          %3707 = vmatmul.f32.gmra.mxu0 %v3651
          %v3708 = vpop.f32.mrf.mxu0
          %v3709 = vadd.f32 %v3680, %v3708
          %3710 = vmatmul.f32.gmra.mxu0 %v3654
          %v3711 = vpop.f32.mrf.mxu0
          %v3712 = vadd.f32 %v3683, %v3711
          %3713 = vmatmul.f32.gmra.mxu0 %v3657
          %v3714 = vpop.f32.mrf.mxu0
          %v3715 = vadd.f32 %v3686, %v3714
          %3716 = vmatmul.f32.gmra.mxu0 %v3660
          %v3717 = vpop.f32.mrf.mxu0
          %v3718 = vadd.f32 %v3689, %v3717
          %3719 = vdwg.mxu0
          %v3720 = vadd.f32 %v3516, %v3709
          %v3721 = vadd.f32 %v3517, %v3712
          %v3722 = vadd.f32 %v3518, %v3715
          %v3723 = vadd.f32 %v3519, %v3718
          %s3724 = scalar_lea.vmem %s7, 256
          %v3725 = vld [vmem:[%s3724] sm:$0xff]
          %v3726 = vld [vmem:[%s3724 + $0x8] sm:$0xff]
          %v3727 = vld [vmem:[%s3724 + $0x10] sm:$0xff]
          %v3728 = vld [vmem:[%s3724 + $0x18] sm:$0xff]
          %v3729 = vld [vmem:[%s3724 + $0x20] sm:$0xff]
          %v3730 = vld [vmem:[%s3724 + $0x28] sm:$0xff]
          %v3731 = vld [vmem:[%s3724 + $0x30] sm:$0xff]
          %v3732 = vld [vmem:[%s3724 + $0x38] sm:$0xff]
          %3733 = vrot.lane.b32.xlu0 %v2957, 124
          %v3734 = vpop.permute.xlu0 %3733
          %3735 = vrot.lane.b32.xlu0 %v2985, 124
          %v3736 = vpop.permute.xlu0 %3735
          %3737 = vrot.lane.b32.xlu0 %v2958, 124
          %v3738 = vpop.permute.xlu0 %3737
          %3739 = vrot.lane.b32.xlu0 %v2986, 124
          %v3740 = vpop.permute.xlu0 %3739
          %3741 = vrot.lane.b32.xlu0 %v2959, 124
          %v3742 = vpop.permute.xlu0 %3741
          %3743 = vrot.lane.b32.xlu0 %v2987, 124
          %v3744 = vpop.permute.xlu0 %3743
          %3745 = vrot.lane.b32.xlu0 %v2960, 124
          %v3746 = vpop.permute.xlu0 %3745
          %3747 = vrot.lane.b32.xlu0 %v2988, 124
          %v3748 = vpop.permute.xlu0 %3747
          %3749 = vrot.lane.b32.xlu0 %v2961, 124
          %v3750 = vpop.permute.xlu0 %3749
          %3751 = vrot.lane.b32.xlu0 %v2989, 124
          %v3752 = vpop.permute.xlu0 %3751
          %3753 = vrot.lane.b32.xlu0 %v2962, 124
          %v3754 = vpop.permute.xlu0 %3753
          %3755 = vrot.lane.b32.xlu0 %v2990, 124
          %v3756 = vpop.permute.xlu0 %3755
          %3757 = vrot.lane.b32.xlu0 %v2963, 124
          %v3758 = vpop.permute.xlu0 %3757
          %3759 = vrot.lane.b32.xlu0 %v2991, 124
          %v3760 = vpop.permute.xlu0 %3759
          %3761 = vrot.lane.b32.xlu0 %v2964, 124
          %v3762 = vpop.permute.xlu0 %3761
          %3763 = vrot.lane.b32.xlu0 %v2992, 124
          %v3764 = vpop.permute.xlu0 %3763
          %3765 = vrot.lane.b32.xlu0 %v2965, 124
          %v3766 = vpop.permute.xlu0 %3765
          %3767 = vrot.lane.b32.xlu0 %v2993, 124
          %v3768 = vpop.permute.xlu0 %3767
          %3769 = vrot.lane.b32.xlu0 %v2966, 124
          %v3770 = vpop.permute.xlu0 %3769
          %3771 = vrot.lane.b32.xlu0 %v2994, 124
          %v3772 = vpop.permute.xlu0 %3771
          %3773 = vrot.lane.b32.xlu0 %v2967, 124
          %v3774 = vpop.permute.xlu0 %3773
          %3775 = vrot.lane.b32.xlu0 %v2995, 124
          %v3776 = vpop.permute.xlu0 %3775
          %3777 = vrot.lane.b32.xlu0 %v2968, 124
          %v3778 = vpop.permute.xlu0 %3777
          %3779 = vrot.lane.b32.xlu0 %v2996, 124
          %v3780 = vpop.permute.xlu0 %3779
          %3781 = vrot.lane.b32.xlu0 %v2969, 124
          %v3782 = vpop.permute.xlu0 %3781
          %3783 = vrot.lane.b32.xlu0 %v2997, 124
          %v3784 = vpop.permute.xlu0 %3783
          %3785 = vrot.lane.b32.xlu0 %v2970, 124
          %v3786 = vpop.permute.xlu0 %3785
          %3787 = vrot.lane.b32.xlu0 %v2998, 124
          %v3788 = vpop.permute.xlu0 %3787
          %3789 = vrot.lane.b32.xlu0 %v2971, 124
          %v3790 = vpop.permute.xlu0 %3789
          %3791 = vrot.lane.b32.xlu0 %v2999, 124
          %v3792 = vpop.permute.xlu0 %3791
          %3793 = vrot.lane.b32.xlu0 %v2972, 124
          %v3794 = vpop.permute.xlu0 %3793
          %3795 = vrot.lane.b32.xlu0 %v3000, 124
          %v3796 = vpop.permute.xlu0 %3795
          %3797 = vrot.lane.b32.xlu0 %v2973, 124
          %v3798 = vpop.permute.xlu0 %3797
          %3799 = vrot.lane.b32.xlu0 %v3001, 124
          %v3800 = vpop.permute.xlu0 %3799
          %3801 = vrot.lane.b32.xlu0 %v2974, 124
          %v3802 = vpop.permute.xlu0 %3801
          %3803 = vrot.lane.b32.xlu0 %v3002, 124
          %v3804 = vpop.permute.xlu0 %3803
          %3805 = vrot.lane.b32.xlu0 %v2975, 124
          %v3806 = vpop.permute.xlu0 %3805
          %3807 = vrot.lane.b32.xlu0 %v3003, 124
          %v3808 = vpop.permute.xlu0 %3807
          %3809 = vrot.lane.b32.xlu0 %v2976, 124
          %v3810 = vpop.permute.xlu0 %3809
          %3811 = vrot.lane.b32.xlu0 %v3004, 124
          %v3812 = vpop.permute.xlu0 %3811
          %vm3813 = vcmask 1014784
          %v3814 = vsel %vm3813, %v3734, %v3736
          %v3815 = vsel %vm3813, %v3738, %v3740
          %v3816 = vsel %vm3813, %v3742, %v3744
          %v3817 = vsel %vm3813, %v3746, %v3748
          %v3818 = vsel %vm3813, %v3750, %v3752
          %v3819 = vsel %vm3813, %v3754, %v3756
          %v3820 = vsel %vm3813, %v3758, %v3760
          %v3821 = vsel %vm3813, %v3762, %v3764
          %v3822 = vsel %vm3813, %v3766, %v3768
          %v3823 = vsel %vm3813, %v3770, %v3772
          %v3824 = vsel %vm3813, %v3774, %v3776
          %v3825 = vsel %vm3813, %v3778, %v3780
          %v3826 = vsel %vm3813, %v3782, %v3784
          %v3827 = vsel %vm3813, %v3786, %v3788
          %v3828 = vsel %vm3813, %v3790, %v3792
          %v3829 = vsel %vm3813, %v3794, %v3796
          %v3830 = vsel %vm3813, %v3798, %v3800
          %v3831 = vsel %vm3813, %v3802, %v3804
          %v3832 = vsel %vm3813, %v3806, %v3808
          %v3833 = vsel %vm3813, %v3810, %v3812
          %v3855 = vsel %vm3175, %v3726, 0
          %v3858 = vsel %vm3175, %v3728, 0
          %v3861 = vsel %vm3175, %v3730, 0
          %v3864 = vsel %vm3175, %v3732, 0
          %3866 = vmatpush.msra.mxu0 %v3829
          %3867 = vmatpush.msra.mxu0 %v3828
          %3868 = vmatpush.msra.mxu0 %v3827
          %3869 = vmatpush.msra.mxu0 %v3826
          %3870 = vmatpush.msra.mxu0 %v3825
          %3871 = vmatpush.msra.mxu0 %v3824
          %3872 = vmatpush.msra.mxu0 %v3823
          %3873 = vmatpush.msra.mxu0 %v3822
          %3874 = vmatpush.msra.mxu0 %v3821
          %3875 = vmatpush.msra.mxu0 %v3820
          %3876 = vmatpush.msra.mxu0 %v3819
          %3877 = vmatpush.msra.mxu0 %v3818
          %3878 = vmatpush.msra.mxu0 %v3817
          %3879 = vmatpush.msra.mxu0 %v3816
          %3880 = vmatpush.msra.mxu0 %v3815
          %3881 = vmatpush.msra.mxu0 %v3814
          %3882 = vmatmul.f32.gmra.mxu0 %v3725
          %v3883 = vpop.f32.mrf.mxu0
          %v3884 = vadd.f32 0.0, %v3883
          %3885 = vmatmul.f32.gmra.mxu0 %v3727
          %v3886 = vpop.f32.mrf.mxu0
          %v3887 = vadd.f32 0.0, %v3886
          %3888 = vmatmul.f32.gmra.mxu0 %v3729
          %v3889 = vpop.f32.mrf.mxu0
          %v3890 = vadd.f32 0.0, %v3889
          %3891 = vmatmul.f32.gmra.mxu0 %v3731
          %v3892 = vpop.f32.mrf.mxu0
          %v3893 = vadd.f32 0.0, %v3892
          %3894 = vdwg.mxu0
          %3895 = vmatpush.msra.mxu0 0.0
          %3896 = vmatpush.msra.mxu0 0.0
          %3897 = vmatpush.msra.mxu0 0.0
          %3898 = vmatpush.msra.mxu0 0.0
          %3899 = vmatpush.msra.mxu0 0.0
          %3900 = vmatpush.msra.mxu0 0.0
          %3901 = vmatpush.msra.mxu0 0.0
          %3902 = vmatpush.msra.mxu0 0.0
          %3903 = vmatpush.msra.mxu0 0.0
          %3904 = vmatpush.msra.mxu0 0.0
          %3905 = vmatpush.msra.mxu0 0.0
          %3906 = vmatpush.msra.mxu0 0.0
          %3907 = vmatpush.msra.mxu0 %v3833
          %3908 = vmatpush.msra.mxu0 %v3832
          %3909 = vmatpush.msra.mxu0 %v3831
          %3910 = vmatpush.msra.mxu0 %v3830
          %3911 = vmatmul.f32.gmra.mxu0 %v3855
          %v3912 = vpop.f32.mrf.mxu0
          %v3913 = vadd.f32 %v3884, %v3912
          %3914 = vmatmul.f32.gmra.mxu0 %v3858
          %v3915 = vpop.f32.mrf.mxu0
          %v3916 = vadd.f32 %v3887, %v3915
          %3917 = vmatmul.f32.gmra.mxu0 %v3861
          %v3918 = vpop.f32.mrf.mxu0
          %v3919 = vadd.f32 %v3890, %v3918
          %3920 = vmatmul.f32.gmra.mxu0 %v3864
          %v3921 = vpop.f32.mrf.mxu0
          %v3922 = vadd.f32 %v3893, %v3921
          %3923 = vdwg.mxu0
          %v3924 = vadd.f32 %v3720, %v3913
          %v3925 = vadd.f32 %v3721, %v3916
          %v3926 = vadd.f32 %v3722, %v3919
          %v3927 = vadd.f32 %v3723, %v3922
          %v3928 = vld [vmem:[%s8] sm:$0xff]
          %v3929 = vld [vmem:[%s8 + $0x8] sm:$0xff]
          %v3930 = vld [vmem:[%s8 + $0x10] sm:$0xff]
          %v3931 = vld [vmem:[%s8 + $0x18] sm:$0xff]
          %3933 = vset.pattern.permute.xlu0 0
          %3934 = vperm.xlu0 %3933, %v3928
          %v3935 = vpop.permute.xlu0 %3934
          %3938 = vset.pattern.permute.xlu0 0
          %3939 = vperm.xlu0 %3938, %v3929
          %v3940 = vpop.permute.xlu0 %3939
          %3943 = vset.pattern.permute.xlu0 0
          %3944 = vperm.xlu0 %3943, %v3930
          %v3945 = vpop.permute.xlu0 %3944
          %3948 = vset.pattern.permute.xlu0 0
          %3949 = vperm.xlu0 %3948, %v3931
          %v3950 = vpop.permute.xlu0 %3949
          %v3952 = vadd.f32 %v3924, %v3935
          %v3953 = vadd.f32 %v3925, %v3940
          %v3954 = vadd.f32 %v3926, %v3945
          %v3955 = vadd.f32 %v3927, %v3950
          %vm3956 = vcmp.ge.f32.partialorder %v3952, 0.0
          %vm3957 = vcmp.ge.f32.partialorder %v3953, 0.0
          %vm3958 = vcmp.ge.f32.partialorder %v3954, 0.0
          %vm3959 = vcmp.ge.f32.partialorder %v3955, 0.0
          %v3960 = vmul.f32 %v3952, 0.01
          %v3961 = vmul.f32 %v3953, 0.01
          %v3962 = vmul.f32 %v3954, 0.01
          %v3963 = vmul.f32 %v3955, 0.01
          %v3964 = vsel %vm3956, %v3952, %v3960
          %v3965 = vsel %vm3957, %v3953, %v3961
          %v3966 = vsel %vm3958, %v3954, %v3962
          %v3967 = vsel %vm3959, %v3955, %v3963
          %s3968 = smul.u32 %s2946, 2
          %s3969 = sadd.s32 %s3968, 1
          %s3970 = smul.u32 %s3969, 32
          %s3971 = sshra.s32 %s3970, 3
          %s3972 = sand.u32 %s3970, 7
          %s3973 = smul.u32 %s3971, 2
          %s3974 = smul.addr %s3973, 8
          %s3975 = scalar_lea.vmem [#allocation3], %s3974
          %v3976 = vld [vmem:[%s3975] sm:$0xff]
          %v3977 = vld [vmem:[%s3975 + $0x10] sm:$0xff]
          %v3978 = vld [vmem:[%s3975 + $0x20] sm:$0xff]
          %v3979 = vld [vmem:[%s3975 + $0x30] sm:$0xff]
          %v3980 = vld [vmem:[%s3975 + $0x40] sm:$0xff]
          %v3981 = vld [vmem:[%s3975 + $0x50] sm:$0xff]
          %v3982 = vld [vmem:[%s3975 + $0x60] sm:$0xff]
          %v3983 = vld [vmem:[%s3975 + $0x70] sm:$0xff]
          %v3984 = vld [vmem:[%s3975 + $0x80] sm:$0xff]
          %v3985 = vld [vmem:[%s3975 + $0x90] sm:$0xff]
          %v3986 = vld [vmem:[%s3975 + $0xa0] sm:$0xff]
          %v3987 = vld [vmem:[%s3975 + $0xb0] sm:$0xff]
          %v3988 = vld [vmem:[%s3975 + $0xc0] sm:$0xff]
          %v3989 = vld [vmem:[%s3975 + $0xd0] sm:$0xff]
          %v3990 = vld [vmem:[%s3975 + $0xe0] sm:$0xff]
          %v3991 = vld [vmem:[%s3975 + $0xf0] sm:$0xff]
          %v3992 = vld [vmem:[%s3975 + $0x100] sm:$0xff]
          %v3993 = vld [vmem:[%s3975 + $0x110] sm:$0xff]
          %v3994 = vld [vmem:[%s3975 + $0x120] sm:$0xff]
          %v3995 = vld [vmem:[%s3975 + $0x130] sm:$0xff]
          %v3996 = vld [vmem:[%s3975 + $0x8] sm:$0xff]
          %v3997 = vld [vmem:[%s3975 + $0x18] sm:$0xff]
          %v3998 = vld [vmem:[%s3975 + $0x28] sm:$0xff]
          %v3999 = vld [vmem:[%s3975 + $0x38] sm:$0xff]
          %v4000 = vld [vmem:[%s3975 + $0x48] sm:$0xff]
          %v4001 = vld [vmem:[%s3975 + $0x58] sm:$0xff]
          %v4002 = vld [vmem:[%s3975 + $0x68] sm:$0xff]
          %v4003 = vld [vmem:[%s3975 + $0x78] sm:$0xff]
          %v4004 = vld [vmem:[%s3975 + $0x88] sm:$0xff]
          %v4005 = vld [vmem:[%s3975 + $0x98] sm:$0xff]
          %v4006 = vld [vmem:[%s3975 + $0xa8] sm:$0xff]
          %v4007 = vld [vmem:[%s3975 + $0xb8] sm:$0xff]
          %v4008 = vld [vmem:[%s3975 + $0xc8] sm:$0xff]
          %v4009 = vld [vmem:[%s3975 + $0xd8] sm:$0xff]
          %v4010 = vld [vmem:[%s3975 + $0xe8] sm:$0xff]
          %v4011 = vld [vmem:[%s3975 + $0xf8] sm:$0xff]
          %v4012 = vld [vmem:[%s3975 + $0x108] sm:$0xff]
          %v4013 = vld [vmem:[%s3975 + $0x118] sm:$0xff]
          %v4014 = vld [vmem:[%s3975 + $0x128] sm:$0xff]
          %v4015 = vld [vmem:[%s3975 + $0x138] sm:$0xff]
          %4056 = vrot.lane.b32.xlu0 %v3976, 127
          %v4057 = vpop.permute.xlu0 %4056
          %4058 = vrot.lane.b32.xlu0 %v3996, 127
          %v4059 = vpop.permute.xlu0 %4058
          %4060 = vrot.lane.b32.xlu0 %v3977, 127
          %v4061 = vpop.permute.xlu0 %4060
          %4062 = vrot.lane.b32.xlu0 %v3997, 127
          %v4063 = vpop.permute.xlu0 %4062
          %4064 = vrot.lane.b32.xlu0 %v3978, 127
          %v4065 = vpop.permute.xlu0 %4064
          %4066 = vrot.lane.b32.xlu0 %v3998, 127
          %v4067 = vpop.permute.xlu0 %4066
          %4068 = vrot.lane.b32.xlu0 %v3979, 127
          %v4069 = vpop.permute.xlu0 %4068
          %4070 = vrot.lane.b32.xlu0 %v3999, 127
          %v4071 = vpop.permute.xlu0 %4070
          %4072 = vrot.lane.b32.xlu0 %v3980, 127
          %v4073 = vpop.permute.xlu0 %4072
          %4074 = vrot.lane.b32.xlu0 %v4000, 127
          %v4075 = vpop.permute.xlu0 %4074
          %4076 = vrot.lane.b32.xlu0 %v3981, 127
          %v4077 = vpop.permute.xlu0 %4076
          %4078 = vrot.lane.b32.xlu0 %v4001, 127
          %v4079 = vpop.permute.xlu0 %4078
          %4080 = vrot.lane.b32.xlu0 %v3982, 127
          %v4081 = vpop.permute.xlu0 %4080
          %4082 = vrot.lane.b32.xlu0 %v4002, 127
          %v4083 = vpop.permute.xlu0 %4082
          %4084 = vrot.lane.b32.xlu0 %v3983, 127
          %v4085 = vpop.permute.xlu0 %4084
          %4086 = vrot.lane.b32.xlu0 %v4003, 127
          %v4087 = vpop.permute.xlu0 %4086
          %4088 = vrot.lane.b32.xlu0 %v3984, 127
          %v4089 = vpop.permute.xlu0 %4088
          %4090 = vrot.lane.b32.xlu0 %v4004, 127
          %v4091 = vpop.permute.xlu0 %4090
          %4092 = vrot.lane.b32.xlu0 %v3985, 127
          %v4093 = vpop.permute.xlu0 %4092
          %4094 = vrot.lane.b32.xlu0 %v4005, 127
          %v4095 = vpop.permute.xlu0 %4094
          %4096 = vrot.lane.b32.xlu0 %v3986, 127
          %v4097 = vpop.permute.xlu0 %4096
          %4098 = vrot.lane.b32.xlu0 %v4006, 127
          %v4099 = vpop.permute.xlu0 %4098
          %4100 = vrot.lane.b32.xlu0 %v3987, 127
          %v4101 = vpop.permute.xlu0 %4100
          %4102 = vrot.lane.b32.xlu0 %v4007, 127
          %v4103 = vpop.permute.xlu0 %4102
          %4104 = vrot.lane.b32.xlu0 %v3988, 127
          %v4105 = vpop.permute.xlu0 %4104
          %4106 = vrot.lane.b32.xlu0 %v4008, 127
          %v4107 = vpop.permute.xlu0 %4106
          %4108 = vrot.lane.b32.xlu0 %v3989, 127
          %v4109 = vpop.permute.xlu0 %4108
          %4110 = vrot.lane.b32.xlu0 %v4009, 127
          %v4111 = vpop.permute.xlu0 %4110
          %4112 = vrot.lane.b32.xlu0 %v3990, 127
          %v4113 = vpop.permute.xlu0 %4112
          %4114 = vrot.lane.b32.xlu0 %v4010, 127
          %v4115 = vpop.permute.xlu0 %4114
          %4116 = vrot.lane.b32.xlu0 %v3991, 127
          %v4117 = vpop.permute.xlu0 %4116
          %4118 = vrot.lane.b32.xlu0 %v4011, 127
          %v4119 = vpop.permute.xlu0 %4118
          %4120 = vrot.lane.b32.xlu0 %v3992, 127
          %v4121 = vpop.permute.xlu0 %4120
          %4122 = vrot.lane.b32.xlu0 %v4012, 127
          %v4123 = vpop.permute.xlu0 %4122
          %4124 = vrot.lane.b32.xlu0 %v3993, 127
          %v4125 = vpop.permute.xlu0 %4124
          %4126 = vrot.lane.b32.xlu0 %v4013, 127
          %v4127 = vpop.permute.xlu0 %4126
          %4128 = vrot.lane.b32.xlu0 %v3994, 127
          %v4129 = vpop.permute.xlu0 %4128
          %4130 = vrot.lane.b32.xlu0 %v4014, 127
          %v4131 = vpop.permute.xlu0 %4130
          %4132 = vrot.lane.b32.xlu0 %v3995, 127
          %v4133 = vpop.permute.xlu0 %4132
          %4134 = vrot.lane.b32.xlu0 %v4015, 127
          %v4135 = vpop.permute.xlu0 %4134
          %v4136 = vsel %vm3134, %v4057, %v4059
          %v4137 = vsel %vm3134, %v4061, %v4063
          %v4138 = vsel %vm3134, %v4065, %v4067
          %v4139 = vsel %vm3134, %v4069, %v4071
          %v4140 = vsel %vm3134, %v4073, %v4075
          %v4141 = vsel %vm3134, %v4077, %v4079
          %v4142 = vsel %vm3134, %v4081, %v4083
          %v4143 = vsel %vm3134, %v4085, %v4087
          %v4144 = vsel %vm3134, %v4089, %v4091
          %v4145 = vsel %vm3134, %v4093, %v4095
          %v4146 = vsel %vm3134, %v4097, %v4099
          %v4147 = vsel %vm3134, %v4101, %v4103
          %v4148 = vsel %vm3134, %v4105, %v4107
          %v4149 = vsel %vm3134, %v4109, %v4111
          %v4150 = vsel %vm3134, %v4113, %v4115
          %v4151 = vsel %vm3134, %v4117, %v4119
          %v4152 = vsel %vm3134, %v4121, %v4123
          %v4153 = vsel %vm3134, %v4125, %v4127
          %v4154 = vsel %vm3134, %v4129, %v4131
          %v4155 = vsel %vm3134, %v4133, %v4135
          %4176 = vmatpush.msra.mxu0 %v4151
          %4177 = vmatpush.msra.mxu0 %v4150
          %4178 = vmatpush.msra.mxu0 %v4149
          %4179 = vmatpush.msra.mxu0 %v4148
          %4180 = vmatpush.msra.mxu0 %v4147
          %4181 = vmatpush.msra.mxu0 %v4146
          %4182 = vmatpush.msra.mxu0 %v4145
          %4183 = vmatpush.msra.mxu0 %v4144
          %4184 = vmatpush.msra.mxu0 %v4143
          %4185 = vmatpush.msra.mxu0 %v4142
          %4186 = vmatpush.msra.mxu0 %v4141
          %4187 = vmatpush.msra.mxu0 %v4140
          %4188 = vmatpush.msra.mxu0 %v4139
          %4189 = vmatpush.msra.mxu0 %v4138
          %4190 = vmatpush.msra.mxu0 %v4137
          %4191 = vmatpush.msra.mxu0 %v4136
          %4192 = vmatmul.f32.gmra.mxu0 %v3006
          %v4193 = vpop.f32.mrf.mxu0
          %v4194 = vadd.f32 0.0, %v4193
          %4195 = vmatmul.f32.gmra.mxu0 %v3008
          %v4196 = vpop.f32.mrf.mxu0
          %v4197 = vadd.f32 0.0, %v4196
          %4198 = vmatmul.f32.gmra.mxu0 %v3010
          %v4199 = vpop.f32.mrf.mxu0
          %v4200 = vadd.f32 0.0, %v4199
          %4201 = vmatmul.f32.gmra.mxu0 %v3012
          %v4202 = vpop.f32.mrf.mxu0
          %v4203 = vadd.f32 0.0, %v4202
          %4204 = vdwg.mxu0
          %4205 = vmatpush.msra.mxu0 0.0
          %4206 = vmatpush.msra.mxu0 0.0
          %4207 = vmatpush.msra.mxu0 0.0
          %4208 = vmatpush.msra.mxu0 0.0
          %4209 = vmatpush.msra.mxu0 0.0
          %4210 = vmatpush.msra.mxu0 0.0
          %4211 = vmatpush.msra.mxu0 0.0
          %4212 = vmatpush.msra.mxu0 0.0
          %4213 = vmatpush.msra.mxu0 0.0
          %4214 = vmatpush.msra.mxu0 0.0
          %4215 = vmatpush.msra.mxu0 0.0
          %4216 = vmatpush.msra.mxu0 0.0
          %4217 = vmatpush.msra.mxu0 %v4155
          %4218 = vmatpush.msra.mxu0 %v4154
          %4219 = vmatpush.msra.mxu0 %v4153
          %4220 = vmatpush.msra.mxu0 %v4152
          %4221 = vmatmul.f32.gmra.mxu0 %v3177
          %v4222 = vpop.f32.mrf.mxu0
          %v4223 = vadd.f32 %v4194, %v4222
          %4224 = vmatmul.f32.gmra.mxu0 %v3180
          %v4225 = vpop.f32.mrf.mxu0
          %v4226 = vadd.f32 %v4197, %v4225
          %4227 = vmatmul.f32.gmra.mxu0 %v3183
          %v4228 = vpop.f32.mrf.mxu0
          %v4229 = vadd.f32 %v4200, %v4228
          %4230 = vmatmul.f32.gmra.mxu0 %v3186
          %v4231 = vpop.f32.mrf.mxu0
          %v4232 = vadd.f32 %v4203, %v4231
          %4233 = vdwg.mxu0
          %4234 = vmatpush.msra.mxu0 %v3991
          %4235 = vmatpush.msra.mxu0 %v3990
          %4236 = vmatpush.msra.mxu0 %v3989
          %4237 = vmatpush.msra.mxu0 %v3988
          %4238 = vmatpush.msra.mxu0 %v3987
          %4239 = vmatpush.msra.mxu0 %v3986
          %4240 = vmatpush.msra.mxu0 %v3985
          %4241 = vmatpush.msra.mxu0 %v3984
          %4242 = vmatpush.msra.mxu0 %v3983
          %4243 = vmatpush.msra.mxu0 %v3982
          %4244 = vmatpush.msra.mxu0 %v3981
          %4245 = vmatpush.msra.mxu0 %v3980
          %4246 = vmatpush.msra.mxu0 %v3979
          %4247 = vmatpush.msra.mxu0 %v3978
          %4248 = vmatpush.msra.mxu0 %v3977
          %4249 = vmatpush.msra.mxu0 %v3976
          %4250 = vmatmul.f32.gmra.mxu0 %v2977
          %v4251 = vpop.f32.mrf.mxu0
          %v4252 = vadd.f32 %v4223, %v4251
          %4253 = vmatmul.f32.gmra.mxu0 %v2979
          %v4254 = vpop.f32.mrf.mxu0
          %v4255 = vadd.f32 %v4226, %v4254
          %4256 = vmatmul.f32.gmra.mxu0 %v2981
          %v4257 = vpop.f32.mrf.mxu0
          %v4258 = vadd.f32 %v4229, %v4257
          %4259 = vmatmul.f32.gmra.mxu0 %v2983
          %v4260 = vpop.f32.mrf.mxu0
          %v4261 = vadd.f32 %v4232, %v4260
          %4262 = vdwg.mxu0
          %4263 = vmatpush.msra.mxu0 0.0
          %4264 = vmatpush.msra.mxu0 0.0
          %4265 = vmatpush.msra.mxu0 0.0
          %4266 = vmatpush.msra.mxu0 0.0
          %4267 = vmatpush.msra.mxu0 0.0
          %4268 = vmatpush.msra.mxu0 0.0
          %4269 = vmatpush.msra.mxu0 0.0
          %4270 = vmatpush.msra.mxu0 0.0
          %4271 = vmatpush.msra.mxu0 0.0
          %4272 = vmatpush.msra.mxu0 0.0
          %4273 = vmatpush.msra.mxu0 0.0
          %4274 = vmatpush.msra.mxu0 0.0
          %4275 = vmatpush.msra.mxu0 %v3995
          %4276 = vmatpush.msra.mxu0 %v3994
          %4277 = vmatpush.msra.mxu0 %v3993
          %4278 = vmatpush.msra.mxu0 %v3992
          %4279 = vmatmul.f32.gmra.mxu0 %v3247
          %v4280 = vpop.f32.mrf.mxu0
          %v4281 = vadd.f32 %v4252, %v4280
          %4282 = vmatmul.f32.gmra.mxu0 %v3250
          %v4283 = vpop.f32.mrf.mxu0
          %v4284 = vadd.f32 %v4255, %v4283
          %4285 = vmatmul.f32.gmra.mxu0 %v3253
          %v4286 = vpop.f32.mrf.mxu0
          %v4287 = vadd.f32 %v4258, %v4286
          %4288 = vmatmul.f32.gmra.mxu0 %v3256
          %v4289 = vpop.f32.mrf.mxu0
          %v4290 = vadd.f32 %v4261, %v4289
          %4291 = vdwg.mxu0
          %4292 = vrot.lane.b32.xlu0 %v3976, 126
          %v4293 = vpop.permute.xlu0 %4292
          %4294 = vrot.lane.b32.xlu0 %v3996, 126
          %v4295 = vpop.permute.xlu0 %4294
          %4296 = vrot.lane.b32.xlu0 %v3977, 126
          %v4297 = vpop.permute.xlu0 %4296
          %4298 = vrot.lane.b32.xlu0 %v3997, 126
          %v4299 = vpop.permute.xlu0 %4298
          %4300 = vrot.lane.b32.xlu0 %v3978, 126
          %v4301 = vpop.permute.xlu0 %4300
          %4302 = vrot.lane.b32.xlu0 %v3998, 126
          %v4303 = vpop.permute.xlu0 %4302
          %4304 = vrot.lane.b32.xlu0 %v3979, 126
          %v4305 = vpop.permute.xlu0 %4304
          %4306 = vrot.lane.b32.xlu0 %v3999, 126
          %v4307 = vpop.permute.xlu0 %4306
          %4308 = vrot.lane.b32.xlu0 %v3980, 126
          %v4309 = vpop.permute.xlu0 %4308
          %4310 = vrot.lane.b32.xlu0 %v4000, 126
          %v4311 = vpop.permute.xlu0 %4310
          %4312 = vrot.lane.b32.xlu0 %v3981, 126
          %v4313 = vpop.permute.xlu0 %4312
          %4314 = vrot.lane.b32.xlu0 %v4001, 126
          %v4315 = vpop.permute.xlu0 %4314
          %4316 = vrot.lane.b32.xlu0 %v3982, 126
          %v4317 = vpop.permute.xlu0 %4316
          %4318 = vrot.lane.b32.xlu0 %v4002, 126
          %v4319 = vpop.permute.xlu0 %4318
          %4320 = vrot.lane.b32.xlu0 %v3983, 126
          %v4321 = vpop.permute.xlu0 %4320
          %4322 = vrot.lane.b32.xlu0 %v4003, 126
          %v4323 = vpop.permute.xlu0 %4322
          %4324 = vrot.lane.b32.xlu0 %v3984, 126
          %v4325 = vpop.permute.xlu0 %4324
          %4326 = vrot.lane.b32.xlu0 %v4004, 126
          %v4327 = vpop.permute.xlu0 %4326
          %4328 = vrot.lane.b32.xlu0 %v3985, 126
          %v4329 = vpop.permute.xlu0 %4328
          %4330 = vrot.lane.b32.xlu0 %v4005, 126
          %v4331 = vpop.permute.xlu0 %4330
          %4332 = vrot.lane.b32.xlu0 %v3986, 126
          %v4333 = vpop.permute.xlu0 %4332
          %4334 = vrot.lane.b32.xlu0 %v4006, 126
          %v4335 = vpop.permute.xlu0 %4334
          %4336 = vrot.lane.b32.xlu0 %v3987, 126
          %v4337 = vpop.permute.xlu0 %4336
          %4338 = vrot.lane.b32.xlu0 %v4007, 126
          %v4339 = vpop.permute.xlu0 %4338
          %4340 = vrot.lane.b32.xlu0 %v3988, 126
          %v4341 = vpop.permute.xlu0 %4340
          %4342 = vrot.lane.b32.xlu0 %v4008, 126
          %v4343 = vpop.permute.xlu0 %4342
          %4344 = vrot.lane.b32.xlu0 %v3989, 126
          %v4345 = vpop.permute.xlu0 %4344
          %4346 = vrot.lane.b32.xlu0 %v4009, 126
          %v4347 = vpop.permute.xlu0 %4346
          %4348 = vrot.lane.b32.xlu0 %v3990, 126
          %v4349 = vpop.permute.xlu0 %4348
          %4350 = vrot.lane.b32.xlu0 %v4010, 126
          %v4351 = vpop.permute.xlu0 %4350
          %4352 = vrot.lane.b32.xlu0 %v3991, 126
          %v4353 = vpop.permute.xlu0 %4352
          %4354 = vrot.lane.b32.xlu0 %v4011, 126
          %v4355 = vpop.permute.xlu0 %4354
          %4356 = vrot.lane.b32.xlu0 %v3992, 126
          %v4357 = vpop.permute.xlu0 %4356
          %4358 = vrot.lane.b32.xlu0 %v4012, 126
          %v4359 = vpop.permute.xlu0 %4358
          %4360 = vrot.lane.b32.xlu0 %v3993, 126
          %v4361 = vpop.permute.xlu0 %4360
          %4362 = vrot.lane.b32.xlu0 %v4013, 126
          %v4363 = vpop.permute.xlu0 %4362
          %4364 = vrot.lane.b32.xlu0 %v3994, 126
          %v4365 = vpop.permute.xlu0 %4364
          %4366 = vrot.lane.b32.xlu0 %v4014, 126
          %v4367 = vpop.permute.xlu0 %4366
          %4368 = vrot.lane.b32.xlu0 %v3995, 126
          %v4369 = vpop.permute.xlu0 %4368
          %4370 = vrot.lane.b32.xlu0 %v4015, 126
          %v4371 = vpop.permute.xlu0 %4370
          %v4372 = vsel %vm3405, %v4293, %v4295
          %v4373 = vsel %vm3405, %v4297, %v4299
          %v4374 = vsel %vm3405, %v4301, %v4303
          %v4375 = vsel %vm3405, %v4305, %v4307
          %v4376 = vsel %vm3405, %v4309, %v4311
          %v4377 = vsel %vm3405, %v4313, %v4315
          %v4378 = vsel %vm3405, %v4317, %v4319
          %v4379 = vsel %vm3405, %v4321, %v4323
          %v4380 = vsel %vm3405, %v4325, %v4327
          %v4381 = vsel %vm3405, %v4329, %v4331
          %v4382 = vsel %vm3405, %v4333, %v4335
          %v4383 = vsel %vm3405, %v4337, %v4339
          %v4384 = vsel %vm3405, %v4341, %v4343
          %v4385 = vsel %vm3405, %v4345, %v4347
          %v4386 = vsel %vm3405, %v4349, %v4351
          %v4387 = vsel %vm3405, %v4353, %v4355
          %v4388 = vsel %vm3405, %v4357, %v4359
          %v4389 = vsel %vm3405, %v4361, %v4363
          %v4390 = vsel %vm3405, %v4365, %v4367
          %v4391 = vsel %vm3405, %v4369, %v4371
          %4412 = vmatpush.msra.mxu0 %v4387
          %4413 = vmatpush.msra.mxu0 %v4386
          %4414 = vmatpush.msra.mxu0 %v4385
          %4415 = vmatpush.msra.mxu0 %v4384
          %4416 = vmatpush.msra.mxu0 %v4383
          %4417 = vmatpush.msra.mxu0 %v4382
          %4418 = vmatpush.msra.mxu0 %v4381
          %4419 = vmatpush.msra.mxu0 %v4380
          %4420 = vmatpush.msra.mxu0 %v4379
          %4421 = vmatpush.msra.mxu0 %v4378
          %4422 = vmatpush.msra.mxu0 %v4377
          %4423 = vmatpush.msra.mxu0 %v4376
          %4424 = vmatpush.msra.mxu0 %v4375
          %4425 = vmatpush.msra.mxu0 %v4374
          %4426 = vmatpush.msra.mxu0 %v4373
          %4427 = vmatpush.msra.mxu0 %v4372
          %4428 = vmatmul.f32.gmra.mxu0 %v3317
          %v4429 = vpop.f32.mrf.mxu0
          %v4430 = vadd.f32 0.0, %v4429
          %4431 = vmatmul.f32.gmra.mxu0 %v3319
          %v4432 = vpop.f32.mrf.mxu0
          %v4433 = vadd.f32 0.0, %v4432
          %4434 = vmatmul.f32.gmra.mxu0 %v3321
          %v4435 = vpop.f32.mrf.mxu0
          %v4436 = vadd.f32 0.0, %v4435
          %4437 = vmatmul.f32.gmra.mxu0 %v3323
          %v4438 = vpop.f32.mrf.mxu0
          %v4439 = vadd.f32 0.0, %v4438
          %4440 = vdwg.mxu0
          %4441 = vmatpush.msra.mxu0 0.0
          %4442 = vmatpush.msra.mxu0 0.0
          %4443 = vmatpush.msra.mxu0 0.0
          %4444 = vmatpush.msra.mxu0 0.0
          %4445 = vmatpush.msra.mxu0 0.0
          %4446 = vmatpush.msra.mxu0 0.0
          %4447 = vmatpush.msra.mxu0 0.0
          %4448 = vmatpush.msra.mxu0 0.0
          %4449 = vmatpush.msra.mxu0 0.0
          %4450 = vmatpush.msra.mxu0 0.0
          %4451 = vmatpush.msra.mxu0 0.0
          %4452 = vmatpush.msra.mxu0 0.0
          %4453 = vmatpush.msra.mxu0 %v4391
          %4454 = vmatpush.msra.mxu0 %v4390
          %4455 = vmatpush.msra.mxu0 %v4389
          %4456 = vmatpush.msra.mxu0 %v4388
          %4457 = vmatmul.f32.gmra.mxu0 %v3447
          %v4458 = vpop.f32.mrf.mxu0
          %v4459 = vadd.f32 %v4430, %v4458
          %4460 = vmatmul.f32.gmra.mxu0 %v3450
          %v4461 = vpop.f32.mrf.mxu0
          %v4462 = vadd.f32 %v4433, %v4461
          %4463 = vmatmul.f32.gmra.mxu0 %v3453
          %v4464 = vpop.f32.mrf.mxu0
          %v4465 = vadd.f32 %v4436, %v4464
          %4466 = vmatmul.f32.gmra.mxu0 %v3456
          %v4467 = vpop.f32.mrf.mxu0
          %v4468 = vadd.f32 %v4439, %v4467
          %4469 = vdwg.mxu0
          %v4470 = vadd.f32 %v4281, %v4459
          %v4471 = vadd.f32 %v4284, %v4462
          %v4472 = vadd.f32 %v4287, %v4465
          %v4473 = vadd.f32 %v4290, %v4468
          %4474 = vrot.lane.b32.xlu0 %v3976, 125
          %v4475 = vpop.permute.xlu0 %4474
          %4476 = vrot.lane.b32.xlu0 %v3996, 125
          %v4477 = vpop.permute.xlu0 %4476
          %4478 = vrot.lane.b32.xlu0 %v3977, 125
          %v4479 = vpop.permute.xlu0 %4478
          %4480 = vrot.lane.b32.xlu0 %v3997, 125
          %v4481 = vpop.permute.xlu0 %4480
          %4482 = vrot.lane.b32.xlu0 %v3978, 125
          %v4483 = vpop.permute.xlu0 %4482
          %4484 = vrot.lane.b32.xlu0 %v3998, 125
          %v4485 = vpop.permute.xlu0 %4484
          %4486 = vrot.lane.b32.xlu0 %v3979, 125
          %v4487 = vpop.permute.xlu0 %4486
          %4488 = vrot.lane.b32.xlu0 %v3999, 125
          %v4489 = vpop.permute.xlu0 %4488
          %4490 = vrot.lane.b32.xlu0 %v3980, 125
          %v4491 = vpop.permute.xlu0 %4490
          %4492 = vrot.lane.b32.xlu0 %v4000, 125
          %v4493 = vpop.permute.xlu0 %4492
          %4494 = vrot.lane.b32.xlu0 %v3981, 125
          %v4495 = vpop.permute.xlu0 %4494
          %4496 = vrot.lane.b32.xlu0 %v4001, 125
          %v4497 = vpop.permute.xlu0 %4496
          %4498 = vrot.lane.b32.xlu0 %v3982, 125
          %v4499 = vpop.permute.xlu0 %4498
          %4500 = vrot.lane.b32.xlu0 %v4002, 125
          %v4501 = vpop.permute.xlu0 %4500
          %4502 = vrot.lane.b32.xlu0 %v3983, 125
          %v4503 = vpop.permute.xlu0 %4502
          %4504 = vrot.lane.b32.xlu0 %v4003, 125
          %v4505 = vpop.permute.xlu0 %4504
          %4506 = vrot.lane.b32.xlu0 %v3984, 125
          %v4507 = vpop.permute.xlu0 %4506
          %4508 = vrot.lane.b32.xlu0 %v4004, 125
          %v4509 = vpop.permute.xlu0 %4508
          %4510 = vrot.lane.b32.xlu0 %v3985, 125
          %v4511 = vpop.permute.xlu0 %4510
          %4512 = vrot.lane.b32.xlu0 %v4005, 125
          %v4513 = vpop.permute.xlu0 %4512
          %4514 = vrot.lane.b32.xlu0 %v3986, 125
          %v4515 = vpop.permute.xlu0 %4514
          %4516 = vrot.lane.b32.xlu0 %v4006, 125
          %v4517 = vpop.permute.xlu0 %4516
          %4518 = vrot.lane.b32.xlu0 %v3987, 125
          %v4519 = vpop.permute.xlu0 %4518
          %4520 = vrot.lane.b32.xlu0 %v4007, 125
          %v4521 = vpop.permute.xlu0 %4520
          %4522 = vrot.lane.b32.xlu0 %v3988, 125
          %v4523 = vpop.permute.xlu0 %4522
          %4524 = vrot.lane.b32.xlu0 %v4008, 125
          %v4525 = vpop.permute.xlu0 %4524
          %4526 = vrot.lane.b32.xlu0 %v3989, 125
          %v4527 = vpop.permute.xlu0 %4526
          %4528 = vrot.lane.b32.xlu0 %v4009, 125
          %v4529 = vpop.permute.xlu0 %4528
          %4530 = vrot.lane.b32.xlu0 %v3990, 125
          %v4531 = vpop.permute.xlu0 %4530
          %4532 = vrot.lane.b32.xlu0 %v4010, 125
          %v4533 = vpop.permute.xlu0 %4532
          %4534 = vrot.lane.b32.xlu0 %v3991, 125
          %v4535 = vpop.permute.xlu0 %4534
          %4536 = vrot.lane.b32.xlu0 %v4011, 125
          %v4537 = vpop.permute.xlu0 %4536
          %4538 = vrot.lane.b32.xlu0 %v3992, 125
          %v4539 = vpop.permute.xlu0 %4538
          %4540 = vrot.lane.b32.xlu0 %v4012, 125
          %v4541 = vpop.permute.xlu0 %4540
          %4542 = vrot.lane.b32.xlu0 %v3993, 125
          %v4543 = vpop.permute.xlu0 %4542
          %4544 = vrot.lane.b32.xlu0 %v4013, 125
          %v4545 = vpop.permute.xlu0 %4544
          %4546 = vrot.lane.b32.xlu0 %v3994, 125
          %v4547 = vpop.permute.xlu0 %4546
          %4548 = vrot.lane.b32.xlu0 %v4014, 125
          %v4549 = vpop.permute.xlu0 %4548
          %4550 = vrot.lane.b32.xlu0 %v3995, 125
          %v4551 = vpop.permute.xlu0 %4550
          %4552 = vrot.lane.b32.xlu0 %v4015, 125
          %v4553 = vpop.permute.xlu0 %4552
          %v4554 = vsel %vm3609, %v4475, %v4477
          %v4555 = vsel %vm3609, %v4479, %v4481
          %v4556 = vsel %vm3609, %v4483, %v4485
          %v4557 = vsel %vm3609, %v4487, %v4489
          %v4558 = vsel %vm3609, %v4491, %v4493
          %v4559 = vsel %vm3609, %v4495, %v4497
          %v4560 = vsel %vm3609, %v4499, %v4501
          %v4561 = vsel %vm3609, %v4503, %v4505
          %v4562 = vsel %vm3609, %v4507, %v4509
          %v4563 = vsel %vm3609, %v4511, %v4513
          %v4564 = vsel %vm3609, %v4515, %v4517
          %v4565 = vsel %vm3609, %v4519, %v4521
          %v4566 = vsel %vm3609, %v4523, %v4525
          %v4567 = vsel %vm3609, %v4527, %v4529
          %v4568 = vsel %vm3609, %v4531, %v4533
          %v4569 = vsel %vm3609, %v4535, %v4537
          %v4570 = vsel %vm3609, %v4539, %v4541
          %v4571 = vsel %vm3609, %v4543, %v4545
          %v4572 = vsel %vm3609, %v4547, %v4549
          %v4573 = vsel %vm3609, %v4551, %v4553
          %4594 = vmatpush.msra.mxu0 %v4569
          %4595 = vmatpush.msra.mxu0 %v4568
          %4596 = vmatpush.msra.mxu0 %v4567
          %4597 = vmatpush.msra.mxu0 %v4566
          %4598 = vmatpush.msra.mxu0 %v4565
          %4599 = vmatpush.msra.mxu0 %v4564
          %4600 = vmatpush.msra.mxu0 %v4563
          %4601 = vmatpush.msra.mxu0 %v4562
          %4602 = vmatpush.msra.mxu0 %v4561
          %4603 = vmatpush.msra.mxu0 %v4560
          %4604 = vmatpush.msra.mxu0 %v4559
          %4605 = vmatpush.msra.mxu0 %v4558
          %4606 = vmatpush.msra.mxu0 %v4557
          %4607 = vmatpush.msra.mxu0 %v4556
          %4608 = vmatpush.msra.mxu0 %v4555
          %4609 = vmatpush.msra.mxu0 %v4554
          %4610 = vmatmul.f32.gmra.mxu0 %v3521
          %v4611 = vpop.f32.mrf.mxu0
          %v4612 = vadd.f32 0.0, %v4611
          %4613 = vmatmul.f32.gmra.mxu0 %v3523
          %v4614 = vpop.f32.mrf.mxu0
          %v4615 = vadd.f32 0.0, %v4614
          %4616 = vmatmul.f32.gmra.mxu0 %v3525
          %v4617 = vpop.f32.mrf.mxu0
          %v4618 = vadd.f32 0.0, %v4617
          %4619 = vmatmul.f32.gmra.mxu0 %v3527
          %v4620 = vpop.f32.mrf.mxu0
          %v4621 = vadd.f32 0.0, %v4620
          %4622 = vdwg.mxu0
          %4623 = vmatpush.msra.mxu0 0.0
          %4624 = vmatpush.msra.mxu0 0.0
          %4625 = vmatpush.msra.mxu0 0.0
          %4626 = vmatpush.msra.mxu0 0.0
          %4627 = vmatpush.msra.mxu0 0.0
          %4628 = vmatpush.msra.mxu0 0.0
          %4629 = vmatpush.msra.mxu0 0.0
          %4630 = vmatpush.msra.mxu0 0.0
          %4631 = vmatpush.msra.mxu0 0.0
          %4632 = vmatpush.msra.mxu0 0.0
          %4633 = vmatpush.msra.mxu0 0.0
          %4634 = vmatpush.msra.mxu0 0.0
          %4635 = vmatpush.msra.mxu0 %v4573
          %4636 = vmatpush.msra.mxu0 %v4572
          %4637 = vmatpush.msra.mxu0 %v4571
          %4638 = vmatpush.msra.mxu0 %v4570
          %4639 = vmatmul.f32.gmra.mxu0 %v3651
          %v4640 = vpop.f32.mrf.mxu0
          %v4641 = vadd.f32 %v4612, %v4640
          %4642 = vmatmul.f32.gmra.mxu0 %v3654
          %v4643 = vpop.f32.mrf.mxu0
          %v4644 = vadd.f32 %v4615, %v4643
          %4645 = vmatmul.f32.gmra.mxu0 %v3657
          %v4646 = vpop.f32.mrf.mxu0
          %v4647 = vadd.f32 %v4618, %v4646
          %4648 = vmatmul.f32.gmra.mxu0 %v3660
          %v4649 = vpop.f32.mrf.mxu0
          %v4650 = vadd.f32 %v4621, %v4649
          %4651 = vdwg.mxu0
          %v4652 = vadd.f32 %v4470, %v4641
          %v4653 = vadd.f32 %v4471, %v4644
          %v4654 = vadd.f32 %v4472, %v4647
          %v4655 = vadd.f32 %v4473, %v4650
          %4656 = vrot.lane.b32.xlu0 %v3976, 124
          %v4657 = vpop.permute.xlu0 %4656
          %4658 = vrot.lane.b32.xlu0 %v3996, 124
          %v4659 = vpop.permute.xlu0 %4658
          %4660 = vrot.lane.b32.xlu0 %v3977, 124
          %v4661 = vpop.permute.xlu0 %4660
          %4662 = vrot.lane.b32.xlu0 %v3997, 124
          %v4663 = vpop.permute.xlu0 %4662
          %4664 = vrot.lane.b32.xlu0 %v3978, 124
          %v4665 = vpop.permute.xlu0 %4664
          %4666 = vrot.lane.b32.xlu0 %v3998, 124
          %v4667 = vpop.permute.xlu0 %4666
          %4668 = vrot.lane.b32.xlu0 %v3979, 124
          %v4669 = vpop.permute.xlu0 %4668
          %4670 = vrot.lane.b32.xlu0 %v3999, 124
          %v4671 = vpop.permute.xlu0 %4670
          %4672 = vrot.lane.b32.xlu0 %v3980, 124
          %v4673 = vpop.permute.xlu0 %4672
          %4674 = vrot.lane.b32.xlu0 %v4000, 124
          %v4675 = vpop.permute.xlu0 %4674
          %4676 = vrot.lane.b32.xlu0 %v3981, 124
          %v4677 = vpop.permute.xlu0 %4676
          %4678 = vrot.lane.b32.xlu0 %v4001, 124
          %v4679 = vpop.permute.xlu0 %4678
          %4680 = vrot.lane.b32.xlu0 %v3982, 124
          %v4681 = vpop.permute.xlu0 %4680
          %4682 = vrot.lane.b32.xlu0 %v4002, 124
          %v4683 = vpop.permute.xlu0 %4682
          %4684 = vrot.lane.b32.xlu0 %v3983, 124
          %v4685 = vpop.permute.xlu0 %4684
          %4686 = vrot.lane.b32.xlu0 %v4003, 124
          %v4687 = vpop.permute.xlu0 %4686
          %4688 = vrot.lane.b32.xlu0 %v3984, 124
          %v4689 = vpop.permute.xlu0 %4688
          %4690 = vrot.lane.b32.xlu0 %v4004, 124
          %v4691 = vpop.permute.xlu0 %4690
          %4692 = vrot.lane.b32.xlu0 %v3985, 124
          %v4693 = vpop.permute.xlu0 %4692
          %4694 = vrot.lane.b32.xlu0 %v4005, 124
          %v4695 = vpop.permute.xlu0 %4694
          %4696 = vrot.lane.b32.xlu0 %v3986, 124
          %v4697 = vpop.permute.xlu0 %4696
          %4698 = vrot.lane.b32.xlu0 %v4006, 124
          %v4699 = vpop.permute.xlu0 %4698
          %4700 = vrot.lane.b32.xlu0 %v3987, 124
          %v4701 = vpop.permute.xlu0 %4700
          %4702 = vrot.lane.b32.xlu0 %v4007, 124
          %v4703 = vpop.permute.xlu0 %4702
          %4704 = vrot.lane.b32.xlu0 %v3988, 124
          %v4705 = vpop.permute.xlu0 %4704
          %4706 = vrot.lane.b32.xlu0 %v4008, 124
          %v4707 = vpop.permute.xlu0 %4706
          %4708 = vrot.lane.b32.xlu0 %v3989, 124
          %v4709 = vpop.permute.xlu0 %4708
          %4710 = vrot.lane.b32.xlu0 %v4009, 124
          %v4711 = vpop.permute.xlu0 %4710
          %4712 = vrot.lane.b32.xlu0 %v3990, 124
          %v4713 = vpop.permute.xlu0 %4712
          %4714 = vrot.lane.b32.xlu0 %v4010, 124
          %v4715 = vpop.permute.xlu0 %4714
          %4716 = vrot.lane.b32.xlu0 %v3991, 124
          %v4717 = vpop.permute.xlu0 %4716
          %4718 = vrot.lane.b32.xlu0 %v4011, 124
          %v4719 = vpop.permute.xlu0 %4718
          %4720 = vrot.lane.b32.xlu0 %v3992, 124
          %v4721 = vpop.permute.xlu0 %4720
          %4722 = vrot.lane.b32.xlu0 %v4012, 124
          %v4723 = vpop.permute.xlu0 %4722
          %4724 = vrot.lane.b32.xlu0 %v3993, 124
          %v4725 = vpop.permute.xlu0 %4724
          %4726 = vrot.lane.b32.xlu0 %v4013, 124
          %v4727 = vpop.permute.xlu0 %4726
          %4728 = vrot.lane.b32.xlu0 %v3994, 124
          %v4729 = vpop.permute.xlu0 %4728
          %4730 = vrot.lane.b32.xlu0 %v4014, 124
          %v4731 = vpop.permute.xlu0 %4730
          %4732 = vrot.lane.b32.xlu0 %v3995, 124
          %v4733 = vpop.permute.xlu0 %4732
          %4734 = vrot.lane.b32.xlu0 %v4015, 124
          %v4735 = vpop.permute.xlu0 %4734
          %v4736 = vsel %vm3813, %v4657, %v4659
          %v4737 = vsel %vm3813, %v4661, %v4663
          %v4738 = vsel %vm3813, %v4665, %v4667
          %v4739 = vsel %vm3813, %v4669, %v4671
          %v4740 = vsel %vm3813, %v4673, %v4675
          %v4741 = vsel %vm3813, %v4677, %v4679
          %v4742 = vsel %vm3813, %v4681, %v4683
          %v4743 = vsel %vm3813, %v4685, %v4687
          %v4744 = vsel %vm3813, %v4689, %v4691
          %v4745 = vsel %vm3813, %v4693, %v4695
          %v4746 = vsel %vm3813, %v4697, %v4699
          %v4747 = vsel %vm3813, %v4701, %v4703
          %v4748 = vsel %vm3813, %v4705, %v4707
          %v4749 = vsel %vm3813, %v4709, %v4711
          %v4750 = vsel %vm3813, %v4713, %v4715
          %v4751 = vsel %vm3813, %v4717, %v4719
          %v4752 = vsel %vm3813, %v4721, %v4723
          %v4753 = vsel %vm3813, %v4725, %v4727
          %v4754 = vsel %vm3813, %v4729, %v4731
          %v4755 = vsel %vm3813, %v4733, %v4735
          %4776 = vmatpush.msra.mxu0 %v4751
          %4777 = vmatpush.msra.mxu0 %v4750
          %4778 = vmatpush.msra.mxu0 %v4749
          %4779 = vmatpush.msra.mxu0 %v4748
          %4780 = vmatpush.msra.mxu0 %v4747
          %4781 = vmatpush.msra.mxu0 %v4746
          %4782 = vmatpush.msra.mxu0 %v4745
          %4783 = vmatpush.msra.mxu0 %v4744
          %4784 = vmatpush.msra.mxu0 %v4743
          %4785 = vmatpush.msra.mxu0 %v4742
          %4786 = vmatpush.msra.mxu0 %v4741
          %4787 = vmatpush.msra.mxu0 %v4740
          %4788 = vmatpush.msra.mxu0 %v4739
          %4789 = vmatpush.msra.mxu0 %v4738
          %4790 = vmatpush.msra.mxu0 %v4737
          %4791 = vmatpush.msra.mxu0 %v4736
          %4792 = vmatmul.f32.gmra.mxu0 %v3725
          %v4793 = vpop.f32.mrf.mxu0
          %v4794 = vadd.f32 0.0, %v4793
          %4795 = vmatmul.f32.gmra.mxu0 %v3727
          %v4796 = vpop.f32.mrf.mxu0
          %v4797 = vadd.f32 0.0, %v4796
          %4798 = vmatmul.f32.gmra.mxu0 %v3729
          %v4799 = vpop.f32.mrf.mxu0
          %v4800 = vadd.f32 0.0, %v4799
          %4801 = vmatmul.f32.gmra.mxu0 %v3731
          %v4802 = vpop.f32.mrf.mxu0
          %v4803 = vadd.f32 0.0, %v4802
          %4804 = vdwg.mxu0
          %4805 = vmatpush.msra.mxu0 0.0
          %4806 = vmatpush.msra.mxu0 0.0
          %4807 = vmatpush.msra.mxu0 0.0
          %4808 = vmatpush.msra.mxu0 0.0
          %4809 = vmatpush.msra.mxu0 0.0
          %4810 = vmatpush.msra.mxu0 0.0
          %4811 = vmatpush.msra.mxu0 0.0
          %4812 = vmatpush.msra.mxu0 0.0
          %4813 = vmatpush.msra.mxu0 0.0
          %4814 = vmatpush.msra.mxu0 0.0
          %4815 = vmatpush.msra.mxu0 0.0
          %4816 = vmatpush.msra.mxu0 0.0
          %4817 = vmatpush.msra.mxu0 %v4755
          %4818 = vmatpush.msra.mxu0 %v4754
          %4819 = vmatpush.msra.mxu0 %v4753
          %4820 = vmatpush.msra.mxu0 %v4752
          %4821 = vmatmul.f32.gmra.mxu0 %v3855
          %v4822 = vpop.f32.mrf.mxu0
          %v4823 = vadd.f32 %v4794, %v4822
          %4824 = vmatmul.f32.gmra.mxu0 %v3858
          %v4825 = vpop.f32.mrf.mxu0
          %v4826 = vadd.f32 %v4797, %v4825
          %4827 = vmatmul.f32.gmra.mxu0 %v3861
          %v4828 = vpop.f32.mrf.mxu0
          %v4829 = vadd.f32 %v4800, %v4828
          %4830 = vmatmul.f32.gmra.mxu0 %v3864
          %v4831 = vpop.f32.mrf.mxu0
          %v4832 = vadd.f32 %v4803, %v4831
          %4833 = vdwg.mxu0
          %v4834 = vadd.f32 %v4652, %v4823
          %v4835 = vadd.f32 %v4653, %v4826
          %v4836 = vadd.f32 %v4654, %v4829
          %v4837 = vadd.f32 %v4655, %v4832
          %v4838 = vadd.f32 %v4834, %v3935
          %v4839 = vadd.f32 %v4835, %v3940
          %v4840 = vadd.f32 %v4836, %v3945
          %v4841 = vadd.f32 %v4837, %v3950
          %vm4842 = vcmp.ge.f32.partialorder %v4838, 0.0
          %vm4843 = vcmp.ge.f32.partialorder %v4839, 0.0
          %vm4844 = vcmp.ge.f32.partialorder %v4840, 0.0
          %vm4845 = vcmp.ge.f32.partialorder %v4841, 0.0
          %v4846 = vmul.f32 %v4838, 0.01
          %v4847 = vmul.f32 %v4839, 0.01
          %v4848 = vmul.f32 %v4840, 0.01
          %v4849 = vmul.f32 %v4841, 0.01
          %v4850 = vsel %vm4842, %v4838, %v4846
          %v4851 = vsel %vm4843, %v4839, %v4847
          %v4852 = vsel %vm4844, %v4840, %v4848
          %v4853 = vsel %vm4845, %v4841, %v4849
          %v4854 = vmax.f32 %v3964, %v4850
          %v4855 = vmax.f32 %v3965, %v4851
          %v4856 = vmax.f32 %v3966, %v4852
          %v4857 = vmax.f32 %v3967, %v4853
          %v4858 = vld [vmem:[#allocation7] sm:$0xff]
          %v4859 = vld [vmem:[#allocation7 + $0x8] sm:$0xff]
          %v4860 = vld [vmem:[#allocation7 + $0x10] sm:$0xff]
          %v4861 = vld [vmem:[#allocation7 + $0x18] sm:$0xff]
          %v4862 = vld [vmem:[#allocation7 + $0x20] sm:$0xff]
          %v4863 = vld [vmem:[#allocation7 + $0x28] sm:$0xff]
          %v4864 = vld [vmem:[#allocation7 + $0x30] sm:$0xff]
          %v4865 = vld [vmem:[#allocation7 + $0x38] sm:$0xff]
          %v4866 = vld [vmem:[#allocation7 + $0x40] sm:$0xff]
          %v4867 = vld [vmem:[#allocation7 + $0x48] sm:$0xff]
          %v4868 = vld [vmem:[#allocation7 + $0x50] sm:$0xff]
          %v4869 = vld [vmem:[#allocation7 + $0x58] sm:$0xff]
          %v4870 = vld [vmem:[#allocation7 + $0x60] sm:$0xff]
          %v4871 = vld [vmem:[#allocation7 + $0x68] sm:$0xff]
          %v4872 = vld [vmem:[#allocation7 + $0x70] sm:$0xff]
          %v4873 = vld [vmem:[#allocation7 + $0x78] sm:$0xff]
          %4874 = vmatpush.msra.mxu0 %v4873
          %4875 = vmatpush.msra.mxu0 %v4872
          %4876 = vmatpush.msra.mxu0 %v4871
          %4877 = vmatpush.msra.mxu0 %v4870
          %4878 = vmatpush.msra.mxu0 %v4869
          %4879 = vmatpush.msra.mxu0 %v4868
          %4880 = vmatpush.msra.mxu0 %v4867
          %4881 = vmatpush.msra.mxu0 %v4866
          %4882 = vmatpush.msra.mxu0 %v4865
          %4883 = vmatpush.msra.mxu0 %v4864
          %4884 = vmatpush.msra.mxu0 %v4863
          %4885 = vmatpush.msra.mxu0 %v4862
          %4886 = vmatpush.msra.mxu0 %v4861
          %4887 = vmatpush.msra.mxu0 %v4860
          %4888 = vmatpush.msra.mxu0 %v4859
          %4889 = vmatpush.msra.mxu0 %v4858
          %4890 = vmatmul.f32.gmra.mxu0 %v4854
          %v4891 = vpop.f32.mrf.mxu0
          %v4892 = vadd.f32 0.0, %v4891
          %4893 = vmatmul.f32.gmra.mxu0 %v4855
          %v4894 = vpop.f32.mrf.mxu0
          %v4895 = vadd.f32 0.0, %v4894
          %4896 = vmatmul.f32.gmra.mxu0 %v4856
          %v4897 = vpop.f32.mrf.mxu0
          %v4898 = vadd.f32 0.0, %v4897
          %4899 = vmatmul.f32.gmra.mxu0 %v4857
          %v4900 = vpop.f32.mrf.mxu0
          %v4901 = vadd.f32 0.0, %v4900
          %4902 = vdwg.mxu0
          %v4903 = vld [vmem:[%s2] sm:$0xff]
          %v4904 = vld [vmem:[%s2 + $0x8] sm:$0xff]
          %v4905 = vld [vmem:[%s2 + $0x10] sm:$0xff]
          %v4906 = vld [vmem:[%s2 + $0x18] sm:$0xff]
          %v4907 = vld [vmem:[%s2 + $0x20] sm:$0xff]
          %v4908 = vld [vmem:[%s2 + $0x28] sm:$0xff]
          %v4909 = vld [vmem:[%s2 + $0x30] sm:$0xff]
          %v4910 = vld [vmem:[%s2 + $0x38] sm:$0xff]
          %v4911 = vld [vmem:[%s2 + $0x40] sm:$0xff]
          %v4912 = vld [vmem:[%s2 + $0x48] sm:$0xff]
          %v4913 = vld [vmem:[%s2 + $0x50] sm:$0xff]
          %v4914 = vld [vmem:[%s2 + $0x58] sm:$0xff]
          %v4915 = vld [vmem:[%s2 + $0x60] sm:$0xff]
          %v4916 = vld [vmem:[%s2 + $0x68] sm:$0xff]
          %v4917 = vld [vmem:[%s2 + $0x70] sm:$0xff]
          %v4918 = vld [vmem:[%s2 + $0x78] sm:$0xff]
          %4919 = vmatpush.msra.mxu0 %v4918
          %4920 = vmatpush.msra.mxu0 %v4917
          %4921 = vmatpush.msra.mxu0 %v4916
          %4922 = vmatpush.msra.mxu0 %v4915
          %4923 = vmatpush.msra.mxu0 %v4914
          %4924 = vmatpush.msra.mxu0 %v4913
          %4925 = vmatpush.msra.mxu0 %v4912
          %4926 = vmatpush.msra.mxu0 %v4911
          %4927 = vmatpush.msra.mxu0 %v4910
          %4928 = vmatpush.msra.mxu0 %v4909
          %4929 = vmatpush.msra.mxu0 %v4908
          %4930 = vmatpush.msra.mxu0 %v4907
          %4931 = vmatpush.msra.mxu0 %v4906
          %4932 = vmatpush.msra.mxu0 %v4905
          %4933 = vmatpush.msra.mxu0 %v4904
          %4934 = vmatpush.msra.mxu0 %v4903
          %4935 = vmatmul.f32.gmra.mxu0 %v4854
          %v4936 = vpop.f32.mrf.mxu0
          %v4937 = vadd.f32 0.0, %v4936
          %4938 = vmatmul.f32.gmra.mxu0 %v4855
          %v4939 = vpop.f32.mrf.mxu0
          %v4940 = vadd.f32 0.0, %v4939
          %4941 = vmatmul.f32.gmra.mxu0 %v4856
          %v4942 = vpop.f32.mrf.mxu0
          %v4943 = vadd.f32 0.0, %v4942
          %4944 = vmatmul.f32.gmra.mxu0 %v4857
          %v4945 = vpop.f32.mrf.mxu0
          %v4946 = vadd.f32 0.0, %v4945
          %4947 = vdwg.mxu0
          %v4948 = vmax.f32 %v4892, %v4937
          %v4949 = vmax.f32 %v4895, %v4940
          %v4950 = vmax.f32 %v4898, %v4943
          %v4951 = vmax.f32 %v4901, %v4946
          %s4952 = sadd.s32 %s2946, 1
          %s4953 = smul.u32 %s4952, 32
          %4958 = vrot.lane.b32.xlu0 %v4948, 1
          %v4959 = vpop.permute.xlu0 %4958
          %4960 = vrot.lane.b32.xlu0 %v4949, 1
          %v4961 = vpop.permute.xlu0 %4960
          %4962 = vrot.lane.b32.xlu0 %v4950, 1
          %v4963 = vpop.permute.xlu0 %4962
          %4964 = vrot.lane.b32.xlu0 %v4951, 1
          %v4965 = vpop.permute.xlu0 %4964
          %s4970 = scalar_lea.vmem [#allocation4], %s4953
          %vm4971 = vcmask 531464
          %4972 = vst.msk [vmem:[%s4970] sm:$0xff] %vm4971, %v4959
          %4973 = vst.msk [vmem:[%s4970 + $0x8] sm:$0xff] %vm4971, %v4961
          %4974 = vst.msk [vmem:[%s4970 + $0x10] sm:$0xff] %vm4971, %v4963
          %4975 = vst.msk [vmem:[%s4970 + $0x18] sm:$0xff] %vm4971, %v4965
        $region103: #{forward.2} parent=79 // loop_footer
          %s2950 = sadd.s32 1, %s2946
        $region104: #{forward.2} parent=79 // loop_footer_branch
          %2945 = sbr.rel target = $region100
        $region105: #{forward.2} parent=79 // loop_exit
          _
        loop: start=0, step=1, limit=48
        $region106: #{forward.2} parent=79 // loop_pre_header
          _
        $region107: #{forward.2} parent=79 // loop_header
          %s4977 = sphi 0, %s4981
          %p4978 = scmp.ge.s32.totalorder %s4977, 48
        $region108: #{forward.2} parent=79 // loop_header_branch
          %4980 = sbr.rel (%p4978) target = $region112
        $region109: #{forward.2} parent=79 // loop_body
          %s4982 = smul.u32 %s4977, 32
          %s4983 = scalar_lea.vmem [#allocation4], %s4982
          %v4984 = vld [vmem:[%s4983] sm:$0xff]
          %v4985 = vld [vmem:[%s4983 + $0x8] sm:$0xff]
          %v4986 = vld [vmem:[%s4983 + $0x10] sm:$0xff]
          %v4987 = vld [vmem:[%s4983 + $0x18] sm:$0xff]
          %v4988 = vld [vmem:[%s4983 + $0x20] sm:$0xff]
          %v4989 = vld [vmem:[%s4983 + $0x28] sm:$0xff]
          %v4990 = vld [vmem:[%s4983 + $0x30] sm:$0xff]
          %v4991 = vld [vmem:[%s4983 + $0x38] sm:$0xff]
          %v4992 = vld [vmem:[%s4983 + $0x40] sm:$0xff]
          %v4993 = vld [vmem:[%s4983 + $0x48] sm:$0xff]
          %v4994 = vld [vmem:[%s4983 + $0x50] sm:$0xff]
          %v4995 = vld [vmem:[%s4983 + $0x58] sm:$0xff]
          %v4996 = vld [vmem:[%s9] sm:$0xff]
          %s4997 = scalar_lea.vmem %s9, 8
          %v4998 = vld [vmem:[%s4997] sm:$0xff]
          %5011 = vrot.lane.b32.xlu0 %v4984, 127
          %v5012 = vpop.permute.xlu0 %5011
          %5013 = vrot.lane.b32.xlu0 %v4985, 127
          %v5014 = vpop.permute.xlu0 %5013
          %5015 = vrot.lane.b32.xlu0 %v4986, 127
          %v5016 = vpop.permute.xlu0 %5015
          %5017 = vrot.lane.b32.xlu0 %v4987, 127
          %v5018 = vpop.permute.xlu0 %5017
          %5019 = vrot.lane.b32.xlu0 %v4988, 127
          %v5020 = vpop.permute.xlu0 %5019
          %5021 = vrot.lane.b32.xlu0 %v4989, 127
          %v5022 = vpop.permute.xlu0 %5021
          %5023 = vrot.lane.b32.xlu0 %v4990, 127
          %v5024 = vpop.permute.xlu0 %5023
          %5025 = vrot.lane.b32.xlu0 %v4991, 127
          %v5026 = vpop.permute.xlu0 %5025
          %5027 = vrot.lane.b32.xlu0 %v4992, 127
          %v5028 = vpop.permute.xlu0 %5027
          %5029 = vrot.lane.b32.xlu0 %v4993, 127
          %v5030 = vpop.permute.xlu0 %5029
          %5031 = vrot.lane.b32.xlu0 %v4994, 127
          %v5032 = vpop.permute.xlu0 %5031
          %5033 = vrot.lane.b32.xlu0 %v4995, 127
          %v5034 = vpop.permute.xlu0 %5033
          %vm5047 = vcmask 785408
          %v5049 = vsel %vm5047, %v4998, 0
          %5051 = vmatpush.msra.mxu0 0.0
          %5052 = vmatpush.msra.mxu0 0.0
          %5053 = vmatpush.msra.mxu0 0.0
          %5054 = vmatpush.msra.mxu0 0.0
          %5055 = vmatpush.msra.mxu0 %v5034
          %5056 = vmatpush.msra.mxu0 %v5032
          %5057 = vmatpush.msra.mxu0 %v5030
          %5058 = vmatpush.msra.mxu0 %v5028
          %5059 = vmatpush.msra.mxu0 %v5026
          %5060 = vmatpush.msra.mxu0 %v5024
          %5061 = vmatpush.msra.mxu0 %v5022
          %5062 = vmatpush.msra.mxu0 %v5020
          %5063 = vmatpush.msra.mxu0 %v5018
          %5064 = vmatpush.msra.mxu0 %v5016
          %5065 = vmatpush.msra.mxu0 %v5014
          %5066 = vmatpush.msra.mxu0 %v5012
          %5067 = vmatmul.f32.gmra.mxu0 %v5049
          %v5068 = vpop.f32.mrf.mxu0
          %v5069 = vadd.f32 0.0, %v5068
          %5070 = vdwg.mxu0
          %v5072 = vsel %vm5047, %v4996, 0
          %5074 = vmatpush.msra.mxu0 0.0
          %5075 = vmatpush.msra.mxu0 0.0
          %5076 = vmatpush.msra.mxu0 0.0
          %5077 = vmatpush.msra.mxu0 0.0
          %5078 = vmatpush.msra.mxu0 %v4995
          %5079 = vmatpush.msra.mxu0 %v4994
          %5080 = vmatpush.msra.mxu0 %v4993
          %5081 = vmatpush.msra.mxu0 %v4992
          %5082 = vmatpush.msra.mxu0 %v4991
          %5083 = vmatpush.msra.mxu0 %v4990
          %5084 = vmatpush.msra.mxu0 %v4989
          %5085 = vmatpush.msra.mxu0 %v4988
          %5086 = vmatpush.msra.mxu0 %v4987
          %5087 = vmatpush.msra.mxu0 %v4986
          %5088 = vmatpush.msra.mxu0 %v4985
          %5089 = vmatpush.msra.mxu0 %v4984
          %5090 = vmatmul.f32.gmra.mxu0 %v5072
          %v5091 = vpop.f32.mrf.mxu0
          %v5092 = vadd.f32 %v5069, %v5091
          %5093 = vdwg.mxu0
          %s5094 = scalar_lea.vmem %s9, 16
          %v5095 = vld [vmem:[%s5094] sm:$0xff]
          %5096 = vrot.lane.b32.xlu0 %v4984, 126
          %v5097 = vpop.permute.xlu0 %5096
          %5098 = vrot.lane.b32.xlu0 %v4985, 126
          %v5099 = vpop.permute.xlu0 %5098
          %5100 = vrot.lane.b32.xlu0 %v4986, 126
          %v5101 = vpop.permute.xlu0 %5100
          %5102 = vrot.lane.b32.xlu0 %v4987, 126
          %v5103 = vpop.permute.xlu0 %5102
          %5104 = vrot.lane.b32.xlu0 %v4988, 126
          %v5105 = vpop.permute.xlu0 %5104
          %5106 = vrot.lane.b32.xlu0 %v4989, 126
          %v5107 = vpop.permute.xlu0 %5106
          %5108 = vrot.lane.b32.xlu0 %v4990, 126
          %v5109 = vpop.permute.xlu0 %5108
          %5110 = vrot.lane.b32.xlu0 %v4991, 126
          %v5111 = vpop.permute.xlu0 %5110
          %5112 = vrot.lane.b32.xlu0 %v4992, 126
          %v5113 = vpop.permute.xlu0 %5112
          %5114 = vrot.lane.b32.xlu0 %v4993, 126
          %v5115 = vpop.permute.xlu0 %5114
          %5116 = vrot.lane.b32.xlu0 %v4994, 126
          %v5117 = vpop.permute.xlu0 %5116
          %5118 = vrot.lane.b32.xlu0 %v4995, 126
          %v5119 = vpop.permute.xlu0 %5118
          %v5133 = vsel %vm5047, %v5095, 0
          %5135 = vmatpush.msra.mxu0 0.0
          %5136 = vmatpush.msra.mxu0 0.0
          %5137 = vmatpush.msra.mxu0 0.0
          %5138 = vmatpush.msra.mxu0 0.0
          %5139 = vmatpush.msra.mxu0 %v5119
          %5140 = vmatpush.msra.mxu0 %v5117
          %5141 = vmatpush.msra.mxu0 %v5115
          %5142 = vmatpush.msra.mxu0 %v5113
          %5143 = vmatpush.msra.mxu0 %v5111
          %5144 = vmatpush.msra.mxu0 %v5109
          %5145 = vmatpush.msra.mxu0 %v5107
          %5146 = vmatpush.msra.mxu0 %v5105
          %5147 = vmatpush.msra.mxu0 %v5103
          %5148 = vmatpush.msra.mxu0 %v5101
          %5149 = vmatpush.msra.mxu0 %v5099
          %5150 = vmatpush.msra.mxu0 %v5097
          %5151 = vmatmul.f32.gmra.mxu0 %v5133
          %v5152 = vpop.f32.mrf.mxu0
          %v5153 = vadd.f32 0.0, %v5152
          %5154 = vdwg.mxu0
          %v5155 = vadd.f32 %v5092, %v5153
          %v5156 = vld [vmem:[%s10] sm:$0xff]
          %5158 = vset.pattern.permute.xlu0 0
          %5159 = vperm.xlu0 %5158, %v5156
          %v5160 = vpop.permute.xlu0 %5159
          %v5162 = vadd.f32 %v5155, %v5160
          %vm5163 = vcmp.ge.f32.partialorder %v5162, 0.0
          %v5164 = vmul.f32 %v5162, 0.01
          %v5165 = vsel %vm5163, %v5162, %v5164
          %s5166 = sadd.s32 %s4977, 1
          %s5167 = smul.u32 %s5166, 8
          %5169 = vrot.lane.b32.xlu0 %v5165, 1
          %v5170 = vpop.permute.xlu0 %5169
          %s5172 = scalar_lea.vmem [#allocation5], %s5167
          %vm5173 = vcmask 531464
          %5174 = vst.msk [vmem:[%s5172] sm:$0xff] %vm5173, %v5170
        $region110: #{forward.2} parent=79 // loop_footer
          %s4981 = sadd.s32 1, %s4977
        $region111: #{forward.2} parent=79 // loop_footer_branch
          %4976 = sbr.rel target = $region107
        $region112: #{forward.2} parent=79 // loop_exit
          _
        loop: start=0, step=1, limit=48
        $region113: #{forward.2} parent=79 // loop_pre_header
          _
        $region114: #{forward.2} parent=79 // loop_header
          %s5176 = sphi 0, %s5180
          %p5177 = scmp.ge.s32.totalorder %s5176, 48
        $region115: #{forward.2} parent=79 // loop_header_branch
          %5179 = sbr.rel (%p5177) target = $region119
        $region116: #{forward.2} parent=79 // loop_body
          %s5181 = smul.u32 %s5176, 8
          %s5182 = scalar_lea.vmem [#allocation5], %s5181
          %v5183 = vld [vmem:[%s5182] sm:$0xff]
          %v5184 = vld [vmem:[%s5182 + $0x8] sm:$0xff]
          %v5185 = vld [vmem:[%s5182 + $0x10] sm:$0xff]
          %v5186 = vld [vmem:[%s11] sm:$0xff]
          %s5187 = scalar_lea.vmem %s11, 8
          %v5188 = vld [vmem:[%s5187] sm:$0xff]
          %5192 = vrot.lane.b32.xlu0 %v5183, 127
          %v5193 = vpop.permute.xlu0 %5192
          %5194 = vrot.lane.b32.xlu0 %v5184, 127
          %v5195 = vpop.permute.xlu0 %5194
          %5196 = vrot.lane.b32.xlu0 %v5185, 127
          %v5197 = vpop.permute.xlu0 %5196
          %vm5201 = vcmask 195584
          %v5203 = vsel %vm5201, %v5188, 0
          %5205 = vmatpush.msra.mxu0 0.0
          %5206 = vmatpush.msra.mxu0 0.0
          %5207 = vmatpush.msra.mxu0 0.0
          %5208 = vmatpush.msra.mxu0 0.0
          %5209 = vmatpush.msra.mxu0 0.0
          %5210 = vmatpush.msra.mxu0 0.0
          %5211 = vmatpush.msra.mxu0 0.0
          %5212 = vmatpush.msra.mxu0 0.0
          %5213 = vmatpush.msra.mxu0 0.0
          %5214 = vmatpush.msra.mxu0 0.0
          %5215 = vmatpush.msra.mxu0 0.0
          %5216 = vmatpush.msra.mxu0 0.0
          %5217 = vmatpush.msra.mxu0 0.0
          %5218 = vmatpush.msra.mxu0 %v5197
          %5219 = vmatpush.msra.mxu0 %v5195
          %5220 = vmatpush.msra.mxu0 %v5193
          %5221 = vmatmul.f32.gmra.mxu0 %v5203
          %v5222 = vpop.f32.mrf.mxu0
          %v5223 = vadd.f32 0.0, %v5222
          %5224 = vdwg.mxu0
          %v5226 = vsel %vm5201, %v5186, 0
          %5228 = vmatpush.msra.mxu0 0.0
          %5229 = vmatpush.msra.mxu0 0.0
          %5230 = vmatpush.msra.mxu0 0.0
          %5231 = vmatpush.msra.mxu0 0.0
          %5232 = vmatpush.msra.mxu0 0.0
          %5233 = vmatpush.msra.mxu0 0.0
          %5234 = vmatpush.msra.mxu0 0.0
          %5235 = vmatpush.msra.mxu0 0.0
          %5236 = vmatpush.msra.mxu0 0.0
          %5237 = vmatpush.msra.mxu0 0.0
          %5238 = vmatpush.msra.mxu0 0.0
          %5239 = vmatpush.msra.mxu0 0.0
          %5240 = vmatpush.msra.mxu0 0.0
          %5241 = vmatpush.msra.mxu0 %v5185
          %5242 = vmatpush.msra.mxu0 %v5184
          %5243 = vmatpush.msra.mxu0 %v5183
          %5244 = vmatmul.f32.gmra.mxu0 %v5226
          %v5245 = vpop.f32.mrf.mxu0
          %v5246 = vadd.f32 %v5223, %v5245
          %5247 = vdwg.mxu0
          %s5248 = scalar_lea.vmem %s11, 16
          %v5249 = vld [vmem:[%s5248] sm:$0xff]
          %5250 = vrot.lane.b32.xlu0 %v5183, 126
          %v5251 = vpop.permute.xlu0 %5250
          %5252 = vrot.lane.b32.xlu0 %v5184, 126
          %v5253 = vpop.permute.xlu0 %5252
          %5254 = vrot.lane.b32.xlu0 %v5185, 126
          %v5255 = vpop.permute.xlu0 %5254
          %v5260 = vsel %vm5201, %v5249, 0
          %5262 = vmatpush.msra.mxu0 0.0
          %5263 = vmatpush.msra.mxu0 0.0
          %5264 = vmatpush.msra.mxu0 0.0
          %5265 = vmatpush.msra.mxu0 0.0
          %5266 = vmatpush.msra.mxu0 0.0
          %5267 = vmatpush.msra.mxu0 0.0
          %5268 = vmatpush.msra.mxu0 0.0
          %5269 = vmatpush.msra.mxu0 0.0
          %5270 = vmatpush.msra.mxu0 0.0
          %5271 = vmatpush.msra.mxu0 0.0
          %5272 = vmatpush.msra.mxu0 0.0
          %5273 = vmatpush.msra.mxu0 0.0
          %5274 = vmatpush.msra.mxu0 0.0
          %5275 = vmatpush.msra.mxu0 %v5255
          %5276 = vmatpush.msra.mxu0 %v5253
          %5277 = vmatpush.msra.mxu0 %v5251
          %5278 = vmatmul.f32.gmra.mxu0 %v5260
          %v5279 = vpop.f32.mrf.mxu0
          %v5280 = vadd.f32 0.0, %v5279
          %5281 = vdwg.mxu0
          %v5282 = vadd.f32 %v5246, %v5280
          %v5283 = vld [vmem:[%s12] sm:$0xff]
          %5285 = vset.pattern.permute.xlu0 0
          %5286 = vperm.xlu0 %5285, %v5283
          %v5287 = vpop.permute.xlu0 %5286
          %v5289 = vadd.f32 %v5282, %v5287
          %vm5290 = vcmp.ge.f32.partialorder %v5289, 0.0
          %v5291 = vmul.f32 %v5289, 0.01
          %v5292 = vsel %vm5290, %v5289, %v5291
          %v5293 = vld [vmem:[%s13] sm:$0x1]
          %v5294 = vld [vmem:[#allocation6] sm:$0x1]
          %5296 = vset.pattern.permute.xlu0 0
          %5297 = vperm.xlu0 %5296, %v5294
          %v5298 = vpop.permute.xlu0 %5297
          %v5300 = vperm.slane %v5298, 0
          %vm5301 = vcmask 64512
          %v5303 = vsel %vm5301, %v5293, 0
          %5305 = vmatpush.msra.mxu0 0.0
          %5306 = vmatpush.msra.mxu0 0.0
          %5307 = vmatpush.msra.mxu0 0.0
          %5308 = vmatpush.msra.mxu0 0.0
          %5309 = vmatpush.msra.mxu0 0.0
          %5310 = vmatpush.msra.mxu0 0.0
          %5311 = vmatpush.msra.mxu0 0.0
          %5312 = vmatpush.msra.mxu0 0.0
          %5313 = vmatpush.msra.mxu0 0.0
          %5314 = vmatpush.msra.mxu0 0.0
          %5315 = vmatpush.msra.mxu0 0.0
          %5316 = vmatpush.msra.mxu0 0.0
          %5317 = vmatpush.msra.mxu0 0.0
          %5318 = vmatpush.msra.mxu0 0.0
          %5319 = vmatpush.msra.mxu0 0.0
          %5320 = vmatpush.msra.mxu0 %v5292
          %5321 = vmatmul.f32.gmra.mxu0 %v5303
          %v5322 = vpop.f32.mrf.mxu0
          %v5323 = vadd.f32 %v5300, %v5322
          %5324 = vdwg.mxu0
          %vm5325 = vcmp.ge.f32.partialorder %v5323, 0.0
          %v5326 = vmul.f32 %v5323, 0.01
          %v5327 = vsel %vm5325, %v5323, %v5326
          %s5328 = scalar_lea.vmem %s513, %s5176
          %vm5329 = vcmask 516096
          %5330 = vst.msk [vmem:[%s5328] sm:$0x1] %vm5329, %v5327
        $region117: #{forward.2} parent=79 // loop_footer
          %s5180 = sadd.s32 1, %s5176
        $region118: #{forward.2} parent=79 // loop_footer_branch
          %5175 = sbr.rel target = $region114
        $region119: #{forward.2} parent=79 // loop_exit
          _
        %p5331 = scmp.lt.s32.totalorder %s29, 1
        %s5332 = scalar_select %p5331, %s29, 1
        %s5333 = smul.addr %s5332, 6
        %s5334 = smul.addr %s5333, 8
        %s5335 = scalar_lea.vmem %s15, %s5334
        // Predicated region
        $region120: #{forward.2} parent=79 // pred_check
          %p5336 = pneg %p367
        $region121: #{forward.2} parent=79 // pred_check_branch
          %5338 = sbr.rel (%p5336) target = $region123
        $region122: #{forward.2} parent=79 // pred_region
          _
        $region123: #{forward.2} parent=79 // pred_fallthru
          _
      $region80: #{forward.2} parent=5 // pred_fallthru
        _
      %p5339 = scmp.le.s32.totalorder 2, %s24
      // Predicated region
      $region124: #{forward.2} parent=5 // pred_check
        %p5340 = pneg %p5339
      $region125: #{forward.2} parent=5 // pred_check_branch
        %5342 = sbr.rel (%p5340) target = $region127
      $region126: #{forward.2} parent=5 // pred_region
        %s5343 = ssub.s32 %s24, 2
        // Predicated region
        $region128: #{forward.2} parent=126 // pred_check
          %p5344 = pneg %p373
        $region129: #{forward.2} parent=126 // pred_check_branch
          %5346 = sbr.rel (%p5344) target = $region131
        $region130: #{forward.2} parent=126 // pred_region
          %p5347 = scmp.lt.s32.totalorder %s30, 1
          %s5348 = scalar_select %p5347, %s30, 1
          %s5349 = smul.addr %s5348, 6
          %s5350 = smul.addr %s5349, 8
          %s5351 = scalar_lea.vmem %s15, %s5350
        $region131: #{forward.2} parent=126 // pred_fallthru
          _
      $region127: #{forward.2} parent=5 // pred_fallthru
        _
    $region6: #{forward.2} parent=1 // loop_footer
      %s28 = sadd.s32 1, %s24
    $region7: #{forward.2} parent=1 // loop_footer_branch
      %23 = sbr.rel target = $region3
    $region8: #{forward.2} parent=1 // loop_exit
      _
    %5352 = vsyncpa [#allocation8], 1
    %s5353 = scalar_lea.sflag [#allocation8], 1
    %5354 = vsyncpa %s5353, 1

</llo_original>
